<compile_context>
chip_gen: v5e
topology: v5e:2x2
jax: 0.10.0
libtpu: 0.0.40
codegen_flags: <defaults>
</compile_context>

<pallas_src>
import functools
import numpy as np

import jax
import jax.numpy as jnp
from jax import lax
from jax.experimental import pallas as pl
from jax.experimental.pallas import tpu as pltpu

# ---- scaled-down hyper-parameters (module defaults: d=200, seq=10000, k=256) ----
INPUT_DIM = 1
EMBED_DIM = 32          # divisible by NUM_HEADS (200/4 in the original)
SEQ_LEN = 128           # max_len of the positional encoding == input seq length
NUM_HEADS = 4
LINFORMER_K = 256       # k=256 is hard-coded in the module's Linformer(...) call
BATCH = 2
LN_EPS = 1e-5           # torch.nn.LayerNorm default


# --------------------------------------------------------------------------
# In-kernel math helpers
# --------------------------------------------------------------------------
def _gelu_tanh(x):
    # TODO(synk): torch.nn.GELU defaults to the exact erf formulation; the tanh
    # approximation is used to avoid relying on erf lowering inside Mosaic.
    c = jnp.float32(0.7978845608028654)  # sqrt(2/pi)
    return 0.5 * x * (1.0 + jnp.tanh(c * (x + 0.044715 * x * x * x)))


def _layernorm(x, g, b):
    mu = jnp.mean(x, axis=-1, keepdims=True)
    xc = x - mu
    var = jnp.mean(xc * xc, axis=-1, keepdims=True)
    return xc * lax.rsqrt(var + LN_EPS) * g + b


# --------------------------------------------------------------------------
# Fused encoder kernel (single step: whole batch folded into M = B*n)
# --------------------------------------------------------------------------
def _encoder_kernel(x_ref, pe_ref, emb_w_ref, emb_b_ref,
                    ln1_g_ref, ln1_b_ref, wqkv_ref,
                    pkt_ref, pvt_ref, wo_ref, bo_ref,
                    ln2_g_ref, ln2_b_ref,
                    ff_w1_ref, ff_b1_ref, ff_w2_ref, ff_b2_ref,
                    fc_w_ref, fc_b_ref, o_ref, *, batch, heads):
    f32 = jnp.float32
    n, d = pe_ref.shape
    dh = d // heads

    # ---- embedding (input_dim == 1 -> broadcast multiply) + positional enc ----
    pe_bias = emb_b_ref[...] + pe_ref[...]                                # (n, d)
    hid = jnp.concatenate(
        [x_ref[b].astype(f32) * emb_w_ref[...] + pe_bias for b in range(batch)],
        axis=0)                                                           # (B*n, d)

    # ---- attention block: hid = hid + Wo(attn(LN(hid))) + bo ----
    y = _layernorm(hid, ln1_g_ref[...], ln1_b_ref[...])
    qkv = jnp.dot(y, wqkv_ref[...], preferred_element_type=f32)           # (B*n, 3d)
    q = qkv[:, :d]                       # 1/sqrt(dh) already folded into Wq
    keys = qkv[:, d:2 * d]
    vals = qkv[:, 2 * d:]

    attn_rows = []
    for b in range(batch):               # static unroll over batch (small)
        rows = slice(b * n, (b + 1) * n)
        # sequence-length compression: E^T K, F^T V (proj stored pre-transposed)
        kp = jnp.dot(pkt_ref[...], keys[rows], preferred_element_type=f32)  # (k, d)
        vp = jnp.dot(pvt_ref[...], vals[rows], preferred_element_type=f32)  # (k, d)
        qb = q[rows]
        head_outs = []
        for h in range(heads):           # static unroll over heads
            cols = slice(h * dh, (h + 1) * dh)
            # contract-last-dims (A @ B^T) form: Mosaic-native matmul pattern,
            # no materialized per-head transpose.
            dots = lax.dot_general(qb[:, cols], kp[:, cols],
                                   (((1,), (1,)), ((), ())),
                                   preferred_element_type=f32)            # (n, k)
            m = jnp.max(dots, axis=-1, keepdims=True)
            p = jnp.exp(dots - m)
            inv_l = pl.reciprocal(jnp.sum(p, axis=-1, keepdims=True), approx=True)
            head_outs.append(
                jnp.dot(p, vp[:, cols], preferred_element_type=f32) * inv_l)  # (n, dh)
        attn_rows.append(jnp.concatenate(head_outs, axis=1))              # (n, d)
    attn_out = jnp.concatenate(attn_rows, axis=0)                         # (B*n, d)

    # single merged output projection (replaces 4 per-head K=8 matmuls)
    hid = hid + jnp.dot(attn_out, wo_ref[...], preferred_element_type=f32) + bo_ref[...]

    # ---- feed-forward block: hid = hid + W2 gelu(W1 LN(hid)) ----
    y = _layernorm(hid, ln2_g_ref[...], ln2_b_ref[...])
    f1 = _gelu_tanh(jnp.dot(y, ff_w1_ref[...], preferred_element_type=f32)
                    + ff_b1_ref[...])                                     # (B*n, 4d)
    hid = hid + jnp.dot(f1, ff_w2_ref[...], preferred_element_type=f32) + ff_b2_ref[...]

    # ---- final fc (d -> d//2), fused into the epilogue ----
    # TODO(synk): at real shapes pad the output last dim up to 128 lanes for
    # unmasked (lane-dense) stores; at 16 lanes / 16 KB output this is noise.
    out = jnp.dot(hid, fc_w_ref[...], preferred_element_type=f32) + fc_b_ref[...]
    for b in range(batch):
        o_ref[b] = out[b * n:(b + 1) * n].astype(o_ref.dtype)


# --------------------------------------------------------------------------
# Wrapper
# --------------------------------------------------------------------------
def linformer_seq_encoder_forward(params, x):
    B, n, _ = x.shape
    d = params["emb_w"].shape[1]

    kernel = functools.partial(_encoder_kernel, batch=B, heads=NUM_HEADS)

    # No grid: one kernel invocation, all operands (a few hundred KB total at
    # this config) live whole in VMEM; batch is folded into the matmul M dim.
    return pl.pallas_call(
        kernel,
        out_shape=jax.ShapeDtypeStruct((B, n, d // 2), x.dtype),
        compiler_params=pltpu.CompilerParams(
            vmem_limit_bytes=32 * 1024 * 1024),
    )(x, params["pe"][:n],
      params["emb_w"], params["emb_b"],
      params["ln1_g"], params["ln1_b"],
      params["wqkv"],
      params["proj_k_t"][:, :n], params["proj_v_t"][:, :n],
      params["wo"], params["bo"],
      params["ln2_g"], params["ln2_b"],
      params["ff_w1"], params["ff_b1"],
      params["ff_w2"], params["ff_b2"],
      params["fc_w"], params["fc_b"])


# --------------------------------------------------------------------------
# Parameters (deterministic, synthetic init)
# --------------------------------------------------------------------------
def make_positional_encoding(max_len, d_model):
    position = jnp.arange(max_len, dtype=jnp.float32)[:, None]
    div_term = jnp.exp(jnp.arange(0, d_model, 2, dtype=jnp.float32)
                       * (-jnp.log(jnp.float32(10000.0)) / d_model))
    pe = jnp.zeros((max_len, d_model), jnp.float32)
    pe = pe.at[:, 0::2].set(jnp.sin(position * div_term))
    pe = pe.at[:, 1::2].set(jnp.cos(position * div_term))
    return pe


def init_params(key):
    d, kk, n, h = EMBED_DIM, LINFORMER_K, SEQ_LEN, NUM_HEADS
    dh = d // h
    ks = jax.random.split(key, 10)

    def w(k, shape, scale=0.05):
        return (scale * jax.random.normal(k, shape)).astype(jnp.float32)

    zeros = lambda s: jnp.zeros(s, jnp.float32)
    ones = lambda s: jnp.ones(s, jnp.float32)

    wq = w(ks[1], (d, d))                      # to_q (bias=False)
    wk = w(ks[2], (d, d))                      # to_k (bias=False)
    wv = w(ks[3], (d, d))                      # to_v (bias=False)
    # Fuse Wq|Wk|Wv into one (d, 3d) weight at init time; fold the 1/sqrt(dh)
    # query scale into the Wq columns (weight-side, constant under jit).
    wqkv = jnp.concatenate([wq * (dh ** -0.5), wk, wv], axis=1)

    # proj_k / proj_v are (seq_len, k) in the module; stored pre-transposed as
    # (k, seq_len) so the kernel contracts over n with a plain matmul.
    proj_k = w(ks[4], (n, kk), scale=1.0 / np.sqrt(kk))
    proj_v = w(ks[5], (n, kk), scale=1.0 / np.sqrt(kk))

    return dict(
        emb_w=w(ks[0], (INPUT_DIM, d)), emb_b=zeros((1, d)),
        pe=make_positional_encoding(n, d),
        ln1_g=ones((1, d)), ln1_b=zeros((1, d)),
        wqkv=wqkv,
        proj_k_t=proj_k.T, proj_v_t=proj_v.T,
        wo=w(ks[6], (d, d)), bo=zeros((1, d)),      # to_out
        ln2_g=ones((1, d)), ln2_b=zeros((1, d)),
        ff_w1=w(ks[7], (d, 4 * d)), ff_b1=zeros((1, 4 * d)),
        ff_w2=w(ks[8], (4 * d, d)), ff_b2=zeros((1, d)),
        fc_w=w(ks[9], (d, d // 2)), fc_b=zeros((1, d // 2)),
    )


if __name__ == "__main__":
    key = jax.random.PRNGKey(0)
    k_x, k_p = jax.random.split(key)
    x = jax.random.normal(k_x, (BATCH, SEQ_LEN, INPUT_DIM), dtype=jnp.float32)
    params = init_params(k_p)

    out = jax.jit(linformer_seq_encoder_forward)(params, x)
    out = jax.block_until_ready(out)

    assert out.shape == (BATCH, SEQ_LEN, EMBED_DIM // 2), out.shape
    assert bool(jnp.all(jnp.isfinite(out)))
    print("KERNEL_OK")
</pallas_src>

<mosaic_0001>
module attributes {stable_mosaic.version = 11 : i64} {
  func.func @_encoder_kernel(%arg0: memref<2x128x1xf32, #tpu.memory_space<vmem>>, %arg1: memref<128x32xf32, #tpu.memory_space<vmem>>, %arg2: memref<1x32xf32, #tpu.memory_space<vmem>>, %arg3: memref<1x32xf32, #tpu.memory_space<vmem>>, %arg4: memref<1x32xf32, #tpu.memory_space<vmem>>, %arg5: memref<1x32xf32, #tpu.memory_space<vmem>>, %arg6: memref<32x96xf32, #tpu.memory_space<vmem>>, %arg7: memref<256x128xf32, #tpu.memory_space<vmem>>, %arg8: memref<256x128xf32, #tpu.memory_space<vmem>>, %arg9: memref<32x32xf32, #tpu.memory_space<vmem>>, %arg10: memref<1x32xf32, #tpu.memory_space<vmem>>, %arg11: memref<1x32xf32, #tpu.memory_space<vmem>>, %arg12: memref<1x32xf32, #tpu.memory_space<vmem>>, %arg13: memref<32x128xf32, #tpu.memory_space<vmem>>, %arg14: memref<1x128xf32, #tpu.memory_space<vmem>>, %arg15: memref<128x32xf32, #tpu.memory_space<vmem>>, %arg16: memref<1x32xf32, #tpu.memory_space<vmem>>, %arg17: memref<32x16xf32, #tpu.memory_space<vmem>>, %arg18: memref<1x16xf32, #tpu.memory_space<vmem>>, %arg19: memref<2x128x16xf32, #tpu.memory_space<vmem>>) attributes {dimension_semantics = [], scalar_prefetch = 0 : i64, scratch_operands = 0 : i64, tpu.core_type = #tpu.core_type<tc>} {
    %c0 = arith.constant 0 : index
    %c0_0 = arith.constant 0 : index
    %0 = vector.load %arg3[%c0, %c0_0] : memref<1x32xf32, #tpu.memory_space<vmem>>, vector<1x32xf32>
    %c0_1 = arith.constant 0 : index
    %c0_2 = arith.constant 0 : index
    %1 = vector.load %arg1[%c0_1, %c0_2] : memref<128x32xf32, #tpu.memory_space<vmem>>, vector<128x32xf32>
    %2 = vector.broadcast %0 : vector<1x32xf32> to vector<128x32xf32>
    %3 = arith.addf %2, %1 : vector<128x32xf32>
    %c0_3 = arith.constant 0 : index
    %c0_4 = arith.constant 0 : index
    %c0_5 = arith.constant 0 : index
    %4 = vector.load %arg0[%c0_3, %c0_4, %c0_5] : memref<2x128x1xf32, #tpu.memory_space<vmem>>, vector<1x128x1xf32>
    %5 = vector.shape_cast %4 : vector<1x128x1xf32> to vector<128x1xf32>
    %c0_6 = arith.constant 0 : index
    %c0_7 = arith.constant 0 : index
    %6 = vector.load %arg2[%c0_6, %c0_7] : memref<1x32xf32, #tpu.memory_space<vmem>>, vector<1x32xf32>
    %7 = vector.broadcast %5 : vector<128x1xf32> to vector<128x32xf32>
    %8 = vector.broadcast %6 : vector<1x32xf32> to vector<128x32xf32>
    %9 = arith.mulf %7, %8 : vector<128x32xf32>
    %10 = arith.addf %9, %3 : vector<128x32xf32>
    %c1 = arith.constant 1 : index
    %c0_8 = arith.constant 0 : index
    %c0_9 = arith.constant 0 : index
    %11 = vector.load %arg0[%c1, %c0_8, %c0_9] : memref<2x128x1xf32, #tpu.memory_space<vmem>>, vector<1x128x1xf32>
    %12 = vector.shape_cast %11 : vector<1x128x1xf32> to vector<128x1xf32>
    %c0_10 = arith.constant 0 : index
    %c0_11 = arith.constant 0 : index
    %13 = vector.load %arg2[%c0_10, %c0_11] : memref<1x32xf32, #tpu.memory_space<vmem>>, vector<1x32xf32>
    %14 = vector.broadcast %12 : vector<128x1xf32> to vector<128x32xf32>
    %15 = vector.broadcast %13 : vector<1x32xf32> to vector<128x32xf32>
    %16 = arith.mulf %14, %15 : vector<128x32xf32>
    %17 = arith.addf %16, %3 : vector<128x32xf32>
    %18 = tpu.concatenate %10, %17 in 0 : vector<128x32xf32>, vector<128x32xf32> -> vector<256x32xf32>
    %c0_12 = arith.constant 0 : index
    %c0_13 = arith.constant 0 : index
    %19 = vector.load %arg4[%c0_12, %c0_13] : memref<1x32xf32, #tpu.memory_space<vmem>>, vector<1x32xf32>
    %c0_14 = arith.constant 0 : index
    %c0_15 = arith.constant 0 : index
    %20 = vector.load %arg5[%c0_14, %c0_15] : memref<1x32xf32, #tpu.memory_space<vmem>>, vector<1x32xf32>
    %cst = arith.constant dense<0.000000e+00> : vector<256xf32>
    %21 = vector.multi_reduction <add>, %18, %cst [1] : vector<256x32xf32> to vector<256xf32>
    %22 = vector.shape_cast %21 : vector<256xf32> to vector<256x1xf32>
    %cst_16 = arith.constant 3.200000e+01 : f32
    %23 = vector.broadcast %cst_16 : f32 to vector<256x1xf32>
    %24 = arith.divf %22, %23 : vector<256x1xf32>
    %25 = vector.broadcast %24 : vector<256x1xf32> to vector<256x32xf32>
    %26 = arith.subf %18, %25 : vector<256x32xf32>
    %27 = arith.mulf %26, %26 : vector<256x32xf32>
    %cst_17 = arith.constant dense<0.000000e+00> : vector<256xf32>
    %28 = vector.multi_reduction <add>, %27, %cst_17 [1] : vector<256x32xf32> to vector<256xf32>
    %29 = vector.shape_cast %28 : vector<256xf32> to vector<256x1xf32>
    %cst_18 = arith.constant 3.200000e+01 : f32
    %30 = vector.broadcast %cst_18 : f32 to vector<256x1xf32>
    %31 = arith.divf %29, %30 : vector<256x1xf32>
    %cst_19 = arith.constant 9.99999974E-6 : f32
    %32 = vector.broadcast %cst_19 : f32 to vector<256x1xf32>
    %33 = arith.addf %31, %32 : vector<256x1xf32>
    %34 = math.rsqrt %33 : vector<256x1xf32>
    %35 = vector.broadcast %34 : vector<256x1xf32> to vector<256x32xf32>
    %36 = arith.mulf %26, %35 : vector<256x32xf32>
    %37 = vector.broadcast %19 : vector<1x32xf32> to vector<256x32xf32>
    %38 = arith.mulf %36, %37 : vector<256x32xf32>
    %39 = vector.broadcast %20 : vector<1x32xf32> to vector<256x32xf32>
    %40 = arith.addf %38, %39 : vector<256x32xf32>
    %c0_20 = arith.constant 0 : index
    %c0_21 = arith.constant 0 : index
    %41 = vector.load %arg6[%c0_20, %c0_21] : memref<32x96xf32, #tpu.memory_space<vmem>>, vector<32x96xf32>
    %cst_22 = arith.constant dense<0.000000e+00> : vector<256x96xf32>
    %42 = tpu.matmul %40, %41, %cst_22 {dimension_numbers = #tpu.dot_dimension_numbers<[1], [0], [0], [1], [0, 0, 1, 1], [], []>} : vector<256x32xf32>, vector<32x96xf32>, vector<256x96xf32> -> vector<256x96xf32>
    %43 = vector.extract_strided_slice %42 {offsets = [0, 0], sizes = [256, 32], strides = [1, 1]} : vector<256x96xf32> to vector<256x32xf32>
    %44 = vector.extract_strided_slice %42 {offsets = [0, 32], sizes = [256, 32], strides = [1, 1]} : vector<256x96xf32> to vector<256x32xf32>
    %45 = vector.extract_strided_slice %42 {offsets = [0, 64], sizes = [256, 32], strides = [1, 1]} : vector<256x96xf32> to vector<256x32xf32>
    %c0_23 = arith.constant 0 : index
    %c0_24 = arith.constant 0 : index
    %46 = vector.load %arg7[%c0_23, %c0_24] : memref<256x128xf32, #tpu.memory_space<vmem>>, vector<256x128xf32>
    %47 = vector.extract_strided_slice %44 {offsets = [0, 0], sizes = [128, 32], strides = [1, 1]} : vector<256x32xf32> to vector<128x32xf32>
    %cst_25 = arith.constant dense<0.000000e+00> : vector<256x32xf32>
    %48 = tpu.matmul %46, %47, %cst_25 {dimension_numbers = #tpu.dot_dimension_numbers<[1], [0], [0], [1], [0, 0, 1, 1], [], []>} : vector<256x128xf32>, vector<128x32xf32>, vector<256x32xf32> -> vector<256x32xf32>
    %c0_26 = arith.constant 0 : index
    %c0_27 = arith.constant 0 : index
    %49 = vector.load %arg8[%c0_26, %c0_27] : memref<256x128xf32, #tpu.memory_space<vmem>>, vector<256x128xf32>
    %50 = vector.extract_strided_slice %45 {offsets = [0, 0], sizes = [128, 32], strides = [1, 1]} : vector<256x32xf32> to vector<128x32xf32>
    %cst_28 = arith.constant dense<0.000000e+00> : vector<256x32xf32>
    %51 = tpu.matmul %49, %50, %cst_28 {dimension_numbers = #tpu.dot_dimension_numbers<[1], [0], [0], [1], [0, 0, 1, 1], [], []>} : vector<256x128xf32>, vector<128x32xf32>, vector<256x32xf32> -> vector<256x32xf32>
    %52 = vector.extract_strided_slice %43 {offsets = [0, 0], sizes = [128, 32], strides = [1, 1]} : vector<256x32xf32> to vector<128x32xf32>
    %53 = vector.extract_strided_slice %52 {offsets = [0, 0], sizes = [128, 8], strides = [1, 1]} : vector<128x32xf32> to vector<128x8xf32>
    %54 = vector.extract_strided_slice %48 {offsets = [0, 0], sizes = [256, 8], strides = [1, 1]} : vector<256x32xf32> to vector<256x8xf32>
    %cst_29 = arith.constant dense<0.000000e+00> : vector<128x256xf32>
    %55 = tpu.matmul %53, %54, %cst_29 {dimension_numbers = #tpu.dot_dimension_numbers<[1], [1], [0], [0], [0, 0, 1, 0], [], []>} : vector<128x8xf32>, vector<256x8xf32>, vector<128x256xf32> -> vector<128x256xf32>
    %cst_30 = arith.constant dense<0xFF800000> : vector<128xf32>
    %56 = vector.multi_reduction <maximumf>, %55, %cst_30 [1] : vector<128x256xf32> to vector<128xf32>
    %57 = vector.shape_cast %56 : vector<128xf32> to vector<128x1xf32>
    %58 = vector.broadcast %57 : vector<128x1xf32> to vector<128x256xf32>
    %59 = arith.subf %55, %58 : vector<128x256xf32>
    %60 = math.exp %59 : vector<128x256xf32>
    %cst_31 = arith.constant dense<0.000000e+00> : vector<128xf32>
    %61 = vector.multi_reduction <add>, %60, %cst_31 [1] : vector<128x256xf32> to vector<128xf32>
    %62 = vector.shape_cast %61 : vector<128xf32> to vector<128x1xf32>
    %63 = tpu.reciprocal %62 {approx = true} : vector<128x1xf32> -> vector<128x1xf32>
    %64 = vector.extract_strided_slice %51 {offsets = [0, 0], sizes = [256, 8], strides = [1, 1]} : vector<256x32xf32> to vector<256x8xf32>
    %cst_32 = arith.constant dense<0.000000e+00> : vector<128x8xf32>
    %65 = tpu.matmul %60, %64, %cst_32 {dimension_numbers = #tpu.dot_dimension_numbers<[1], [0], [0], [1], [0, 0, 1, 1], [], []>} : vector<128x256xf32>, vector<256x8xf32>, vector<128x8xf32> -> vector<128x8xf32>
    %66 = vector.broadcast %63 : vector<128x1xf32> to vector<128x8xf32>
    %67 = arith.mulf %65, %66 : vector<128x8xf32>
    %68 = vector.extract_strided_slice %52 {offsets = [0, 8], sizes = [128, 8], strides = [1, 1]} : vector<128x32xf32> to vector<128x8xf32>
    %69 = vector.extract_strided_slice %48 {offsets = [0, 8], sizes = [256, 8], strides = [1, 1]} : vector<256x32xf32> to vector<256x8xf32>
    %cst_33 = arith.constant dense<0.000000e+00> : vector<128x256xf32>
    %70 = tpu.matmul %68, %69, %cst_33 {dimension_numbers = #tpu.dot_dimension_numbers<[1], [1], [0], [0], [0, 0, 1, 0], [], []>} : vector<128x8xf32>, vector<256x8xf32>, vector<128x256xf32> -> vector<128x256xf32>
    %cst_34 = arith.constant dense<0xFF800000> : vector<128xf32>
    %71 = vector.multi_reduction <maximumf>, %70, %cst_34 [1] : vector<128x256xf32> to vector<128xf32>
    %72 = vector.shape_cast %71 : vector<128xf32> to vector<128x1xf32>
    %73 = vector.broadcast %72 : vector<128x1xf32> to vector<128x256xf32>
    %74 = arith.subf %70, %73 : vector<128x256xf32>
    %75 = math.exp %74 : vector<128x256xf32>
    %cst_35 = arith.constant dense<0.000000e+00> : vector<128xf32>
    %76 = vector.multi_reduction <add>, %75, %cst_35 [1] : vector<128x256xf32> to vector<128xf32>
    %77 = vector.shape_cast %76 : vector<128xf32> to vector<128x1xf32>
    %78 = tpu.reciprocal %77 {approx = true} : vector<128x1xf32> -> vector<128x1xf32>
    %79 = vector.extract_strided_slice %51 {offsets = [0, 8], sizes = [256, 8], strides = [1, 1]} : vector<256x32xf32> to vector<256x8xf32>
    %cst_36 = arith.constant dense<0.000000e+00> : vector<128x8xf32>
    %80 = tpu.matmul %75, %79, %cst_36 {dimension_numbers = #tpu.dot_dimension_numbers<[1], [0], [0], [1], [0, 0, 1, 1], [], []>} : vector<128x256xf32>, vector<256x8xf32>, vector<128x8xf32> -> vector<128x8xf32>
    %81 = vector.broadcast %78 : vector<128x1xf32> to vector<128x8xf32>
    %82 = arith.mulf %80, %81 : vector<128x8xf32>
    %83 = vector.extract_strided_slice %52 {offsets = [0, 16], sizes = [128, 8], strides = [1, 1]} : vector<128x32xf32> to vector<128x8xf32>
    %84 = vector.extract_strided_slice %48 {offsets = [0, 16], sizes = [256, 8], strides = [1, 1]} : vector<256x32xf32> to vector<256x8xf32>
    %cst_37 = arith.constant dense<0.000000e+00> : vector<128x256xf32>
    %85 = tpu.matmul %83, %84, %cst_37 {dimension_numbers = #tpu.dot_dimension_numbers<[1], [1], [0], [0], [0, 0, 1, 0], [], []>} : vector<128x8xf32>, vector<256x8xf32>, vector<128x256xf32> -> vector<128x256xf32>
    %cst_38 = arith.constant dense<0xFF800000> : vector<128xf32>
    %86 = vector.multi_reduction <maximumf>, %85, %cst_38 [1] : vector<128x256xf32> to vector<128xf32>
    %87 = vector.shape_cast %86 : vector<128xf32> to vector<128x1xf32>
    %88 = vector.broadcast %87 : vector<128x1xf32> to vector<128x256xf32>
    %89 = arith.subf %85, %88 : vector<128x256xf32>
    %90 = math.exp %89 : vector<128x256xf32>
    %cst_39 = arith.constant dense<0.000000e+00> : vector<128xf32>
    %91 = vector.multi_reduction <add>, %90, %cst_39 [1] : vector<128x256xf32> to vector<128xf32>
    %92 = vector.shape_cast %91 : vector<128xf32> to vector<128x1xf32>
    %93 = tpu.reciprocal %92 {approx = true} : vector<128x1xf32> -> vector<128x1xf32>
    %94 = vector.extract_strided_slice %51 {offsets = [0, 16], sizes = [256, 8], strides = [1, 1]} : vector<256x32xf32> to vector<256x8xf32>
    %cst_40 = arith.constant dense<0.000000e+00> : vector<128x8xf32>
    %95 = tpu.matmul %90, %94, %cst_40 {dimension_numbers = #tpu.dot_dimension_numbers<[1], [0], [0], [1], [0, 0, 1, 1], [], []>} : vector<128x256xf32>, vector<256x8xf32>, vector<128x8xf32> -> vector<128x8xf32>
    %96 = vector.broadcast %93 : vector<128x1xf32> to vector<128x8xf32>
    %97 = arith.mulf %95, %96 : vector<128x8xf32>
    %98 = vector.extract_strided_slice %52 {offsets = [0, 24], sizes = [128, 8], strides = [1, 1]} : vector<128x32xf32> to vector<128x8xf32>
    %99 = vector.extract_strided_slice %48 {offsets = [0, 24], sizes = [256, 8], strides = [1, 1]} : vector<256x32xf32> to vector<256x8xf32>
    %cst_41 = arith.constant dense<0.000000e+00> : vector<128x256xf32>
    %100 = tpu.matmul %98, %99, %cst_41 {dimension_numbers = #tpu.dot_dimension_numbers<[1], [1], [0], [0], [0, 0, 1, 0], [], []>} : vector<128x8xf32>, vector<256x8xf32>, vector<128x256xf32> -> vector<128x256xf32>
    %cst_42 = arith.constant dense<0xFF800000> : vector<128xf32>
    %101 = vector.multi_reduction <maximumf>, %100, %cst_42 [1] : vector<128x256xf32> to vector<128xf32>
    %102 = vector.shape_cast %101 : vector<128xf32> to vector<128x1xf32>
    %103 = vector.broadcast %102 : vector<128x1xf32> to vector<128x256xf32>
    %104 = arith.subf %100, %103 : vector<128x256xf32>
    %105 = math.exp %104 : vector<128x256xf32>
    %cst_43 = arith.constant dense<0.000000e+00> : vector<128xf32>
    %106 = vector.multi_reduction <add>, %105, %cst_43 [1] : vector<128x256xf32> to vector<128xf32>
    %107 = vector.shape_cast %106 : vector<128xf32> to vector<128x1xf32>
    %108 = tpu.reciprocal %107 {approx = true} : vector<128x1xf32> -> vector<128x1xf32>
    %109 = vector.extract_strided_slice %51 {offsets = [0, 24], sizes = [256, 8], strides = [1, 1]} : vector<256x32xf32> to vector<256x8xf32>
    %cst_44 = arith.constant dense<0.000000e+00> : vector<128x8xf32>
    %110 = tpu.matmul %105, %109, %cst_44 {dimension_numbers = #tpu.dot_dimension_numbers<[1], [0], [0], [1], [0, 0, 1, 1], [], []>} : vector<128x256xf32>, vector<256x8xf32>, vector<128x8xf32> -> vector<128x8xf32>
    %111 = vector.broadcast %108 : vector<128x1xf32> to vector<128x8xf32>
    %112 = arith.mulf %110, %111 : vector<128x8xf32>
    %113 = tpu.concatenate %67, %82, %97, %112 in 1 : vector<128x8xf32>, vector<128x8xf32>, vector<128x8xf32>, vector<128x8xf32> -> vector<128x32xf32>
    %c0_45 = arith.constant 0 : index
    %c0_46 = arith.constant 0 : index
    %114 = vector.load %arg7[%c0_45, %c0_46] : memref<256x128xf32, #tpu.memory_space<vmem>>, vector<256x128xf32>
    %115 = vector.extract_strided_slice %44 {offsets = [128, 0], sizes = [128, 32], strides = [1, 1]} : vector<256x32xf32> to vector<128x32xf32>
    %cst_47 = arith.constant dense<0.000000e+00> : vector<256x32xf32>
    %116 = tpu.matmul %114, %115, %cst_47 {dimension_numbers = #tpu.dot_dimension_numbers<[1], [0], [0], [1], [0, 0, 1, 1], [], []>} : vector<256x128xf32>, vector<128x32xf32>, vector<256x32xf32> -> vector<256x32xf32>
    %c0_48 = arith.constant 0 : index
    %c0_49 = arith.constant 0 : index
    %117 = vector.load %arg8[%c0_48, %c0_49] : memref<256x128xf32, #tpu.memory_space<vmem>>, vector<256x128xf32>
    %118 = vector.extract_strided_slice %45 {offsets = [128, 0], sizes = [128, 32], strides = [1, 1]} : vector<256x32xf32> to vector<128x32xf32>
    %cst_50 = arith.constant dense<0.000000e+00> : vector<256x32xf32>
    %119 = tpu.matmul %117, %118, %cst_50 {dimension_numbers = #tpu.dot_dimension_numbers<[1], [0], [0], [1], [0, 0, 1, 1], [], []>} : vector<256x128xf32>, vector<128x32xf32>, vector<256x32xf32> -> vector<256x32xf32>
    %120 = vector.extract_strided_slice %43 {offsets = [128, 0], sizes = [128, 32], strides = [1, 1]} : vector<256x32xf32> to vector<128x32xf32>
    %121 = vector.extract_strided_slice %120 {offsets = [0, 0], sizes = [128, 8], strides = [1, 1]} : vector<128x32xf32> to vector<128x8xf32>
    %122 = vector.extract_strided_slice %116 {offsets = [0, 0], sizes = [256, 8], strides = [1, 1]} : vector<256x32xf32> to vector<256x8xf32>
    %cst_51 = arith.constant dense<0.000000e+00> : vector<128x256xf32>
    %123 = tpu.matmul %121, %122, %cst_51 {dimension_numbers = #tpu.dot_dimension_numbers<[1], [1], [0], [0], [0, 0, 1, 0], [], []>} : vector<128x8xf32>, vector<256x8xf32>, vector<128x256xf32> -> vector<128x256xf32>
    %cst_52 = arith.constant dense<0xFF800000> : vector<128xf32>
    %124 = vector.multi_reduction <maximumf>, %123, %cst_52 [1] : vector<128x256xf32> to vector<128xf32>
    %125 = vector.shape_cast %124 : vector<128xf32> to vector<128x1xf32>
    %126 = vector.broadcast %125 : vector<128x1xf32> to vector<128x256xf32>
    %127 = arith.subf %123, %126 : vector<128x256xf32>
    %128 = math.exp %127 : vector<128x256xf32>
    %cst_53 = arith.constant dense<0.000000e+00> : vector<128xf32>
    %129 = vector.multi_reduction <add>, %128, %cst_53 [1] : vector<128x256xf32> to vector<128xf32>
    %130 = vector.shape_cast %129 : vector<128xf32> to vector<128x1xf32>
    %131 = tpu.reciprocal %130 {approx = true} : vector<128x1xf32> -> vector<128x1xf32>
    %132 = vector.extract_strided_slice %119 {offsets = [0, 0], sizes = [256, 8], strides = [1, 1]} : vector<256x32xf32> to vector<256x8xf32>
    %cst_54 = arith.constant dense<0.000000e+00> : vector<128x8xf32>
    %133 = tpu.matmul %128, %132, %cst_54 {dimension_numbers = #tpu.dot_dimension_numbers<[1], [0], [0], [1], [0, 0, 1, 1], [], []>} : vector<128x256xf32>, vector<256x8xf32>, vector<128x8xf32> -> vector<128x8xf32>
    %134 = vector.broadcast %131 : vector<128x1xf32> to vector<128x8xf32>
    %135 = arith.mulf %133, %134 : vector<128x8xf32>
    %136 = vector.extract_strided_slice %120 {offsets = [0, 8], sizes = [128, 8], strides = [1, 1]} : vector<128x32xf32> to vector<128x8xf32>
    %137 = vector.extract_strided_slice %116 {offsets = [0, 8], sizes = [256, 8], strides = [1, 1]} : vector<256x32xf32> to vector<256x8xf32>
    %cst_55 = arith.constant dense<0.000000e+00> : vector<128x256xf32>
    %138 = tpu.matmul %136, %137, %cst_55 {dimension_numbers = #tpu.dot_dimension_numbers<[1], [1], [0], [0], [0, 0, 1, 0], [], []>} : vector<128x8xf32>, vector<256x8xf32>, vector<128x256xf32> -> vector<128x256xf32>
    %cst_56 = arith.constant dense<0xFF800000> : vector<128xf32>
    %139 = vector.multi_reduction <maximumf>, %138, %cst_56 [1] : vector<128x256xf32> to vector<128xf32>
    %140 = vector.shape_cast %139 : vector<128xf32> to vector<128x1xf32>
    %141 = vector.broadcast %140 : vector<128x1xf32> to vector<128x256xf32>
    %142 = arith.subf %138, %141 : vector<128x256xf32>
    %143 = math.exp %142 : vector<128x256xf32>
    %cst_57 = arith.constant dense<0.000000e+00> : vector<128xf32>
    %144 = vector.multi_reduction <add>, %143, %cst_57 [1] : vector<128x256xf32> to vector<128xf32>
    %145 = vector.shape_cast %144 : vector<128xf32> to vector<128x1xf32>
    %146 = tpu.reciprocal %145 {approx = true} : vector<128x1xf32> -> vector<128x1xf32>
    %147 = vector.extract_strided_slice %119 {offsets = [0, 8], sizes = [256, 8], strides = [1, 1]} : vector<256x32xf32> to vector<256x8xf32>
    %cst_58 = arith.constant dense<0.000000e+00> : vector<128x8xf32>
    %148 = tpu.matmul %143, %147, %cst_58 {dimension_numbers = #tpu.dot_dimension_numbers<[1], [0], [0], [1], [0, 0, 1, 1], [], []>} : vector<128x256xf32>, vector<256x8xf32>, vector<128x8xf32> -> vector<128x8xf32>
    %149 = vector.broadcast %146 : vector<128x1xf32> to vector<128x8xf32>
    %150 = arith.mulf %148, %149 : vector<128x8xf32>
    %151 = vector.extract_strided_slice %120 {offsets = [0, 16], sizes = [128, 8], strides = [1, 1]} : vector<128x32xf32> to vector<128x8xf32>
    %152 = vector.extract_strided_slice %116 {offsets = [0, 16], sizes = [256, 8], strides = [1, 1]} : vector<256x32xf32> to vector<256x8xf32>
    %cst_59 = arith.constant dense<0.000000e+00> : vector<128x256xf32>
    %153 = tpu.matmul %151, %152, %cst_59 {dimension_numbers = #tpu.dot_dimension_numbers<[1], [1], [0], [0], [0, 0, 1, 0], [], []>} : vector<128x8xf32>, vector<256x8xf32>, vector<128x256xf32> -> vector<128x256xf32>
    %cst_60 = arith.constant dense<0xFF800000> : vector<128xf32>
    %154 = vector.multi_reduction <maximumf>, %153, %cst_60 [1] : vector<128x256xf32> to vector<128xf32>
    %155 = vector.shape_cast %154 : vector<128xf32> to vector<128x1xf32>
    %156 = vector.broadcast %155 : vector<128x1xf32> to vector<128x256xf32>
    %157 = arith.subf %153, %156 : vector<128x256xf32>
    %158 = math.exp %157 : vector<128x256xf32>
    %cst_61 = arith.constant dense<0.000000e+00> : vector<128xf32>
    %159 = vector.multi_reduction <add>, %158, %cst_61 [1] : vector<128x256xf32> to vector<128xf32>
    %160 = vector.shape_cast %159 : vector<128xf32> to vector<128x1xf32>
    %161 = tpu.reciprocal %160 {approx = true} : vector<128x1xf32> -> vector<128x1xf32>
    %162 = vector.extract_strided_slice %119 {offsets = [0, 16], sizes = [256, 8], strides = [1, 1]} : vector<256x32xf32> to vector<256x8xf32>
    %cst_62 = arith.constant dense<0.000000e+00> : vector<128x8xf32>
    %163 = tpu.matmul %158, %162, %cst_62 {dimension_numbers = #tpu.dot_dimension_numbers<[1], [0], [0], [1], [0, 0, 1, 1], [], []>} : vector<128x256xf32>, vector<256x8xf32>, vector<128x8xf32> -> vector<128x8xf32>
    %164 = vector.broadcast %161 : vector<128x1xf32> to vector<128x8xf32>
    %165 = arith.mulf %163, %164 : vector<128x8xf32>
    %166 = vector.extract_strided_slice %120 {offsets = [0, 24], sizes = [128, 8], strides = [1, 1]} : vector<128x32xf32> to vector<128x8xf32>
    %167 = vector.extract_strided_slice %116 {offsets = [0, 24], sizes = [256, 8], strides = [1, 1]} : vector<256x32xf32> to vector<256x8xf32>
    %cst_63 = arith.constant dense<0.000000e+00> : vector<128x256xf32>
    %168 = tpu.matmul %166, %167, %cst_63 {dimension_numbers = #tpu.dot_dimension_numbers<[1], [1], [0], [0], [0, 0, 1, 0], [], []>} : vector<128x8xf32>, vector<256x8xf32>, vector<128x256xf32> -> vector<128x256xf32>
    %cst_64 = arith.constant dense<0xFF800000> : vector<128xf32>
    %169 = vector.multi_reduction <maximumf>, %168, %cst_64 [1] : vector<128x256xf32> to vector<128xf32>
    %170 = vector.shape_cast %169 : vector<128xf32> to vector<128x1xf32>
    %171 = vector.broadcast %170 : vector<128x1xf32> to vector<128x256xf32>
    %172 = arith.subf %168, %171 : vector<128x256xf32>
    %173 = math.exp %172 : vector<128x256xf32>
    %cst_65 = arith.constant dense<0.000000e+00> : vector<128xf32>
    %174 = vector.multi_reduction <add>, %173, %cst_65 [1] : vector<128x256xf32> to vector<128xf32>
    %175 = vector.shape_cast %174 : vector<128xf32> to vector<128x1xf32>
    %176 = tpu.reciprocal %175 {approx = true} : vector<128x1xf32> -> vector<128x1xf32>
    %177 = vector.extract_strided_slice %119 {offsets = [0, 24], sizes = [256, 8], strides = [1, 1]} : vector<256x32xf32> to vector<256x8xf32>
    %cst_66 = arith.constant dense<0.000000e+00> : vector<128x8xf32>
    %178 = tpu.matmul %173, %177, %cst_66 {dimension_numbers = #tpu.dot_dimension_numbers<[1], [0], [0], [1], [0, 0, 1, 1], [], []>} : vector<128x256xf32>, vector<256x8xf32>, vector<128x8xf32> -> vector<128x8xf32>
    %179 = vector.broadcast %176 : vector<128x1xf32> to vector<128x8xf32>
    %180 = arith.mulf %178, %179 : vector<128x8xf32>
    %181 = tpu.concatenate %135, %150, %165, %180 in 1 : vector<128x8xf32>, vector<128x8xf32>, vector<128x8xf32>, vector<128x8xf32> -> vector<128x32xf32>
    %182 = tpu.concatenate %113, %181 in 0 : vector<128x32xf32>, vector<128x32xf32> -> vector<256x32xf32>
    %c0_67 = arith.constant 0 : index
    %c0_68 = arith.constant 0 : index
    %183 = vector.load %arg9[%c0_67, %c0_68] : memref<32x32xf32, #tpu.memory_space<vmem>>, vector<32x32xf32>
    %cst_69 = arith.constant dense<0.000000e+00> : vector<256x32xf32>
    %184 = tpu.matmul %182, %183, %cst_69 {dimension_numbers = #tpu.dot_dimension_numbers<[1], [0], [0], [1], [0, 0, 1, 1], [], []>} : vector<256x32xf32>, vector<32x32xf32>, vector<256x32xf32> -> vector<256x32xf32>
    %185 = arith.addf %18, %184 : vector<256x32xf32>
    %c0_70 = arith.constant 0 : index
    %c0_71 = arith.constant 0 : index
    %186 = vector.load %arg10[%c0_70, %c0_71] : memref<1x32xf32, #tpu.memory_space<vmem>>, vector<1x32xf32>
    %187 = vector.broadcast %186 : vector<1x32xf32> to vector<256x32xf32>
    %188 = arith.addf %185, %187 : vector<256x32xf32>
    %c0_72 = arith.constant 0 : index
    %c0_73 = arith.constant 0 : index
    %189 = vector.load %arg11[%c0_72, %c0_73] : memref<1x32xf32, #tpu.memory_space<vmem>>, vector<1x32xf32>
    %c0_74 = arith.constant 0 : index
    %c0_75 = arith.constant 0 : index
    %190 = vector.load %arg12[%c0_74, %c0_75] : memref<1x32xf32, #tpu.memory_space<vmem>>, vector<1x32xf32>
    %cst_76 = arith.constant dense<0.000000e+00> : vector<256xf32>
    %191 = vector.multi_reduction <add>, %188, %cst_76 [1] : vector<256x32xf32> to vector<256xf32>
    %192 = vector.shape_cast %191 : vector<256xf32> to vector<256x1xf32>
    %cst_77 = arith.constant 3.200000e+01 : f32
    %193 = vector.broadcast %cst_77 : f32 to vector<256x1xf32>
    %194 = arith.divf %192, %193 : vector<256x1xf32>
    %195 = vector.broadcast %194 : vector<256x1xf32> to vector<256x32xf32>
    %196 = arith.subf %188, %195 : vector<256x32xf32>
    %197 = arith.mulf %196, %196 : vector<256x32xf32>
    %cst_78 = arith.constant dense<0.000000e+00> : vector<256xf32>
    %198 = vector.multi_reduction <add>, %197, %cst_78 [1] : vector<256x32xf32> to vector<256xf32>
    %199 = vector.shape_cast %198 : vector<256xf32> to vector<256x1xf32>
    %cst_79 = arith.constant 3.200000e+01 : f32
    %200 = vector.broadcast %cst_79 : f32 to vector<256x1xf32>
    %201 = arith.divf %199, %200 : vector<256x1xf32>
    %cst_80 = arith.constant 9.99999974E-6 : f32
    %202 = vector.broadcast %cst_80 : f32 to vector<256x1xf32>
    %203 = arith.addf %201, %202 : vector<256x1xf32>
    %204 = math.rsqrt %203 : vector<256x1xf32>
    %205 = vector.broadcast %204 : vector<256x1xf32> to vector<256x32xf32>
    %206 = arith.mulf %196, %205 : vector<256x32xf32>
    %207 = vector.broadcast %189 : vector<1x32xf32> to vector<256x32xf32>
    %208 = arith.mulf %206, %207 : vector<256x32xf32>
    %209 = vector.broadcast %190 : vector<1x32xf32> to vector<256x32xf32>
    %210 = arith.addf %208, %209 : vector<256x32xf32>
    %c0_81 = arith.constant 0 : index
    %c0_82 = arith.constant 0 : index
    %211 = vector.load %arg13[%c0_81, %c0_82] : memref<32x128xf32, #tpu.memory_space<vmem>>, vector<32x128xf32>
    %cst_83 = arith.constant dense<0.000000e+00> : vector<256x128xf32>
    %212 = tpu.matmul %210, %211, %cst_83 {dimension_numbers = #tpu.dot_dimension_numbers<[1], [0], [0], [1], [0, 0, 1, 1], [], []>} : vector<256x32xf32>, vector<32x128xf32>, vector<256x128xf32> -> vector<256x128xf32>
    %c0_84 = arith.constant 0 : index
    %c0_85 = arith.constant 0 : index
    %213 = vector.load %arg14[%c0_84, %c0_85] : memref<1x128xf32, #tpu.memory_space<vmem>>, vector<1x128xf32>
    %214 = vector.broadcast %213 : vector<1x128xf32> to vector<256x128xf32>
    %215 = arith.addf %212, %214 : vector<256x128xf32>
    %cst_86 = arith.constant 5.000000e-01 : f32
    %216 = vector.broadcast %cst_86 : f32 to vector<256x128xf32>
    %217 = arith.mulf %216, %215 : vector<256x128xf32>
    %cst_87 = arith.constant 4.471500e-02 : f32
    %218 = vector.broadcast %cst_87 : f32 to vector<256x128xf32>
    %219 = arith.mulf %218, %215 : vector<256x128xf32>
    %220 = arith.mulf %219, %215 : vector<256x128xf32>
    %221 = arith.mulf %220, %215 : vector<256x128xf32>
    %222 = arith.addf %215, %221 : vector<256x128xf32>
    %cst_88 = arith.constant 0.797884583 : f32
    %223 = vector.broadcast %cst_88 : f32 to vector<256x128xf32>
    %224 = arith.mulf %223, %222 : vector<256x128xf32>
    %225 = math.tanh %224 : vector<256x128xf32>
    %cst_89 = arith.constant 1.000000e+00 : f32
    %226 = vector.broadcast %cst_89 : f32 to vector<256x128xf32>
    %227 = arith.addf %226, %225 : vector<256x128xf32>
    %228 = arith.mulf %217, %227 : vector<256x128xf32>
    %c0_90 = arith.constant 0 : index
    %c0_91 = arith.constant 0 : index
    %229 = vector.load %arg15[%c0_90, %c0_91] : memref<128x32xf32, #tpu.memory_space<vmem>>, vector<128x32xf32>
    %cst_92 = arith.constant dense<0.000000e+00> : vector<256x32xf32>
    %230 = tpu.matmul %228, %229, %cst_92 {dimension_numbers = #tpu.dot_dimension_numbers<[1], [0], [0], [1], [0, 0, 1, 1], [], []>} : vector<256x128xf32>, vector<128x32xf32>, vector<256x32xf32> -> vector<256x32xf32>
    %231 = arith.addf %188, %230 : vector<256x32xf32>
    %c0_93 = arith.constant 0 : index
    %c0_94 = arith.constant 0 : index
    %232 = vector.load %arg16[%c0_93, %c0_94] : memref<1x32xf32, #tpu.memory_space<vmem>>, vector<1x32xf32>
    %233 = vector.broadcast %232 : vector<1x32xf32> to vector<256x32xf32>
    %234 = arith.addf %231, %233 : vector<256x32xf32>
    %c0_95 = arith.constant 0 : index
    %c0_96 = arith.constant 0 : index
    %235 = vector.load %arg17[%c0_95, %c0_96] : memref<32x16xf32, #tpu.memory_space<vmem>>, vector<32x16xf32>
    %cst_97 = arith.constant dense<0.000000e+00> : vector<256x16xf32>
    %236 = tpu.matmul %234, %235, %cst_97 {dimension_numbers = #tpu.dot_dimension_numbers<[1], [0], [0], [1], [0, 0, 1, 1], [], []>} : vector<256x32xf32>, vector<32x16xf32>, vector<256x16xf32> -> vector<256x16xf32>
    %c0_98 = arith.constant 0 : index
    %c0_99 = arith.constant 0 : index
    %237 = vector.load %arg18[%c0_98, %c0_99] : memref<1x16xf32, #tpu.memory_space<vmem>>, vector<1x16xf32>
    %238 = vector.broadcast %237 : vector<1x16xf32> to vector<256x16xf32>
    %239 = arith.addf %236, %238 : vector<256x16xf32>
    %240 = vector.extract_strided_slice %239 {offsets = [0, 0], sizes = [128, 16], strides = [1, 1]} : vector<256x16xf32> to vector<128x16xf32>
    %c0_100 = arith.constant 0 : index
    %c0_101 = arith.constant 0 : index
    %c0_102 = arith.constant 0 : index
    %241 = vector.load %arg19[%c0_100, %c0_101, %c0_102] : memref<2x128x16xf32, #tpu.memory_space<vmem>>, vector<1x128x16xf32>
    %242 = vector.shape_cast %241 : vector<1x128x16xf32> to vector<128x16xf32>
    %243 = vector.shape_cast %240 : vector<128x16xf32> to vector<1x128x16xf32>
    tpu.vector_store %arg19[%c0_100, %c0_101, %c0_102], %243 {strides = array<i32>} : memref<2x128x16xf32, #tpu.memory_space<vmem>>, vector<1x128x16xf32>,
    %244 = vector.extract_strided_slice %239 {offsets = [128, 0], sizes = [128, 16], strides = [1, 1]} : vector<256x16xf32> to vector<128x16xf32>
    %c1_103 = arith.constant 1 : index
    %c0_104 = arith.constant 0 : index
    %c0_105 = arith.constant 0 : index
    %245 = vector.load %arg19[%c1_103, %c0_104, %c0_105] : memref<2x128x16xf32, #tpu.memory_space<vmem>>, vector<1x128x16xf32>
    %246 = vector.shape_cast %245 : vector<1x128x16xf32> to vector<128x16xf32>
    %247 = vector.shape_cast %244 : vector<128x16xf32> to vector<1x128x16xf32>
    tpu.vector_store %arg19[%c1_103, %c0_104, %c0_105], %247 {strides = array<i32>} : memref<2x128x16xf32, #tpu.memory_space<vmem>>, vector<1x128x16xf32>,
    return
  }
}

</mosaic_0001>

<llo_original>
// kernel: linformer_seq_encoder_forward.1
$region0: #{linformer_seq_encoder_forward.1}
  #allocation0 [shape = 'u32[]', space=smem, size = 0x4, offset = 0x4, fixed_abs, tag = 'smem constant byte address 0x4 - core index']
  #allocation1 [shape = 'u32[72,128]{1,0:T(1,128)}', space=vmem, size = 0x9000, scoped, tag = 'internal scratch']
  %s0 = inlined_call_operand.vmem [shape: f32[2,128,1], index: 0, kind: input, shape index: {}]
  %s1 = inlined_call_operand.vmem [shape: f32[128,32], index: 1, kind: input, shape index: {}]
  %s2 = inlined_call_operand.vmem [shape: f32[1,32], index: 2, kind: input, shape index: {}]
  %s3 = inlined_call_operand.vmem [shape: f32[1,32], index: 3, kind: input, shape index: {}]
  %s4 = inlined_call_operand.vmem [shape: f32[1,32], index: 4, kind: input, shape index: {}]
  %s5 = inlined_call_operand.vmem [shape: f32[1,32], index: 5, kind: input, shape index: {}]
  %s6 = inlined_call_operand.vmem [shape: f32[32,96], index: 6, kind: input, shape index: {}]
  %s7 = inlined_call_operand.vmem [shape: f32[256,128], index: 7, kind: input, shape index: {}]
  %s8 = inlined_call_operand.vmem [shape: f32[256,128], index: 8, kind: input, shape index: {}]
  %s9 = inlined_call_operand.hbm [shape: f32[32,32], index: 9, kind: input, shape index: {}]
  %s10 = inlined_call_operand.vmem [shape: f32[1,32], index: 10, kind: input, shape index: {}]
  %s11 = inlined_call_operand.vmem [shape: f32[1,32], index: 11, kind: input, shape index: {}]
  %s12 = inlined_call_operand.vmem [shape: f32[1,32], index: 12, kind: input, shape index: {}]
  %s13 = inlined_call_operand.hbm [shape: f32[32,128], index: 13, kind: input, shape index: {}]
  %s14 = inlined_call_operand.vmem [shape: f32[1,128], index: 14, kind: input, shape index: {}]
  %s15 = inlined_call_operand.vmem [shape: f32[128,32], index: 15, kind: input, shape index: {}]
  %s16 = inlined_call_operand.vmem [shape: f32[1,32], index: 16, kind: input, shape index: {}]
  %s17 = inlined_call_operand.vmem [shape: f32[32,16], index: 17, kind: input, shape index: {}]
  %s18 = inlined_call_operand.vmem [shape: f32[1,16], index: 18, kind: input, shape index: {}]
  %s19 = inlined_call_operand.vmem [shape: f32[2,128,16], index: 19, kind: output, shape index: {}]
  %s20 = sld [smem:[#allocation0]]
  $region94: #{linformer_seq_encoder_forward.1} parent=0
    _
  %s22 = ssub.s32 1, %s20
  %s23 = scalar_select 0, %s22, %s20
  $region1: #{linformer_seq_encoder_forward.1} parent=0
    #allocation2 [shape = 'u8[16384]{0}', space=vmem, size = 0x4000, scoped, tag = 'input window, operand 9, single buffered']
    #allocation3 [shape = 's32[1]{0}', space=sflag, size = 0x4, scoped, tag = 'scoped memory for linformer_seq_encoder_forward.1']
    #allocation4 [shape = 'u8[16384]{0}', space=vmem, size = 0x4000, scoped, tag = 'input window, operand 13, single buffered']
    #allocation5 [shape = 's32[1]{0}', space=sflag, size = 0x4, scoped, tag = 'scoped memory for linformer_seq_encoder_forward.1']
    %24 = vsyncpa [#allocation3], 0
    %25 = vsyncpa [#allocation5], 0
    // Predicated region
    $region2: #{linformer_seq_encoder_forward.1} parent=1 // pred_check
      _
    $region3: #{linformer_seq_encoder_forward.1} parent=1 // pred_check_branch
      %27 = sbr.rel (0) target = $region5
    $region4: #{linformer_seq_encoder_forward.1} parent=1 // pred_region
      _
    $region5: #{linformer_seq_encoder_forward.1} parent=1 // pred_fallthru
      _
    // Predicated region
    $region6: #{linformer_seq_encoder_forward.1} parent=1 // pred_check
      _
    $region7: #{linformer_seq_encoder_forward.1} parent=1 // pred_check_branch
      %29 = sbr.rel (0) target = $region9
    $region8: #{linformer_seq_encoder_forward.1} parent=1 // pred_region
      _
    $region9: #{linformer_seq_encoder_forward.1} parent=1 // pred_fallthru
      _
    // Predicated region
    $region10: #{linformer_seq_encoder_forward.1} parent=1 // pred_check
      _
    $region11: #{linformer_seq_encoder_forward.1} parent=1 // pred_check_branch
      %31 = sbr.rel (0) target = $region13
    $region12: #{linformer_seq_encoder_forward.1} parent=1 // pred_region
      _
    $region13: #{linformer_seq_encoder_forward.1} parent=1 // pred_fallthru
      _
    // Predicated region
    $region14: #{linformer_seq_encoder_forward.1} parent=1 // pred_check
      _
    $region15: #{linformer_seq_encoder_forward.1} parent=1 // pred_check_branch
      %33 = sbr.rel (0) target = $region17
    $region16: #{linformer_seq_encoder_forward.1} parent=1 // pred_region
      _
    $region17: #{linformer_seq_encoder_forward.1} parent=1 // pred_fallthru
      _
    // Predicated region
    $region18: #{linformer_seq_encoder_forward.1} parent=1 // pred_check
      _
    $region19: #{linformer_seq_encoder_forward.1} parent=1 // pred_check_branch
      %35 = sbr.rel (0) target = $region21
    $region20: #{linformer_seq_encoder_forward.1} parent=1 // pred_region
      _
    $region21: #{linformer_seq_encoder_forward.1} parent=1 // pred_fallthru
      _
    // Predicated region
    $region22: #{linformer_seq_encoder_forward.1} parent=1 // pred_check
      _
    $region23: #{linformer_seq_encoder_forward.1} parent=1 // pred_check_branch
      %37 = sbr.rel (0) target = $region25
    $region24: #{linformer_seq_encoder_forward.1} parent=1 // pred_region
      _
    $region25: #{linformer_seq_encoder_forward.1} parent=1 // pred_fallthru
      _
    // Predicated region
    $region26: #{linformer_seq_encoder_forward.1} parent=1 // pred_check
      _
    $region27: #{linformer_seq_encoder_forward.1} parent=1 // pred_check_branch
      %39 = sbr.rel (0) target = $region29
    $region28: #{linformer_seq_encoder_forward.1} parent=1 // pred_region
      _
    $region29: #{linformer_seq_encoder_forward.1} parent=1 // pred_fallthru
      _
    // Predicated region
    $region30: #{linformer_seq_encoder_forward.1} parent=1 // pred_check
      _
    $region31: #{linformer_seq_encoder_forward.1} parent=1 // pred_check_branch
      %41 = sbr.rel (0) target = $region33
    $region32: #{linformer_seq_encoder_forward.1} parent=1 // pred_region
      _
    $region33: #{linformer_seq_encoder_forward.1} parent=1 // pred_fallthru
      _
    // Predicated region
    $region34: #{linformer_seq_encoder_forward.1} parent=1 // pred_check
      _
    $region35: #{linformer_seq_encoder_forward.1} parent=1 // pred_check_branch
      %43 = sbr.rel (0) target = $region37
    $region36: #{linformer_seq_encoder_forward.1} parent=1 // pred_region
      _
    $region37: #{linformer_seq_encoder_forward.1} parent=1 // pred_fallthru
      _
    // Predicated region
    $region38: #{linformer_seq_encoder_forward.1} parent=1 // pred_check
      _
    $region39: #{linformer_seq_encoder_forward.1} parent=1 // pred_check_branch
      %45 = sbr.rel (0) target = $region41
    $region40: #{linformer_seq_encoder_forward.1} parent=1 // pred_region
      %47 = vsyncadd [#allocation3], 0
      %s48 = sshll.u32 %s9, 4
      %s49 = int_to_ptr.hbm [resolvable:$true] %s48
      %s50 = sshll.u32 [#allocation2], 4
      %s51 = int_to_ptr.vmem [resolvable:$true] %s50
      %56 = dma.hbm_to_vmem [thread:$0]  %s49, 512, %s51, [#allocation3], 128, 128, 8
    $region41: #{linformer_seq_encoder_forward.1} parent=1 // pred_fallthru
      _
    // Predicated region
    $region42: #{linformer_seq_encoder_forward.1} parent=1 // pred_check
      _
    $region43: #{linformer_seq_encoder_forward.1} parent=1 // pred_check_branch
      %58 = sbr.rel (0) target = $region45
    $region44: #{linformer_seq_encoder_forward.1} parent=1 // pred_region
      _
    $region45: #{linformer_seq_encoder_forward.1} parent=1 // pred_fallthru
      _
    // Predicated region
    $region46: #{linformer_seq_encoder_forward.1} parent=1 // pred_check
      _
    $region47: #{linformer_seq_encoder_forward.1} parent=1 // pred_check_branch
      %60 = sbr.rel (0) target = $region49
    $region48: #{linformer_seq_encoder_forward.1} parent=1 // pred_region
      _
    $region49: #{linformer_seq_encoder_forward.1} parent=1 // pred_fallthru
      _
    // Predicated region
    $region50: #{linformer_seq_encoder_forward.1} parent=1 // pred_check
      _
    $region51: #{linformer_seq_encoder_forward.1} parent=1 // pred_check_branch
      %62 = sbr.rel (0) target = $region53
    $region52: #{linformer_seq_encoder_forward.1} parent=1 // pred_region
      _
    $region53: #{linformer_seq_encoder_forward.1} parent=1 // pred_fallthru
      _
    // Predicated region
    $region54: #{linformer_seq_encoder_forward.1} parent=1 // pred_check
      _
    $region55: #{linformer_seq_encoder_forward.1} parent=1 // pred_check_branch
      %64 = sbr.rel (0) target = $region57
    $region56: #{linformer_seq_encoder_forward.1} parent=1 // pred_region
      %66 = vsyncadd [#allocation5], 0
      %s67 = sshll.u32 %s13, 4
      %s68 = int_to_ptr.hbm [resolvable:$true] %s67
      %s69 = sshll.u32 [#allocation4], 4
      %s70 = int_to_ptr.vmem [resolvable:$true] %s69
      %75 = dma.hbm_to_vmem [thread:$0]  %s68, 512, %s70, [#allocation5], 128, 128, 8
    $region57: #{linformer_seq_encoder_forward.1} parent=1 // pred_fallthru
      _
    // Predicated region
    $region58: #{linformer_seq_encoder_forward.1} parent=1 // pred_check
      _
    $region59: #{linformer_seq_encoder_forward.1} parent=1 // pred_check_branch
      %77 = sbr.rel (0) target = $region61
    $region60: #{linformer_seq_encoder_forward.1} parent=1 // pred_region
      _
    $region61: #{linformer_seq_encoder_forward.1} parent=1 // pred_fallthru
      _
    // Predicated region
    $region62: #{linformer_seq_encoder_forward.1} parent=1 // pred_check
      _
    $region63: #{linformer_seq_encoder_forward.1} parent=1 // pred_check_branch
      %79 = sbr.rel (0) target = $region65
    $region64: #{linformer_seq_encoder_forward.1} parent=1 // pred_region
      _
    $region65: #{linformer_seq_encoder_forward.1} parent=1 // pred_fallthru
      _
    // Predicated region
    $region66: #{linformer_seq_encoder_forward.1} parent=1 // pred_check
      _
    $region67: #{linformer_seq_encoder_forward.1} parent=1 // pred_check_branch
      %81 = sbr.rel (0) target = $region69
    $region68: #{linformer_seq_encoder_forward.1} parent=1 // pred_region
      _
    $region69: #{linformer_seq_encoder_forward.1} parent=1 // pred_fallthru
      _
    // Predicated region
    $region70: #{linformer_seq_encoder_forward.1} parent=1 // pred_check
      _
    $region71: #{linformer_seq_encoder_forward.1} parent=1 // pred_check_branch
      %83 = sbr.rel (0) target = $region73
    $region72: #{linformer_seq_encoder_forward.1} parent=1 // pred_region
      _
    $region73: #{linformer_seq_encoder_forward.1} parent=1 // pred_fallthru
      _
    // Predicated region
    $region74: #{linformer_seq_encoder_forward.1} parent=1 // pred_check
      _
    $region75: #{linformer_seq_encoder_forward.1} parent=1 // pred_check_branch
      %85 = sbr.rel (0) target = $region77
    $region76: #{linformer_seq_encoder_forward.1} parent=1 // pred_region
      _
    $region77: #{linformer_seq_encoder_forward.1} parent=1 // pred_fallthru
      _
    // Predicated region
    $region78: #{linformer_seq_encoder_forward.1} parent=1 // pred_check
      _
    $region79: #{linformer_seq_encoder_forward.1} parent=1 // pred_check_branch
      %87 = sbr.rel (0) target = $region81
    $region80: #{linformer_seq_encoder_forward.1} parent=1 // pred_region
      %89 = dma.done [#allocation3], 512
    $region81: #{linformer_seq_encoder_forward.1} parent=1 // pred_fallthru
      _
    // Predicated region
    $region82: #{linformer_seq_encoder_forward.1} parent=1 // pred_check
      _
    $region83: #{linformer_seq_encoder_forward.1} parent=1 // pred_check_branch
      %91 = sbr.rel (0) target = $region85
    $region84: #{linformer_seq_encoder_forward.1} parent=1 // pred_region
      %93 = dma.done [#allocation5], 512
    $region85: #{linformer_seq_encoder_forward.1} parent=1 // pred_fallthru
      _
    %v94 = vld [vmem:[%s3] sm:$0x1]
    %v95 = vld [vmem:[%s1] sm:$0xff]
    %v96 = vld [vmem:[%s1 + $0x8] sm:$0xff]
    %v97 = vld [vmem:[%s1 + $0x10] sm:$0xff]
    %v98 = vld [vmem:[%s1 + $0x18] sm:$0xff]
    %v99 = vld [vmem:[%s1 + $0x20] sm:$0xff]
    %v100 = vld [vmem:[%s1 + $0x28] sm:$0xff]
    %v101 = vld [vmem:[%s1 + $0x30] sm:$0xff]
    %v102 = vld [vmem:[%s1 + $0x38] sm:$0xff]
    %v103 = vld [vmem:[%s1 + $0x40] sm:$0xff]
    %v104 = vld [vmem:[%s1 + $0x48] sm:$0xff]
    %v105 = vld [vmem:[%s1 + $0x50] sm:$0xff]
    %v106 = vld [vmem:[%s1 + $0x58] sm:$0xff]
    %v107 = vld [vmem:[%s1 + $0x60] sm:$0xff]
    %v108 = vld [vmem:[%s1 + $0x68] sm:$0xff]
    %v109 = vld [vmem:[%s1 + $0x70] sm:$0xff]
    %v110 = vld [vmem:[%s1 + $0x78] sm:$0xff]
    %v112 = vperm.slane %v94, 0
    %v114 = vadd.f32 %v112, %v95
    %v115 = vadd.f32 %v112, %v96
    %v116 = vadd.f32 %v112, %v97
    %v117 = vadd.f32 %v112, %v98
    %v118 = vadd.f32 %v112, %v99
    %v119 = vadd.f32 %v112, %v100
    %v120 = vadd.f32 %v112, %v101
    %v121 = vadd.f32 %v112, %v102
    %v122 = vadd.f32 %v112, %v103
    %v123 = vadd.f32 %v112, %v104
    %v124 = vadd.f32 %v112, %v105
    %v125 = vadd.f32 %v112, %v106
    %v126 = vadd.f32 %v112, %v107
    %v127 = vadd.f32 %v112, %v108
    %v128 = vadd.f32 %v112, %v109
    %v129 = vadd.f32 %v112, %v110
    %v130 = vld [vmem:[%s0] sm:$0xff]
    %v131 = vld [vmem:[%s0 + $0x8] sm:$0xff]
    %v132 = vld [vmem:[%s0 + $0x10] sm:$0xff]
    %v133 = vld [vmem:[%s0 + $0x18] sm:$0xff]
    %v134 = vld [vmem:[%s0 + $0x20] sm:$0xff]
    %v135 = vld [vmem:[%s0 + $0x28] sm:$0xff]
    %v136 = vld [vmem:[%s0 + $0x30] sm:$0xff]
    %v137 = vld [vmem:[%s0 + $0x38] sm:$0xff]
    %v138 = vld [vmem:[%s0 + $0x40] sm:$0xff]
    %v139 = vld [vmem:[%s0 + $0x48] sm:$0xff]
    %v140 = vld [vmem:[%s0 + $0x50] sm:$0xff]
    %v141 = vld [vmem:[%s0 + $0x58] sm:$0xff]
    %v142 = vld [vmem:[%s0 + $0x60] sm:$0xff]
    %v143 = vld [vmem:[%s0 + $0x68] sm:$0xff]
    %v144 = vld [vmem:[%s0 + $0x70] sm:$0xff]
    %v145 = vld [vmem:[%s0 + $0x78] sm:$0xff]
    %v146 = vld [vmem:[%s2] sm:$0x1]
    %148 = vset.pattern.permute.xlu0 0
    %149 = vperm.xlu0 %148, %v130
    %v150 = vpop.permute.xlu0 %149
    %153 = vset.pattern.permute.xlu0 0
    %154 = vperm.xlu0 %153, %v131
    %v155 = vpop.permute.xlu0 %154
    %158 = vset.pattern.permute.xlu0 0
    %159 = vperm.xlu0 %158, %v132
    %v160 = vpop.permute.xlu0 %159
    %163 = vset.pattern.permute.xlu0 0
    %164 = vperm.xlu0 %163, %v133
    %v165 = vpop.permute.xlu0 %164
    %168 = vset.pattern.permute.xlu0 0
    %169 = vperm.xlu0 %168, %v134
    %v170 = vpop.permute.xlu0 %169
    %173 = vset.pattern.permute.xlu0 0
    %174 = vperm.xlu0 %173, %v135
    %v175 = vpop.permute.xlu0 %174
    %178 = vset.pattern.permute.xlu0 0
    %179 = vperm.xlu0 %178, %v136
    %v180 = vpop.permute.xlu0 %179
    %183 = vset.pattern.permute.xlu0 0
    %184 = vperm.xlu0 %183, %v137
    %v185 = vpop.permute.xlu0 %184
    %188 = vset.pattern.permute.xlu0 0
    %189 = vperm.xlu0 %188, %v138
    %v190 = vpop.permute.xlu0 %189
    %193 = vset.pattern.permute.xlu0 0
    %194 = vperm.xlu0 %193, %v139
    %v195 = vpop.permute.xlu0 %194
    %198 = vset.pattern.permute.xlu0 0
    %199 = vperm.xlu0 %198, %v140
    %v200 = vpop.permute.xlu0 %199
    %203 = vset.pattern.permute.xlu0 0
    %204 = vperm.xlu0 %203, %v141
    %v205 = vpop.permute.xlu0 %204
    %208 = vset.pattern.permute.xlu0 0
    %209 = vperm.xlu0 %208, %v142
    %v210 = vpop.permute.xlu0 %209
    %213 = vset.pattern.permute.xlu0 0
    %214 = vperm.xlu0 %213, %v143
    %v215 = vpop.permute.xlu0 %214
    %218 = vset.pattern.permute.xlu0 0
    %219 = vperm.xlu0 %218, %v144
    %v220 = vpop.permute.xlu0 %219
    %223 = vset.pattern.permute.xlu0 0
    %224 = vperm.xlu0 %223, %v145
    %v225 = vpop.permute.xlu0 %224
    %v228 = vperm.slane %v146, 0
    %v230 = vmul.f32 %v150, %v228
    %v231 = vmul.f32 %v155, %v228
    %v232 = vmul.f32 %v160, %v228
    %v233 = vmul.f32 %v165, %v228
    %v234 = vmul.f32 %v170, %v228
    %v235 = vmul.f32 %v175, %v228
    %v236 = vmul.f32 %v180, %v228
    %v237 = vmul.f32 %v185, %v228
    %v238 = vmul.f32 %v190, %v228
    %v239 = vmul.f32 %v195, %v228
    %v240 = vmul.f32 %v200, %v228
    %v241 = vmul.f32 %v205, %v228
    %v242 = vmul.f32 %v210, %v228
    %v243 = vmul.f32 %v215, %v228
    %v244 = vmul.f32 %v220, %v228
    %v245 = vmul.f32 %v225, %v228
    %v246 = vadd.f32 %v230, %v114
    %v247 = vadd.f32 %v231, %v115
    %v248 = vadd.f32 %v232, %v116
    %v249 = vadd.f32 %v233, %v117
    %v250 = vadd.f32 %v234, %v118
    %v251 = vadd.f32 %v235, %v119
    %v252 = vadd.f32 %v236, %v120
    %v253 = vadd.f32 %v237, %v121
    %v254 = vadd.f32 %v238, %v122
    %v255 = vadd.f32 %v239, %v123
    %v256 = vadd.f32 %v240, %v124
    %v257 = vadd.f32 %v241, %v125
    %v258 = vadd.f32 %v242, %v126
    %v259 = vadd.f32 %v243, %v127
    %v260 = vadd.f32 %v244, %v128
    %v261 = vadd.f32 %v245, %v129
    %s262 = scalar_lea.vmem %s0, 128
    %v263 = vld [vmem:[%s262] sm:$0xff]
    %v264 = vld [vmem:[%s262 + $0x8] sm:$0xff]
    %v265 = vld [vmem:[%s262 + $0x10] sm:$0xff]
    %v266 = vld [vmem:[%s262 + $0x18] sm:$0xff]
    %v267 = vld [vmem:[%s262 + $0x20] sm:$0xff]
    %v268 = vld [vmem:[%s262 + $0x28] sm:$0xff]
    %v269 = vld [vmem:[%s262 + $0x30] sm:$0xff]
    %v270 = vld [vmem:[%s262 + $0x38] sm:$0xff]
    %v271 = vld [vmem:[%s262 + $0x40] sm:$0xff]
    %v272 = vld [vmem:[%s262 + $0x48] sm:$0xff]
    %v273 = vld [vmem:[%s262 + $0x50] sm:$0xff]
    %v274 = vld [vmem:[%s262 + $0x58] sm:$0xff]
    %v275 = vld [vmem:[%s262 + $0x60] sm:$0xff]
    %v276 = vld [vmem:[%s262 + $0x68] sm:$0xff]
    %v277 = vld [vmem:[%s262 + $0x70] sm:$0xff]
    %v278 = vld [vmem:[%s262 + $0x78] sm:$0xff]
    %280 = vset.pattern.permute.xlu0 0
    %281 = vperm.xlu0 %280, %v263
    %v282 = vpop.permute.xlu0 %281
    %285 = vset.pattern.permute.xlu0 0
    %286 = vperm.xlu0 %285, %v264
    %v287 = vpop.permute.xlu0 %286
    %290 = vset.pattern.permute.xlu0 0
    %291 = vperm.xlu0 %290, %v265
    %v292 = vpop.permute.xlu0 %291
    %295 = vset.pattern.permute.xlu0 0
    %296 = vperm.xlu0 %295, %v266
    %v297 = vpop.permute.xlu0 %296
    %300 = vset.pattern.permute.xlu0 0
    %301 = vperm.xlu0 %300, %v267
    %v302 = vpop.permute.xlu0 %301
    %305 = vset.pattern.permute.xlu0 0
    %306 = vperm.xlu0 %305, %v268
    %v307 = vpop.permute.xlu0 %306
    %310 = vset.pattern.permute.xlu0 0
    %311 = vperm.xlu0 %310, %v269
    %v312 = vpop.permute.xlu0 %311
    %315 = vset.pattern.permute.xlu0 0
    %316 = vperm.xlu0 %315, %v270
    %v317 = vpop.permute.xlu0 %316
    %320 = vset.pattern.permute.xlu0 0
    %321 = vperm.xlu0 %320, %v271
    %v322 = vpop.permute.xlu0 %321
    %325 = vset.pattern.permute.xlu0 0
    %326 = vperm.xlu0 %325, %v272
    %v327 = vpop.permute.xlu0 %326
    %330 = vset.pattern.permute.xlu0 0
    %331 = vperm.xlu0 %330, %v273
    %v332 = vpop.permute.xlu0 %331
    %335 = vset.pattern.permute.xlu0 0
    %336 = vperm.xlu0 %335, %v274
    %v337 = vpop.permute.xlu0 %336
    %340 = vset.pattern.permute.xlu0 0
    %341 = vperm.xlu0 %340, %v275
    %v342 = vpop.permute.xlu0 %341
    %345 = vset.pattern.permute.xlu0 0
    %346 = vperm.xlu0 %345, %v276
    %v347 = vpop.permute.xlu0 %346
    %350 = vset.pattern.permute.xlu0 0
    %351 = vperm.xlu0 %350, %v277
    %v352 = vpop.permute.xlu0 %351
    %355 = vset.pattern.permute.xlu0 0
    %356 = vperm.xlu0 %355, %v278
    %v357 = vpop.permute.xlu0 %356
    %v359 = vmul.f32 %v282, %v228
    %v360 = vmul.f32 %v287, %v228
    %v361 = vmul.f32 %v292, %v228
    %v362 = vmul.f32 %v297, %v228
    %v363 = vmul.f32 %v302, %v228
    %v364 = vmul.f32 %v307, %v228
    %v365 = vmul.f32 %v312, %v228
    %v366 = vmul.f32 %v317, %v228
    %v367 = vmul.f32 %v322, %v228
    %v368 = vmul.f32 %v327, %v228
    %v369 = vmul.f32 %v332, %v228
    %v370 = vmul.f32 %v337, %v228
    %v371 = vmul.f32 %v342, %v228
    %v372 = vmul.f32 %v347, %v228
    %v373 = vmul.f32 %v352, %v228
    %v374 = vmul.f32 %v357, %v228
    %v375 = vadd.f32 %v359, %v114
    %v376 = vadd.f32 %v360, %v115
    %v377 = vadd.f32 %v361, %v116
    %v378 = vadd.f32 %v362, %v117
    %v379 = vadd.f32 %v363, %v118
    %v380 = vadd.f32 %v364, %v119
    %v381 = vadd.f32 %v365, %v120
    %v382 = vadd.f32 %v366, %v121
    %v383 = vadd.f32 %v367, %v122
    %v384 = vadd.f32 %v368, %v123
    %v385 = vadd.f32 %v369, %v124
    %v386 = vadd.f32 %v370, %v125
    %v387 = vadd.f32 %v371, %v126
    %v388 = vadd.f32 %v372, %v127
    %v389 = vadd.f32 %v373, %v128
    %v390 = vadd.f32 %v374, %v129
    %v391 = vld [vmem:[%s4] sm:$0x1]
    %v392 = vld [vmem:[%s5] sm:$0x1]
    %vm393 = vcmask 261120
    %v394 = vsel %vm393, %v246, 0.0
    %395 = vadd.xlane.f32.xlu0 %v394
    %v396 = vpop.xlane.xlu0 %395
    %v397 = vsel %vm393, %v247, 0.0
    %398 = vadd.xlane.f32.xlu0 %v397
    %v399 = vpop.xlane.xlu0 %398
    %v400 = vsel %vm393, %v248, 0.0
    %401 = vadd.xlane.f32.xlu0 %v400
    %v402 = vpop.xlane.xlu0 %401
    %v403 = vsel %vm393, %v249, 0.0
    %404 = vadd.xlane.f32.xlu0 %v403
    %v405 = vpop.xlane.xlu0 %404
    %v406 = vsel %vm393, %v250, 0.0
    %407 = vadd.xlane.f32.xlu0 %v406
    %v408 = vpop.xlane.xlu0 %407
    %v409 = vsel %vm393, %v251, 0.0
    %410 = vadd.xlane.f32.xlu0 %v409
    %v411 = vpop.xlane.xlu0 %410
    %v412 = vsel %vm393, %v252, 0.0
    %413 = vadd.xlane.f32.xlu0 %v412
    %v414 = vpop.xlane.xlu0 %413
    %v415 = vsel %vm393, %v253, 0.0
    %416 = vadd.xlane.f32.xlu0 %v415
    %v417 = vpop.xlane.xlu0 %416
    %v418 = vsel %vm393, %v254, 0.0
    %419 = vadd.xlane.f32.xlu0 %v418
    %v420 = vpop.xlane.xlu0 %419
    %v421 = vsel %vm393, %v255, 0.0
    %422 = vadd.xlane.f32.xlu0 %v421
    %v423 = vpop.xlane.xlu0 %422
    %v424 = vsel %vm393, %v256, 0.0
    %425 = vadd.xlane.f32.xlu0 %v424
    %v426 = vpop.xlane.xlu0 %425
    %v427 = vsel %vm393, %v257, 0.0
    %428 = vadd.xlane.f32.xlu0 %v427
    %v429 = vpop.xlane.xlu0 %428
    %v430 = vsel %vm393, %v258, 0.0
    %431 = vadd.xlane.f32.xlu0 %v430
    %v432 = vpop.xlane.xlu0 %431
    %v433 = vsel %vm393, %v259, 0.0
    %434 = vadd.xlane.f32.xlu0 %v433
    %v435 = vpop.xlane.xlu0 %434
    %v436 = vsel %vm393, %v260, 0.0
    %437 = vadd.xlane.f32.xlu0 %v436
    %v438 = vpop.xlane.xlu0 %437
    %v439 = vsel %vm393, %v261, 0.0
    %440 = vadd.xlane.f32.xlu0 %v439
    %v441 = vpop.xlane.xlu0 %440
    %v442 = vsel %vm393, %v375, 0.0
    %443 = vadd.xlane.f32.xlu0 %v442
    %v444 = vpop.xlane.xlu0 %443
    %v445 = vsel %vm393, %v376, 0.0
    %446 = vadd.xlane.f32.xlu0 %v445
    %v447 = vpop.xlane.xlu0 %446
    %v448 = vsel %vm393, %v377, 0.0
    %449 = vadd.xlane.f32.xlu0 %v448
    %v450 = vpop.xlane.xlu0 %449
    %v451 = vsel %vm393, %v378, 0.0
    %452 = vadd.xlane.f32.xlu0 %v451
    %v453 = vpop.xlane.xlu0 %452
    %v454 = vsel %vm393, %v379, 0.0
    %455 = vadd.xlane.f32.xlu0 %v454
    %v456 = vpop.xlane.xlu0 %455
    %v457 = vsel %vm393, %v380, 0.0
    %458 = vadd.xlane.f32.xlu0 %v457
    %v459 = vpop.xlane.xlu0 %458
    %v460 = vsel %vm393, %v381, 0.0
    %461 = vadd.xlane.f32.xlu0 %v460
    %v462 = vpop.xlane.xlu0 %461
    %v463 = vsel %vm393, %v382, 0.0
    %464 = vadd.xlane.f32.xlu0 %v463
    %v465 = vpop.xlane.xlu0 %464
    %v466 = vsel %vm393, %v383, 0.0
    %467 = vadd.xlane.f32.xlu0 %v466
    %v468 = vpop.xlane.xlu0 %467
    %v469 = vsel %vm393, %v384, 0.0
    %470 = vadd.xlane.f32.xlu0 %v469
    %v471 = vpop.xlane.xlu0 %470
    %v472 = vsel %vm393, %v385, 0.0
    %473 = vadd.xlane.f32.xlu0 %v472
    %v474 = vpop.xlane.xlu0 %473
    %v475 = vsel %vm393, %v386, 0.0
    %476 = vadd.xlane.f32.xlu0 %v475
    %v477 = vpop.xlane.xlu0 %476
    %v478 = vsel %vm393, %v387, 0.0
    %479 = vadd.xlane.f32.xlu0 %v478
    %v480 = vpop.xlane.xlu0 %479
    %v481 = vsel %vm393, %v388, 0.0
    %482 = vadd.xlane.f32.xlu0 %v481
    %v483 = vpop.xlane.xlu0 %482
    %v484 = vsel %vm393, %v389, 0.0
    %485 = vadd.xlane.f32.xlu0 %v484
    %v486 = vpop.xlane.xlu0 %485
    %v487 = vsel %vm393, %v390, 0.0
    %488 = vadd.xlane.f32.xlu0 %v487
    %v489 = vpop.xlane.xlu0 %488
    %v490 = vrcp.pop 32.0
    %v491 = vmul.f32 32.0, %v490
    %v492 = vsub.f32 1.0, %v491
    %v493 = vmul.f32 %v490, %v492
    %v494 = vadd.f32 %v490, %v493
    %vm495 = vweird.f32 %v490
    %v496 = vsel %vm495, %v490, %v494
    %v497 = vmul.f32 %v396, %v496
    %v498 = vmul.f32 %v399, %v496
    %v499 = vmul.f32 %v402, %v496
    %v500 = vmul.f32 %v405, %v496
    %v501 = vmul.f32 %v408, %v496
    %v502 = vmul.f32 %v411, %v496
    %v503 = vmul.f32 %v414, %v496
    %v504 = vmul.f32 %v417, %v496
    %v505 = vmul.f32 %v420, %v496
    %v506 = vmul.f32 %v423, %v496
    %v507 = vmul.f32 %v426, %v496
    %v508 = vmul.f32 %v429, %v496
    %v509 = vmul.f32 %v432, %v496
    %v510 = vmul.f32 %v435, %v496
    %v511 = vmul.f32 %v438, %v496
    %v512 = vmul.f32 %v441, %v496
    %v513 = vmul.f32 %v444, %v496
    %v514 = vmul.f32 %v447, %v496
    %v515 = vmul.f32 %v450, %v496
    %v516 = vmul.f32 %v453, %v496
    %v517 = vmul.f32 %v456, %v496
    %v518 = vmul.f32 %v459, %v496
    %v519 = vmul.f32 %v462, %v496
    %v520 = vmul.f32 %v465, %v496
    %v521 = vmul.f32 %v468, %v496
    %v522 = vmul.f32 %v471, %v496
    %v523 = vmul.f32 %v474, %v496
    %v524 = vmul.f32 %v477, %v496
    %v525 = vmul.f32 %v480, %v496
    %v526 = vmul.f32 %v483, %v496
    %v527 = vmul.f32 %v486, %v496
    %v528 = vmul.f32 %v489, %v496
    %v529 = vsub.f32 %v246, %v497
    %v530 = vsub.f32 %v247, %v498
    %v531 = vsub.f32 %v248, %v499
    %v532 = vsub.f32 %v249, %v500
    %v533 = vsub.f32 %v250, %v501
    %v534 = vsub.f32 %v251, %v502
    %v535 = vsub.f32 %v252, %v503
    %v536 = vsub.f32 %v253, %v504
    %v537 = vsub.f32 %v254, %v505
    %v538 = vsub.f32 %v255, %v506
    %v539 = vsub.f32 %v256, %v507
    %v540 = vsub.f32 %v257, %v508
    %v541 = vsub.f32 %v258, %v509
    %v542 = vsub.f32 %v259, %v510
    %v543 = vsub.f32 %v260, %v511
    %v544 = vsub.f32 %v261, %v512
    %v545 = vsub.f32 %v375, %v513
    %v546 = vsub.f32 %v376, %v514
    %v547 = vsub.f32 %v377, %v515
    %v548 = vsub.f32 %v378, %v516
    %v549 = vsub.f32 %v379, %v517
    %v550 = vsub.f32 %v380, %v518
    %v551 = vsub.f32 %v381, %v519
    %v552 = vsub.f32 %v382, %v520
    %v553 = vsub.f32 %v383, %v521
    %v554 = vsub.f32 %v384, %v522
    %v555 = vsub.f32 %v385, %v523
    %v556 = vsub.f32 %v386, %v524
    %v557 = vsub.f32 %v387, %v525
    %v558 = vsub.f32 %v388, %v526
    %v559 = vsub.f32 %v389, %v527
    %v560 = vsub.f32 %v390, %v528
    %v561 = vmul.f32 %v529, %v529
    %v562 = vmul.f32 %v530, %v530
    %v563 = vmul.f32 %v531, %v531
    %v564 = vmul.f32 %v532, %v532
    %v565 = vmul.f32 %v533, %v533
    %v566 = vmul.f32 %v534, %v534
    %v567 = vmul.f32 %v535, %v535
    %v568 = vmul.f32 %v536, %v536
    %v569 = vmul.f32 %v537, %v537
    %v570 = vmul.f32 %v538, %v538
    %v571 = vmul.f32 %v539, %v539
    %v572 = vmul.f32 %v540, %v540
    %v573 = vmul.f32 %v541, %v541
    %v574 = vmul.f32 %v542, %v542
    %v575 = vmul.f32 %v543, %v543
    %v576 = vmul.f32 %v544, %v544
    %v577 = vmul.f32 %v545, %v545
    %v578 = vmul.f32 %v546, %v546
    %v579 = vmul.f32 %v547, %v547
    %v580 = vmul.f32 %v548, %v548
    %v581 = vmul.f32 %v549, %v549
    %v582 = vmul.f32 %v550, %v550
    %v583 = vmul.f32 %v551, %v551
    %v584 = vmul.f32 %v552, %v552
    %v585 = vmul.f32 %v553, %v553
    %v586 = vmul.f32 %v554, %v554
    %v587 = vmul.f32 %v555, %v555
    %v588 = vmul.f32 %v556, %v556
    %v589 = vmul.f32 %v557, %v557
    %v590 = vmul.f32 %v558, %v558
    %v591 = vmul.f32 %v559, %v559
    %v592 = vmul.f32 %v560, %v560
    %v593 = vsel %vm393, %v561, 0.0
    %594 = vadd.xlane.f32.xlu0 %v593
    %v595 = vpop.xlane.xlu0 %594
    %v596 = vsel %vm393, %v562, 0.0
    %597 = vadd.xlane.f32.xlu0 %v596
    %v598 = vpop.xlane.xlu0 %597
    %v599 = vsel %vm393, %v563, 0.0
    %600 = vadd.xlane.f32.xlu0 %v599
    %v601 = vpop.xlane.xlu0 %600
    %v602 = vsel %vm393, %v564, 0.0
    %603 = vadd.xlane.f32.xlu0 %v602
    %v604 = vpop.xlane.xlu0 %603
    %v605 = vsel %vm393, %v565, 0.0
    %606 = vadd.xlane.f32.xlu0 %v605
    %v607 = vpop.xlane.xlu0 %606
    %v608 = vsel %vm393, %v566, 0.0
    %609 = vadd.xlane.f32.xlu0 %v608
    %v610 = vpop.xlane.xlu0 %609
    %v611 = vsel %vm393, %v567, 0.0
    %612 = vadd.xlane.f32.xlu0 %v611
    %v613 = vpop.xlane.xlu0 %612
    %v614 = vsel %vm393, %v568, 0.0
    %615 = vadd.xlane.f32.xlu0 %v614
    %v616 = vpop.xlane.xlu0 %615
    %v617 = vsel %vm393, %v569, 0.0
    %618 = vadd.xlane.f32.xlu0 %v617
    %v619 = vpop.xlane.xlu0 %618
    %v620 = vsel %vm393, %v570, 0.0
    %621 = vadd.xlane.f32.xlu0 %v620
    %v622 = vpop.xlane.xlu0 %621
    %v623 = vsel %vm393, %v571, 0.0
    %624 = vadd.xlane.f32.xlu0 %v623
    %v625 = vpop.xlane.xlu0 %624
    %v626 = vsel %vm393, %v572, 0.0
    %627 = vadd.xlane.f32.xlu0 %v626
    %v628 = vpop.xlane.xlu0 %627
    %v629 = vsel %vm393, %v573, 0.0
    %630 = vadd.xlane.f32.xlu0 %v629
    %v631 = vpop.xlane.xlu0 %630
    %v632 = vsel %vm393, %v574, 0.0
    %633 = vadd.xlane.f32.xlu0 %v632
    %v634 = vpop.xlane.xlu0 %633
    %v635 = vsel %vm393, %v575, 0.0
    %636 = vadd.xlane.f32.xlu0 %v635
    %v637 = vpop.xlane.xlu0 %636
    %v638 = vsel %vm393, %v576, 0.0
    %639 = vadd.xlane.f32.xlu0 %v638
    %v640 = vpop.xlane.xlu0 %639
    %v641 = vsel %vm393, %v577, 0.0
    %642 = vadd.xlane.f32.xlu0 %v641
    %v643 = vpop.xlane.xlu0 %642
    %v644 = vsel %vm393, %v578, 0.0
    %645 = vadd.xlane.f32.xlu0 %v644
    %v646 = vpop.xlane.xlu0 %645
    %v647 = vsel %vm393, %v579, 0.0
    %648 = vadd.xlane.f32.xlu0 %v647
    %v649 = vpop.xlane.xlu0 %648
    %v650 = vsel %vm393, %v580, 0.0
    %651 = vadd.xlane.f32.xlu0 %v650
    %v652 = vpop.xlane.xlu0 %651
    %v653 = vsel %vm393, %v581, 0.0
    %654 = vadd.xlane.f32.xlu0 %v653
    %v655 = vpop.xlane.xlu0 %654
    %v656 = vsel %vm393, %v582, 0.0
    %657 = vadd.xlane.f32.xlu0 %v656
    %v658 = vpop.xlane.xlu0 %657
    %v659 = vsel %vm393, %v583, 0.0
    %660 = vadd.xlane.f32.xlu0 %v659
    %v661 = vpop.xlane.xlu0 %660
    %v662 = vsel %vm393, %v584, 0.0
    %663 = vadd.xlane.f32.xlu0 %v662
    %v664 = vpop.xlane.xlu0 %663
    %v665 = vsel %vm393, %v585, 0.0
    %666 = vadd.xlane.f32.xlu0 %v665
    %v667 = vpop.xlane.xlu0 %666
    %v668 = vsel %vm393, %v586, 0.0
    %669 = vadd.xlane.f32.xlu0 %v668
    %v670 = vpop.xlane.xlu0 %669
    %v671 = vsel %vm393, %v587, 0.0
    %672 = vadd.xlane.f32.xlu0 %v671
    %v673 = vpop.xlane.xlu0 %672
    %v674 = vsel %vm393, %v588, 0.0
    %675 = vadd.xlane.f32.xlu0 %v674
    %v676 = vpop.xlane.xlu0 %675
    %v677 = vsel %vm393, %v589, 0.0
    %678 = vadd.xlane.f32.xlu0 %v677
    %v679 = vpop.xlane.xlu0 %678
    %v680 = vsel %vm393, %v590, 0.0
    %681 = vadd.xlane.f32.xlu0 %v680
    %v682 = vpop.xlane.xlu0 %681
    %v683 = vsel %vm393, %v591, 0.0
    %684 = vadd.xlane.f32.xlu0 %v683
    %v685 = vpop.xlane.xlu0 %684
    %v686 = vsel %vm393, %v592, 0.0
    %687 = vadd.xlane.f32.xlu0 %v686
    %v688 = vpop.xlane.xlu0 %687
    %v689 = vmul.f32 %v595, %v496
    %v690 = vmul.f32 %v598, %v496
    %v691 = vmul.f32 %v601, %v496
    %v692 = vmul.f32 %v604, %v496
    %v693 = vmul.f32 %v607, %v496
    %v694 = vmul.f32 %v610, %v496
    %v695 = vmul.f32 %v613, %v496
    %v696 = vmul.f32 %v616, %v496
    %v697 = vmul.f32 %v619, %v496
    %v698 = vmul.f32 %v622, %v496
    %v699 = vmul.f32 %v625, %v496
    %v700 = vmul.f32 %v628, %v496
    %v701 = vmul.f32 %v631, %v496
    %v702 = vmul.f32 %v634, %v496
    %v703 = vmul.f32 %v637, %v496
    %v704 = vmul.f32 %v640, %v496
    %v705 = vmul.f32 %v643, %v496
    %v706 = vmul.f32 %v646, %v496
    %v707 = vmul.f32 %v649, %v496
    %v708 = vmul.f32 %v652, %v496
    %v709 = vmul.f32 %v655, %v496
    %v710 = vmul.f32 %v658, %v496
    %v711 = vmul.f32 %v661, %v496
    %v712 = vmul.f32 %v664, %v496
    %v713 = vmul.f32 %v667, %v496
    %v714 = vmul.f32 %v670, %v496
    %v715 = vmul.f32 %v673, %v496
    %v716 = vmul.f32 %v676, %v496
    %v717 = vmul.f32 %v679, %v496
    %v718 = vmul.f32 %v682, %v496
    %v719 = vmul.f32 %v685, %v496
    %v720 = vmul.f32 %v688, %v496
    %v721 = vadd.f32 %v689, 1e-05
    %v722 = vadd.f32 %v690, 1e-05
    %v723 = vadd.f32 %v691, 1e-05
    %v724 = vadd.f32 %v692, 1e-05
    %v725 = vadd.f32 %v693, 1e-05
    %v726 = vadd.f32 %v694, 1e-05
    %v727 = vadd.f32 %v695, 1e-05
    %v728 = vadd.f32 %v696, 1e-05
    %v729 = vadd.f32 %v697, 1e-05
    %v730 = vadd.f32 %v698, 1e-05
    %v731 = vadd.f32 %v699, 1e-05
    %v732 = vadd.f32 %v700, 1e-05
    %v733 = vadd.f32 %v701, 1e-05
    %v734 = vadd.f32 %v702, 1e-05
    %v735 = vadd.f32 %v703, 1e-05
    %v736 = vadd.f32 %v704, 1e-05
    %v737 = vadd.f32 %v705, 1e-05
    %v738 = vadd.f32 %v706, 1e-05
    %v739 = vadd.f32 %v707, 1e-05
    %v740 = vadd.f32 %v708, 1e-05
    %v741 = vadd.f32 %v709, 1e-05
    %v742 = vadd.f32 %v710, 1e-05
    %v743 = vadd.f32 %v711, 1e-05
    %v744 = vadd.f32 %v712, 1e-05
    %v745 = vadd.f32 %v713, 1e-05
    %v746 = vadd.f32 %v714, 1e-05
    %v747 = vadd.f32 %v715, 1e-05
    %v748 = vadd.f32 %v716, 1e-05
    %v749 = vadd.f32 %v717, 1e-05
    %v750 = vadd.f32 %v718, 1e-05
    %v751 = vadd.f32 %v719, 1e-05
    %v752 = vadd.f32 %v720, 1e-05
    %v753 = vrsqrt.pop %v721
    %v754 = vmul.f32 %v753, %v721
    %v755 = vmul.f32 %v754, %v753
    %v756 = vmul.f32 0.5, %v755
    %v757 = vsub.f32 1.5, %v756
    %v758 = vmul.f32 %v753, %v757
    %vm759 = vweird.f32 %v721
    %vm760 = vweird.f32 %v753
    %vm761 = vmor %vm759, %vm760
    %v762 = vsel %vm761, %v753, %v758
    %v763 = vrsqrt.pop %v722
    %v764 = vmul.f32 %v763, %v722
    %v765 = vmul.f32 %v764, %v763
    %v766 = vmul.f32 0.5, %v765
    %v767 = vsub.f32 1.5, %v766
    %v768 = vmul.f32 %v763, %v767
    %vm769 = vweird.f32 %v722
    %vm770 = vweird.f32 %v763
    %vm771 = vmor %vm769, %vm770
    %v772 = vsel %vm771, %v763, %v768
    %v773 = vrsqrt.pop %v723
    %v774 = vmul.f32 %v773, %v723
    %v775 = vmul.f32 %v774, %v773
    %v776 = vmul.f32 0.5, %v775
    %v777 = vsub.f32 1.5, %v776
    %v778 = vmul.f32 %v773, %v777
    %vm779 = vweird.f32 %v723
    %vm780 = vweird.f32 %v773
    %vm781 = vmor %vm779, %vm780
    %v782 = vsel %vm781, %v773, %v778
    %v783 = vrsqrt.pop %v724
    %v784 = vmul.f32 %v783, %v724
    %v785 = vmul.f32 %v784, %v783
    %v786 = vmul.f32 0.5, %v785
    %v787 = vsub.f32 1.5, %v786
    %v788 = vmul.f32 %v783, %v787
    %vm789 = vweird.f32 %v724
    %vm790 = vweird.f32 %v783
    %vm791 = vmor %vm789, %vm790
    %v792 = vsel %vm791, %v783, %v788
    %v793 = vrsqrt.pop %v725
    %v794 = vmul.f32 %v793, %v725
    %v795 = vmul.f32 %v794, %v793
    %v796 = vmul.f32 0.5, %v795
    %v797 = vsub.f32 1.5, %v796
    %v798 = vmul.f32 %v793, %v797
    %vm799 = vweird.f32 %v725
    %vm800 = vweird.f32 %v793
    %vm801 = vmor %vm799, %vm800
    %v802 = vsel %vm801, %v793, %v798
    %v803 = vrsqrt.pop %v726
    %v804 = vmul.f32 %v803, %v726
    %v805 = vmul.f32 %v804, %v803
    %v806 = vmul.f32 0.5, %v805
    %v807 = vsub.f32 1.5, %v806
    %v808 = vmul.f32 %v803, %v807
    %vm809 = vweird.f32 %v726
    %vm810 = vweird.f32 %v803
    %vm811 = vmor %vm809, %vm810
    %v812 = vsel %vm811, %v803, %v808
    %v813 = vrsqrt.pop %v727
    %v814 = vmul.f32 %v813, %v727
    %v815 = vmul.f32 %v814, %v813
    %v816 = vmul.f32 0.5, %v815
    %v817 = vsub.f32 1.5, %v816
    %v818 = vmul.f32 %v813, %v817
    %vm819 = vweird.f32 %v727
    %vm820 = vweird.f32 %v813
    %vm821 = vmor %vm819, %vm820
    %v822 = vsel %vm821, %v813, %v818
    %v823 = vrsqrt.pop %v728
    %v824 = vmul.f32 %v823, %v728
    %v825 = vmul.f32 %v824, %v823
    %v826 = vmul.f32 0.5, %v825
    %v827 = vsub.f32 1.5, %v826
    %v828 = vmul.f32 %v823, %v827
    %vm829 = vweird.f32 %v728
    %vm830 = vweird.f32 %v823
    %vm831 = vmor %vm829, %vm830
    %v832 = vsel %vm831, %v823, %v828
    %v833 = vrsqrt.pop %v729
    %v834 = vmul.f32 %v833, %v729
    %v835 = vmul.f32 %v834, %v833
    %v836 = vmul.f32 0.5, %v835
    %v837 = vsub.f32 1.5, %v836
    %v838 = vmul.f32 %v833, %v837
    %vm839 = vweird.f32 %v729
    %vm840 = vweird.f32 %v833
    %vm841 = vmor %vm839, %vm840
    %v842 = vsel %vm841, %v833, %v838
    %v843 = vrsqrt.pop %v730
    %v844 = vmul.f32 %v843, %v730
    %v845 = vmul.f32 %v844, %v843
    %v846 = vmul.f32 0.5, %v845
    %v847 = vsub.f32 1.5, %v846
    %v848 = vmul.f32 %v843, %v847
    %vm849 = vweird.f32 %v730
    %vm850 = vweird.f32 %v843
    %vm851 = vmor %vm849, %vm850
    %v852 = vsel %vm851, %v843, %v848
    %v853 = vrsqrt.pop %v731
    %v854 = vmul.f32 %v853, %v731
    %v855 = vmul.f32 %v854, %v853
    %v856 = vmul.f32 0.5, %v855
    %v857 = vsub.f32 1.5, %v856
    %v858 = vmul.f32 %v853, %v857
    %vm859 = vweird.f32 %v731
    %vm860 = vweird.f32 %v853
    %vm861 = vmor %vm859, %vm860
    %v862 = vsel %vm861, %v853, %v858
    %v863 = vrsqrt.pop %v732
    %v864 = vmul.f32 %v863, %v732
    %v865 = vmul.f32 %v864, %v863
    %v866 = vmul.f32 0.5, %v865
    %v867 = vsub.f32 1.5, %v866
    %v868 = vmul.f32 %v863, %v867
    %vm869 = vweird.f32 %v732
    %vm870 = vweird.f32 %v863
    %vm871 = vmor %vm869, %vm870
    %v872 = vsel %vm871, %v863, %v868
    %v873 = vrsqrt.pop %v733
    %v874 = vmul.f32 %v873, %v733
    %v875 = vmul.f32 %v874, %v873
    %v876 = vmul.f32 0.5, %v875
    %v877 = vsub.f32 1.5, %v876
    %v878 = vmul.f32 %v873, %v877
    %vm879 = vweird.f32 %v733
    %vm880 = vweird.f32 %v873
    %vm881 = vmor %vm879, %vm880
    %v882 = vsel %vm881, %v873, %v878
    %v883 = vrsqrt.pop %v734
    %v884 = vmul.f32 %v883, %v734
    %v885 = vmul.f32 %v884, %v883
    %v886 = vmul.f32 0.5, %v885
    %v887 = vsub.f32 1.5, %v886
    %v888 = vmul.f32 %v883, %v887
    %vm889 = vweird.f32 %v734
    %vm890 = vweird.f32 %v883
    %vm891 = vmor %vm889, %vm890
    %v892 = vsel %vm891, %v883, %v888
    %v893 = vrsqrt.pop %v735
    %v894 = vmul.f32 %v893, %v735
    %v895 = vmul.f32 %v894, %v893
    %v896 = vmul.f32 0.5, %v895
    %v897 = vsub.f32 1.5, %v896
    %v898 = vmul.f32 %v893, %v897
    %vm899 = vweird.f32 %v735
    %vm900 = vweird.f32 %v893
    %vm901 = vmor %vm899, %vm900
    %v902 = vsel %vm901, %v893, %v898
    %v903 = vrsqrt.pop %v736
    %v904 = vmul.f32 %v903, %v736
    %v905 = vmul.f32 %v904, %v903
    %v906 = vmul.f32 0.5, %v905
    %v907 = vsub.f32 1.5, %v906
    %v908 = vmul.f32 %v903, %v907
    %vm909 = vweird.f32 %v736
    %vm910 = vweird.f32 %v903
    %vm911 = vmor %vm909, %vm910
    %v912 = vsel %vm911, %v903, %v908
    %v913 = vrsqrt.pop %v737
    %v914 = vmul.f32 %v913, %v737
    %v915 = vmul.f32 %v914, %v913
    %v916 = vmul.f32 0.5, %v915
    %v917 = vsub.f32 1.5, %v916
    %v918 = vmul.f32 %v913, %v917
    %vm919 = vweird.f32 %v737
    %vm920 = vweird.f32 %v913
    %vm921 = vmor %vm919, %vm920
    %v922 = vsel %vm921, %v913, %v918
    %v923 = vrsqrt.pop %v738
    %v924 = vmul.f32 %v923, %v738
    %v925 = vmul.f32 %v924, %v923
    %v926 = vmul.f32 0.5, %v925
    %v927 = vsub.f32 1.5, %v926
    %v928 = vmul.f32 %v923, %v927
    %vm929 = vweird.f32 %v738
    %vm930 = vweird.f32 %v923
    %vm931 = vmor %vm929, %vm930
    %v932 = vsel %vm931, %v923, %v928
    %v933 = vrsqrt.pop %v739
    %v934 = vmul.f32 %v933, %v739
    %v935 = vmul.f32 %v934, %v933
    %v936 = vmul.f32 0.5, %v935
    %v937 = vsub.f32 1.5, %v936
    %v938 = vmul.f32 %v933, %v937
    %vm939 = vweird.f32 %v739
    %vm940 = vweird.f32 %v933
    %vm941 = vmor %vm939, %vm940
    %v942 = vsel %vm941, %v933, %v938
    %v943 = vrsqrt.pop %v740
    %v944 = vmul.f32 %v943, %v740
    %v945 = vmul.f32 %v944, %v943
    %v946 = vmul.f32 0.5, %v945
    %v947 = vsub.f32 1.5, %v946
    %v948 = vmul.f32 %v943, %v947
    %vm949 = vweird.f32 %v740
    %vm950 = vweird.f32 %v943
    %vm951 = vmor %vm949, %vm950
    %v952 = vsel %vm951, %v943, %v948
    %v953 = vrsqrt.pop %v741
    %v954 = vmul.f32 %v953, %v741
    %v955 = vmul.f32 %v954, %v953
    %v956 = vmul.f32 0.5, %v955
    %v957 = vsub.f32 1.5, %v956
    %v958 = vmul.f32 %v953, %v957
    %vm959 = vweird.f32 %v741
    %vm960 = vweird.f32 %v953
    %vm961 = vmor %vm959, %vm960
    %v962 = vsel %vm961, %v953, %v958
    %v963 = vrsqrt.pop %v742
    %v964 = vmul.f32 %v963, %v742
    %v965 = vmul.f32 %v964, %v963
    %v966 = vmul.f32 0.5, %v965
    %v967 = vsub.f32 1.5, %v966
    %v968 = vmul.f32 %v963, %v967
    %vm969 = vweird.f32 %v742
    %vm970 = vweird.f32 %v963
    %vm971 = vmor %vm969, %vm970
    %v972 = vsel %vm971, %v963, %v968
    %v973 = vrsqrt.pop %v743
    %v974 = vmul.f32 %v973, %v743
    %v975 = vmul.f32 %v974, %v973
    %v976 = vmul.f32 0.5, %v975
    %v977 = vsub.f32 1.5, %v976
    %v978 = vmul.f32 %v973, %v977
    %vm979 = vweird.f32 %v743
    %vm980 = vweird.f32 %v973
    %vm981 = vmor %vm979, %vm980
    %v982 = vsel %vm981, %v973, %v978
    %v983 = vrsqrt.pop %v744
    %v984 = vmul.f32 %v983, %v744
    %v985 = vmul.f32 %v984, %v983
    %v986 = vmul.f32 0.5, %v985
    %v987 = vsub.f32 1.5, %v986
    %v988 = vmul.f32 %v983, %v987
    %vm989 = vweird.f32 %v744
    %vm990 = vweird.f32 %v983
    %vm991 = vmor %vm989, %vm990
    %v992 = vsel %vm991, %v983, %v988
    %v993 = vrsqrt.pop %v745
    %v994 = vmul.f32 %v993, %v745
    %v995 = vmul.f32 %v994, %v993
    %v996 = vmul.f32 0.5, %v995
    %v997 = vsub.f32 1.5, %v996
    %v998 = vmul.f32 %v993, %v997
    %vm999 = vweird.f32 %v745
    %vm1000 = vweird.f32 %v993
    %vm1001 = vmor %vm999, %vm1000
    %v1002 = vsel %vm1001, %v993, %v998
    %v1003 = vrsqrt.pop %v746
    %v1004 = vmul.f32 %v1003, %v746
    %v1005 = vmul.f32 %v1004, %v1003
    %v1006 = vmul.f32 0.5, %v1005
    %v1007 = vsub.f32 1.5, %v1006
    %v1008 = vmul.f32 %v1003, %v1007
    %vm1009 = vweird.f32 %v746
    %vm1010 = vweird.f32 %v1003
    %vm1011 = vmor %vm1009, %vm1010
    %v1012 = vsel %vm1011, %v1003, %v1008
    %v1013 = vrsqrt.pop %v747
    %v1014 = vmul.f32 %v1013, %v747
    %v1015 = vmul.f32 %v1014, %v1013
    %v1016 = vmul.f32 0.5, %v1015
    %v1017 = vsub.f32 1.5, %v1016
    %v1018 = vmul.f32 %v1013, %v1017
    %vm1019 = vweird.f32 %v747
    %vm1020 = vweird.f32 %v1013
    %vm1021 = vmor %vm1019, %vm1020
    %v1022 = vsel %vm1021, %v1013, %v1018
    %v1023 = vrsqrt.pop %v748
    %v1024 = vmul.f32 %v1023, %v748
    %v1025 = vmul.f32 %v1024, %v1023
    %v1026 = vmul.f32 0.5, %v1025
    %v1027 = vsub.f32 1.5, %v1026
    %v1028 = vmul.f32 %v1023, %v1027
    %vm1029 = vweird.f32 %v748
    %vm1030 = vweird.f32 %v1023
    %vm1031 = vmor %vm1029, %vm1030
    %v1032 = vsel %vm1031, %v1023, %v1028
    %v1033 = vrsqrt.pop %v749
    %v1034 = vmul.f32 %v1033, %v749
    %v1035 = vmul.f32 %v1034, %v1033
    %v1036 = vmul.f32 0.5, %v1035
    %v1037 = vsub.f32 1.5, %v1036
    %v1038 = vmul.f32 %v1033, %v1037
    %vm1039 = vweird.f32 %v749
    %vm1040 = vweird.f32 %v1033
    %vm1041 = vmor %vm1039, %vm1040
    %v1042 = vsel %vm1041, %v1033, %v1038
    %v1043 = vrsqrt.pop %v750
    %v1044 = vmul.f32 %v1043, %v750
    %v1045 = vmul.f32 %v1044, %v1043
    %v1046 = vmul.f32 0.5, %v1045
    %v1047 = vsub.f32 1.5, %v1046
    %v1048 = vmul.f32 %v1043, %v1047
    %vm1049 = vweird.f32 %v750
    %vm1050 = vweird.f32 %v1043
    %vm1051 = vmor %vm1049, %vm1050
    %v1052 = vsel %vm1051, %v1043, %v1048
    %v1053 = vrsqrt.pop %v751
    %v1054 = vmul.f32 %v1053, %v751
    %v1055 = vmul.f32 %v1054, %v1053
    %v1056 = vmul.f32 0.5, %v1055
    %v1057 = vsub.f32 1.5, %v1056
    %v1058 = vmul.f32 %v1053, %v1057
    %vm1059 = vweird.f32 %v751
    %vm1060 = vweird.f32 %v1053
    %vm1061 = vmor %vm1059, %vm1060
    %v1062 = vsel %vm1061, %v1053, %v1058
    %v1063 = vrsqrt.pop %v752
    %v1064 = vmul.f32 %v1063, %v752
    %v1065 = vmul.f32 %v1064, %v1063
    %v1066 = vmul.f32 0.5, %v1065
    %v1067 = vsub.f32 1.5, %v1066
    %v1068 = vmul.f32 %v1063, %v1067
    %vm1069 = vweird.f32 %v752
    %vm1070 = vweird.f32 %v1063
    %vm1071 = vmor %vm1069, %vm1070
    %v1072 = vsel %vm1071, %v1063, %v1068
    %v1073 = vmul.f32 %v529, %v762
    %v1074 = vmul.f32 %v530, %v772
    %v1075 = vmul.f32 %v531, %v782
    %v1076 = vmul.f32 %v532, %v792
    %v1077 = vmul.f32 %v533, %v802
    %v1078 = vmul.f32 %v534, %v812
    %v1079 = vmul.f32 %v535, %v822
    %v1080 = vmul.f32 %v536, %v832
    %v1081 = vmul.f32 %v537, %v842
    %v1082 = vmul.f32 %v538, %v852
    %v1083 = vmul.f32 %v539, %v862
    %v1084 = vmul.f32 %v540, %v872
    %v1085 = vmul.f32 %v541, %v882
    %v1086 = vmul.f32 %v542, %v892
    %v1087 = vmul.f32 %v543, %v902
    %v1088 = vmul.f32 %v544, %v912
    %v1089 = vmul.f32 %v545, %v922
    %v1090 = vmul.f32 %v546, %v932
    %v1091 = vmul.f32 %v547, %v942
    %v1092 = vmul.f32 %v548, %v952
    %v1093 = vmul.f32 %v549, %v962
    %v1094 = vmul.f32 %v550, %v972
    %v1095 = vmul.f32 %v551, %v982
    %v1096 = vmul.f32 %v552, %v992
    %v1097 = vmul.f32 %v553, %v1002
    %v1098 = vmul.f32 %v554, %v1012
    %v1099 = vmul.f32 %v555, %v1022
    %v1100 = vmul.f32 %v556, %v1032
    %v1101 = vmul.f32 %v557, %v1042
    %v1102 = vmul.f32 %v558, %v1052
    %v1103 = vmul.f32 %v559, %v1062
    %v1104 = vmul.f32 %v560, %v1072
    %v1106 = vperm.slane %v391, 0
    %v1108 = vmul.f32 %v1073, %v1106
    %v1109 = vmul.f32 %v1074, %v1106
    %v1110 = vmul.f32 %v1075, %v1106
    %v1111 = vmul.f32 %v1076, %v1106
    %v1112 = vmul.f32 %v1077, %v1106
    %v1113 = vmul.f32 %v1078, %v1106
    %v1114 = vmul.f32 %v1079, %v1106
    %v1115 = vmul.f32 %v1080, %v1106
    %v1116 = vmul.f32 %v1081, %v1106
    %v1117 = vmul.f32 %v1082, %v1106
    %v1118 = vmul.f32 %v1083, %v1106
    %v1119 = vmul.f32 %v1084, %v1106
    %v1120 = vmul.f32 %v1085, %v1106
    %v1121 = vmul.f32 %v1086, %v1106
    %v1122 = vmul.f32 %v1087, %v1106
    %v1123 = vmul.f32 %v1088, %v1106
    %v1124 = vmul.f32 %v1089, %v1106
    %v1125 = vmul.f32 %v1090, %v1106
    %v1126 = vmul.f32 %v1091, %v1106
    %v1127 = vmul.f32 %v1092, %v1106
    %v1128 = vmul.f32 %v1093, %v1106
    %v1129 = vmul.f32 %v1094, %v1106
    %v1130 = vmul.f32 %v1095, %v1106
    %v1131 = vmul.f32 %v1096, %v1106
    %v1132 = vmul.f32 %v1097, %v1106
    %v1133 = vmul.f32 %v1098, %v1106
    %v1134 = vmul.f32 %v1099, %v1106
    %v1135 = vmul.f32 %v1100, %v1106
    %v1136 = vmul.f32 %v1101, %v1106
    %v1137 = vmul.f32 %v1102, %v1106
    %v1138 = vmul.f32 %v1103, %v1106
    %v1139 = vmul.f32 %v1104, %v1106
    %v1141 = vperm.slane %v392, 0
    %v1143 = vadd.f32 %v1108, %v1141
    %v1144 = vadd.f32 %v1109, %v1141
    %v1145 = vadd.f32 %v1110, %v1141
    %v1146 = vadd.f32 %v1111, %v1141
    %v1147 = vadd.f32 %v1112, %v1141
    %v1148 = vadd.f32 %v1113, %v1141
    %v1149 = vadd.f32 %v1114, %v1141
    %v1150 = vadd.f32 %v1115, %v1141
    %v1151 = vadd.f32 %v1116, %v1141
    %v1152 = vadd.f32 %v1117, %v1141
    %v1153 = vadd.f32 %v1118, %v1141
    %v1154 = vadd.f32 %v1119, %v1141
    %v1155 = vadd.f32 %v1120, %v1141
    %v1156 = vadd.f32 %v1121, %v1141
    %v1157 = vadd.f32 %v1122, %v1141
    %v1158 = vadd.f32 %v1123, %v1141
    %v1159 = vadd.f32 %v1124, %v1141
    %v1160 = vadd.f32 %v1125, %v1141
    %v1161 = vadd.f32 %v1126, %v1141
    %v1162 = vadd.f32 %v1127, %v1141
    %v1163 = vadd.f32 %v1128, %v1141
    %v1164 = vadd.f32 %v1129, %v1141
    %v1165 = vadd.f32 %v1130, %v1141
    %v1166 = vadd.f32 %v1131, %v1141
    %v1167 = vadd.f32 %v1132, %v1141
    %v1168 = vadd.f32 %v1133, %v1141
    %v1169 = vadd.f32 %v1134, %v1141
    %v1170 = vadd.f32 %v1135, %v1141
    %v1171 = vadd.f32 %v1136, %v1141
    %v1172 = vadd.f32 %v1137, %v1141
    %v1173 = vadd.f32 %v1138, %v1141
    %v1174 = vadd.f32 %v1139, %v1141
    %v1175 = vld [vmem:[%s6] sm:$0xff]
    %v1176 = vld [vmem:[%s6 + $0x8] sm:$0xff]
    %v1177 = vld [vmem:[%s6 + $0x10] sm:$0xff]
    %v1178 = vld [vmem:[%s6 + $0x18] sm:$0xff]
    %v1180 = vsel %vm393, %v1143, 0
    %v1183 = vsel %vm393, %v1144, 0
    %v1186 = vsel %vm393, %v1145, 0
    %v1189 = vsel %vm393, %v1146, 0
    %v1192 = vsel %vm393, %v1147, 0
    %v1195 = vsel %vm393, %v1148, 0
    %v1198 = vsel %vm393, %v1149, 0
    %v1201 = vsel %vm393, %v1150, 0
    %v1204 = vsel %vm393, %v1151, 0
    %v1207 = vsel %vm393, %v1152, 0
    %v1210 = vsel %vm393, %v1153, 0
    %v1213 = vsel %vm393, %v1154, 0
    %v1216 = vsel %vm393, %v1155, 0
    %v1219 = vsel %vm393, %v1156, 0
    %v1222 = vsel %vm393, %v1157, 0
    %v1225 = vsel %vm393, %v1158, 0
    %v1228 = vsel %vm393, %v1159, 0
    %v1231 = vsel %vm393, %v1160, 0
    %v1234 = vsel %vm393, %v1161, 0
    %v1237 = vsel %vm393, %v1162, 0
    %v1240 = vsel %vm393, %v1163, 0
    %v1243 = vsel %vm393, %v1164, 0
    %v1246 = vsel %vm393, %v1165, 0
    %v1249 = vsel %vm393, %v1166, 0
    %v1252 = vsel %vm393, %v1167, 0
    %v1255 = vsel %vm393, %v1168, 0
    %v1258 = vsel %vm393, %v1169, 0
    %v1261 = vsel %vm393, %v1170, 0
    %v1264 = vsel %vm393, %v1171, 0
    %v1267 = vsel %vm393, %v1172, 0
    %v1270 = vsel %vm393, %v1173, 0
    %v1273 = vsel %vm393, %v1174, 0
    %1275 = vmatpush.msra.mxu0 0.0
    %1276 = vmatpush.msra.mxu0 0.0
    %1277 = vmatpush.msra.mxu0 0.0
    %1278 = vmatpush.msra.mxu0 0.0
    %1279 = vmatpush.msra.mxu0 0.0
    %1280 = vmatpush.msra.mxu0 0.0
    %1281 = vmatpush.msra.mxu0 0.0
    %1282 = vmatpush.msra.mxu0 0.0
    %1283 = vmatpush.msra.mxu0 0.0
    %1284 = vmatpush.msra.mxu0 0.0
    %1285 = vmatpush.msra.mxu0 0.0
    %1286 = vmatpush.msra.mxu0 0.0
    %1287 = vmatpush.msra.mxu0 %v1178
    %1288 = vmatpush.msra.mxu0 %v1177
    %1289 = vmatpush.msra.mxu0 %v1176
    %1290 = vmatpush.msra.mxu0 %v1175
    %1291 = vmatmul.f32.gmra.mxu0 %v1180
    %v1292 = vpop.f32.mrf.mxu0
    %v1293 = vadd.f32 0.0, %v1292
    %1294 = vmatmul.f32.gmra.mxu0 %v1183
    %v1295 = vpop.f32.mrf.mxu0
    %v1296 = vadd.f32 0.0, %v1295
    %1297 = vmatmul.f32.gmra.mxu0 %v1186
    %v1298 = vpop.f32.mrf.mxu0
    %v1299 = vadd.f32 0.0, %v1298
    %1300 = vmatmul.f32.gmra.mxu0 %v1189
    %v1301 = vpop.f32.mrf.mxu0
    %v1302 = vadd.f32 0.0, %v1301
    %1303 = vmatmul.f32.gmra.mxu0 %v1192
    %v1304 = vpop.f32.mrf.mxu0
    %v1305 = vadd.f32 0.0, %v1304
    %1306 = vmatmul.f32.gmra.mxu0 %v1195
    %v1307 = vpop.f32.mrf.mxu0
    %v1308 = vadd.f32 0.0, %v1307
    %1309 = vmatmul.f32.gmra.mxu0 %v1198
    %v1310 = vpop.f32.mrf.mxu0
    %v1311 = vadd.f32 0.0, %v1310
    %1312 = vmatmul.f32.gmra.mxu0 %v1201
    %v1313 = vpop.f32.mrf.mxu0
    %v1314 = vadd.f32 0.0, %v1313
    %1315 = vmatmul.f32.gmra.mxu0 %v1204
    %v1316 = vpop.f32.mrf.mxu0
    %v1317 = vadd.f32 0.0, %v1316
    %1318 = vmatmul.f32.gmra.mxu0 %v1207
    %v1319 = vpop.f32.mrf.mxu0
    %v1320 = vadd.f32 0.0, %v1319
    %1321 = vmatmul.f32.gmra.mxu0 %v1210
    %v1322 = vpop.f32.mrf.mxu0
    %v1323 = vadd.f32 0.0, %v1322
    %1324 = vmatmul.f32.gmra.mxu0 %v1213
    %v1325 = vpop.f32.mrf.mxu0
    %v1326 = vadd.f32 0.0, %v1325
    %1327 = vmatmul.f32.gmra.mxu0 %v1216
    %v1328 = vpop.f32.mrf.mxu0
    %v1329 = vadd.f32 0.0, %v1328
    %1330 = vmatmul.f32.gmra.mxu0 %v1219
    %v1331 = vpop.f32.mrf.mxu0
    %v1332 = vadd.f32 0.0, %v1331
    %1333 = vmatmul.f32.gmra.mxu0 %v1222
    %v1334 = vpop.f32.mrf.mxu0
    %v1335 = vadd.f32 0.0, %v1334
    %1336 = vmatmul.f32.gmra.mxu0 %v1225
    %v1337 = vpop.f32.mrf.mxu0
    %v1338 = vadd.f32 0.0, %v1337
    %1339 = vmatmul.f32.gmra.mxu0 %v1228
    %v1340 = vpop.f32.mrf.mxu0
    %v1341 = vadd.f32 0.0, %v1340
    %1342 = vmatmul.f32.gmra.mxu0 %v1231
    %v1343 = vpop.f32.mrf.mxu0
    %v1344 = vadd.f32 0.0, %v1343
    %1345 = vmatmul.f32.gmra.mxu0 %v1234
    %v1346 = vpop.f32.mrf.mxu0
    %v1347 = vadd.f32 0.0, %v1346
    %1348 = vmatmul.f32.gmra.mxu0 %v1237
    %v1349 = vpop.f32.mrf.mxu0
    %v1350 = vadd.f32 0.0, %v1349
    %1351 = vmatmul.f32.gmra.mxu0 %v1240
    %v1352 = vpop.f32.mrf.mxu0
    %v1353 = vadd.f32 0.0, %v1352
    %1354 = vmatmul.f32.gmra.mxu0 %v1243
    %v1355 = vpop.f32.mrf.mxu0
    %v1356 = vadd.f32 0.0, %v1355
    %1357 = vmatmul.f32.gmra.mxu0 %v1246
    %v1358 = vpop.f32.mrf.mxu0
    %v1359 = vadd.f32 0.0, %v1358
    %1360 = vmatmul.f32.gmra.mxu0 %v1249
    %v1361 = vpop.f32.mrf.mxu0
    %v1362 = vadd.f32 0.0, %v1361
    %1363 = vmatmul.f32.gmra.mxu0 %v1252
    %v1364 = vpop.f32.mrf.mxu0
    %v1365 = vadd.f32 0.0, %v1364
    %1366 = vmatmul.f32.gmra.mxu0 %v1255
    %v1367 = vpop.f32.mrf.mxu0
    %v1368 = vadd.f32 0.0, %v1367
    %1369 = vmatmul.f32.gmra.mxu0 %v1258
    %v1370 = vpop.f32.mrf.mxu0
    %v1371 = vadd.f32 0.0, %v1370
    %1372 = vmatmul.f32.gmra.mxu0 %v1261
    %v1373 = vpop.f32.mrf.mxu0
    %v1374 = vadd.f32 0.0, %v1373
    %1375 = vmatmul.f32.gmra.mxu0 %v1264
    %v1376 = vpop.f32.mrf.mxu0
    %v1377 = vadd.f32 0.0, %v1376
    %1378 = vmatmul.f32.gmra.mxu0 %v1267
    %v1379 = vpop.f32.mrf.mxu0
    %v1380 = vadd.f32 0.0, %v1379
    %1381 = vmatmul.f32.gmra.mxu0 %v1270
    %v1382 = vpop.f32.mrf.mxu0
    %v1383 = vadd.f32 0.0, %v1382
    %1384 = vmatmul.f32.gmra.mxu0 %v1273
    %v1385 = vpop.f32.mrf.mxu0
    %v1386 = vadd.f32 0.0, %v1385
    %1387 = vdwg.mxu0
    %v1388 = vld [vmem:[%s7] sm:$0xff]
    %v1389 = vld [vmem:[%s7 + $0x8] sm:$0xff]
    %v1390 = vld [vmem:[%s7 + $0x10] sm:$0xff]
    %v1391 = vld [vmem:[%s7 + $0x18] sm:$0xff]
    %v1392 = vld [vmem:[%s7 + $0x20] sm:$0xff]
    %v1393 = vld [vmem:[%s7 + $0x28] sm:$0xff]
    %v1394 = vld [vmem:[%s7 + $0x30] sm:$0xff]
    %v1395 = vld [vmem:[%s7 + $0x38] sm:$0xff]
    %v1396 = vld [vmem:[%s7 + $0x40] sm:$0xff]
    %v1397 = vld [vmem:[%s7 + $0x48] sm:$0xff]
    %v1398 = vld [vmem:[%s7 + $0x50] sm:$0xff]
    %v1399 = vld [vmem:[%s7 + $0x58] sm:$0xff]
    %v1400 = vld [vmem:[%s7 + $0x60] sm:$0xff]
    %v1401 = vld [vmem:[%s7 + $0x68] sm:$0xff]
    %v1402 = vld [vmem:[%s7 + $0x70] sm:$0xff]
    %v1403 = vld [vmem:[%s7 + $0x78] sm:$0xff]
    %v1404 = vld [vmem:[%s7 + $0x80] sm:$0xff]
    %v1405 = vld [vmem:[%s7 + $0x88] sm:$0xff]
    %v1406 = vld [vmem:[%s7 + $0x90] sm:$0xff]
    %v1407 = vld [vmem:[%s7 + $0x98] sm:$0xff]
    %v1408 = vld [vmem:[%s7 + $0xa0] sm:$0xff]
    %v1409 = vld [vmem:[%s7 + $0xa8] sm:$0xff]
    %v1410 = vld [vmem:[%s7 + $0xb0] sm:$0xff]
    %v1411 = vld [vmem:[%s7 + $0xb8] sm:$0xff]
    %v1412 = vld [vmem:[%s7 + $0xc0] sm:$0xff]
    %v1413 = vld [vmem:[%s7 + $0xc8] sm:$0xff]
    %v1414 = vld [vmem:[%s7 + $0xd0] sm:$0xff]
    %v1415 = vld [vmem:[%s7 + $0xd8] sm:$0xff]
    %v1416 = vld [vmem:[%s7 + $0xe0] sm:$0xff]
    %v1417 = vld [vmem:[%s7 + $0xe8] sm:$0xff]
    %v1418 = vld [vmem:[%s7 + $0xf0] sm:$0xff]
    %v1419 = vld [vmem:[%s7 + $0xf8] sm:$0xff]
    %1436 = vrot.lane.b32.xlu0 %v1293, 96
    %v1437 = vpop.permute.xlu0 %1436
    %1438 = vrot.lane.b32.xlu0 %v1296, 96
    %v1439 = vpop.permute.xlu0 %1438
    %1440 = vrot.lane.b32.xlu0 %v1299, 96
    %v1441 = vpop.permute.xlu0 %1440
    %1442 = vrot.lane.b32.xlu0 %v1302, 96
    %v1443 = vpop.permute.xlu0 %1442
    %1444 = vrot.lane.b32.xlu0 %v1305, 96
    %v1445 = vpop.permute.xlu0 %1444
    %1446 = vrot.lane.b32.xlu0 %v1308, 96
    %v1447 = vpop.permute.xlu0 %1446
    %1448 = vrot.lane.b32.xlu0 %v1311, 96
    %v1449 = vpop.permute.xlu0 %1448
    %1450 = vrot.lane.b32.xlu0 %v1314, 96
    %v1451 = vpop.permute.xlu0 %1450
    %1452 = vrot.lane.b32.xlu0 %v1317, 96
    %v1453 = vpop.permute.xlu0 %1452
    %1454 = vrot.lane.b32.xlu0 %v1320, 96
    %v1455 = vpop.permute.xlu0 %1454
    %1456 = vrot.lane.b32.xlu0 %v1323, 96
    %v1457 = vpop.permute.xlu0 %1456
    %1458 = vrot.lane.b32.xlu0 %v1326, 96
    %v1459 = vpop.permute.xlu0 %1458
    %1460 = vrot.lane.b32.xlu0 %v1329, 96
    %v1461 = vpop.permute.xlu0 %1460
    %1462 = vrot.lane.b32.xlu0 %v1332, 96
    %v1463 = vpop.permute.xlu0 %1462
    %1464 = vrot.lane.b32.xlu0 %v1335, 96
    %v1465 = vpop.permute.xlu0 %1464
    %1466 = vrot.lane.b32.xlu0 %v1338, 96
    %v1467 = vpop.permute.xlu0 %1466
    %1484 = vmatpush.msra.mxu0 %v1467
    %1485 = vmatpush.msra.mxu0 %v1465
    %1486 = vmatpush.msra.mxu0 %v1463
    %1487 = vmatpush.msra.mxu0 %v1461
    %1488 = vmatpush.msra.mxu0 %v1459
    %1489 = vmatpush.msra.mxu0 %v1457
    %1490 = vmatpush.msra.mxu0 %v1455
    %1491 = vmatpush.msra.mxu0 %v1453
    %1492 = vmatpush.msra.mxu0 %v1451
    %1493 = vmatpush.msra.mxu0 %v1449
    %1494 = vmatpush.msra.mxu0 %v1447
    %1495 = vmatpush.msra.mxu0 %v1445
    %1496 = vmatpush.msra.mxu0 %v1443
    %1497 = vmatpush.msra.mxu0 %v1441
    %1498 = vmatpush.msra.mxu0 %v1439
    %1499 = vmatpush.msra.mxu0 %v1437
    %1500 = vmatmul.f32.gmra.mxu0 %v1388
    %v1501 = vpop.f32.mrf.mxu0
    %v1502 = vadd.f32 0.0, %v1501
    %1503 = vmatmul.f32.gmra.mxu0 %v1389
    %v1504 = vpop.f32.mrf.mxu0
    %v1505 = vadd.f32 0.0, %v1504
    %1506 = vmatmul.f32.gmra.mxu0 %v1390
    %v1507 = vpop.f32.mrf.mxu0
    %v1508 = vadd.f32 0.0, %v1507
    %1509 = vmatmul.f32.gmra.mxu0 %v1391
    %v1510 = vpop.f32.mrf.mxu0
    %v1511 = vadd.f32 0.0, %v1510
    %1512 = vmatmul.f32.gmra.mxu0 %v1392
    %v1513 = vpop.f32.mrf.mxu0
    %v1514 = vadd.f32 0.0, %v1513
    %1515 = vmatmul.f32.gmra.mxu0 %v1393
    %v1516 = vpop.f32.mrf.mxu0
    %v1517 = vadd.f32 0.0, %v1516
    %1518 = vmatmul.f32.gmra.mxu0 %v1394
    %v1519 = vpop.f32.mrf.mxu0
    %v1520 = vadd.f32 0.0, %v1519
    %1521 = vmatmul.f32.gmra.mxu0 %v1395
    %v1522 = vpop.f32.mrf.mxu0
    %v1523 = vadd.f32 0.0, %v1522
    %1524 = vmatmul.f32.gmra.mxu0 %v1396
    %v1525 = vpop.f32.mrf.mxu0
    %v1526 = vadd.f32 0.0, %v1525
    %1527 = vmatmul.f32.gmra.mxu0 %v1397
    %v1528 = vpop.f32.mrf.mxu0
    %v1529 = vadd.f32 0.0, %v1528
    %1530 = vmatmul.f32.gmra.mxu0 %v1398
    %v1531 = vpop.f32.mrf.mxu0
    %v1532 = vadd.f32 0.0, %v1531
    %1533 = vmatmul.f32.gmra.mxu0 %v1399
    %v1534 = vpop.f32.mrf.mxu0
    %v1535 = vadd.f32 0.0, %v1534
    %1536 = vmatmul.f32.gmra.mxu0 %v1400
    %v1537 = vpop.f32.mrf.mxu0
    %v1538 = vadd.f32 0.0, %v1537
    %1539 = vmatmul.f32.gmra.mxu0 %v1401
    %v1540 = vpop.f32.mrf.mxu0
    %v1541 = vadd.f32 0.0, %v1540
    %1542 = vmatmul.f32.gmra.mxu0 %v1402
    %v1543 = vpop.f32.mrf.mxu0
    %v1544 = vadd.f32 0.0, %v1543
    %1545 = vmatmul.f32.gmra.mxu0 %v1403
    %v1546 = vpop.f32.mrf.mxu0
    %v1547 = vadd.f32 0.0, %v1546
    %1548 = vmatmul.f32.gmra.mxu0 %v1404
    %v1549 = vpop.f32.mrf.mxu0
    %v1550 = vadd.f32 0.0, %v1549
    %1551 = vmatmul.f32.gmra.mxu0 %v1405
    %v1552 = vpop.f32.mrf.mxu0
    %v1553 = vadd.f32 0.0, %v1552
    %1554 = vmatmul.f32.gmra.mxu0 %v1406
    %v1555 = vpop.f32.mrf.mxu0
    %v1556 = vadd.f32 0.0, %v1555
    %1557 = vmatmul.f32.gmra.mxu0 %v1407
    %v1558 = vpop.f32.mrf.mxu0
    %v1559 = vadd.f32 0.0, %v1558
    %1560 = vmatmul.f32.gmra.mxu0 %v1408
    %v1561 = vpop.f32.mrf.mxu0
    %v1562 = vadd.f32 0.0, %v1561
    %1563 = vmatmul.f32.gmra.mxu0 %v1409
    %v1564 = vpop.f32.mrf.mxu0
    %v1565 = vadd.f32 0.0, %v1564
    %1566 = vmatmul.f32.gmra.mxu0 %v1410
    %v1567 = vpop.f32.mrf.mxu0
    %v1568 = vadd.f32 0.0, %v1567
    %1569 = vmatmul.f32.gmra.mxu0 %v1411
    %v1570 = vpop.f32.mrf.mxu0
    %v1571 = vadd.f32 0.0, %v1570
    %1572 = vmatmul.f32.gmra.mxu0 %v1412
    %v1573 = vpop.f32.mrf.mxu0
    %v1574 = vadd.f32 0.0, %v1573
    %1575 = vmatmul.f32.gmra.mxu0 %v1413
    %v1576 = vpop.f32.mrf.mxu0
    %v1577 = vadd.f32 0.0, %v1576
    %1578 = vmatmul.f32.gmra.mxu0 %v1414
    %v1579 = vpop.f32.mrf.mxu0
    %v1580 = vadd.f32 0.0, %v1579
    %1581 = vmatmul.f32.gmra.mxu0 %v1415
    %v1582 = vpop.f32.mrf.mxu0
    %v1583 = vadd.f32 0.0, %v1582
    %1584 = vmatmul.f32.gmra.mxu0 %v1416
    %v1585 = vpop.f32.mrf.mxu0
    %v1586 = vadd.f32 0.0, %v1585
    %1587 = vmatmul.f32.gmra.mxu0 %v1417
    %v1588 = vpop.f32.mrf.mxu0
    %v1589 = vadd.f32 0.0, %v1588
    %1590 = vmatmul.f32.gmra.mxu0 %v1418
    %v1591 = vpop.f32.mrf.mxu0
    %v1592 = vadd.f32 0.0, %v1591
    %1593 = vmatmul.f32.gmra.mxu0 %v1419
    %v1594 = vpop.f32.mrf.mxu0
    %v1595 = vadd.f32 0.0, %v1594
    %1596 = vdwg.mxu0
    %v1597 = vld [vmem:[%s8] sm:$0xff]
    %v1598 = vld [vmem:[%s8 + $0x8] sm:$0xff]
    %v1599 = vld [vmem:[%s8 + $0x10] sm:$0xff]
    %v1600 = vld [vmem:[%s8 + $0x18] sm:$0xff]
    %v1601 = vld [vmem:[%s8 + $0x20] sm:$0xff]
    %v1602 = vld [vmem:[%s8 + $0x28] sm:$0xff]
    %v1603 = vld [vmem:[%s8 + $0x30] sm:$0xff]
    %v1604 = vld [vmem:[%s8 + $0x38] sm:$0xff]
    %v1605 = vld [vmem:[%s8 + $0x40] sm:$0xff]
    %v1606 = vld [vmem:[%s8 + $0x48] sm:$0xff]
    %v1607 = vld [vmem:[%s8 + $0x50] sm:$0xff]
    %v1608 = vld [vmem:[%s8 + $0x58] sm:$0xff]
    %v1609 = vld [vmem:[%s8 + $0x60] sm:$0xff]
    %v1610 = vld [vmem:[%s8 + $0x68] sm:$0xff]
    %v1611 = vld [vmem:[%s8 + $0x70] sm:$0xff]
    %v1612 = vld [vmem:[%s8 + $0x78] sm:$0xff]
    %v1613 = vld [vmem:[%s8 + $0x80] sm:$0xff]
    %v1614 = vld [vmem:[%s8 + $0x88] sm:$0xff]
    %v1615 = vld [vmem:[%s8 + $0x90] sm:$0xff]
    %v1616 = vld [vmem:[%s8 + $0x98] sm:$0xff]
    %v1617 = vld [vmem:[%s8 + $0xa0] sm:$0xff]
    %v1618 = vld [vmem:[%s8 + $0xa8] sm:$0xff]
    %v1619 = vld [vmem:[%s8 + $0xb0] sm:$0xff]
    %v1620 = vld [vmem:[%s8 + $0xb8] sm:$0xff]
    %v1621 = vld [vmem:[%s8 + $0xc0] sm:$0xff]
    %v1622 = vld [vmem:[%s8 + $0xc8] sm:$0xff]
    %v1623 = vld [vmem:[%s8 + $0xd0] sm:$0xff]
    %v1624 = vld [vmem:[%s8 + $0xd8] sm:$0xff]
    %v1625 = vld [vmem:[%s8 + $0xe0] sm:$0xff]
    %v1626 = vld [vmem:[%s8 + $0xe8] sm:$0xff]
    %v1627 = vld [vmem:[%s8 + $0xf0] sm:$0xff]
    %v1628 = vld [vmem:[%s8 + $0xf8] sm:$0xff]
    %1629 = vrot.lane.b32.xlu0 %v1293, 64
    %v1630 = vpop.permute.xlu0 %1629
    %1631 = vrot.lane.b32.xlu0 %v1296, 64
    %v1632 = vpop.permute.xlu0 %1631
    %1633 = vrot.lane.b32.xlu0 %v1299, 64
    %v1634 = vpop.permute.xlu0 %1633
    %1635 = vrot.lane.b32.xlu0 %v1302, 64
    %v1636 = vpop.permute.xlu0 %1635
    %1637 = vrot.lane.b32.xlu0 %v1305, 64
    %v1638 = vpop.permute.xlu0 %1637
    %1639 = vrot.lane.b32.xlu0 %v1308, 64
    %v1640 = vpop.permute.xlu0 %1639
    %1641 = vrot.lane.b32.xlu0 %v1311, 64
    %v1642 = vpop.permute.xlu0 %1641
    %1643 = vrot.lane.b32.xlu0 %v1314, 64
    %v1644 = vpop.permute.xlu0 %1643
    %1645 = vrot.lane.b32.xlu0 %v1317, 64
    %v1646 = vpop.permute.xlu0 %1645
    %1647 = vrot.lane.b32.xlu0 %v1320, 64
    %v1648 = vpop.permute.xlu0 %1647
    %1649 = vrot.lane.b32.xlu0 %v1323, 64
    %v1650 = vpop.permute.xlu0 %1649
    %1651 = vrot.lane.b32.xlu0 %v1326, 64
    %v1652 = vpop.permute.xlu0 %1651
    %1653 = vrot.lane.b32.xlu0 %v1329, 64
    %v1654 = vpop.permute.xlu0 %1653
    %1655 = vrot.lane.b32.xlu0 %v1332, 64
    %v1656 = vpop.permute.xlu0 %1655
    %1657 = vrot.lane.b32.xlu0 %v1335, 64
    %v1658 = vpop.permute.xlu0 %1657
    %1659 = vrot.lane.b32.xlu0 %v1338, 64
    %v1660 = vpop.permute.xlu0 %1659
    %1677 = vmatpush.msra.mxu0 %v1660
    %1678 = vmatpush.msra.mxu0 %v1658
    %1679 = vmatpush.msra.mxu0 %v1656
    %1680 = vmatpush.msra.mxu0 %v1654
    %1681 = vmatpush.msra.mxu0 %v1652
    %1682 = vmatpush.msra.mxu0 %v1650
    %1683 = vmatpush.msra.mxu0 %v1648
    %1684 = vmatpush.msra.mxu0 %v1646
    %1685 = vmatpush.msra.mxu0 %v1644
    %1686 = vmatpush.msra.mxu0 %v1642
    %1687 = vmatpush.msra.mxu0 %v1640
    %1688 = vmatpush.msra.mxu0 %v1638
    %1689 = vmatpush.msra.mxu0 %v1636
    %1690 = vmatpush.msra.mxu0 %v1634
    %1691 = vmatpush.msra.mxu0 %v1632
    %1692 = vmatpush.msra.mxu0 %v1630
    %1693 = vmatmul.f32.gmra.mxu0 %v1597
    %v1694 = vpop.f32.mrf.mxu0
    %v1695 = vadd.f32 0.0, %v1694
    %1696 = vmatmul.f32.gmra.mxu0 %v1598
    %v1697 = vpop.f32.mrf.mxu0
    %v1698 = vadd.f32 0.0, %v1697
    %1699 = vmatmul.f32.gmra.mxu0 %v1599
    %v1700 = vpop.f32.mrf.mxu0
    %v1701 = vadd.f32 0.0, %v1700
    %1702 = vmatmul.f32.gmra.mxu0 %v1600
    %v1703 = vpop.f32.mrf.mxu0
    %v1704 = vadd.f32 0.0, %v1703
    %1705 = vmatmul.f32.gmra.mxu0 %v1601
    %v1706 = vpop.f32.mrf.mxu0
    %v1707 = vadd.f32 0.0, %v1706
    %1708 = vmatmul.f32.gmra.mxu0 %v1602
    %v1709 = vpop.f32.mrf.mxu0
    %v1710 = vadd.f32 0.0, %v1709
    %1711 = vmatmul.f32.gmra.mxu0 %v1603
    %v1712 = vpop.f32.mrf.mxu0
    %v1713 = vadd.f32 0.0, %v1712
    %1714 = vmatmul.f32.gmra.mxu0 %v1604
    %v1715 = vpop.f32.mrf.mxu0
    %v1716 = vadd.f32 0.0, %v1715
    %1717 = vmatmul.f32.gmra.mxu0 %v1605
    %v1718 = vpop.f32.mrf.mxu0
    %v1719 = vadd.f32 0.0, %v1718
    %1720 = vmatmul.f32.gmra.mxu0 %v1606
    %v1721 = vpop.f32.mrf.mxu0
    %v1722 = vadd.f32 0.0, %v1721
    %1723 = vmatmul.f32.gmra.mxu0 %v1607
    %v1724 = vpop.f32.mrf.mxu0
    %v1725 = vadd.f32 0.0, %v1724
    %1726 = vmatmul.f32.gmra.mxu0 %v1608
    %v1727 = vpop.f32.mrf.mxu0
    %v1728 = vadd.f32 0.0, %v1727
    %1729 = vmatmul.f32.gmra.mxu0 %v1609
    %v1730 = vpop.f32.mrf.mxu0
    %v1731 = vadd.f32 0.0, %v1730
    %1732 = vmatmul.f32.gmra.mxu0 %v1610
    %v1733 = vpop.f32.mrf.mxu0
    %v1734 = vadd.f32 0.0, %v1733
    %1735 = vmatmul.f32.gmra.mxu0 %v1611
    %v1736 = vpop.f32.mrf.mxu0
    %v1737 = vadd.f32 0.0, %v1736
    %1738 = vmatmul.f32.gmra.mxu0 %v1612
    %v1739 = vpop.f32.mrf.mxu0
    %v1740 = vadd.f32 0.0, %v1739
    %1741 = vmatmul.f32.gmra.mxu0 %v1613
    %v1742 = vpop.f32.mrf.mxu0
    %v1743 = vadd.f32 0.0, %v1742
    %1744 = vmatmul.f32.gmra.mxu0 %v1614
    %v1745 = vpop.f32.mrf.mxu0
    %v1746 = vadd.f32 0.0, %v1745
    %1747 = vmatmul.f32.gmra.mxu0 %v1615
    %v1748 = vpop.f32.mrf.mxu0
    %v1749 = vadd.f32 0.0, %v1748
    %1750 = vmatmul.f32.gmra.mxu0 %v1616
    %v1751 = vpop.f32.mrf.mxu0
    %v1752 = vadd.f32 0.0, %v1751
    %1753 = vmatmul.f32.gmra.mxu0 %v1617
    %v1754 = vpop.f32.mrf.mxu0
    %v1755 = vadd.f32 0.0, %v1754
    %1756 = vmatmul.f32.gmra.mxu0 %v1618
    %v1757 = vpop.f32.mrf.mxu0
    %v1758 = vadd.f32 0.0, %v1757
    %1759 = vmatmul.f32.gmra.mxu0 %v1619
    %v1760 = vpop.f32.mrf.mxu0
    %v1761 = vadd.f32 0.0, %v1760
    %1762 = vmatmul.f32.gmra.mxu0 %v1620
    %v1763 = vpop.f32.mrf.mxu0
    %v1764 = vadd.f32 0.0, %v1763
    %1765 = vmatmul.f32.gmra.mxu0 %v1621
    %v1766 = vpop.f32.mrf.mxu0
    %v1767 = vadd.f32 0.0, %v1766
    %1768 = vmatmul.f32.gmra.mxu0 %v1622
    %v1769 = vpop.f32.mrf.mxu0
    %v1770 = vadd.f32 0.0, %v1769
    %1771 = vmatmul.f32.gmra.mxu0 %v1623
    %v1772 = vpop.f32.mrf.mxu0
    %v1773 = vadd.f32 0.0, %v1772
    %1774 = vmatmul.f32.gmra.mxu0 %v1624
    %v1775 = vpop.f32.mrf.mxu0
    %v1776 = vadd.f32 0.0, %v1775
    %1777 = vmatmul.f32.gmra.mxu0 %v1625
    %v1778 = vpop.f32.mrf.mxu0
    %v1779 = vadd.f32 0.0, %v1778
    %1780 = vmatmul.f32.gmra.mxu0 %v1626
    %v1781 = vpop.f32.mrf.mxu0
    %v1782 = vadd.f32 0.0, %v1781
    %1783 = vmatmul.f32.gmra.mxu0 %v1627
    %v1784 = vpop.f32.mrf.mxu0
    %v1785 = vadd.f32 0.0, %v1784
    %1786 = vmatmul.f32.gmra.mxu0 %v1628
    %v1787 = vpop.f32.mrf.mxu0
    %v1788 = vadd.f32 0.0, %v1787
    %1789 = vdwg.mxu0
    %vm1790 = vcmask 64512
    %v1791 = vsel %vm1790, %v1293, 0
    %v1793 = vsel %vm1790, %v1296, 0
    %v1795 = vsel %vm1790, %v1299, 0
    %v1797 = vsel %vm1790, %v1302, 0
    %v1799 = vsel %vm1790, %v1305, 0
    %v1801 = vsel %vm1790, %v1308, 0
    %v1803 = vsel %vm1790, %v1311, 0
    %v1805 = vsel %vm1790, %v1314, 0
    %v1807 = vsel %vm1790, %v1317, 0
    %v1809 = vsel %vm1790, %v1320, 0
    %v1811 = vsel %vm1790, %v1323, 0
    %v1813 = vsel %vm1790, %v1326, 0
    %v1815 = vsel %vm1790, %v1329, 0
    %v1817 = vsel %vm1790, %v1332, 0
    %v1819 = vsel %vm1790, %v1335, 0
    %v1821 = vsel %vm1790, %v1338, 0
    %v1824 = vsel %vm1790, %v1502, 0
    %v1827 = vsel %vm1790, %v1505, 0
    %v1830 = vsel %vm1790, %v1508, 0
    %v1833 = vsel %vm1790, %v1511, 0
    %v1836 = vsel %vm1790, %v1514, 0
    %v1839 = vsel %vm1790, %v1517, 0
    %v1842 = vsel %vm1790, %v1520, 0
    %v1845 = vsel %vm1790, %v1523, 0
    %v1848 = vsel %vm1790, %v1526, 0
    %v1851 = vsel %vm1790, %v1529, 0
    %v1854 = vsel %vm1790, %v1532, 0
    %v1857 = vsel %vm1790, %v1535, 0
    %v1860 = vsel %vm1790, %v1538, 0
    %v1863 = vsel %vm1790, %v1541, 0
    %v1866 = vsel %vm1790, %v1544, 0
    %v1869 = vsel %vm1790, %v1547, 0
    %v1872 = vsel %vm1790, %v1550, 0
    %v1875 = vsel %vm1790, %v1553, 0
    %v1878 = vsel %vm1790, %v1556, 0
    %v1881 = vsel %vm1790, %v1559, 0
    %v1884 = vsel %vm1790, %v1562, 0
    %v1887 = vsel %vm1790, %v1565, 0
    %v1890 = vsel %vm1790, %v1568, 0
    %v1893 = vsel %vm1790, %v1571, 0
    %v1896 = vsel %vm1790, %v1574, 0
    %v1899 = vsel %vm1790, %v1577, 0
    %v1902 = vsel %vm1790, %v1580, 0
    %v1905 = vsel %vm1790, %v1583, 0
    %v1908 = vsel %vm1790, %v1586, 0
    %v1911 = vsel %vm1790, %v1589, 0
    %v1914 = vsel %vm1790, %v1592, 0
    %v1917 = vsel %vm1790, %v1595, 0
    %1919 = vmatpush.xpose.msra.mxu0 %v1869
    %1920 = vmatpush.xpose.msra.mxu0 %v1866
    %1921 = vmatpush.xpose.msra.mxu0 %v1863
    %1922 = vmatpush.xpose.msra.mxu0 %v1860
    %1923 = vmatpush.xpose.msra.mxu0 %v1857
    %1924 = vmatpush.xpose.msra.mxu0 %v1854
    %1925 = vmatpush.xpose.msra.mxu0 %v1851
    %1926 = vmatpush.xpose.msra.mxu0 %v1848
    %1927 = vmatpush.xpose.msra.mxu0 %v1845
    %1928 = vmatpush.xpose.msra.mxu0 %v1842
    %1929 = vmatpush.xpose.msra.mxu0 %v1839
    %1930 = vmatpush.xpose.msra.mxu0 %v1836
    %1931 = vmatpush.xpose.msra.mxu0 %v1833
    %1932 = vmatpush.xpose.msra.mxu0 %v1830
    %1933 = vmatpush.xpose.msra.mxu0 %v1827
    %1934 = vmatpush.xpose.msra.mxu0 %v1824
    %1935 = vmatmul.f32.gmra.mxu0 %v1791
    %v1936 = vpop.f32.mrf.mxu0
    %v1937 = vadd.f32 0.0, %v1936
    %1938 = vmatmul.f32.gmra.mxu0 %v1793
    %v1939 = vpop.f32.mrf.mxu0
    %v1940 = vadd.f32 0.0, %v1939
    %1941 = vmatmul.f32.gmra.mxu0 %v1795
    %v1942 = vpop.f32.mrf.mxu0
    %v1943 = vadd.f32 0.0, %v1942
    %1944 = vmatmul.f32.gmra.mxu0 %v1797
    %v1945 = vpop.f32.mrf.mxu0
    %v1946 = vadd.f32 0.0, %v1945
    %1947 = vmatmul.f32.gmra.mxu0 %v1799
    %v1948 = vpop.f32.mrf.mxu0
    %v1949 = vadd.f32 0.0, %v1948
    %1950 = vmatmul.f32.gmra.mxu0 %v1801
    %v1951 = vpop.f32.mrf.mxu0
    %v1952 = vadd.f32 0.0, %v1951
    %1953 = vmatmul.f32.gmra.mxu0 %v1803
    %v1954 = vpop.f32.mrf.mxu0
    %v1955 = vadd.f32 0.0, %v1954
    %1956 = vmatmul.f32.gmra.mxu0 %v1805
    %v1957 = vpop.f32.mrf.mxu0
    %v1958 = vadd.f32 0.0, %v1957
    %1959 = vmatmul.f32.gmra.mxu0 %v1807
    %v1960 = vpop.f32.mrf.mxu0
    %v1961 = vadd.f32 0.0, %v1960
    %1962 = vmatmul.f32.gmra.mxu0 %v1809
    %v1963 = vpop.f32.mrf.mxu0
    %v1964 = vadd.f32 0.0, %v1963
    %1965 = vmatmul.f32.gmra.mxu0 %v1811
    %v1966 = vpop.f32.mrf.mxu0
    %v1967 = vadd.f32 0.0, %v1966
    %1968 = vmatmul.f32.gmra.mxu0 %v1813
    %v1969 = vpop.f32.mrf.mxu0
    %v1970 = vadd.f32 0.0, %v1969
    %1971 = vmatmul.f32.gmra.mxu0 %v1815
    %v1972 = vpop.f32.mrf.mxu0
    %v1973 = vadd.f32 0.0, %v1972
    %1974 = vmatmul.f32.gmra.mxu0 %v1817
    %v1975 = vpop.f32.mrf.mxu0
    %v1976 = vadd.f32 0.0, %v1975
    %1977 = vmatmul.f32.gmra.mxu0 %v1819
    %v1978 = vpop.f32.mrf.mxu0
    %v1979 = vadd.f32 0.0, %v1978
    %1980 = vmatmul.f32.gmra.mxu0 %v1821
    %v1981 = vpop.f32.mrf.mxu0
    %v1982 = vadd.f32 0.0, %v1981
    %1983 = vdwg.mxu0
    %1984 = vmatpush.xpose.msra.mxu0 %v1917
    %1985 = vmatpush.xpose.msra.mxu0 %v1914
    %1986 = vmatpush.xpose.msra.mxu0 %v1911
    %1987 = vmatpush.xpose.msra.mxu0 %v1908
    %1988 = vmatpush.xpose.msra.mxu0 %v1905
    %1989 = vmatpush.xpose.msra.mxu0 %v1902
    %1990 = vmatpush.xpose.msra.mxu0 %v1899
    %1991 = vmatpush.xpose.msra.mxu0 %v1896
    %1992 = vmatpush.xpose.msra.mxu0 %v1893
    %1993 = vmatpush.xpose.msra.mxu0 %v1890
    %1994 = vmatpush.xpose.msra.mxu0 %v1887
    %1995 = vmatpush.xpose.msra.mxu0 %v1884
    %1996 = vmatpush.xpose.msra.mxu0 %v1881
    %1997 = vmatpush.xpose.msra.mxu0 %v1878
    %1998 = vmatpush.xpose.msra.mxu0 %v1875
    %1999 = vmatpush.xpose.msra.mxu0 %v1872
    %2000 = vmatmul.f32.gmra.mxu0 %v1791
    %v2001 = vpop.f32.mrf.mxu0
    %v2002 = vadd.f32 0.0, %v2001
    %2003 = vmatmul.f32.gmra.mxu0 %v1793
    %v2004 = vpop.f32.mrf.mxu0
    %v2005 = vadd.f32 0.0, %v2004
    %2006 = vmatmul.f32.gmra.mxu0 %v1795
    %v2007 = vpop.f32.mrf.mxu0
    %v2008 = vadd.f32 0.0, %v2007
    %2009 = vmatmul.f32.gmra.mxu0 %v1797
    %v2010 = vpop.f32.mrf.mxu0
    %v2011 = vadd.f32 0.0, %v2010
    %2012 = vmatmul.f32.gmra.mxu0 %v1799
    %v2013 = vpop.f32.mrf.mxu0
    %v2014 = vadd.f32 0.0, %v2013
    %2015 = vmatmul.f32.gmra.mxu0 %v1801
    %v2016 = vpop.f32.mrf.mxu0
    %v2017 = vadd.f32 0.0, %v2016
    %2018 = vmatmul.f32.gmra.mxu0 %v1803
    %v2019 = vpop.f32.mrf.mxu0
    %v2020 = vadd.f32 0.0, %v2019
    %2021 = vmatmul.f32.gmra.mxu0 %v1805
    %v2022 = vpop.f32.mrf.mxu0
    %v2023 = vadd.f32 0.0, %v2022
    %2024 = vmatmul.f32.gmra.mxu0 %v1807
    %v2025 = vpop.f32.mrf.mxu0
    %v2026 = vadd.f32 0.0, %v2025
    %2027 = vmatmul.f32.gmra.mxu0 %v1809
    %v2028 = vpop.f32.mrf.mxu0
    %v2029 = vadd.f32 0.0, %v2028
    %2030 = vmatmul.f32.gmra.mxu0 %v1811
    %v2031 = vpop.f32.mrf.mxu0
    %v2032 = vadd.f32 0.0, %v2031
    %2033 = vmatmul.f32.gmra.mxu0 %v1813
    %v2034 = vpop.f32.mrf.mxu0
    %v2035 = vadd.f32 0.0, %v2034
    %2036 = vmatmul.f32.gmra.mxu0 %v1815
    %v2037 = vpop.f32.mrf.mxu0
    %v2038 = vadd.f32 0.0, %v2037
    %2039 = vmatmul.f32.gmra.mxu0 %v1817
    %v2040 = vpop.f32.mrf.mxu0
    %v2041 = vadd.f32 0.0, %v2040
    %2042 = vmatmul.f32.gmra.mxu0 %v1819
    %v2043 = vpop.f32.mrf.mxu0
    %v2044 = vadd.f32 0.0, %v2043
    %2045 = vmatmul.f32.gmra.mxu0 %v1821
    %v2046 = vpop.f32.mrf.mxu0
    %v2047 = vadd.f32 0.0, %v2046
    %2048 = vdwg.mxu0
    %v2049 = vmax.f32 %v1937, %v2002
    %2050 = vmax.xlane.f32.xlu0 %v2049
    %v2051 = vpop.xlane.xlu0 %2050
    %v2052 = vmax.f32 %v1940, %v2005
    %2053 = vmax.xlane.f32.xlu0 %v2052
    %v2054 = vpop.xlane.xlu0 %2053
    %v2055 = vmax.f32 %v1943, %v2008
    %2056 = vmax.xlane.f32.xlu0 %v2055
    %v2057 = vpop.xlane.xlu0 %2056
    %v2058 = vmax.f32 %v1946, %v2011
    %2059 = vmax.xlane.f32.xlu0 %v2058
    %v2060 = vpop.xlane.xlu0 %2059
    %v2061 = vmax.f32 %v1949, %v2014
    %2062 = vmax.xlane.f32.xlu0 %v2061
    %v2063 = vpop.xlane.xlu0 %2062
    %v2064 = vmax.f32 %v1952, %v2017
    %2065 = vmax.xlane.f32.xlu0 %v2064
    %v2066 = vpop.xlane.xlu0 %2065
    %v2067 = vmax.f32 %v1955, %v2020
    %2068 = vmax.xlane.f32.xlu0 %v2067
    %v2069 = vpop.xlane.xlu0 %2068
    %v2070 = vmax.f32 %v1958, %v2023
    %2071 = vmax.xlane.f32.xlu0 %v2070
    %v2072 = vpop.xlane.xlu0 %2071
    %v2073 = vmax.f32 %v1961, %v2026
    %2074 = vmax.xlane.f32.xlu0 %v2073
    %v2075 = vpop.xlane.xlu0 %2074
    %v2076 = vmax.f32 %v1964, %v2029
    %2077 = vmax.xlane.f32.xlu0 %v2076
    %v2078 = vpop.xlane.xlu0 %2077
    %v2079 = vmax.f32 %v1967, %v2032
    %2080 = vmax.xlane.f32.xlu0 %v2079
    %v2081 = vpop.xlane.xlu0 %2080
    %v2082 = vmax.f32 %v1970, %v2035
    %2083 = vmax.xlane.f32.xlu0 %v2082
    %v2084 = vpop.xlane.xlu0 %2083
    %v2085 = vmax.f32 %v1973, %v2038
    %2086 = vmax.xlane.f32.xlu0 %v2085
    %v2087 = vpop.xlane.xlu0 %2086
    %v2088 = vmax.f32 %v1976, %v2041
    %2089 = vmax.xlane.f32.xlu0 %v2088
    %v2090 = vpop.xlane.xlu0 %2089
    %v2091 = vmax.f32 %v1979, %v2044
    %2092 = vmax.xlane.f32.xlu0 %v2091
    %v2093 = vpop.xlane.xlu0 %2092
    %v2094 = vmax.f32 %v1982, %v2047
    %2095 = vmax.xlane.f32.xlu0 %v2094
    %v2096 = vpop.xlane.xlu0 %2095
    %v2097 = vsub.f32 %v1937, %v2051
    %v2098 = vsub.f32 %v2002, %v2051
    %v2099 = vsub.f32 %v1940, %v2054
    %v2100 = vsub.f32 %v2005, %v2054
    %v2101 = vsub.f32 %v1943, %v2057
    %v2102 = vsub.f32 %v2008, %v2057
    %v2103 = vsub.f32 %v1946, %v2060
    %v2104 = vsub.f32 %v2011, %v2060
    %v2105 = vsub.f32 %v1949, %v2063
    %v2106 = vsub.f32 %v2014, %v2063
    %v2107 = vsub.f32 %v1952, %v2066
    %v2108 = vsub.f32 %v2017, %v2066
    %v2109 = vsub.f32 %v1955, %v2069
    %v2110 = vsub.f32 %v2020, %v2069
    %v2111 = vsub.f32 %v1958, %v2072
    %v2112 = vsub.f32 %v2023, %v2072
    %v2113 = vsub.f32 %v1961, %v2075
    %v2114 = vsub.f32 %v2026, %v2075
    %v2115 = vsub.f32 %v1964, %v2078
    %v2116 = vsub.f32 %v2029, %v2078
    %v2117 = vsub.f32 %v1967, %v2081
    %v2118 = vsub.f32 %v2032, %v2081
    %v2119 = vsub.f32 %v1970, %v2084
    %v2120 = vsub.f32 %v2035, %v2084
    %v2121 = vsub.f32 %v1973, %v2087
    %v2122 = vsub.f32 %v2038, %v2087
    %v2123 = vsub.f32 %v1976, %v2090
    %v2124 = vsub.f32 %v2041, %v2090
    %v2125 = vsub.f32 %v1979, %v2093
    %v2126 = vsub.f32 %v2044, %v2093
    %v2127 = vsub.f32 %v1982, %v2096
    %v2128 = vsub.f32 %v2047, %v2096
    %v2129 = vmul.f32 %v2097, 1.442695
    %v2130 = vpow.pop %v2129
    %v2131 = vmul.f32 %v2098, 1.442695
    %v2132 = vpow.pop %v2131
    %v2133 = vmul.f32 %v2099, 1.442695
    %v2134 = vpow.pop %v2133
    %v2135 = vmul.f32 %v2100, 1.442695
    %v2136 = vpow.pop %v2135
    %v2137 = vmul.f32 %v2101, 1.442695
    %v2138 = vpow.pop %v2137
    %v2139 = vmul.f32 %v2102, 1.442695
    %v2140 = vpow.pop %v2139
    %v2141 = vmul.f32 %v2103, 1.442695
    %v2142 = vpow.pop %v2141
    %v2143 = vmul.f32 %v2104, 1.442695
    %v2144 = vpow.pop %v2143
    %v2145 = vmul.f32 %v2105, 1.442695
    %v2146 = vpow.pop %v2145
    %v2147 = vmul.f32 %v2106, 1.442695
    %v2148 = vpow.pop %v2147
    %v2149 = vmul.f32 %v2107, 1.442695
    %v2150 = vpow.pop %v2149
    %v2151 = vmul.f32 %v2108, 1.442695
    %v2152 = vpow.pop %v2151
    %v2153 = vmul.f32 %v2109, 1.442695
    %v2154 = vpow.pop %v2153
    %v2155 = vmul.f32 %v2110, 1.442695
    %v2156 = vpow.pop %v2155
    %v2157 = vmul.f32 %v2111, 1.442695
    %v2158 = vpow.pop %v2157
    %v2159 = vmul.f32 %v2112, 1.442695
    %v2160 = vpow.pop %v2159
    %v2161 = vmul.f32 %v2113, 1.442695
    %v2162 = vpow.pop %v2161
    %v2163 = vmul.f32 %v2114, 1.442695
    %v2164 = vpow.pop %v2163
    %v2165 = vmul.f32 %v2115, 1.442695
    %v2166 = vpow.pop %v2165
    %v2167 = vmul.f32 %v2116, 1.442695
    %v2168 = vpow.pop %v2167
    %v2169 = vmul.f32 %v2117, 1.442695
    %v2170 = vpow.pop %v2169
    %v2171 = vmul.f32 %v2118, 1.442695
    %v2172 = vpow.pop %v2171
    %v2173 = vmul.f32 %v2119, 1.442695
    %v2174 = vpow.pop %v2173
    %v2175 = vmul.f32 %v2120, 1.442695
    %v2176 = vpow.pop %v2175
    %v2177 = vmul.f32 %v2121, 1.442695
    %v2178 = vpow.pop %v2177
    %v2179 = vmul.f32 %v2122, 1.442695
    %v2180 = vpow.pop %v2179
    %v2181 = vmul.f32 %v2123, 1.442695
    %v2182 = vpow.pop %v2181
    %v2183 = vmul.f32 %v2124, 1.442695
    %v2184 = vpow.pop %v2183
    %v2185 = vmul.f32 %v2125, 1.442695
    %v2186 = vpow.pop %v2185
    %v2187 = vmul.f32 %v2126, 1.442695
    %v2188 = vpow.pop %v2187
    %v2189 = vmul.f32 %v2127, 1.442695
    %v2190 = vpow.pop %v2189
    %v2191 = vmul.f32 %v2128, 1.442695
    %v2192 = vpow.pop %v2191
    %v2193 = vadd.f32 %v2130, %v2132
    %2194 = vadd.xlane.f32.xlu0 %v2193
    %v2195 = vpop.xlane.xlu0 %2194
    %v2196 = vadd.f32 %v2134, %v2136
    %2197 = vadd.xlane.f32.xlu0 %v2196
    %v2198 = vpop.xlane.xlu0 %2197
    %v2199 = vadd.f32 %v2138, %v2140
    %2200 = vadd.xlane.f32.xlu0 %v2199
    %v2201 = vpop.xlane.xlu0 %2200
    %v2202 = vadd.f32 %v2142, %v2144
    %2203 = vadd.xlane.f32.xlu0 %v2202
    %v2204 = vpop.xlane.xlu0 %2203
    %v2205 = vadd.f32 %v2146, %v2148
    %2206 = vadd.xlane.f32.xlu0 %v2205
    %v2207 = vpop.xlane.xlu0 %2206
    %v2208 = vadd.f32 %v2150, %v2152
    %2209 = vadd.xlane.f32.xlu0 %v2208
    %v2210 = vpop.xlane.xlu0 %2209
    %v2211 = vadd.f32 %v2154, %v2156
    %2212 = vadd.xlane.f32.xlu0 %v2211
    %v2213 = vpop.xlane.xlu0 %2212
    %v2214 = vadd.f32 %v2158, %v2160
    %2215 = vadd.xlane.f32.xlu0 %v2214
    %v2216 = vpop.xlane.xlu0 %2215
    %v2217 = vadd.f32 %v2162, %v2164
    %2218 = vadd.xlane.f32.xlu0 %v2217
    %v2219 = vpop.xlane.xlu0 %2218
    %v2220 = vadd.f32 %v2166, %v2168
    %2221 = vadd.xlane.f32.xlu0 %v2220
    %v2222 = vpop.xlane.xlu0 %2221
    %v2223 = vadd.f32 %v2170, %v2172
    %2224 = vadd.xlane.f32.xlu0 %v2223
    %v2225 = vpop.xlane.xlu0 %2224
    %v2226 = vadd.f32 %v2174, %v2176
    %2227 = vadd.xlane.f32.xlu0 %v2226
    %v2228 = vpop.xlane.xlu0 %2227
    %v2229 = vadd.f32 %v2178, %v2180
    %2230 = vadd.xlane.f32.xlu0 %v2229
    %v2231 = vpop.xlane.xlu0 %2230
    %v2232 = vadd.f32 %v2182, %v2184
    %2233 = vadd.xlane.f32.xlu0 %v2232
    %v2234 = vpop.xlane.xlu0 %2233
    %v2235 = vadd.f32 %v2186, %v2188
    %2236 = vadd.xlane.f32.xlu0 %v2235
    %v2237 = vpop.xlane.xlu0 %2236
    %v2238 = vadd.f32 %v2190, %v2192
    %2239 = vadd.xlane.f32.xlu0 %v2238
    %v2240 = vpop.xlane.xlu0 %2239
    %v2241 = vrcp.pop %v2195
    %v2242 = vrcp.pop %v2198
    %v2243 = vrcp.pop %v2201
    %v2244 = vrcp.pop %v2204
    %v2245 = vrcp.pop %v2207
    %v2246 = vrcp.pop %v2210
    %v2247 = vrcp.pop %v2213
    %v2248 = vrcp.pop %v2216
    %v2249 = vrcp.pop %v2219
    %v2250 = vrcp.pop %v2222
    %v2251 = vrcp.pop %v2225
    %v2252 = vrcp.pop %v2228
    %v2253 = vrcp.pop %v2231
    %v2254 = vrcp.pop %v2234
    %v2255 = vrcp.pop %v2237
    %v2256 = vrcp.pop %v2240
    %2257 = vmatpush.msra.mxu0 %v1740
    %2258 = vmatpush.msra.mxu0 %v1737
    %2259 = vmatpush.msra.mxu0 %v1734
    %2260 = vmatpush.msra.mxu0 %v1731
    %2261 = vmatpush.msra.mxu0 %v1728
    %2262 = vmatpush.msra.mxu0 %v1725
    %2263 = vmatpush.msra.mxu0 %v1722
    %2264 = vmatpush.msra.mxu0 %v1719
    %2265 = vmatpush.msra.mxu0 %v1716
    %2266 = vmatpush.msra.mxu0 %v1713
    %2267 = vmatpush.msra.mxu0 %v1710
    %2268 = vmatpush.msra.mxu0 %v1707
    %2269 = vmatpush.msra.mxu0 %v1704
    %2270 = vmatpush.msra.mxu0 %v1701
    %2271 = vmatpush.msra.mxu0 %v1698
    %2272 = vmatpush.msra.mxu0 %v1695
    %2273 = vmatmul.f32.gmra.mxu0 %v2130
    %v2274 = vpop.f32.mrf.mxu0
    %v2275 = vadd.f32 0.0, %v2274
    %2276 = vmatmul.f32.gmra.mxu0 %v2134
    %v2277 = vpop.f32.mrf.mxu0
    %v2278 = vadd.f32 0.0, %v2277
    %2279 = vmatmul.f32.gmra.mxu0 %v2138
    %v2280 = vpop.f32.mrf.mxu0
    %v2281 = vadd.f32 0.0, %v2280
    %2282 = vmatmul.f32.gmra.mxu0 %v2142
    %v2283 = vpop.f32.mrf.mxu0
    %v2284 = vadd.f32 0.0, %v2283
    %2285 = vmatmul.f32.gmra.mxu0 %v2146
    %v2286 = vpop.f32.mrf.mxu0
    %v2287 = vadd.f32 0.0, %v2286
    %2288 = vmatmul.f32.gmra.mxu0 %v2150
    %v2289 = vpop.f32.mrf.mxu0
    %v2290 = vadd.f32 0.0, %v2289
    %2291 = vmatmul.f32.gmra.mxu0 %v2154
    %v2292 = vpop.f32.mrf.mxu0
    %v2293 = vadd.f32 0.0, %v2292
    %2294 = vmatmul.f32.gmra.mxu0 %v2158
    %v2295 = vpop.f32.mrf.mxu0
    %v2296 = vadd.f32 0.0, %v2295
    %2297 = vmatmul.f32.gmra.mxu0 %v2162
    %v2298 = vpop.f32.mrf.mxu0
    %v2299 = vadd.f32 0.0, %v2298
    %2300 = vmatmul.f32.gmra.mxu0 %v2166
    %v2301 = vpop.f32.mrf.mxu0
    %v2302 = vadd.f32 0.0, %v2301
    %2303 = vmatmul.f32.gmra.mxu0 %v2170
    %v2304 = vpop.f32.mrf.mxu0
    %v2305 = vadd.f32 0.0, %v2304
    %2306 = vmatmul.f32.gmra.mxu0 %v2174
    %v2307 = vpop.f32.mrf.mxu0
    %v2308 = vadd.f32 0.0, %v2307
    %2309 = vmatmul.f32.gmra.mxu0 %v2178
    %v2310 = vpop.f32.mrf.mxu0
    %v2311 = vadd.f32 0.0, %v2310
    %2312 = vmatmul.f32.gmra.mxu0 %v2182
    %v2313 = vpop.f32.mrf.mxu0
    %v2314 = vadd.f32 0.0, %v2313
    %2315 = vmatmul.f32.gmra.mxu0 %v2186
    %v2316 = vpop.f32.mrf.mxu0
    %v2317 = vadd.f32 0.0, %v2316
    %2318 = vmatmul.f32.gmra.mxu0 %v2190
    %v2319 = vpop.f32.mrf.mxu0
    %v2320 = vadd.f32 0.0, %v2319
    %2321 = vdwg.mxu0
    %2322 = vmatpush.msra.mxu0 %v1788
    %2323 = vmatpush.msra.mxu0 %v1785
    %2324 = vmatpush.msra.mxu0 %v1782
    %2325 = vmatpush.msra.mxu0 %v1779
    %2326 = vmatpush.msra.mxu0 %v1776
    %2327 = vmatpush.msra.mxu0 %v1773
    %2328 = vmatpush.msra.mxu0 %v1770
    %2329 = vmatpush.msra.mxu0 %v1767
    %2330 = vmatpush.msra.mxu0 %v1764
    %2331 = vmatpush.msra.mxu0 %v1761
    %2332 = vmatpush.msra.mxu0 %v1758
    %2333 = vmatpush.msra.mxu0 %v1755
    %2334 = vmatpush.msra.mxu0 %v1752
    %2335 = vmatpush.msra.mxu0 %v1749
    %2336 = vmatpush.msra.mxu0 %v1746
    %2337 = vmatpush.msra.mxu0 %v1743
    %2338 = vmatmul.f32.gmra.mxu0 %v2132
    %v2339 = vpop.f32.mrf.mxu0
    %v2340 = vadd.f32 %v2275, %v2339
    %2341 = vmatmul.f32.gmra.mxu0 %v2136
    %v2342 = vpop.f32.mrf.mxu0
    %v2343 = vadd.f32 %v2278, %v2342
    %2344 = vmatmul.f32.gmra.mxu0 %v2140
    %v2345 = vpop.f32.mrf.mxu0
    %v2346 = vadd.f32 %v2281, %v2345
    %2347 = vmatmul.f32.gmra.mxu0 %v2144
    %v2348 = vpop.f32.mrf.mxu0
    %v2349 = vadd.f32 %v2284, %v2348
    %2350 = vmatmul.f32.gmra.mxu0 %v2148
    %v2351 = vpop.f32.mrf.mxu0
    %v2352 = vadd.f32 %v2287, %v2351
    %2353 = vmatmul.f32.gmra.mxu0 %v2152
    %v2354 = vpop.f32.mrf.mxu0
    %v2355 = vadd.f32 %v2290, %v2354
    %2356 = vmatmul.f32.gmra.mxu0 %v2156
    %v2357 = vpop.f32.mrf.mxu0
    %v2358 = vadd.f32 %v2293, %v2357
    %2359 = vmatmul.f32.gmra.mxu0 %v2160
    %v2360 = vpop.f32.mrf.mxu0
    %v2361 = vadd.f32 %v2296, %v2360
    %2362 = vmatmul.f32.gmra.mxu0 %v2164
    %v2363 = vpop.f32.mrf.mxu0
    %v2364 = vadd.f32 %v2299, %v2363
    %2365 = vmatmul.f32.gmra.mxu0 %v2168
    %v2366 = vpop.f32.mrf.mxu0
    %v2367 = vadd.f32 %v2302, %v2366
    %2368 = vmatmul.f32.gmra.mxu0 %v2172
    %v2369 = vpop.f32.mrf.mxu0
    %v2370 = vadd.f32 %v2305, %v2369
    %2371 = vmatmul.f32.gmra.mxu0 %v2176
    %v2372 = vpop.f32.mrf.mxu0
    %v2373 = vadd.f32 %v2308, %v2372
    %2374 = vmatmul.f32.gmra.mxu0 %v2180
    %v2375 = vpop.f32.mrf.mxu0
    %v2376 = vadd.f32 %v2311, %v2375
    %2377 = vmatmul.f32.gmra.mxu0 %v2184
    %v2378 = vpop.f32.mrf.mxu0
    %v2379 = vadd.f32 %v2314, %v2378
    %2380 = vmatmul.f32.gmra.mxu0 %v2188
    %v2381 = vpop.f32.mrf.mxu0
    %v2382 = vadd.f32 %v2317, %v2381
    %2383 = vmatmul.f32.gmra.mxu0 %v2192
    %v2384 = vpop.f32.mrf.mxu0
    %v2385 = vadd.f32 %v2320, %v2384
    %2386 = vdwg.mxu0
    %v2387 = vmul.f32 %v2340, %v2241
    %v2388 = vmul.f32 %v2343, %v2242
    %v2389 = vmul.f32 %v2346, %v2243
    %v2390 = vmul.f32 %v2349, %v2244
    %v2391 = vmul.f32 %v2352, %v2245
    %v2392 = vmul.f32 %v2355, %v2246
    %v2393 = vmul.f32 %v2358, %v2247
    %v2394 = vmul.f32 %v2361, %v2248
    %v2395 = vmul.f32 %v2364, %v2249
    %v2396 = vmul.f32 %v2367, %v2250
    %v2397 = vmul.f32 %v2370, %v2251
    %v2398 = vmul.f32 %v2373, %v2252
    %v2399 = vmul.f32 %v2376, %v2253
    %v2400 = vmul.f32 %v2379, %v2254
    %v2401 = vmul.f32 %v2382, %v2255
    %v2402 = vmul.f32 %v2385, %v2256
    %2403 = vrot.lane.b32.xlu0 %v1293, 120
    %v2404 = vpop.permute.xlu0 %2403
    %2405 = vrot.lane.b32.xlu0 %v1296, 120
    %v2406 = vpop.permute.xlu0 %2405
    %2407 = vrot.lane.b32.xlu0 %v1299, 120
    %v2408 = vpop.permute.xlu0 %2407
    %2409 = vrot.lane.b32.xlu0 %v1302, 120
    %v2410 = vpop.permute.xlu0 %2409
    %2411 = vrot.lane.b32.xlu0 %v1305, 120
    %v2412 = vpop.permute.xlu0 %2411
    %2413 = vrot.lane.b32.xlu0 %v1308, 120
    %v2414 = vpop.permute.xlu0 %2413
    %2415 = vrot.lane.b32.xlu0 %v1311, 120
    %v2416 = vpop.permute.xlu0 %2415
    %2417 = vrot.lane.b32.xlu0 %v1314, 120
    %v2418 = vpop.permute.xlu0 %2417
    %2419 = vrot.lane.b32.xlu0 %v1317, 120
    %v2420 = vpop.permute.xlu0 %2419
    %2421 = vrot.lane.b32.xlu0 %v1320, 120
    %v2422 = vpop.permute.xlu0 %2421
    %2423 = vrot.lane.b32.xlu0 %v1323, 120
    %v2424 = vpop.permute.xlu0 %2423
    %2425 = vrot.lane.b32.xlu0 %v1326, 120
    %v2426 = vpop.permute.xlu0 %2425
    %2427 = vrot.lane.b32.xlu0 %v1329, 120
    %v2428 = vpop.permute.xlu0 %2427
    %2429 = vrot.lane.b32.xlu0 %v1332, 120
    %v2430 = vpop.permute.xlu0 %2429
    %2431 = vrot.lane.b32.xlu0 %v1335, 120
    %v2432 = vpop.permute.xlu0 %2431
    %2433 = vrot.lane.b32.xlu0 %v1338, 120
    %v2434 = vpop.permute.xlu0 %2433
    %2435 = vrot.lane.b32.xlu0 %v1502, 120
    %v2436 = vpop.permute.xlu0 %2435
    %2437 = vrot.lane.b32.xlu0 %v1505, 120
    %v2438 = vpop.permute.xlu0 %2437
    %2439 = vrot.lane.b32.xlu0 %v1508, 120
    %v2440 = vpop.permute.xlu0 %2439
    %2441 = vrot.lane.b32.xlu0 %v1511, 120
    %v2442 = vpop.permute.xlu0 %2441
    %2443 = vrot.lane.b32.xlu0 %v1514, 120
    %v2444 = vpop.permute.xlu0 %2443
    %2445 = vrot.lane.b32.xlu0 %v1517, 120
    %v2446 = vpop.permute.xlu0 %2445
    %2447 = vrot.lane.b32.xlu0 %v1520, 120
    %v2448 = vpop.permute.xlu0 %2447
    %2449 = vrot.lane.b32.xlu0 %v1523, 120
    %v2450 = vpop.permute.xlu0 %2449
    %2451 = vrot.lane.b32.xlu0 %v1526, 120
    %v2452 = vpop.permute.xlu0 %2451
    %2453 = vrot.lane.b32.xlu0 %v1529, 120
    %v2454 = vpop.permute.xlu0 %2453
    %2455 = vrot.lane.b32.xlu0 %v1532, 120
    %v2456 = vpop.permute.xlu0 %2455
    %2457 = vrot.lane.b32.xlu0 %v1535, 120
    %v2458 = vpop.permute.xlu0 %2457
    %2459 = vrot.lane.b32.xlu0 %v1538, 120
    %v2460 = vpop.permute.xlu0 %2459
    %2461 = vrot.lane.b32.xlu0 %v1541, 120
    %v2462 = vpop.permute.xlu0 %2461
    %2463 = vrot.lane.b32.xlu0 %v1544, 120
    %v2464 = vpop.permute.xlu0 %2463
    %2465 = vrot.lane.b32.xlu0 %v1547, 120
    %v2466 = vpop.permute.xlu0 %2465
    %2467 = vrot.lane.b32.xlu0 %v1550, 120
    %v2468 = vpop.permute.xlu0 %2467
    %2469 = vrot.lane.b32.xlu0 %v1553, 120
    %v2470 = vpop.permute.xlu0 %2469
    %2471 = vrot.lane.b32.xlu0 %v1556, 120
    %v2472 = vpop.permute.xlu0 %2471
    %2473 = vrot.lane.b32.xlu0 %v1559, 120
    %v2474 = vpop.permute.xlu0 %2473
    %2475 = vrot.lane.b32.xlu0 %v1562, 120
    %v2476 = vpop.permute.xlu0 %2475
    %2477 = vrot.lane.b32.xlu0 %v1565, 120
    %v2478 = vpop.permute.xlu0 %2477
    %2479 = vrot.lane.b32.xlu0 %v1568, 120
    %v2480 = vpop.permute.xlu0 %2479
    %2481 = vrot.lane.b32.xlu0 %v1571, 120
    %v2482 = vpop.permute.xlu0 %2481
    %2483 = vrot.lane.b32.xlu0 %v1574, 120
    %v2484 = vpop.permute.xlu0 %2483
    %2485 = vrot.lane.b32.xlu0 %v1577, 120
    %v2486 = vpop.permute.xlu0 %2485
    %2487 = vrot.lane.b32.xlu0 %v1580, 120
    %v2488 = vpop.permute.xlu0 %2487
    %2489 = vrot.lane.b32.xlu0 %v1583, 120
    %v2490 = vpop.permute.xlu0 %2489
    %2491 = vrot.lane.b32.xlu0 %v1586, 120
    %v2492 = vpop.permute.xlu0 %2491
    %2493 = vrot.lane.b32.xlu0 %v1589, 120
    %v2494 = vpop.permute.xlu0 %2493
    %2495 = vrot.lane.b32.xlu0 %v1592, 120
    %v2496 = vpop.permute.xlu0 %2495
    %2497 = vrot.lane.b32.xlu0 %v1595, 120
    %v2498 = vpop.permute.xlu0 %2497
    %v2499 = vsel %vm1790, %v2404, 0
    %v2501 = vsel %vm1790, %v2406, 0
    %v2503 = vsel %vm1790, %v2408, 0
    %v2505 = vsel %vm1790, %v2410, 0
    %v2507 = vsel %vm1790, %v2412, 0
    %v2509 = vsel %vm1790, %v2414, 0
    %v2511 = vsel %vm1790, %v2416, 0
    %v2513 = vsel %vm1790, %v2418, 0
    %v2515 = vsel %vm1790, %v2420, 0
    %v2517 = vsel %vm1790, %v2422, 0
    %v2519 = vsel %vm1790, %v2424, 0
    %v2521 = vsel %vm1790, %v2426, 0
    %v2523 = vsel %vm1790, %v2428, 0
    %v2525 = vsel %vm1790, %v2430, 0
    %v2527 = vsel %vm1790, %v2432, 0
    %v2529 = vsel %vm1790, %v2434, 0
    %v2531 = vsel %vm1790, %v2436, 0
    %v2533 = vsel %vm1790, %v2438, 0
    %v2535 = vsel %vm1790, %v2440, 0
    %v2537 = vsel %vm1790, %v2442, 0
    %v2539 = vsel %vm1790, %v2444, 0
    %v2541 = vsel %vm1790, %v2446, 0
    %v2543 = vsel %vm1790, %v2448, 0
    %v2545 = vsel %vm1790, %v2450, 0
    %v2547 = vsel %vm1790, %v2452, 0
    %v2549 = vsel %vm1790, %v2454, 0
    %v2551 = vsel %vm1790, %v2456, 0
    %v2553 = vsel %vm1790, %v2458, 0
    %v2555 = vsel %vm1790, %v2460, 0
    %v2557 = vsel %vm1790, %v2462, 0
    %v2559 = vsel %vm1790, %v2464, 0
    %v2561 = vsel %vm1790, %v2466, 0
    %v2563 = vsel %vm1790, %v2468, 0
    %v2565 = vsel %vm1790, %v2470, 0
    %v2567 = vsel %vm1790, %v2472, 0
    %v2569 = vsel %vm1790, %v2474, 0
    %v2571 = vsel %vm1790, %v2476, 0
    %v2573 = vsel %vm1790, %v2478, 0
    %v2575 = vsel %vm1790, %v2480, 0
    %v2577 = vsel %vm1790, %v2482, 0
    %v2579 = vsel %vm1790, %v2484, 0
    %v2581 = vsel %vm1790, %v2486, 0
    %v2583 = vsel %vm1790, %v2488, 0
    %v2585 = vsel %vm1790, %v2490, 0
    %v2587 = vsel %vm1790, %v2492, 0
    %v2589 = vsel %vm1790, %v2494, 0
    %v2591 = vsel %vm1790, %v2496, 0
    %v2593 = vsel %vm1790, %v2498, 0
    %2595 = vmatpush.xpose.msra.mxu0 %v2561
    %2596 = vmatpush.xpose.msra.mxu0 %v2559
    %2597 = vmatpush.xpose.msra.mxu0 %v2557
    %2598 = vmatpush.xpose.msra.mxu0 %v2555
    %2599 = vmatpush.xpose.msra.mxu0 %v2553
    %2600 = vmatpush.xpose.msra.mxu0 %v2551
    %2601 = vmatpush.xpose.msra.mxu0 %v2549
    %2602 = vmatpush.xpose.msra.mxu0 %v2547
    %2603 = vmatpush.xpose.msra.mxu0 %v2545
    %2604 = vmatpush.xpose.msra.mxu0 %v2543
    %2605 = vmatpush.xpose.msra.mxu0 %v2541
    %2606 = vmatpush.xpose.msra.mxu0 %v2539
    %2607 = vmatpush.xpose.msra.mxu0 %v2537
    %2608 = vmatpush.xpose.msra.mxu0 %v2535
    %2609 = vmatpush.xpose.msra.mxu0 %v2533
    %2610 = vmatpush.xpose.msra.mxu0 %v2531
    %2611 = vmatmul.f32.gmra.mxu0 %v2499
    %v2612 = vpop.f32.mrf.mxu0
    %v2613 = vadd.f32 0.0, %v2612
    %2614 = vmatmul.f32.gmra.mxu0 %v2501
    %v2615 = vpop.f32.mrf.mxu0
    %v2616 = vadd.f32 0.0, %v2615
    %2617 = vmatmul.f32.gmra.mxu0 %v2503
    %v2618 = vpop.f32.mrf.mxu0
    %v2619 = vadd.f32 0.0, %v2618
    %2620 = vmatmul.f32.gmra.mxu0 %v2505
    %v2621 = vpop.f32.mrf.mxu0
    %v2622 = vadd.f32 0.0, %v2621
    %2623 = vmatmul.f32.gmra.mxu0 %v2507
    %v2624 = vpop.f32.mrf.mxu0
    %v2625 = vadd.f32 0.0, %v2624
    %2626 = vmatmul.f32.gmra.mxu0 %v2509
    %v2627 = vpop.f32.mrf.mxu0
    %v2628 = vadd.f32 0.0, %v2627
    %2629 = vmatmul.f32.gmra.mxu0 %v2511
    %v2630 = vpop.f32.mrf.mxu0
    %v2631 = vadd.f32 0.0, %v2630
    %2632 = vmatmul.f32.gmra.mxu0 %v2513
    %v2633 = vpop.f32.mrf.mxu0
    %v2634 = vadd.f32 0.0, %v2633
    %2635 = vmatmul.f32.gmra.mxu0 %v2515
    %v2636 = vpop.f32.mrf.mxu0
    %v2637 = vadd.f32 0.0, %v2636
    %2638 = vmatmul.f32.gmra.mxu0 %v2517
    %v2639 = vpop.f32.mrf.mxu0
    %v2640 = vadd.f32 0.0, %v2639
    %2641 = vmatmul.f32.gmra.mxu0 %v2519
    %v2642 = vpop.f32.mrf.mxu0
    %v2643 = vadd.f32 0.0, %v2642
    %2644 = vmatmul.f32.gmra.mxu0 %v2521
    %v2645 = vpop.f32.mrf.mxu0
    %v2646 = vadd.f32 0.0, %v2645
    %2647 = vmatmul.f32.gmra.mxu0 %v2523
    %v2648 = vpop.f32.mrf.mxu0
    %v2649 = vadd.f32 0.0, %v2648
    %2650 = vmatmul.f32.gmra.mxu0 %v2525
    %v2651 = vpop.f32.mrf.mxu0
    %v2652 = vadd.f32 0.0, %v2651
    %2653 = vmatmul.f32.gmra.mxu0 %v2527
    %v2654 = vpop.f32.mrf.mxu0
    %v2655 = vadd.f32 0.0, %v2654
    %2656 = vmatmul.f32.gmra.mxu0 %v2529
    %v2657 = vpop.f32.mrf.mxu0
    %v2658 = vadd.f32 0.0, %v2657
    %2659 = vdwg.mxu0
    %2660 = vmatpush.xpose.msra.mxu0 %v2593
    %2661 = vmatpush.xpose.msra.mxu0 %v2591
    %2662 = vmatpush.xpose.msra.mxu0 %v2589
    %2663 = vmatpush.xpose.msra.mxu0 %v2587
    %2664 = vmatpush.xpose.msra.mxu0 %v2585
    %2665 = vmatpush.xpose.msra.mxu0 %v2583
    %2666 = vmatpush.xpose.msra.mxu0 %v2581
    %2667 = vmatpush.xpose.msra.mxu0 %v2579
    %2668 = vmatpush.xpose.msra.mxu0 %v2577
    %2669 = vmatpush.xpose.msra.mxu0 %v2575
    %2670 = vmatpush.xpose.msra.mxu0 %v2573
    %2671 = vmatpush.xpose.msra.mxu0 %v2571
    %2672 = vmatpush.xpose.msra.mxu0 %v2569
    %2673 = vmatpush.xpose.msra.mxu0 %v2567
    %2674 = vmatpush.xpose.msra.mxu0 %v2565
    %2675 = vmatpush.xpose.msra.mxu0 %v2563
    %2676 = vmatmul.f32.gmra.mxu0 %v2499
    %v2677 = vpop.f32.mrf.mxu0
    %v2678 = vadd.f32 0.0, %v2677
    %2679 = vmatmul.f32.gmra.mxu0 %v2501
    %v2680 = vpop.f32.mrf.mxu0
    %v2681 = vadd.f32 0.0, %v2680
    %2682 = vmatmul.f32.gmra.mxu0 %v2503
    %v2683 = vpop.f32.mrf.mxu0
    %v2684 = vadd.f32 0.0, %v2683
    %2685 = vmatmul.f32.gmra.mxu0 %v2505
    %v2686 = vpop.f32.mrf.mxu0
    %v2687 = vadd.f32 0.0, %v2686
    %2688 = vmatmul.f32.gmra.mxu0 %v2507
    %v2689 = vpop.f32.mrf.mxu0
    %v2690 = vadd.f32 0.0, %v2689
    %2691 = vmatmul.f32.gmra.mxu0 %v2509
    %v2692 = vpop.f32.mrf.mxu0
    %v2693 = vadd.f32 0.0, %v2692
    %2694 = vmatmul.f32.gmra.mxu0 %v2511
    %v2695 = vpop.f32.mrf.mxu0
    %v2696 = vadd.f32 0.0, %v2695
    %2697 = vmatmul.f32.gmra.mxu0 %v2513
    %v2698 = vpop.f32.mrf.mxu0
    %v2699 = vadd.f32 0.0, %v2698
    %2700 = vmatmul.f32.gmra.mxu0 %v2515
    %v2701 = vpop.f32.mrf.mxu0
    %v2702 = vadd.f32 0.0, %v2701
    %2703 = vmatmul.f32.gmra.mxu0 %v2517
    %v2704 = vpop.f32.mrf.mxu0
    %v2705 = vadd.f32 0.0, %v2704
    %2706 = vmatmul.f32.gmra.mxu0 %v2519
    %v2707 = vpop.f32.mrf.mxu0
    %v2708 = vadd.f32 0.0, %v2707
    %2709 = vmatmul.f32.gmra.mxu0 %v2521
    %v2710 = vpop.f32.mrf.mxu0
    %v2711 = vadd.f32 0.0, %v2710
    %2712 = vmatmul.f32.gmra.mxu0 %v2523
    %v2713 = vpop.f32.mrf.mxu0
    %v2714 = vadd.f32 0.0, %v2713
    %2715 = vmatmul.f32.gmra.mxu0 %v2525
    %v2716 = vpop.f32.mrf.mxu0
    %v2717 = vadd.f32 0.0, %v2716
    %2718 = vmatmul.f32.gmra.mxu0 %v2527
    %v2719 = vpop.f32.mrf.mxu0
    %v2720 = vadd.f32 0.0, %v2719
    %2721 = vmatmul.f32.gmra.mxu0 %v2529
    %v2722 = vpop.f32.mrf.mxu0
    %v2723 = vadd.f32 0.0, %v2722
    %2724 = vdwg.mxu0
    %v2725 = vmax.f32 %v2613, %v2678
    %2726 = vmax.xlane.f32.xlu0 %v2725
    %v2727 = vpop.xlane.xlu0 %2726
    %v2728 = vmax.f32 %v2616, %v2681
    %2729 = vmax.xlane.f32.xlu0 %v2728
    %v2730 = vpop.xlane.xlu0 %2729
    %v2731 = vmax.f32 %v2619, %v2684
    %2732 = vmax.xlane.f32.xlu0 %v2731
    %v2733 = vpop.xlane.xlu0 %2732
    %v2734 = vmax.f32 %v2622, %v2687
    %2735 = vmax.xlane.f32.xlu0 %v2734
    %v2736 = vpop.xlane.xlu0 %2735
    %v2737 = vmax.f32 %v2625, %v2690
    %2738 = vmax.xlane.f32.xlu0 %v2737
    %v2739 = vpop.xlane.xlu0 %2738
    %v2740 = vmax.f32 %v2628, %v2693
    %2741 = vmax.xlane.f32.xlu0 %v2740
    %v2742 = vpop.xlane.xlu0 %2741
    %v2743 = vmax.f32 %v2631, %v2696
    %2744 = vmax.xlane.f32.xlu0 %v2743
    %v2745 = vpop.xlane.xlu0 %2744
    %v2746 = vmax.f32 %v2634, %v2699
    %2747 = vmax.xlane.f32.xlu0 %v2746
    %v2748 = vpop.xlane.xlu0 %2747
    %v2749 = vmax.f32 %v2637, %v2702
    %2750 = vmax.xlane.f32.xlu0 %v2749
    %v2751 = vpop.xlane.xlu0 %2750
    %v2752 = vmax.f32 %v2640, %v2705
    %2753 = vmax.xlane.f32.xlu0 %v2752
    %v2754 = vpop.xlane.xlu0 %2753
    %v2755 = vmax.f32 %v2643, %v2708
    %2756 = vmax.xlane.f32.xlu0 %v2755
    %v2757 = vpop.xlane.xlu0 %2756
    %v2758 = vmax.f32 %v2646, %v2711
    %2759 = vmax.xlane.f32.xlu0 %v2758
    %v2760 = vpop.xlane.xlu0 %2759
    %v2761 = vmax.f32 %v2649, %v2714
    %2762 = vmax.xlane.f32.xlu0 %v2761
    %v2763 = vpop.xlane.xlu0 %2762
    %v2764 = vmax.f32 %v2652, %v2717
    %2765 = vmax.xlane.f32.xlu0 %v2764
    %v2766 = vpop.xlane.xlu0 %2765
    %v2767 = vmax.f32 %v2655, %v2720
    %2768 = vmax.xlane.f32.xlu0 %v2767
    %v2769 = vpop.xlane.xlu0 %2768
    %v2770 = vmax.f32 %v2658, %v2723
    %2771 = vmax.xlane.f32.xlu0 %v2770
    %v2772 = vpop.xlane.xlu0 %2771
    %v2773 = vsub.f32 %v2613, %v2727
    %v2774 = vsub.f32 %v2678, %v2727
    %v2775 = vsub.f32 %v2616, %v2730
    %v2776 = vsub.f32 %v2681, %v2730
    %v2777 = vsub.f32 %v2619, %v2733
    %v2778 = vsub.f32 %v2684, %v2733
    %v2779 = vsub.f32 %v2622, %v2736
    %v2780 = vsub.f32 %v2687, %v2736
    %v2781 = vsub.f32 %v2625, %v2739
    %v2782 = vsub.f32 %v2690, %v2739
    %v2783 = vsub.f32 %v2628, %v2742
    %v2784 = vsub.f32 %v2693, %v2742
    %v2785 = vsub.f32 %v2631, %v2745
    %v2786 = vsub.f32 %v2696, %v2745
    %v2787 = vsub.f32 %v2634, %v2748
    %v2788 = vsub.f32 %v2699, %v2748
    %v2789 = vsub.f32 %v2637, %v2751
    %v2790 = vsub.f32 %v2702, %v2751
    %v2791 = vsub.f32 %v2640, %v2754
    %v2792 = vsub.f32 %v2705, %v2754
    %v2793 = vsub.f32 %v2643, %v2757
    %v2794 = vsub.f32 %v2708, %v2757
    %v2795 = vsub.f32 %v2646, %v2760
    %v2796 = vsub.f32 %v2711, %v2760
    %v2797 = vsub.f32 %v2649, %v2763
    %v2798 = vsub.f32 %v2714, %v2763
    %v2799 = vsub.f32 %v2652, %v2766
    %v2800 = vsub.f32 %v2717, %v2766
    %v2801 = vsub.f32 %v2655, %v2769
    %v2802 = vsub.f32 %v2720, %v2769
    %v2803 = vsub.f32 %v2658, %v2772
    %v2804 = vsub.f32 %v2723, %v2772
    %v2805 = vmul.f32 %v2773, 1.442695
    %v2806 = vpow.pop %v2805
    %v2807 = vmul.f32 %v2774, 1.442695
    %v2808 = vpow.pop %v2807
    %v2809 = vmul.f32 %v2775, 1.442695
    %v2810 = vpow.pop %v2809
    %v2811 = vmul.f32 %v2776, 1.442695
    %v2812 = vpow.pop %v2811
    %v2813 = vmul.f32 %v2777, 1.442695
    %v2814 = vpow.pop %v2813
    %v2815 = vmul.f32 %v2778, 1.442695
    %v2816 = vpow.pop %v2815
    %v2817 = vmul.f32 %v2779, 1.442695
    %v2818 = vpow.pop %v2817
    %v2819 = vmul.f32 %v2780, 1.442695
    %v2820 = vpow.pop %v2819
    %v2821 = vmul.f32 %v2781, 1.442695
    %v2822 = vpow.pop %v2821
    %v2823 = vmul.f32 %v2782, 1.442695
    %v2824 = vpow.pop %v2823
    %v2825 = vmul.f32 %v2783, 1.442695
    %v2826 = vpow.pop %v2825
    %v2827 = vmul.f32 %v2784, 1.442695
    %v2828 = vpow.pop %v2827
    %v2829 = vmul.f32 %v2785, 1.442695
    %v2830 = vpow.pop %v2829
    %v2831 = vmul.f32 %v2786, 1.442695
    %v2832 = vpow.pop %v2831
    %v2833 = vmul.f32 %v2787, 1.442695
    %v2834 = vpow.pop %v2833
    %v2835 = vmul.f32 %v2788, 1.442695
    %v2836 = vpow.pop %v2835
    %v2837 = vmul.f32 %v2789, 1.442695
    %v2838 = vpow.pop %v2837
    %v2839 = vmul.f32 %v2790, 1.442695
    %v2840 = vpow.pop %v2839
    %v2841 = vmul.f32 %v2791, 1.442695
    %v2842 = vpow.pop %v2841
    %v2843 = vmul.f32 %v2792, 1.442695
    %v2844 = vpow.pop %v2843
    %v2845 = vmul.f32 %v2793, 1.442695
    %v2846 = vpow.pop %v2845
    %v2847 = vmul.f32 %v2794, 1.442695
    %v2848 = vpow.pop %v2847
    %v2849 = vmul.f32 %v2795, 1.442695
    %v2850 = vpow.pop %v2849
    %v2851 = vmul.f32 %v2796, 1.442695
    %v2852 = vpow.pop %v2851
    %v2853 = vmul.f32 %v2797, 1.442695
    %v2854 = vpow.pop %v2853
    %v2855 = vmul.f32 %v2798, 1.442695
    %v2856 = vpow.pop %v2855
    %v2857 = vmul.f32 %v2799, 1.442695
    %v2858 = vpow.pop %v2857
    %v2859 = vmul.f32 %v2800, 1.442695
    %v2860 = vpow.pop %v2859
    %v2861 = vmul.f32 %v2801, 1.442695
    %v2862 = vpow.pop %v2861
    %v2863 = vmul.f32 %v2802, 1.442695
    %v2864 = vpow.pop %v2863
    %v2865 = vmul.f32 %v2803, 1.442695
    %v2866 = vpow.pop %v2865
    %v2867 = vmul.f32 %v2804, 1.442695
    %v2868 = vpow.pop %v2867
    %v2869 = vadd.f32 %v2806, %v2808
    %2870 = vadd.xlane.f32.xlu0 %v2869
    %v2871 = vpop.xlane.xlu0 %2870
    %v2872 = vadd.f32 %v2810, %v2812
    %2873 = vadd.xlane.f32.xlu0 %v2872
    %v2874 = vpop.xlane.xlu0 %2873
    %v2875 = vadd.f32 %v2814, %v2816
    %2876 = vadd.xlane.f32.xlu0 %v2875
    %v2877 = vpop.xlane.xlu0 %2876
    %v2878 = vadd.f32 %v2818, %v2820
    %2879 = vadd.xlane.f32.xlu0 %v2878
    %v2880 = vpop.xlane.xlu0 %2879
    %v2881 = vadd.f32 %v2822, %v2824
    %2882 = vadd.xlane.f32.xlu0 %v2881
    %v2883 = vpop.xlane.xlu0 %2882
    %v2884 = vadd.f32 %v2826, %v2828
    %2885 = vadd.xlane.f32.xlu0 %v2884
    %v2886 = vpop.xlane.xlu0 %2885
    %v2887 = vadd.f32 %v2830, %v2832
    %2888 = vadd.xlane.f32.xlu0 %v2887
    %v2889 = vpop.xlane.xlu0 %2888
    %v2890 = vadd.f32 %v2834, %v2836
    %2891 = vadd.xlane.f32.xlu0 %v2890
    %v2892 = vpop.xlane.xlu0 %2891
    %v2893 = vadd.f32 %v2838, %v2840
    %2894 = vadd.xlane.f32.xlu0 %v2893
    %v2895 = vpop.xlane.xlu0 %2894
    %v2896 = vadd.f32 %v2842, %v2844
    %2897 = vadd.xlane.f32.xlu0 %v2896
    %v2898 = vpop.xlane.xlu0 %2897
    %v2899 = vadd.f32 %v2846, %v2848
    %2900 = vadd.xlane.f32.xlu0 %v2899
    %v2901 = vpop.xlane.xlu0 %2900
    %v2902 = vadd.f32 %v2850, %v2852
    %2903 = vadd.xlane.f32.xlu0 %v2902
    %v2904 = vpop.xlane.xlu0 %2903
    %v2905 = vadd.f32 %v2854, %v2856
    %2906 = vadd.xlane.f32.xlu0 %v2905
    %v2907 = vpop.xlane.xlu0 %2906
    %v2908 = vadd.f32 %v2858, %v2860
    %2909 = vadd.xlane.f32.xlu0 %v2908
    %v2910 = vpop.xlane.xlu0 %2909
    %v2911 = vadd.f32 %v2862, %v2864
    %2912 = vadd.xlane.f32.xlu0 %v2911
    %v2913 = vpop.xlane.xlu0 %2912
    %v2914 = vadd.f32 %v2866, %v2868
    %2915 = vadd.xlane.f32.xlu0 %v2914
    %v2916 = vpop.xlane.xlu0 %2915
    %v2917 = vrcp.pop %v2871
    %v2918 = vrcp.pop %v2874
    %v2919 = vrcp.pop %v2877
    %v2920 = vrcp.pop %v2880
    %v2921 = vrcp.pop %v2883
    %v2922 = vrcp.pop %v2886
    %v2923 = vrcp.pop %v2889
    %v2924 = vrcp.pop %v2892
    %v2925 = vrcp.pop %v2895
    %v2926 = vrcp.pop %v2898
    %v2927 = vrcp.pop %v2901
    %v2928 = vrcp.pop %v2904
    %v2929 = vrcp.pop %v2907
    %v2930 = vrcp.pop %v2910
    %v2931 = vrcp.pop %v2913
    %v2932 = vrcp.pop %v2916
    %2965 = vrot.lane.b32.xlu0 %v1695, 120
    %v2966 = vpop.permute.xlu0 %2965
    %2967 = vrot.lane.b32.xlu0 %v1698, 120
    %v2968 = vpop.permute.xlu0 %2967
    %2969 = vrot.lane.b32.xlu0 %v1701, 120
    %v2970 = vpop.permute.xlu0 %2969
    %2971 = vrot.lane.b32.xlu0 %v1704, 120
    %v2972 = vpop.permute.xlu0 %2971
    %2973 = vrot.lane.b32.xlu0 %v1707, 120
    %v2974 = vpop.permute.xlu0 %2973
    %2975 = vrot.lane.b32.xlu0 %v1710, 120
    %v2976 = vpop.permute.xlu0 %2975
    %2977 = vrot.lane.b32.xlu0 %v1713, 120
    %v2978 = vpop.permute.xlu0 %2977
    %2979 = vrot.lane.b32.xlu0 %v1716, 120
    %v2980 = vpop.permute.xlu0 %2979
    %2981 = vrot.lane.b32.xlu0 %v1719, 120
    %v2982 = vpop.permute.xlu0 %2981
    %2983 = vrot.lane.b32.xlu0 %v1722, 120
    %v2984 = vpop.permute.xlu0 %2983
    %2985 = vrot.lane.b32.xlu0 %v1725, 120
    %v2986 = vpop.permute.xlu0 %2985
    %2987 = vrot.lane.b32.xlu0 %v1728, 120
    %v2988 = vpop.permute.xlu0 %2987
    %2989 = vrot.lane.b32.xlu0 %v1731, 120
    %v2990 = vpop.permute.xlu0 %2989
    %2991 = vrot.lane.b32.xlu0 %v1734, 120
    %v2992 = vpop.permute.xlu0 %2991
    %2993 = vrot.lane.b32.xlu0 %v1737, 120
    %v2994 = vpop.permute.xlu0 %2993
    %2995 = vrot.lane.b32.xlu0 %v1740, 120
    %v2996 = vpop.permute.xlu0 %2995
    %2997 = vrot.lane.b32.xlu0 %v1743, 120
    %v2998 = vpop.permute.xlu0 %2997
    %2999 = vrot.lane.b32.xlu0 %v1746, 120
    %v3000 = vpop.permute.xlu0 %2999
    %3001 = vrot.lane.b32.xlu0 %v1749, 120
    %v3002 = vpop.permute.xlu0 %3001
    %3003 = vrot.lane.b32.xlu0 %v1752, 120
    %v3004 = vpop.permute.xlu0 %3003
    %3005 = vrot.lane.b32.xlu0 %v1755, 120
    %v3006 = vpop.permute.xlu0 %3005
    %3007 = vrot.lane.b32.xlu0 %v1758, 120
    %v3008 = vpop.permute.xlu0 %3007
    %3009 = vrot.lane.b32.xlu0 %v1761, 120
    %v3010 = vpop.permute.xlu0 %3009
    %3011 = vrot.lane.b32.xlu0 %v1764, 120
    %v3012 = vpop.permute.xlu0 %3011
    %3013 = vrot.lane.b32.xlu0 %v1767, 120
    %v3014 = vpop.permute.xlu0 %3013
    %3015 = vrot.lane.b32.xlu0 %v1770, 120
    %v3016 = vpop.permute.xlu0 %3015
    %3017 = vrot.lane.b32.xlu0 %v1773, 120
    %v3018 = vpop.permute.xlu0 %3017
    %3019 = vrot.lane.b32.xlu0 %v1776, 120
    %v3020 = vpop.permute.xlu0 %3019
    %3021 = vrot.lane.b32.xlu0 %v1779, 120
    %v3022 = vpop.permute.xlu0 %3021
    %3023 = vrot.lane.b32.xlu0 %v1782, 120
    %v3024 = vpop.permute.xlu0 %3023
    %3025 = vrot.lane.b32.xlu0 %v1785, 120
    %v3026 = vpop.permute.xlu0 %3025
    %3027 = vrot.lane.b32.xlu0 %v1788, 120
    %v3028 = vpop.permute.xlu0 %3027
    %3061 = vmatpush.msra.mxu0 %v2996
    %3062 = vmatpush.msra.mxu0 %v2994
    %3063 = vmatpush.msra.mxu0 %v2992
    %3064 = vmatpush.msra.mxu0 %v2990
    %3065 = vmatpush.msra.mxu0 %v2988
    %3066 = vmatpush.msra.mxu0 %v2986
    %3067 = vmatpush.msra.mxu0 %v2984
    %3068 = vmatpush.msra.mxu0 %v2982
    %3069 = vmatpush.msra.mxu0 %v2980
    %3070 = vmatpush.msra.mxu0 %v2978
    %3071 = vmatpush.msra.mxu0 %v2976
    %3072 = vmatpush.msra.mxu0 %v2974
    %3073 = vmatpush.msra.mxu0 %v2972
    %3074 = vmatpush.msra.mxu0 %v2970
    %3075 = vmatpush.msra.mxu0 %v2968
    %3076 = vmatpush.msra.mxu0 %v2966
    %3077 = vmatmul.f32.gmra.mxu0 %v2806
    %v3078 = vpop.f32.mrf.mxu0
    %v3079 = vadd.f32 0.0, %v3078
    %3080 = vmatmul.f32.gmra.mxu0 %v2810
    %v3081 = vpop.f32.mrf.mxu0
    %v3082 = vadd.f32 0.0, %v3081
    %3083 = vmatmul.f32.gmra.mxu0 %v2814
    %v3084 = vpop.f32.mrf.mxu0
    %v3085 = vadd.f32 0.0, %v3084
    %3086 = vmatmul.f32.gmra.mxu0 %v2818
    %v3087 = vpop.f32.mrf.mxu0
    %v3088 = vadd.f32 0.0, %v3087
    %3089 = vmatmul.f32.gmra.mxu0 %v2822
    %v3090 = vpop.f32.mrf.mxu0
    %v3091 = vadd.f32 0.0, %v3090
    %3092 = vmatmul.f32.gmra.mxu0 %v2826
    %v3093 = vpop.f32.mrf.mxu0
    %v3094 = vadd.f32 0.0, %v3093
    %3095 = vmatmul.f32.gmra.mxu0 %v2830
    %v3096 = vpop.f32.mrf.mxu0
    %v3097 = vadd.f32 0.0, %v3096
    %3098 = vmatmul.f32.gmra.mxu0 %v2834
    %v3099 = vpop.f32.mrf.mxu0
    %v3100 = vadd.f32 0.0, %v3099
    %3101 = vmatmul.f32.gmra.mxu0 %v2838
    %v3102 = vpop.f32.mrf.mxu0
    %v3103 = vadd.f32 0.0, %v3102
    %3104 = vmatmul.f32.gmra.mxu0 %v2842
    %v3105 = vpop.f32.mrf.mxu0
    %v3106 = vadd.f32 0.0, %v3105
    %3107 = vmatmul.f32.gmra.mxu0 %v2846
    %v3108 = vpop.f32.mrf.mxu0
    %v3109 = vadd.f32 0.0, %v3108
    %3110 = vmatmul.f32.gmra.mxu0 %v2850
    %v3111 = vpop.f32.mrf.mxu0
    %v3112 = vadd.f32 0.0, %v3111
    %3113 = vmatmul.f32.gmra.mxu0 %v2854
    %v3114 = vpop.f32.mrf.mxu0
    %v3115 = vadd.f32 0.0, %v3114
    %3116 = vmatmul.f32.gmra.mxu0 %v2858
    %v3117 = vpop.f32.mrf.mxu0
    %v3118 = vadd.f32 0.0, %v3117
    %3119 = vmatmul.f32.gmra.mxu0 %v2862
    %v3120 = vpop.f32.mrf.mxu0
    %v3121 = vadd.f32 0.0, %v3120
    %3122 = vmatmul.f32.gmra.mxu0 %v2866
    %v3123 = vpop.f32.mrf.mxu0
    %v3124 = vadd.f32 0.0, %v3123
    %3125 = vdwg.mxu0
    %3126 = vmatpush.msra.mxu0 %v3028
    %3127 = vmatpush.msra.mxu0 %v3026
    %3128 = vmatpush.msra.mxu0 %v3024
    %3129 = vmatpush.msra.mxu0 %v3022
    %3130 = vmatpush.msra.mxu0 %v3020
    %3131 = vmatpush.msra.mxu0 %v3018
    %3132 = vmatpush.msra.mxu0 %v3016
    %3133 = vmatpush.msra.mxu0 %v3014
    %3134 = vmatpush.msra.mxu0 %v3012
    %3135 = vmatpush.msra.mxu0 %v3010
    %3136 = vmatpush.msra.mxu0 %v3008
    %3137 = vmatpush.msra.mxu0 %v3006
    %3138 = vmatpush.msra.mxu0 %v3004
    %3139 = vmatpush.msra.mxu0 %v3002
    %3140 = vmatpush.msra.mxu0 %v3000
    %3141 = vmatpush.msra.mxu0 %v2998
    %3142 = vmatmul.f32.gmra.mxu0 %v2808
    %v3143 = vpop.f32.mrf.mxu0
    %v3144 = vadd.f32 %v3079, %v3143
    %3145 = vmatmul.f32.gmra.mxu0 %v2812
    %v3146 = vpop.f32.mrf.mxu0
    %v3147 = vadd.f32 %v3082, %v3146
    %3148 = vmatmul.f32.gmra.mxu0 %v2816
    %v3149 = vpop.f32.mrf.mxu0
    %v3150 = vadd.f32 %v3085, %v3149
    %3151 = vmatmul.f32.gmra.mxu0 %v2820
    %v3152 = vpop.f32.mrf.mxu0
    %v3153 = vadd.f32 %v3088, %v3152
    %3154 = vmatmul.f32.gmra.mxu0 %v2824
    %v3155 = vpop.f32.mrf.mxu0
    %v3156 = vadd.f32 %v3091, %v3155
    %3157 = vmatmul.f32.gmra.mxu0 %v2828
    %v3158 = vpop.f32.mrf.mxu0
    %v3159 = vadd.f32 %v3094, %v3158
    %3160 = vmatmul.f32.gmra.mxu0 %v2832
    %v3161 = vpop.f32.mrf.mxu0
    %v3162 = vadd.f32 %v3097, %v3161
    %3163 = vmatmul.f32.gmra.mxu0 %v2836
    %v3164 = vpop.f32.mrf.mxu0
    %v3165 = vadd.f32 %v3100, %v3164
    %3166 = vmatmul.f32.gmra.mxu0 %v2840
    %v3167 = vpop.f32.mrf.mxu0
    %v3168 = vadd.f32 %v3103, %v3167
    %3169 = vmatmul.f32.gmra.mxu0 %v2844
    %v3170 = vpop.f32.mrf.mxu0
    %v3171 = vadd.f32 %v3106, %v3170
    %3172 = vmatmul.f32.gmra.mxu0 %v2848
    %v3173 = vpop.f32.mrf.mxu0
    %v3174 = vadd.f32 %v3109, %v3173
    %3175 = vmatmul.f32.gmra.mxu0 %v2852
    %v3176 = vpop.f32.mrf.mxu0
    %v3177 = vadd.f32 %v3112, %v3176
    %3178 = vmatmul.f32.gmra.mxu0 %v2856
    %v3179 = vpop.f32.mrf.mxu0
    %v3180 = vadd.f32 %v3115, %v3179
    %3181 = vmatmul.f32.gmra.mxu0 %v2860
    %v3182 = vpop.f32.mrf.mxu0
    %v3183 = vadd.f32 %v3118, %v3182
    %3184 = vmatmul.f32.gmra.mxu0 %v2864
    %v3185 = vpop.f32.mrf.mxu0
    %v3186 = vadd.f32 %v3121, %v3185
    %3187 = vmatmul.f32.gmra.mxu0 %v2868
    %v3188 = vpop.f32.mrf.mxu0
    %v3189 = vadd.f32 %v3124, %v3188
    %3190 = vdwg.mxu0
    %v3191 = vmul.f32 %v3144, %v2917
    %v3192 = vmul.f32 %v3147, %v2918
    %v3193 = vmul.f32 %v3150, %v2919
    %v3194 = vmul.f32 %v3153, %v2920
    %v3195 = vmul.f32 %v3156, %v2921
    %v3196 = vmul.f32 %v3159, %v2922
    %v3197 = vmul.f32 %v3162, %v2923
    %v3198 = vmul.f32 %v3165, %v2924
    %v3199 = vmul.f32 %v3168, %v2925
    %v3200 = vmul.f32 %v3171, %v2926
    %v3201 = vmul.f32 %v3174, %v2927
    %v3202 = vmul.f32 %v3177, %v2928
    %v3203 = vmul.f32 %v3180, %v2929
    %v3204 = vmul.f32 %v3183, %v2930
    %v3205 = vmul.f32 %v3186, %v2931
    %v3206 = vmul.f32 %v3189, %v2932
    %3207 = vrot.lane.b32.xlu0 %v1293, 112
    %v3208 = vpop.permute.xlu0 %3207
    %3209 = vrot.lane.b32.xlu0 %v1296, 112
    %v3210 = vpop.permute.xlu0 %3209
    %3211 = vrot.lane.b32.xlu0 %v1299, 112
    %v3212 = vpop.permute.xlu0 %3211
    %3213 = vrot.lane.b32.xlu0 %v1302, 112
    %v3214 = vpop.permute.xlu0 %3213
    %3215 = vrot.lane.b32.xlu0 %v1305, 112
    %v3216 = vpop.permute.xlu0 %3215
    %3217 = vrot.lane.b32.xlu0 %v1308, 112
    %v3218 = vpop.permute.xlu0 %3217
    %3219 = vrot.lane.b32.xlu0 %v1311, 112
    %v3220 = vpop.permute.xlu0 %3219
    %3221 = vrot.lane.b32.xlu0 %v1314, 112
    %v3222 = vpop.permute.xlu0 %3221
    %3223 = vrot.lane.b32.xlu0 %v1317, 112
    %v3224 = vpop.permute.xlu0 %3223
    %3225 = vrot.lane.b32.xlu0 %v1320, 112
    %v3226 = vpop.permute.xlu0 %3225
    %3227 = vrot.lane.b32.xlu0 %v1323, 112
    %v3228 = vpop.permute.xlu0 %3227
    %3229 = vrot.lane.b32.xlu0 %v1326, 112
    %v3230 = vpop.permute.xlu0 %3229
    %3231 = vrot.lane.b32.xlu0 %v1329, 112
    %v3232 = vpop.permute.xlu0 %3231
    %3233 = vrot.lane.b32.xlu0 %v1332, 112
    %v3234 = vpop.permute.xlu0 %3233
    %3235 = vrot.lane.b32.xlu0 %v1335, 112
    %v3236 = vpop.permute.xlu0 %3235
    %3237 = vrot.lane.b32.xlu0 %v1338, 112
    %v3238 = vpop.permute.xlu0 %3237
    %3239 = vrot.lane.b32.xlu0 %v1502, 112
    %v3240 = vpop.permute.xlu0 %3239
    %3241 = vrot.lane.b32.xlu0 %v1505, 112
    %v3242 = vpop.permute.xlu0 %3241
    %3243 = vrot.lane.b32.xlu0 %v1508, 112
    %v3244 = vpop.permute.xlu0 %3243
    %3245 = vrot.lane.b32.xlu0 %v1511, 112
    %v3246 = vpop.permute.xlu0 %3245
    %3247 = vrot.lane.b32.xlu0 %v1514, 112
    %v3248 = vpop.permute.xlu0 %3247
    %3249 = vrot.lane.b32.xlu0 %v1517, 112
    %v3250 = vpop.permute.xlu0 %3249
    %3251 = vrot.lane.b32.xlu0 %v1520, 112
    %v3252 = vpop.permute.xlu0 %3251
    %3253 = vrot.lane.b32.xlu0 %v1523, 112
    %v3254 = vpop.permute.xlu0 %3253
    %3255 = vrot.lane.b32.xlu0 %v1526, 112
    %v3256 = vpop.permute.xlu0 %3255
    %3257 = vrot.lane.b32.xlu0 %v1529, 112
    %v3258 = vpop.permute.xlu0 %3257
    %3259 = vrot.lane.b32.xlu0 %v1532, 112
    %v3260 = vpop.permute.xlu0 %3259
    %3261 = vrot.lane.b32.xlu0 %v1535, 112
    %v3262 = vpop.permute.xlu0 %3261
    %3263 = vrot.lane.b32.xlu0 %v1538, 112
    %v3264 = vpop.permute.xlu0 %3263
    %3265 = vrot.lane.b32.xlu0 %v1541, 112
    %v3266 = vpop.permute.xlu0 %3265
    %3267 = vrot.lane.b32.xlu0 %v1544, 112
    %v3268 = vpop.permute.xlu0 %3267
    %3269 = vrot.lane.b32.xlu0 %v1547, 112
    %v3270 = vpop.permute.xlu0 %3269
    %3271 = vrot.lane.b32.xlu0 %v1550, 112
    %v3272 = vpop.permute.xlu0 %3271
    %3273 = vrot.lane.b32.xlu0 %v1553, 112
    %v3274 = vpop.permute.xlu0 %3273
    %3275 = vrot.lane.b32.xlu0 %v1556, 112
    %v3276 = vpop.permute.xlu0 %3275
    %3277 = vrot.lane.b32.xlu0 %v1559, 112
    %v3278 = vpop.permute.xlu0 %3277
    %3279 = vrot.lane.b32.xlu0 %v1562, 112
    %v3280 = vpop.permute.xlu0 %3279
    %3281 = vrot.lane.b32.xlu0 %v1565, 112
    %v3282 = vpop.permute.xlu0 %3281
    %3283 = vrot.lane.b32.xlu0 %v1568, 112
    %v3284 = vpop.permute.xlu0 %3283
    %3285 = vrot.lane.b32.xlu0 %v1571, 112
    %v3286 = vpop.permute.xlu0 %3285
    %3287 = vrot.lane.b32.xlu0 %v1574, 112
    %v3288 = vpop.permute.xlu0 %3287
    %3289 = vrot.lane.b32.xlu0 %v1577, 112
    %v3290 = vpop.permute.xlu0 %3289
    %3291 = vrot.lane.b32.xlu0 %v1580, 112
    %v3292 = vpop.permute.xlu0 %3291
    %3293 = vrot.lane.b32.xlu0 %v1583, 112
    %v3294 = vpop.permute.xlu0 %3293
    %3295 = vrot.lane.b32.xlu0 %v1586, 112
    %v3296 = vpop.permute.xlu0 %3295
    %3297 = vrot.lane.b32.xlu0 %v1589, 112
    %v3298 = vpop.permute.xlu0 %3297
    %3299 = vrot.lane.b32.xlu0 %v1592, 112
    %v3300 = vpop.permute.xlu0 %3299
    %3301 = vrot.lane.b32.xlu0 %v1595, 112
    %v3302 = vpop.permute.xlu0 %3301
    %v3303 = vsel %vm1790, %v3208, 0
    %v3305 = vsel %vm1790, %v3210, 0
    %v3307 = vsel %vm1790, %v3212, 0
    %v3309 = vsel %vm1790, %v3214, 0
    %v3311 = vsel %vm1790, %v3216, 0
    %v3313 = vsel %vm1790, %v3218, 0
    %v3315 = vsel %vm1790, %v3220, 0
    %v3317 = vsel %vm1790, %v3222, 0
    %v3319 = vsel %vm1790, %v3224, 0
    %v3321 = vsel %vm1790, %v3226, 0
    %v3323 = vsel %vm1790, %v3228, 0
    %v3325 = vsel %vm1790, %v3230, 0
    %v3327 = vsel %vm1790, %v3232, 0
    %v3329 = vsel %vm1790, %v3234, 0
    %v3331 = vsel %vm1790, %v3236, 0
    %v3333 = vsel %vm1790, %v3238, 0
    %v3335 = vsel %vm1790, %v3240, 0
    %v3337 = vsel %vm1790, %v3242, 0
    %v3339 = vsel %vm1790, %v3244, 0
    %v3341 = vsel %vm1790, %v3246, 0
    %v3343 = vsel %vm1790, %v3248, 0
    %v3345 = vsel %vm1790, %v3250, 0
    %v3347 = vsel %vm1790, %v3252, 0
    %v3349 = vsel %vm1790, %v3254, 0
    %v3351 = vsel %vm1790, %v3256, 0
    %v3353 = vsel %vm1790, %v3258, 0
    %v3355 = vsel %vm1790, %v3260, 0
    %v3357 = vsel %vm1790, %v3262, 0
    %v3359 = vsel %vm1790, %v3264, 0
    %v3361 = vsel %vm1790, %v3266, 0
    %v3363 = vsel %vm1790, %v3268, 0
    %v3365 = vsel %vm1790, %v3270, 0
    %v3367 = vsel %vm1790, %v3272, 0
    %v3369 = vsel %vm1790, %v3274, 0
    %v3371 = vsel %vm1790, %v3276, 0
    %v3373 = vsel %vm1790, %v3278, 0
    %v3375 = vsel %vm1790, %v3280, 0
    %v3377 = vsel %vm1790, %v3282, 0
    %v3379 = vsel %vm1790, %v3284, 0
    %v3381 = vsel %vm1790, %v3286, 0
    %v3383 = vsel %vm1790, %v3288, 0
    %v3385 = vsel %vm1790, %v3290, 0
    %v3387 = vsel %vm1790, %v3292, 0
    %v3389 = vsel %vm1790, %v3294, 0
    %v3391 = vsel %vm1790, %v3296, 0
    %v3393 = vsel %vm1790, %v3298, 0
    %v3395 = vsel %vm1790, %v3300, 0
    %v3397 = vsel %vm1790, %v3302, 0
    %3399 = vmatpush.xpose.msra.mxu0 %v3365
    %3400 = vmatpush.xpose.msra.mxu0 %v3363
    %3401 = vmatpush.xpose.msra.mxu0 %v3361
    %3402 = vmatpush.xpose.msra.mxu0 %v3359
    %3403 = vmatpush.xpose.msra.mxu0 %v3357
    %3404 = vmatpush.xpose.msra.mxu0 %v3355
    %3405 = vmatpush.xpose.msra.mxu0 %v3353
    %3406 = vmatpush.xpose.msra.mxu0 %v3351
    %3407 = vmatpush.xpose.msra.mxu0 %v3349
    %3408 = vmatpush.xpose.msra.mxu0 %v3347
    %3409 = vmatpush.xpose.msra.mxu0 %v3345
    %3410 = vmatpush.xpose.msra.mxu0 %v3343
    %3411 = vmatpush.xpose.msra.mxu0 %v3341
    %3412 = vmatpush.xpose.msra.mxu0 %v3339
    %3413 = vmatpush.xpose.msra.mxu0 %v3337
    %3414 = vmatpush.xpose.msra.mxu0 %v3335
    %3415 = vmatmul.f32.gmra.mxu0 %v3303
    %v3416 = vpop.f32.mrf.mxu0
    %v3417 = vadd.f32 0.0, %v3416
    %3418 = vmatmul.f32.gmra.mxu0 %v3305
    %v3419 = vpop.f32.mrf.mxu0
    %v3420 = vadd.f32 0.0, %v3419
    %3421 = vmatmul.f32.gmra.mxu0 %v3307
    %v3422 = vpop.f32.mrf.mxu0
    %v3423 = vadd.f32 0.0, %v3422
    %3424 = vmatmul.f32.gmra.mxu0 %v3309
    %v3425 = vpop.f32.mrf.mxu0
    %v3426 = vadd.f32 0.0, %v3425
    %3427 = vmatmul.f32.gmra.mxu0 %v3311
    %v3428 = vpop.f32.mrf.mxu0
    %v3429 = vadd.f32 0.0, %v3428
    %3430 = vmatmul.f32.gmra.mxu0 %v3313
    %v3431 = vpop.f32.mrf.mxu0
    %v3432 = vadd.f32 0.0, %v3431
    %3433 = vmatmul.f32.gmra.mxu0 %v3315
    %v3434 = vpop.f32.mrf.mxu0
    %v3435 = vadd.f32 0.0, %v3434
    %3436 = vmatmul.f32.gmra.mxu0 %v3317
    %v3437 = vpop.f32.mrf.mxu0
    %v3438 = vadd.f32 0.0, %v3437
    %3439 = vmatmul.f32.gmra.mxu0 %v3319
    %v3440 = vpop.f32.mrf.mxu0
    %v3441 = vadd.f32 0.0, %v3440
    %3442 = vmatmul.f32.gmra.mxu0 %v3321
    %v3443 = vpop.f32.mrf.mxu0
    %v3444 = vadd.f32 0.0, %v3443
    %3445 = vmatmul.f32.gmra.mxu0 %v3323
    %v3446 = vpop.f32.mrf.mxu0
    %v3447 = vadd.f32 0.0, %v3446
    %3448 = vmatmul.f32.gmra.mxu0 %v3325
    %v3449 = vpop.f32.mrf.mxu0
    %v3450 = vadd.f32 0.0, %v3449
    %3451 = vmatmul.f32.gmra.mxu0 %v3327
    %v3452 = vpop.f32.mrf.mxu0
    %v3453 = vadd.f32 0.0, %v3452
    %3454 = vmatmul.f32.gmra.mxu0 %v3329
    %v3455 = vpop.f32.mrf.mxu0
    %v3456 = vadd.f32 0.0, %v3455
    %3457 = vmatmul.f32.gmra.mxu0 %v3331
    %v3458 = vpop.f32.mrf.mxu0
    %v3459 = vadd.f32 0.0, %v3458
    %3460 = vmatmul.f32.gmra.mxu0 %v3333
    %v3461 = vpop.f32.mrf.mxu0
    %v3462 = vadd.f32 0.0, %v3461
    %3463 = vdwg.mxu0
    %3464 = vmatpush.xpose.msra.mxu0 %v3397
    %3465 = vmatpush.xpose.msra.mxu0 %v3395
    %3466 = vmatpush.xpose.msra.mxu0 %v3393
    %3467 = vmatpush.xpose.msra.mxu0 %v3391
    %3468 = vmatpush.xpose.msra.mxu0 %v3389
    %3469 = vmatpush.xpose.msra.mxu0 %v3387
    %3470 = vmatpush.xpose.msra.mxu0 %v3385
    %3471 = vmatpush.xpose.msra.mxu0 %v3383
    %3472 = vmatpush.xpose.msra.mxu0 %v3381
    %3473 = vmatpush.xpose.msra.mxu0 %v3379
    %3474 = vmatpush.xpose.msra.mxu0 %v3377
    %3475 = vmatpush.xpose.msra.mxu0 %v3375
    %3476 = vmatpush.xpose.msra.mxu0 %v3373
    %3477 = vmatpush.xpose.msra.mxu0 %v3371
    %3478 = vmatpush.xpose.msra.mxu0 %v3369
    %3479 = vmatpush.xpose.msra.mxu0 %v3367
    %3480 = vmatmul.f32.gmra.mxu0 %v3303
    %v3481 = vpop.f32.mrf.mxu0
    %v3482 = vadd.f32 0.0, %v3481
    %3483 = vmatmul.f32.gmra.mxu0 %v3305
    %v3484 = vpop.f32.mrf.mxu0
    %v3485 = vadd.f32 0.0, %v3484
    %3486 = vmatmul.f32.gmra.mxu0 %v3307
    %v3487 = vpop.f32.mrf.mxu0
    %v3488 = vadd.f32 0.0, %v3487
    %3489 = vmatmul.f32.gmra.mxu0 %v3309
    %v3490 = vpop.f32.mrf.mxu0
    %v3491 = vadd.f32 0.0, %v3490
    %3492 = vmatmul.f32.gmra.mxu0 %v3311
    %v3493 = vpop.f32.mrf.mxu0
    %v3494 = vadd.f32 0.0, %v3493
    %3495 = vmatmul.f32.gmra.mxu0 %v3313
    %v3496 = vpop.f32.mrf.mxu0
    %v3497 = vadd.f32 0.0, %v3496
    %3498 = vmatmul.f32.gmra.mxu0 %v3315
    %v3499 = vpop.f32.mrf.mxu0
    %v3500 = vadd.f32 0.0, %v3499
    %3501 = vmatmul.f32.gmra.mxu0 %v3317
    %v3502 = vpop.f32.mrf.mxu0
    %v3503 = vadd.f32 0.0, %v3502
    %3504 = vmatmul.f32.gmra.mxu0 %v3319
    %v3505 = vpop.f32.mrf.mxu0
    %v3506 = vadd.f32 0.0, %v3505
    %3507 = vmatmul.f32.gmra.mxu0 %v3321
    %v3508 = vpop.f32.mrf.mxu0
    %v3509 = vadd.f32 0.0, %v3508
    %3510 = vmatmul.f32.gmra.mxu0 %v3323
    %v3511 = vpop.f32.mrf.mxu0
    %v3512 = vadd.f32 0.0, %v3511
    %3513 = vmatmul.f32.gmra.mxu0 %v3325
    %v3514 = vpop.f32.mrf.mxu0
    %v3515 = vadd.f32 0.0, %v3514
    %3516 = vmatmul.f32.gmra.mxu0 %v3327
    %v3517 = vpop.f32.mrf.mxu0
    %v3518 = vadd.f32 0.0, %v3517
    %3519 = vmatmul.f32.gmra.mxu0 %v3329
    %v3520 = vpop.f32.mrf.mxu0
    %v3521 = vadd.f32 0.0, %v3520
    %3522 = vmatmul.f32.gmra.mxu0 %v3331
    %v3523 = vpop.f32.mrf.mxu0
    %v3524 = vadd.f32 0.0, %v3523
    %3525 = vmatmul.f32.gmra.mxu0 %v3333
    %v3526 = vpop.f32.mrf.mxu0
    %v3527 = vadd.f32 0.0, %v3526
    %3528 = vdwg.mxu0
    %v3529 = vmax.f32 %v3417, %v3482
    %3530 = vmax.xlane.f32.xlu0 %v3529
    %v3531 = vpop.xlane.xlu0 %3530
    %v3532 = vmax.f32 %v3420, %v3485
    %3533 = vmax.xlane.f32.xlu0 %v3532
    %v3534 = vpop.xlane.xlu0 %3533
    %v3535 = vmax.f32 %v3423, %v3488
    %3536 = vmax.xlane.f32.xlu0 %v3535
    %v3537 = vpop.xlane.xlu0 %3536
    %v3538 = vmax.f32 %v3426, %v3491
    %3539 = vmax.xlane.f32.xlu0 %v3538
    %v3540 = vpop.xlane.xlu0 %3539
    %v3541 = vmax.f32 %v3429, %v3494
    %3542 = vmax.xlane.f32.xlu0 %v3541
    %v3543 = vpop.xlane.xlu0 %3542
    %v3544 = vmax.f32 %v3432, %v3497
    %3545 = vmax.xlane.f32.xlu0 %v3544
    %v3546 = vpop.xlane.xlu0 %3545
    %v3547 = vmax.f32 %v3435, %v3500
    %3548 = vmax.xlane.f32.xlu0 %v3547
    %v3549 = vpop.xlane.xlu0 %3548
    %v3550 = vmax.f32 %v3438, %v3503
    %3551 = vmax.xlane.f32.xlu0 %v3550
    %v3552 = vpop.xlane.xlu0 %3551
    %v3553 = vmax.f32 %v3441, %v3506
    %3554 = vmax.xlane.f32.xlu0 %v3553
    %v3555 = vpop.xlane.xlu0 %3554
    %v3556 = vmax.f32 %v3444, %v3509
    %3557 = vmax.xlane.f32.xlu0 %v3556
    %v3558 = vpop.xlane.xlu0 %3557
    %v3559 = vmax.f32 %v3447, %v3512
    %3560 = vmax.xlane.f32.xlu0 %v3559
    %v3561 = vpop.xlane.xlu0 %3560
    %v3562 = vmax.f32 %v3450, %v3515
    %3563 = vmax.xlane.f32.xlu0 %v3562
    %v3564 = vpop.xlane.xlu0 %3563
    %v3565 = vmax.f32 %v3453, %v3518
    %3566 = vmax.xlane.f32.xlu0 %v3565
    %v3567 = vpop.xlane.xlu0 %3566
    %v3568 = vmax.f32 %v3456, %v3521
    %3569 = vmax.xlane.f32.xlu0 %v3568
    %v3570 = vpop.xlane.xlu0 %3569
    %v3571 = vmax.f32 %v3459, %v3524
    %3572 = vmax.xlane.f32.xlu0 %v3571
    %v3573 = vpop.xlane.xlu0 %3572
    %v3574 = vmax.f32 %v3462, %v3527
    %3575 = vmax.xlane.f32.xlu0 %v3574
    %v3576 = vpop.xlane.xlu0 %3575
    %v3577 = vsub.f32 %v3417, %v3531
    %v3578 = vsub.f32 %v3482, %v3531
    %v3579 = vsub.f32 %v3420, %v3534
    %v3580 = vsub.f32 %v3485, %v3534
    %v3581 = vsub.f32 %v3423, %v3537
    %v3582 = vsub.f32 %v3488, %v3537
    %v3583 = vsub.f32 %v3426, %v3540
    %v3584 = vsub.f32 %v3491, %v3540
    %v3585 = vsub.f32 %v3429, %v3543
    %v3586 = vsub.f32 %v3494, %v3543
    %v3587 = vsub.f32 %v3432, %v3546
    %v3588 = vsub.f32 %v3497, %v3546
    %v3589 = vsub.f32 %v3435, %v3549
    %v3590 = vsub.f32 %v3500, %v3549
    %v3591 = vsub.f32 %v3438, %v3552
    %v3592 = vsub.f32 %v3503, %v3552
    %v3593 = vsub.f32 %v3441, %v3555
    %v3594 = vsub.f32 %v3506, %v3555
    %v3595 = vsub.f32 %v3444, %v3558
    %v3596 = vsub.f32 %v3509, %v3558
    %v3597 = vsub.f32 %v3447, %v3561
    %v3598 = vsub.f32 %v3512, %v3561
    %v3599 = vsub.f32 %v3450, %v3564
    %v3600 = vsub.f32 %v3515, %v3564
    %v3601 = vsub.f32 %v3453, %v3567
    %v3602 = vsub.f32 %v3518, %v3567
    %v3603 = vsub.f32 %v3456, %v3570
    %v3604 = vsub.f32 %v3521, %v3570
    %v3605 = vsub.f32 %v3459, %v3573
    %v3606 = vsub.f32 %v3524, %v3573
    %v3607 = vsub.f32 %v3462, %v3576
    %v3608 = vsub.f32 %v3527, %v3576
    %v3609 = vmul.f32 %v3577, 1.442695
    %v3610 = vpow.pop %v3609
    %v3611 = vmul.f32 %v3578, 1.442695
    %v3612 = vpow.pop %v3611
    %v3613 = vmul.f32 %v3579, 1.442695
    %v3614 = vpow.pop %v3613
    %v3615 = vmul.f32 %v3580, 1.442695
    %v3616 = vpow.pop %v3615
    %v3617 = vmul.f32 %v3581, 1.442695
    %v3618 = vpow.pop %v3617
    %v3619 = vmul.f32 %v3582, 1.442695
    %v3620 = vpow.pop %v3619
    %v3621 = vmul.f32 %v3583, 1.442695
    %v3622 = vpow.pop %v3621
    %v3623 = vmul.f32 %v3584, 1.442695
    %v3624 = vpow.pop %v3623
    %v3625 = vmul.f32 %v3585, 1.442695
    %v3626 = vpow.pop %v3625
    %v3627 = vmul.f32 %v3586, 1.442695
    %v3628 = vpow.pop %v3627
    %v3629 = vmul.f32 %v3587, 1.442695
    %v3630 = vpow.pop %v3629
    %v3631 = vmul.f32 %v3588, 1.442695
    %v3632 = vpow.pop %v3631
    %v3633 = vmul.f32 %v3589, 1.442695
    %v3634 = vpow.pop %v3633
    %v3635 = vmul.f32 %v3590, 1.442695
    %v3636 = vpow.pop %v3635
    %v3637 = vmul.f32 %v3591, 1.442695
    %v3638 = vpow.pop %v3637
    %v3639 = vmul.f32 %v3592, 1.442695
    %v3640 = vpow.pop %v3639
    %v3641 = vmul.f32 %v3593, 1.442695
    %v3642 = vpow.pop %v3641
    %v3643 = vmul.f32 %v3594, 1.442695
    %v3644 = vpow.pop %v3643
    %v3645 = vmul.f32 %v3595, 1.442695
    %v3646 = vpow.pop %v3645
    %v3647 = vmul.f32 %v3596, 1.442695
    %v3648 = vpow.pop %v3647
    %v3649 = vmul.f32 %v3597, 1.442695
    %v3650 = vpow.pop %v3649
    %v3651 = vmul.f32 %v3598, 1.442695
    %v3652 = vpow.pop %v3651
    %v3653 = vmul.f32 %v3599, 1.442695
    %v3654 = vpow.pop %v3653
    %v3655 = vmul.f32 %v3600, 1.442695
    %v3656 = vpow.pop %v3655
    %v3657 = vmul.f32 %v3601, 1.442695
    %v3658 = vpow.pop %v3657
    %v3659 = vmul.f32 %v3602, 1.442695
    %v3660 = vpow.pop %v3659
    %v3661 = vmul.f32 %v3603, 1.442695
    %v3662 = vpow.pop %v3661
    %v3663 = vmul.f32 %v3604, 1.442695
    %v3664 = vpow.pop %v3663
    %v3665 = vmul.f32 %v3605, 1.442695
    %v3666 = vpow.pop %v3665
    %v3667 = vmul.f32 %v3606, 1.442695
    %v3668 = vpow.pop %v3667
    %v3669 = vmul.f32 %v3607, 1.442695
    %v3670 = vpow.pop %v3669
    %v3671 = vmul.f32 %v3608, 1.442695
    %v3672 = vpow.pop %v3671
    %v3673 = vadd.f32 %v3610, %v3612
    %3674 = vadd.xlane.f32.xlu0 %v3673
    %v3675 = vpop.xlane.xlu0 %3674
    %v3676 = vadd.f32 %v3614, %v3616
    %3677 = vadd.xlane.f32.xlu0 %v3676
    %v3678 = vpop.xlane.xlu0 %3677
    %v3679 = vadd.f32 %v3618, %v3620
    %3680 = vadd.xlane.f32.xlu0 %v3679
    %v3681 = vpop.xlane.xlu0 %3680
    %v3682 = vadd.f32 %v3622, %v3624
    %3683 = vadd.xlane.f32.xlu0 %v3682
    %v3684 = vpop.xlane.xlu0 %3683
    %v3685 = vadd.f32 %v3626, %v3628
    %3686 = vadd.xlane.f32.xlu0 %v3685
    %v3687 = vpop.xlane.xlu0 %3686
    %v3688 = vadd.f32 %v3630, %v3632
    %3689 = vadd.xlane.f32.xlu0 %v3688
    %v3690 = vpop.xlane.xlu0 %3689
    %v3691 = vadd.f32 %v3634, %v3636
    %3692 = vadd.xlane.f32.xlu0 %v3691
    %v3693 = vpop.xlane.xlu0 %3692
    %v3694 = vadd.f32 %v3638, %v3640
    %3695 = vadd.xlane.f32.xlu0 %v3694
    %v3696 = vpop.xlane.xlu0 %3695
    %v3697 = vadd.f32 %v3642, %v3644
    %3698 = vadd.xlane.f32.xlu0 %v3697
    %v3699 = vpop.xlane.xlu0 %3698
    %v3700 = vadd.f32 %v3646, %v3648
    %3701 = vadd.xlane.f32.xlu0 %v3700
    %v3702 = vpop.xlane.xlu0 %3701
    %v3703 = vadd.f32 %v3650, %v3652
    %3704 = vadd.xlane.f32.xlu0 %v3703
    %v3705 = vpop.xlane.xlu0 %3704
    %v3706 = vadd.f32 %v3654, %v3656
    %3707 = vadd.xlane.f32.xlu0 %v3706
    %v3708 = vpop.xlane.xlu0 %3707
    %v3709 = vadd.f32 %v3658, %v3660
    %3710 = vadd.xlane.f32.xlu0 %v3709
    %v3711 = vpop.xlane.xlu0 %3710
    %v3712 = vadd.f32 %v3662, %v3664
    %3713 = vadd.xlane.f32.xlu0 %v3712
    %v3714 = vpop.xlane.xlu0 %3713
    %v3715 = vadd.f32 %v3666, %v3668
    %3716 = vadd.xlane.f32.xlu0 %v3715
    %v3717 = vpop.xlane.xlu0 %3716
    %v3718 = vadd.f32 %v3670, %v3672
    %3719 = vadd.xlane.f32.xlu0 %v3718
    %v3720 = vpop.xlane.xlu0 %3719
    %v3721 = vrcp.pop %v3675
    %v3722 = vrcp.pop %v3678
    %v3723 = vrcp.pop %v3681
    %v3724 = vrcp.pop %v3684
    %v3725 = vrcp.pop %v3687
    %v3726 = vrcp.pop %v3690
    %v3727 = vrcp.pop %v3693
    %v3728 = vrcp.pop %v3696
    %v3729 = vrcp.pop %v3699
    %v3730 = vrcp.pop %v3702
    %v3731 = vrcp.pop %v3705
    %v3732 = vrcp.pop %v3708
    %v3733 = vrcp.pop %v3711
    %v3734 = vrcp.pop %v3714
    %v3735 = vrcp.pop %v3717
    %v3736 = vrcp.pop %v3720
    %3737 = vrot.lane.b32.xlu0 %v1695, 112
    %v3738 = vpop.permute.xlu0 %3737
    %3739 = vrot.lane.b32.xlu0 %v1698, 112
    %v3740 = vpop.permute.xlu0 %3739
    %3741 = vrot.lane.b32.xlu0 %v1701, 112
    %v3742 = vpop.permute.xlu0 %3741
    %3743 = vrot.lane.b32.xlu0 %v1704, 112
    %v3744 = vpop.permute.xlu0 %3743
    %3745 = vrot.lane.b32.xlu0 %v1707, 112
    %v3746 = vpop.permute.xlu0 %3745
    %3747 = vrot.lane.b32.xlu0 %v1710, 112
    %v3748 = vpop.permute.xlu0 %3747
    %3749 = vrot.lane.b32.xlu0 %v1713, 112
    %v3750 = vpop.permute.xlu0 %3749
    %3751 = vrot.lane.b32.xlu0 %v1716, 112
    %v3752 = vpop.permute.xlu0 %3751
    %3753 = vrot.lane.b32.xlu0 %v1719, 112
    %v3754 = vpop.permute.xlu0 %3753
    %3755 = vrot.lane.b32.xlu0 %v1722, 112
    %v3756 = vpop.permute.xlu0 %3755
    %3757 = vrot.lane.b32.xlu0 %v1725, 112
    %v3758 = vpop.permute.xlu0 %3757
    %3759 = vrot.lane.b32.xlu0 %v1728, 112
    %v3760 = vpop.permute.xlu0 %3759
    %3761 = vrot.lane.b32.xlu0 %v1731, 112
    %v3762 = vpop.permute.xlu0 %3761
    %3763 = vrot.lane.b32.xlu0 %v1734, 112
    %v3764 = vpop.permute.xlu0 %3763
    %3765 = vrot.lane.b32.xlu0 %v1737, 112
    %v3766 = vpop.permute.xlu0 %3765
    %3767 = vrot.lane.b32.xlu0 %v1740, 112
    %v3768 = vpop.permute.xlu0 %3767
    %3769 = vrot.lane.b32.xlu0 %v1743, 112
    %v3770 = vpop.permute.xlu0 %3769
    %3771 = vrot.lane.b32.xlu0 %v1746, 112
    %v3772 = vpop.permute.xlu0 %3771
    %3773 = vrot.lane.b32.xlu0 %v1749, 112
    %v3774 = vpop.permute.xlu0 %3773
    %3775 = vrot.lane.b32.xlu0 %v1752, 112
    %v3776 = vpop.permute.xlu0 %3775
    %3777 = vrot.lane.b32.xlu0 %v1755, 112
    %v3778 = vpop.permute.xlu0 %3777
    %3779 = vrot.lane.b32.xlu0 %v1758, 112
    %v3780 = vpop.permute.xlu0 %3779
    %3781 = vrot.lane.b32.xlu0 %v1761, 112
    %v3782 = vpop.permute.xlu0 %3781
    %3783 = vrot.lane.b32.xlu0 %v1764, 112
    %v3784 = vpop.permute.xlu0 %3783
    %3785 = vrot.lane.b32.xlu0 %v1767, 112
    %v3786 = vpop.permute.xlu0 %3785
    %3787 = vrot.lane.b32.xlu0 %v1770, 112
    %v3788 = vpop.permute.xlu0 %3787
    %3789 = vrot.lane.b32.xlu0 %v1773, 112
    %v3790 = vpop.permute.xlu0 %3789
    %3791 = vrot.lane.b32.xlu0 %v1776, 112
    %v3792 = vpop.permute.xlu0 %3791
    %3793 = vrot.lane.b32.xlu0 %v1779, 112
    %v3794 = vpop.permute.xlu0 %3793
    %3795 = vrot.lane.b32.xlu0 %v1782, 112
    %v3796 = vpop.permute.xlu0 %3795
    %3797 = vrot.lane.b32.xlu0 %v1785, 112
    %v3798 = vpop.permute.xlu0 %3797
    %3799 = vrot.lane.b32.xlu0 %v1788, 112
    %v3800 = vpop.permute.xlu0 %3799
    %3833 = vmatpush.msra.mxu0 %v3768
    %3834 = vmatpush.msra.mxu0 %v3766
    %3835 = vmatpush.msra.mxu0 %v3764
    %3836 = vmatpush.msra.mxu0 %v3762
    %3837 = vmatpush.msra.mxu0 %v3760
    %3838 = vmatpush.msra.mxu0 %v3758
    %3839 = vmatpush.msra.mxu0 %v3756
    %3840 = vmatpush.msra.mxu0 %v3754
    %3841 = vmatpush.msra.mxu0 %v3752
    %3842 = vmatpush.msra.mxu0 %v3750
    %3843 = vmatpush.msra.mxu0 %v3748
    %3844 = vmatpush.msra.mxu0 %v3746
    %3845 = vmatpush.msra.mxu0 %v3744
    %3846 = vmatpush.msra.mxu0 %v3742
    %3847 = vmatpush.msra.mxu0 %v3740
    %3848 = vmatpush.msra.mxu0 %v3738
    %3849 = vmatmul.f32.gmra.mxu0 %v3610
    %v3850 = vpop.f32.mrf.mxu0
    %v3851 = vadd.f32 0.0, %v3850
    %3852 = vmatmul.f32.gmra.mxu0 %v3614
    %v3853 = vpop.f32.mrf.mxu0
    %v3854 = vadd.f32 0.0, %v3853
    %3855 = vmatmul.f32.gmra.mxu0 %v3618
    %v3856 = vpop.f32.mrf.mxu0
    %v3857 = vadd.f32 0.0, %v3856
    %3858 = vmatmul.f32.gmra.mxu0 %v3622
    %v3859 = vpop.f32.mrf.mxu0
    %v3860 = vadd.f32 0.0, %v3859
    %3861 = vmatmul.f32.gmra.mxu0 %v3626
    %v3862 = vpop.f32.mrf.mxu0
    %v3863 = vadd.f32 0.0, %v3862
    %3864 = vmatmul.f32.gmra.mxu0 %v3630
    %v3865 = vpop.f32.mrf.mxu0
    %v3866 = vadd.f32 0.0, %v3865
    %3867 = vmatmul.f32.gmra.mxu0 %v3634
    %v3868 = vpop.f32.mrf.mxu0
    %v3869 = vadd.f32 0.0, %v3868
    %3870 = vmatmul.f32.gmra.mxu0 %v3638
    %v3871 = vpop.f32.mrf.mxu0
    %v3872 = vadd.f32 0.0, %v3871
    %3873 = vmatmul.f32.gmra.mxu0 %v3642
    %v3874 = vpop.f32.mrf.mxu0
    %v3875 = vadd.f32 0.0, %v3874
    %3876 = vmatmul.f32.gmra.mxu0 %v3646
    %v3877 = vpop.f32.mrf.mxu0
    %v3878 = vadd.f32 0.0, %v3877
    %3879 = vmatmul.f32.gmra.mxu0 %v3650
    %v3880 = vpop.f32.mrf.mxu0
    %v3881 = vadd.f32 0.0, %v3880
    %3882 = vmatmul.f32.gmra.mxu0 %v3654
    %v3883 = vpop.f32.mrf.mxu0
    %v3884 = vadd.f32 0.0, %v3883
    %3885 = vmatmul.f32.gmra.mxu0 %v3658
    %v3886 = vpop.f32.mrf.mxu0
    %v3887 = vadd.f32 0.0, %v3886
    %3888 = vmatmul.f32.gmra.mxu0 %v3662
    %v3889 = vpop.f32.mrf.mxu0
    %v3890 = vadd.f32 0.0, %v3889
    %3891 = vmatmul.f32.gmra.mxu0 %v3666
    %v3892 = vpop.f32.mrf.mxu0
    %v3893 = vadd.f32 0.0, %v3892
    %3894 = vmatmul.f32.gmra.mxu0 %v3670
    %v3895 = vpop.f32.mrf.mxu0
    %v3896 = vadd.f32 0.0, %v3895
    %3897 = vdwg.mxu0
    %3898 = vmatpush.msra.mxu0 %v3800
    %3899 = vmatpush.msra.mxu0 %v3798
    %3900 = vmatpush.msra.mxu0 %v3796
    %3901 = vmatpush.msra.mxu0 %v3794
    %3902 = vmatpush.msra.mxu0 %v3792
    %3903 = vmatpush.msra.mxu0 %v3790
    %3904 = vmatpush.msra.mxu0 %v3788
    %3905 = vmatpush.msra.mxu0 %v3786
    %3906 = vmatpush.msra.mxu0 %v3784
    %3907 = vmatpush.msra.mxu0 %v3782
    %3908 = vmatpush.msra.mxu0 %v3780
    %3909 = vmatpush.msra.mxu0 %v3778
    %3910 = vmatpush.msra.mxu0 %v3776
    %3911 = vmatpush.msra.mxu0 %v3774
    %3912 = vmatpush.msra.mxu0 %v3772
    %3913 = vmatpush.msra.mxu0 %v3770
    %3914 = vmatmul.f32.gmra.mxu0 %v3612
    %v3915 = vpop.f32.mrf.mxu0
    %v3916 = vadd.f32 %v3851, %v3915
    %3917 = vmatmul.f32.gmra.mxu0 %v3616
    %v3918 = vpop.f32.mrf.mxu0
    %v3919 = vadd.f32 %v3854, %v3918
    %3920 = vmatmul.f32.gmra.mxu0 %v3620
    %v3921 = vpop.f32.mrf.mxu0
    %v3922 = vadd.f32 %v3857, %v3921
    %3923 = vmatmul.f32.gmra.mxu0 %v3624
    %v3924 = vpop.f32.mrf.mxu0
    %v3925 = vadd.f32 %v3860, %v3924
    %3926 = vmatmul.f32.gmra.mxu0 %v3628
    %v3927 = vpop.f32.mrf.mxu0
    %v3928 = vadd.f32 %v3863, %v3927
    %3929 = vmatmul.f32.gmra.mxu0 %v3632
    %v3930 = vpop.f32.mrf.mxu0
    %v3931 = vadd.f32 %v3866, %v3930
    %3932 = vmatmul.f32.gmra.mxu0 %v3636
    %v3933 = vpop.f32.mrf.mxu0
    %v3934 = vadd.f32 %v3869, %v3933
    %3935 = vmatmul.f32.gmra.mxu0 %v3640
    %v3936 = vpop.f32.mrf.mxu0
    %v3937 = vadd.f32 %v3872, %v3936
    %3938 = vmatmul.f32.gmra.mxu0 %v3644
    %v3939 = vpop.f32.mrf.mxu0
    %v3940 = vadd.f32 %v3875, %v3939
    %3941 = vmatmul.f32.gmra.mxu0 %v3648
    %v3942 = vpop.f32.mrf.mxu0
    %v3943 = vadd.f32 %v3878, %v3942
    %3944 = vmatmul.f32.gmra.mxu0 %v3652
    %v3945 = vpop.f32.mrf.mxu0
    %v3946 = vadd.f32 %v3881, %v3945
    %3947 = vmatmul.f32.gmra.mxu0 %v3656
    %v3948 = vpop.f32.mrf.mxu0
    %v3949 = vadd.f32 %v3884, %v3948
    %3950 = vmatmul.f32.gmra.mxu0 %v3660
    %v3951 = vpop.f32.mrf.mxu0
    %v3952 = vadd.f32 %v3887, %v3951
    %3953 = vmatmul.f32.gmra.mxu0 %v3664
    %v3954 = vpop.f32.mrf.mxu0
    %v3955 = vadd.f32 %v3890, %v3954
    %3956 = vmatmul.f32.gmra.mxu0 %v3668
    %v3957 = vpop.f32.mrf.mxu0
    %v3958 = vadd.f32 %v3893, %v3957
    %3959 = vmatmul.f32.gmra.mxu0 %v3672
    %v3960 = vpop.f32.mrf.mxu0
    %v3961 = vadd.f32 %v3896, %v3960
    %3962 = vdwg.mxu0
    %v3963 = vmul.f32 %v3916, %v3721
    %v3964 = vmul.f32 %v3919, %v3722
    %v3965 = vmul.f32 %v3922, %v3723
    %v3966 = vmul.f32 %v3925, %v3724
    %v3967 = vmul.f32 %v3928, %v3725
    %v3968 = vmul.f32 %v3931, %v3726
    %v3969 = vmul.f32 %v3934, %v3727
    %v3970 = vmul.f32 %v3937, %v3728
    %v3971 = vmul.f32 %v3940, %v3729
    %v3972 = vmul.f32 %v3943, %v3730
    %v3973 = vmul.f32 %v3946, %v3731
    %v3974 = vmul.f32 %v3949, %v3732
    %v3975 = vmul.f32 %v3952, %v3733
    %v3976 = vmul.f32 %v3955, %v3734
    %v3977 = vmul.f32 %v3958, %v3735
    %v3978 = vmul.f32 %v3961, %v3736
    %3979 = vrot.lane.b32.xlu0 %v1293, 104
    %v3980 = vpop.permute.xlu0 %3979
    %3981 = vrot.lane.b32.xlu0 %v1296, 104
    %v3982 = vpop.permute.xlu0 %3981
    %3983 = vrot.lane.b32.xlu0 %v1299, 104
    %v3984 = vpop.permute.xlu0 %3983
    %3985 = vrot.lane.b32.xlu0 %v1302, 104
    %v3986 = vpop.permute.xlu0 %3985
    %3987 = vrot.lane.b32.xlu0 %v1305, 104
    %v3988 = vpop.permute.xlu0 %3987
    %3989 = vrot.lane.b32.xlu0 %v1308, 104
    %v3990 = vpop.permute.xlu0 %3989
    %3991 = vrot.lane.b32.xlu0 %v1311, 104
    %v3992 = vpop.permute.xlu0 %3991
    %3993 = vrot.lane.b32.xlu0 %v1314, 104
    %v3994 = vpop.permute.xlu0 %3993
    %3995 = vrot.lane.b32.xlu0 %v1317, 104
    %v3996 = vpop.permute.xlu0 %3995
    %3997 = vrot.lane.b32.xlu0 %v1320, 104
    %v3998 = vpop.permute.xlu0 %3997
    %3999 = vrot.lane.b32.xlu0 %v1323, 104
    %v4000 = vpop.permute.xlu0 %3999
    %4001 = vrot.lane.b32.xlu0 %v1326, 104
    %v4002 = vpop.permute.xlu0 %4001
    %4003 = vrot.lane.b32.xlu0 %v1329, 104
    %v4004 = vpop.permute.xlu0 %4003
    %4005 = vrot.lane.b32.xlu0 %v1332, 104
    %v4006 = vpop.permute.xlu0 %4005
    %4007 = vrot.lane.b32.xlu0 %v1335, 104
    %v4008 = vpop.permute.xlu0 %4007
    %4009 = vrot.lane.b32.xlu0 %v1338, 104
    %v4010 = vpop.permute.xlu0 %4009
    %4011 = vrot.lane.b32.xlu0 %v1502, 104
    %v4012 = vpop.permute.xlu0 %4011
    %4013 = vrot.lane.b32.xlu0 %v1505, 104
    %v4014 = vpop.permute.xlu0 %4013
    %4015 = vrot.lane.b32.xlu0 %v1508, 104
    %v4016 = vpop.permute.xlu0 %4015
    %4017 = vrot.lane.b32.xlu0 %v1511, 104
    %v4018 = vpop.permute.xlu0 %4017
    %4019 = vrot.lane.b32.xlu0 %v1514, 104
    %v4020 = vpop.permute.xlu0 %4019
    %4021 = vrot.lane.b32.xlu0 %v1517, 104
    %v4022 = vpop.permute.xlu0 %4021
    %4023 = vrot.lane.b32.xlu0 %v1520, 104
    %v4024 = vpop.permute.xlu0 %4023
    %4025 = vrot.lane.b32.xlu0 %v1523, 104
    %v4026 = vpop.permute.xlu0 %4025
    %4027 = vrot.lane.b32.xlu0 %v1526, 104
    %v4028 = vpop.permute.xlu0 %4027
    %4029 = vrot.lane.b32.xlu0 %v1529, 104
    %v4030 = vpop.permute.xlu0 %4029
    %4031 = vrot.lane.b32.xlu0 %v1532, 104
    %v4032 = vpop.permute.xlu0 %4031
    %4033 = vrot.lane.b32.xlu0 %v1535, 104
    %v4034 = vpop.permute.xlu0 %4033
    %4035 = vrot.lane.b32.xlu0 %v1538, 104
    %v4036 = vpop.permute.xlu0 %4035
    %4037 = vrot.lane.b32.xlu0 %v1541, 104
    %v4038 = vpop.permute.xlu0 %4037
    %4039 = vrot.lane.b32.xlu0 %v1544, 104
    %v4040 = vpop.permute.xlu0 %4039
    %4041 = vrot.lane.b32.xlu0 %v1547, 104
    %v4042 = vpop.permute.xlu0 %4041
    %4043 = vrot.lane.b32.xlu0 %v1550, 104
    %v4044 = vpop.permute.xlu0 %4043
    %4045 = vrot.lane.b32.xlu0 %v1553, 104
    %v4046 = vpop.permute.xlu0 %4045
    %4047 = vrot.lane.b32.xlu0 %v1556, 104
    %v4048 = vpop.permute.xlu0 %4047
    %4049 = vrot.lane.b32.xlu0 %v1559, 104
    %v4050 = vpop.permute.xlu0 %4049
    %4051 = vrot.lane.b32.xlu0 %v1562, 104
    %v4052 = vpop.permute.xlu0 %4051
    %4053 = vrot.lane.b32.xlu0 %v1565, 104
    %v4054 = vpop.permute.xlu0 %4053
    %4055 = vrot.lane.b32.xlu0 %v1568, 104
    %v4056 = vpop.permute.xlu0 %4055
    %4057 = vrot.lane.b32.xlu0 %v1571, 104
    %v4058 = vpop.permute.xlu0 %4057
    %4059 = vrot.lane.b32.xlu0 %v1574, 104
    %v4060 = vpop.permute.xlu0 %4059
    %4061 = vrot.lane.b32.xlu0 %v1577, 104
    %v4062 = vpop.permute.xlu0 %4061
    %4063 = vrot.lane.b32.xlu0 %v1580, 104
    %v4064 = vpop.permute.xlu0 %4063
    %4065 = vrot.lane.b32.xlu0 %v1583, 104
    %v4066 = vpop.permute.xlu0 %4065
    %4067 = vrot.lane.b32.xlu0 %v1586, 104
    %v4068 = vpop.permute.xlu0 %4067
    %4069 = vrot.lane.b32.xlu0 %v1589, 104
    %v4070 = vpop.permute.xlu0 %4069
    %4071 = vrot.lane.b32.xlu0 %v1592, 104
    %v4072 = vpop.permute.xlu0 %4071
    %4073 = vrot.lane.b32.xlu0 %v1595, 104
    %v4074 = vpop.permute.xlu0 %4073
    %v4075 = vsel %vm1790, %v3980, 0
    %v4077 = vsel %vm1790, %v3982, 0
    %v4079 = vsel %vm1790, %v3984, 0
    %v4081 = vsel %vm1790, %v3986, 0
    %v4083 = vsel %vm1790, %v3988, 0
    %v4085 = vsel %vm1790, %v3990, 0
    %v4087 = vsel %vm1790, %v3992, 0
    %v4089 = vsel %vm1790, %v3994, 0
    %v4091 = vsel %vm1790, %v3996, 0
    %v4093 = vsel %vm1790, %v3998, 0
    %v4095 = vsel %vm1790, %v4000, 0
    %v4097 = vsel %vm1790, %v4002, 0
    %v4099 = vsel %vm1790, %v4004, 0
    %v4101 = vsel %vm1790, %v4006, 0
    %v4103 = vsel %vm1790, %v4008, 0
    %v4105 = vsel %vm1790, %v4010, 0
    %v4107 = vsel %vm1790, %v4012, 0
    %v4109 = vsel %vm1790, %v4014, 0
    %v4111 = vsel %vm1790, %v4016, 0
    %v4113 = vsel %vm1790, %v4018, 0
    %v4115 = vsel %vm1790, %v4020, 0
    %v4117 = vsel %vm1790, %v4022, 0
    %v4119 = vsel %vm1790, %v4024, 0
    %v4121 = vsel %vm1790, %v4026, 0
    %v4123 = vsel %vm1790, %v4028, 0
    %v4125 = vsel %vm1790, %v4030, 0
    %v4127 = vsel %vm1790, %v4032, 0
    %v4129 = vsel %vm1790, %v4034, 0
    %v4131 = vsel %vm1790, %v4036, 0
    %v4133 = vsel %vm1790, %v4038, 0
    %v4135 = vsel %vm1790, %v4040, 0
    %v4137 = vsel %vm1790, %v4042, 0
    %v4139 = vsel %vm1790, %v4044, 0
    %v4141 = vsel %vm1790, %v4046, 0
    %v4143 = vsel %vm1790, %v4048, 0
    %v4145 = vsel %vm1790, %v4050, 0
    %v4147 = vsel %vm1790, %v4052, 0
    %v4149 = vsel %vm1790, %v4054, 0
    %v4151 = vsel %vm1790, %v4056, 0
    %v4153 = vsel %vm1790, %v4058, 0
    %v4155 = vsel %vm1790, %v4060, 0
    %v4157 = vsel %vm1790, %v4062, 0
    %v4159 = vsel %vm1790, %v4064, 0
    %v4161 = vsel %vm1790, %v4066, 0
    %v4163 = vsel %vm1790, %v4068, 0
    %v4165 = vsel %vm1790, %v4070, 0
    %v4167 = vsel %vm1790, %v4072, 0
    %v4169 = vsel %vm1790, %v4074, 0
    %4171 = vmatpush.xpose.msra.mxu0 %v4137
    %4172 = vmatpush.xpose.msra.mxu0 %v4135
    %4173 = vmatpush.xpose.msra.mxu0 %v4133
    %4174 = vmatpush.xpose.msra.mxu0 %v4131
    %4175 = vmatpush.xpose.msra.mxu0 %v4129
    %4176 = vmatpush.xpose.msra.mxu0 %v4127
    %4177 = vmatpush.xpose.msra.mxu0 %v4125
    %4178 = vmatpush.xpose.msra.mxu0 %v4123
    %4179 = vmatpush.xpose.msra.mxu0 %v4121
    %4180 = vmatpush.xpose.msra.mxu0 %v4119
    %4181 = vmatpush.xpose.msra.mxu0 %v4117
    %4182 = vmatpush.xpose.msra.mxu0 %v4115
    %4183 = vmatpush.xpose.msra.mxu0 %v4113
    %4184 = vmatpush.xpose.msra.mxu0 %v4111
    %4185 = vmatpush.xpose.msra.mxu0 %v4109
    %4186 = vmatpush.xpose.msra.mxu0 %v4107
    %4187 = vmatmul.f32.gmra.mxu0 %v4075
    %v4188 = vpop.f32.mrf.mxu0
    %v4189 = vadd.f32 0.0, %v4188
    %4190 = vmatmul.f32.gmra.mxu0 %v4077
    %v4191 = vpop.f32.mrf.mxu0
    %v4192 = vadd.f32 0.0, %v4191
    %4193 = vmatmul.f32.gmra.mxu0 %v4079
    %v4194 = vpop.f32.mrf.mxu0
    %v4195 = vadd.f32 0.0, %v4194
    %4196 = vmatmul.f32.gmra.mxu0 %v4081
    %v4197 = vpop.f32.mrf.mxu0
    %v4198 = vadd.f32 0.0, %v4197
    %4199 = vmatmul.f32.gmra.mxu0 %v4083
    %v4200 = vpop.f32.mrf.mxu0
    %v4201 = vadd.f32 0.0, %v4200
    %4202 = vmatmul.f32.gmra.mxu0 %v4085
    %v4203 = vpop.f32.mrf.mxu0
    %v4204 = vadd.f32 0.0, %v4203
    %4205 = vmatmul.f32.gmra.mxu0 %v4087
    %v4206 = vpop.f32.mrf.mxu0
    %v4207 = vadd.f32 0.0, %v4206
    %4208 = vmatmul.f32.gmra.mxu0 %v4089
    %v4209 = vpop.f32.mrf.mxu0
    %v4210 = vadd.f32 0.0, %v4209
    %4211 = vmatmul.f32.gmra.mxu0 %v4091
    %v4212 = vpop.f32.mrf.mxu0
    %v4213 = vadd.f32 0.0, %v4212
    %4214 = vmatmul.f32.gmra.mxu0 %v4093
    %v4215 = vpop.f32.mrf.mxu0
    %v4216 = vadd.f32 0.0, %v4215
    %4217 = vmatmul.f32.gmra.mxu0 %v4095
    %v4218 = vpop.f32.mrf.mxu0
    %v4219 = vadd.f32 0.0, %v4218
    %4220 = vmatmul.f32.gmra.mxu0 %v4097
    %v4221 = vpop.f32.mrf.mxu0
    %v4222 = vadd.f32 0.0, %v4221
    %4223 = vmatmul.f32.gmra.mxu0 %v4099
    %v4224 = vpop.f32.mrf.mxu0
    %v4225 = vadd.f32 0.0, %v4224
    %4226 = vmatmul.f32.gmra.mxu0 %v4101
    %v4227 = vpop.f32.mrf.mxu0
    %v4228 = vadd.f32 0.0, %v4227
    %4229 = vmatmul.f32.gmra.mxu0 %v4103
    %v4230 = vpop.f32.mrf.mxu0
    %v4231 = vadd.f32 0.0, %v4230
    %4232 = vmatmul.f32.gmra.mxu0 %v4105
    %v4233 = vpop.f32.mrf.mxu0
    %v4234 = vadd.f32 0.0, %v4233
    %4235 = vdwg.mxu0
    %4236 = vmatpush.xpose.msra.mxu0 %v4169
    %4237 = vmatpush.xpose.msra.mxu0 %v4167
    %4238 = vmatpush.xpose.msra.mxu0 %v4165
    %4239 = vmatpush.xpose.msra.mxu0 %v4163
    %4240 = vmatpush.xpose.msra.mxu0 %v4161
    %4241 = vmatpush.xpose.msra.mxu0 %v4159
    %4242 = vmatpush.xpose.msra.mxu0 %v4157
    %4243 = vmatpush.xpose.msra.mxu0 %v4155
    %4244 = vmatpush.xpose.msra.mxu0 %v4153
    %4245 = vmatpush.xpose.msra.mxu0 %v4151
    %4246 = vmatpush.xpose.msra.mxu0 %v4149
    %4247 = vmatpush.xpose.msra.mxu0 %v4147
    %4248 = vmatpush.xpose.msra.mxu0 %v4145
    %4249 = vmatpush.xpose.msra.mxu0 %v4143
    %4250 = vmatpush.xpose.msra.mxu0 %v4141
    %4251 = vmatpush.xpose.msra.mxu0 %v4139
    %4252 = vmatmul.f32.gmra.mxu0 %v4075
    %v4253 = vpop.f32.mrf.mxu0
    %v4254 = vadd.f32 0.0, %v4253
    %4255 = vmatmul.f32.gmra.mxu0 %v4077
    %v4256 = vpop.f32.mrf.mxu0
    %v4257 = vadd.f32 0.0, %v4256
    %4258 = vmatmul.f32.gmra.mxu0 %v4079
    %v4259 = vpop.f32.mrf.mxu0
    %v4260 = vadd.f32 0.0, %v4259
    %4261 = vmatmul.f32.gmra.mxu0 %v4081
    %v4262 = vpop.f32.mrf.mxu0
    %v4263 = vadd.f32 0.0, %v4262
    %4264 = vmatmul.f32.gmra.mxu0 %v4083
    %v4265 = vpop.f32.mrf.mxu0
    %v4266 = vadd.f32 0.0, %v4265
    %4267 = vmatmul.f32.gmra.mxu0 %v4085
    %v4268 = vpop.f32.mrf.mxu0
    %v4269 = vadd.f32 0.0, %v4268
    %4270 = vmatmul.f32.gmra.mxu0 %v4087
    %v4271 = vpop.f32.mrf.mxu0
    %v4272 = vadd.f32 0.0, %v4271
    %4273 = vmatmul.f32.gmra.mxu0 %v4089
    %v4274 = vpop.f32.mrf.mxu0
    %v4275 = vadd.f32 0.0, %v4274
    %4276 = vmatmul.f32.gmra.mxu0 %v4091
    %v4277 = vpop.f32.mrf.mxu0
    %v4278 = vadd.f32 0.0, %v4277
    %4279 = vmatmul.f32.gmra.mxu0 %v4093
    %v4280 = vpop.f32.mrf.mxu0
    %v4281 = vadd.f32 0.0, %v4280
    %4282 = vmatmul.f32.gmra.mxu0 %v4095
    %v4283 = vpop.f32.mrf.mxu0
    %v4284 = vadd.f32 0.0, %v4283
    %4285 = vmatmul.f32.gmra.mxu0 %v4097
    %v4286 = vpop.f32.mrf.mxu0
    %v4287 = vadd.f32 0.0, %v4286
    %4288 = vmatmul.f32.gmra.mxu0 %v4099
    %v4289 = vpop.f32.mrf.mxu0
    %v4290 = vadd.f32 0.0, %v4289
    %4291 = vmatmul.f32.gmra.mxu0 %v4101
    %v4292 = vpop.f32.mrf.mxu0
    %v4293 = vadd.f32 0.0, %v4292
    %4294 = vmatmul.f32.gmra.mxu0 %v4103
    %v4295 = vpop.f32.mrf.mxu0
    %v4296 = vadd.f32 0.0, %v4295
    %4297 = vmatmul.f32.gmra.mxu0 %v4105
    %v4298 = vpop.f32.mrf.mxu0
    %v4299 = vadd.f32 0.0, %v4298
    %4300 = vdwg.mxu0
    %v4301 = vmax.f32 %v4189, %v4254
    %4302 = vmax.xlane.f32.xlu0 %v4301
    %v4303 = vpop.xlane.xlu0 %4302
    %v4304 = vmax.f32 %v4192, %v4257
    %4305 = vmax.xlane.f32.xlu0 %v4304
    %v4306 = vpop.xlane.xlu0 %4305
    %v4307 = vmax.f32 %v4195, %v4260
    %4308 = vmax.xlane.f32.xlu0 %v4307
    %v4309 = vpop.xlane.xlu0 %4308
    %v4310 = vmax.f32 %v4198, %v4263
    %4311 = vmax.xlane.f32.xlu0 %v4310
    %v4312 = vpop.xlane.xlu0 %4311
    %v4313 = vmax.f32 %v4201, %v4266
    %4314 = vmax.xlane.f32.xlu0 %v4313
    %v4315 = vpop.xlane.xlu0 %4314
    %v4316 = vmax.f32 %v4204, %v4269
    %4317 = vmax.xlane.f32.xlu0 %v4316
    %v4318 = vpop.xlane.xlu0 %4317
    %v4319 = vmax.f32 %v4207, %v4272
    %4320 = vmax.xlane.f32.xlu0 %v4319
    %v4321 = vpop.xlane.xlu0 %4320
    %v4322 = vmax.f32 %v4210, %v4275
    %4323 = vmax.xlane.f32.xlu0 %v4322
    %v4324 = vpop.xlane.xlu0 %4323
    %v4325 = vmax.f32 %v4213, %v4278
    %4326 = vmax.xlane.f32.xlu0 %v4325
    %v4327 = vpop.xlane.xlu0 %4326
    %v4328 = vmax.f32 %v4216, %v4281
    %4329 = vmax.xlane.f32.xlu0 %v4328
    %v4330 = vpop.xlane.xlu0 %4329
    %v4331 = vmax.f32 %v4219, %v4284
    %4332 = vmax.xlane.f32.xlu0 %v4331
    %v4333 = vpop.xlane.xlu0 %4332
    %v4334 = vmax.f32 %v4222, %v4287
    %4335 = vmax.xlane.f32.xlu0 %v4334
    %v4336 = vpop.xlane.xlu0 %4335
    %v4337 = vmax.f32 %v4225, %v4290
    %4338 = vmax.xlane.f32.xlu0 %v4337
    %v4339 = vpop.xlane.xlu0 %4338
    %v4340 = vmax.f32 %v4228, %v4293
    %4341 = vmax.xlane.f32.xlu0 %v4340
    %v4342 = vpop.xlane.xlu0 %4341
    %v4343 = vmax.f32 %v4231, %v4296
    %4344 = vmax.xlane.f32.xlu0 %v4343
    %v4345 = vpop.xlane.xlu0 %4344
    %v4346 = vmax.f32 %v4234, %v4299
    %4347 = vmax.xlane.f32.xlu0 %v4346
    %v4348 = vpop.xlane.xlu0 %4347
    %v4349 = vsub.f32 %v4189, %v4303
    %v4350 = vsub.f32 %v4254, %v4303
    %v4351 = vsub.f32 %v4192, %v4306
    %v4352 = vsub.f32 %v4257, %v4306
    %v4353 = vsub.f32 %v4195, %v4309
    %v4354 = vsub.f32 %v4260, %v4309
    %v4355 = vsub.f32 %v4198, %v4312
    %v4356 = vsub.f32 %v4263, %v4312
    %v4357 = vsub.f32 %v4201, %v4315
    %v4358 = vsub.f32 %v4266, %v4315
    %v4359 = vsub.f32 %v4204, %v4318
    %v4360 = vsub.f32 %v4269, %v4318
    %v4361 = vsub.f32 %v4207, %v4321
    %v4362 = vsub.f32 %v4272, %v4321
    %v4363 = vsub.f32 %v4210, %v4324
    %v4364 = vsub.f32 %v4275, %v4324
    %v4365 = vsub.f32 %v4213, %v4327
    %v4366 = vsub.f32 %v4278, %v4327
    %v4367 = vsub.f32 %v4216, %v4330
    %v4368 = vsub.f32 %v4281, %v4330
    %v4369 = vsub.f32 %v4219, %v4333
    %v4370 = vsub.f32 %v4284, %v4333
    %v4371 = vsub.f32 %v4222, %v4336
    %v4372 = vsub.f32 %v4287, %v4336
    %v4373 = vsub.f32 %v4225, %v4339
    %v4374 = vsub.f32 %v4290, %v4339
    %v4375 = vsub.f32 %v4228, %v4342
    %v4376 = vsub.f32 %v4293, %v4342
    %v4377 = vsub.f32 %v4231, %v4345
    %v4378 = vsub.f32 %v4296, %v4345
    %v4379 = vsub.f32 %v4234, %v4348
    %v4380 = vsub.f32 %v4299, %v4348
    %v4381 = vmul.f32 %v4349, 1.442695
    %v4382 = vpow.pop %v4381
    %v4383 = vmul.f32 %v4350, 1.442695
    %v4384 = vpow.pop %v4383
    %v4385 = vmul.f32 %v4351, 1.442695
    %v4386 = vpow.pop %v4385
    %v4387 = vmul.f32 %v4352, 1.442695
    %v4388 = vpow.pop %v4387
    %v4389 = vmul.f32 %v4353, 1.442695
    %v4390 = vpow.pop %v4389
    %v4391 = vmul.f32 %v4354, 1.442695
    %v4392 = vpow.pop %v4391
    %v4393 = vmul.f32 %v4355, 1.442695
    %v4394 = vpow.pop %v4393
    %v4395 = vmul.f32 %v4356, 1.442695
    %v4396 = vpow.pop %v4395
    %v4397 = vmul.f32 %v4357, 1.442695
    %v4398 = vpow.pop %v4397
    %v4399 = vmul.f32 %v4358, 1.442695
    %v4400 = vpow.pop %v4399
    %v4401 = vmul.f32 %v4359, 1.442695
    %v4402 = vpow.pop %v4401
    %v4403 = vmul.f32 %v4360, 1.442695
    %v4404 = vpow.pop %v4403
    %v4405 = vmul.f32 %v4361, 1.442695
    %v4406 = vpow.pop %v4405
    %v4407 = vmul.f32 %v4362, 1.442695
    %v4408 = vpow.pop %v4407
    %v4409 = vmul.f32 %v4363, 1.442695
    %v4410 = vpow.pop %v4409
    %v4411 = vmul.f32 %v4364, 1.442695
    %v4412 = vpow.pop %v4411
    %v4413 = vmul.f32 %v4365, 1.442695
    %v4414 = vpow.pop %v4413
    %v4415 = vmul.f32 %v4366, 1.442695
    %v4416 = vpow.pop %v4415
    %v4417 = vmul.f32 %v4367, 1.442695
    %v4418 = vpow.pop %v4417
    %v4419 = vmul.f32 %v4368, 1.442695
    %v4420 = vpow.pop %v4419
    %v4421 = vmul.f32 %v4369, 1.442695
    %v4422 = vpow.pop %v4421
    %v4423 = vmul.f32 %v4370, 1.442695
    %v4424 = vpow.pop %v4423
    %v4425 = vmul.f32 %v4371, 1.442695
    %v4426 = vpow.pop %v4425
    %v4427 = vmul.f32 %v4372, 1.442695
    %v4428 = vpow.pop %v4427
    %v4429 = vmul.f32 %v4373, 1.442695
    %v4430 = vpow.pop %v4429
    %v4431 = vmul.f32 %v4374, 1.442695
    %v4432 = vpow.pop %v4431
    %v4433 = vmul.f32 %v4375, 1.442695
    %v4434 = vpow.pop %v4433
    %v4435 = vmul.f32 %v4376, 1.442695
    %v4436 = vpow.pop %v4435
    %v4437 = vmul.f32 %v4377, 1.442695
    %v4438 = vpow.pop %v4437
    %v4439 = vmul.f32 %v4378, 1.442695
    %v4440 = vpow.pop %v4439
    %v4441 = vmul.f32 %v4379, 1.442695
    %v4442 = vpow.pop %v4441
    %v4443 = vmul.f32 %v4380, 1.442695
    %v4444 = vpow.pop %v4443
    %v4445 = vadd.f32 %v4382, %v4384
    %4446 = vadd.xlane.f32.xlu0 %v4445
    %v4447 = vpop.xlane.xlu0 %4446
    %v4448 = vadd.f32 %v4386, %v4388
    %4449 = vadd.xlane.f32.xlu0 %v4448
    %v4450 = vpop.xlane.xlu0 %4449
    %v4451 = vadd.f32 %v4390, %v4392
    %4452 = vadd.xlane.f32.xlu0 %v4451
    %v4453 = vpop.xlane.xlu0 %4452
    %v4454 = vadd.f32 %v4394, %v4396
    %4455 = vadd.xlane.f32.xlu0 %v4454
    %v4456 = vpop.xlane.xlu0 %4455
    %v4457 = vadd.f32 %v4398, %v4400
    %4458 = vadd.xlane.f32.xlu0 %v4457
    %v4459 = vpop.xlane.xlu0 %4458
    %v4460 = vadd.f32 %v4402, %v4404
    %4461 = vadd.xlane.f32.xlu0 %v4460
    %v4462 = vpop.xlane.xlu0 %4461
    %v4463 = vadd.f32 %v4406, %v4408
    %4464 = vadd.xlane.f32.xlu0 %v4463
    %v4465 = vpop.xlane.xlu0 %4464
    %v4466 = vadd.f32 %v4410, %v4412
    %4467 = vadd.xlane.f32.xlu0 %v4466
    %v4468 = vpop.xlane.xlu0 %4467
    %v4469 = vadd.f32 %v4414, %v4416
    %4470 = vadd.xlane.f32.xlu0 %v4469
    %v4471 = vpop.xlane.xlu0 %4470
    %v4472 = vadd.f32 %v4418, %v4420
    %4473 = vadd.xlane.f32.xlu0 %v4472
    %v4474 = vpop.xlane.xlu0 %4473
    %v4475 = vadd.f32 %v4422, %v4424
    %4476 = vadd.xlane.f32.xlu0 %v4475
    %v4477 = vpop.xlane.xlu0 %4476
    %v4478 = vadd.f32 %v4426, %v4428
    %4479 = vadd.xlane.f32.xlu0 %v4478
    %v4480 = vpop.xlane.xlu0 %4479
    %v4481 = vadd.f32 %v4430, %v4432
    %4482 = vadd.xlane.f32.xlu0 %v4481
    %v4483 = vpop.xlane.xlu0 %4482
    %v4484 = vadd.f32 %v4434, %v4436
    %4485 = vadd.xlane.f32.xlu0 %v4484
    %v4486 = vpop.xlane.xlu0 %4485
    %v4487 = vadd.f32 %v4438, %v4440
    %4488 = vadd.xlane.f32.xlu0 %v4487
    %v4489 = vpop.xlane.xlu0 %4488
    %v4490 = vadd.f32 %v4442, %v4444
    %4491 = vadd.xlane.f32.xlu0 %v4490
    %v4492 = vpop.xlane.xlu0 %4491
    %v4493 = vrcp.pop %v4447
    %v4494 = vrcp.pop %v4450
    %v4495 = vrcp.pop %v4453
    %v4496 = vrcp.pop %v4456
    %v4497 = vrcp.pop %v4459
    %v4498 = vrcp.pop %v4462
    %v4499 = vrcp.pop %v4465
    %v4500 = vrcp.pop %v4468
    %v4501 = vrcp.pop %v4471
    %v4502 = vrcp.pop %v4474
    %v4503 = vrcp.pop %v4477
    %v4504 = vrcp.pop %v4480
    %v4505 = vrcp.pop %v4483
    %v4506 = vrcp.pop %v4486
    %v4507 = vrcp.pop %v4489
    %v4508 = vrcp.pop %v4492
    %4509 = vrot.lane.b32.xlu0 %v1695, 104
    %v4510 = vpop.permute.xlu0 %4509
    %4511 = vrot.lane.b32.xlu0 %v1698, 104
    %v4512 = vpop.permute.xlu0 %4511
    %4513 = vrot.lane.b32.xlu0 %v1701, 104
    %v4514 = vpop.permute.xlu0 %4513
    %4515 = vrot.lane.b32.xlu0 %v1704, 104
    %v4516 = vpop.permute.xlu0 %4515
    %4517 = vrot.lane.b32.xlu0 %v1707, 104
    %v4518 = vpop.permute.xlu0 %4517
    %4519 = vrot.lane.b32.xlu0 %v1710, 104
    %v4520 = vpop.permute.xlu0 %4519
    %4521 = vrot.lane.b32.xlu0 %v1713, 104
    %v4522 = vpop.permute.xlu0 %4521
    %4523 = vrot.lane.b32.xlu0 %v1716, 104
    %v4524 = vpop.permute.xlu0 %4523
    %4525 = vrot.lane.b32.xlu0 %v1719, 104
    %v4526 = vpop.permute.xlu0 %4525
    %4527 = vrot.lane.b32.xlu0 %v1722, 104
    %v4528 = vpop.permute.xlu0 %4527
    %4529 = vrot.lane.b32.xlu0 %v1725, 104
    %v4530 = vpop.permute.xlu0 %4529
    %4531 = vrot.lane.b32.xlu0 %v1728, 104
    %v4532 = vpop.permute.xlu0 %4531
    %4533 = vrot.lane.b32.xlu0 %v1731, 104
    %v4534 = vpop.permute.xlu0 %4533
    %4535 = vrot.lane.b32.xlu0 %v1734, 104
    %v4536 = vpop.permute.xlu0 %4535
    %4537 = vrot.lane.b32.xlu0 %v1737, 104
    %v4538 = vpop.permute.xlu0 %4537
    %4539 = vrot.lane.b32.xlu0 %v1740, 104
    %v4540 = vpop.permute.xlu0 %4539
    %4541 = vrot.lane.b32.xlu0 %v1743, 104
    %v4542 = vpop.permute.xlu0 %4541
    %4543 = vrot.lane.b32.xlu0 %v1746, 104
    %v4544 = vpop.permute.xlu0 %4543
    %4545 = vrot.lane.b32.xlu0 %v1749, 104
    %v4546 = vpop.permute.xlu0 %4545
    %4547 = vrot.lane.b32.xlu0 %v1752, 104
    %v4548 = vpop.permute.xlu0 %4547
    %4549 = vrot.lane.b32.xlu0 %v1755, 104
    %v4550 = vpop.permute.xlu0 %4549
    %4551 = vrot.lane.b32.xlu0 %v1758, 104
    %v4552 = vpop.permute.xlu0 %4551
    %4553 = vrot.lane.b32.xlu0 %v1761, 104
    %v4554 = vpop.permute.xlu0 %4553
    %4555 = vrot.lane.b32.xlu0 %v1764, 104
    %v4556 = vpop.permute.xlu0 %4555
    %4557 = vrot.lane.b32.xlu0 %v1767, 104
    %v4558 = vpop.permute.xlu0 %4557
    %4559 = vrot.lane.b32.xlu0 %v1770, 104
    %v4560 = vpop.permute.xlu0 %4559
    %4561 = vrot.lane.b32.xlu0 %v1773, 104
    %v4562 = vpop.permute.xlu0 %4561
    %4563 = vrot.lane.b32.xlu0 %v1776, 104
    %v4564 = vpop.permute.xlu0 %4563
    %4565 = vrot.lane.b32.xlu0 %v1779, 104
    %v4566 = vpop.permute.xlu0 %4565
    %4567 = vrot.lane.b32.xlu0 %v1782, 104
    %v4568 = vpop.permute.xlu0 %4567
    %4569 = vrot.lane.b32.xlu0 %v1785, 104
    %v4570 = vpop.permute.xlu0 %4569
    %4571 = vrot.lane.b32.xlu0 %v1788, 104
    %v4572 = vpop.permute.xlu0 %4571
    %4605 = vmatpush.msra.mxu0 %v4540
    %4606 = vmatpush.msra.mxu0 %v4538
    %4607 = vmatpush.msra.mxu0 %v4536
    %4608 = vmatpush.msra.mxu0 %v4534
    %4609 = vmatpush.msra.mxu0 %v4532
    %4610 = vmatpush.msra.mxu0 %v4530
    %4611 = vmatpush.msra.mxu0 %v4528
    %4612 = vmatpush.msra.mxu0 %v4526
    %4613 = vmatpush.msra.mxu0 %v4524
    %4614 = vmatpush.msra.mxu0 %v4522
    %4615 = vmatpush.msra.mxu0 %v4520
    %4616 = vmatpush.msra.mxu0 %v4518
    %4617 = vmatpush.msra.mxu0 %v4516
    %4618 = vmatpush.msra.mxu0 %v4514
    %4619 = vmatpush.msra.mxu0 %v4512
    %4620 = vmatpush.msra.mxu0 %v4510
    %4621 = vmatmul.f32.gmra.mxu0 %v4382
    %v4622 = vpop.f32.mrf.mxu0
    %v4623 = vadd.f32 0.0, %v4622
    %4624 = vmatmul.f32.gmra.mxu0 %v4386
    %v4625 = vpop.f32.mrf.mxu0
    %v4626 = vadd.f32 0.0, %v4625
    %4627 = vmatmul.f32.gmra.mxu0 %v4390
    %v4628 = vpop.f32.mrf.mxu0
    %v4629 = vadd.f32 0.0, %v4628
    %4630 = vmatmul.f32.gmra.mxu0 %v4394
    %v4631 = vpop.f32.mrf.mxu0
    %v4632 = vadd.f32 0.0, %v4631
    %4633 = vmatmul.f32.gmra.mxu0 %v4398
    %v4634 = vpop.f32.mrf.mxu0
    %v4635 = vadd.f32 0.0, %v4634
    %4636 = vmatmul.f32.gmra.mxu0 %v4402
    %v4637 = vpop.f32.mrf.mxu0
    %v4638 = vadd.f32 0.0, %v4637
    %4639 = vmatmul.f32.gmra.mxu0 %v4406
    %v4640 = vpop.f32.mrf.mxu0
    %v4641 = vadd.f32 0.0, %v4640
    %4642 = vmatmul.f32.gmra.mxu0 %v4410
    %v4643 = vpop.f32.mrf.mxu0
    %v4644 = vadd.f32 0.0, %v4643
    %4645 = vmatmul.f32.gmra.mxu0 %v4414
    %v4646 = vpop.f32.mrf.mxu0
    %v4647 = vadd.f32 0.0, %v4646
    %4648 = vmatmul.f32.gmra.mxu0 %v4418
    %v4649 = vpop.f32.mrf.mxu0
    %v4650 = vadd.f32 0.0, %v4649
    %4651 = vmatmul.f32.gmra.mxu0 %v4422
    %v4652 = vpop.f32.mrf.mxu0
    %v4653 = vadd.f32 0.0, %v4652
    %4654 = vmatmul.f32.gmra.mxu0 %v4426
    %v4655 = vpop.f32.mrf.mxu0
    %v4656 = vadd.f32 0.0, %v4655
    %4657 = vmatmul.f32.gmra.mxu0 %v4430
    %v4658 = vpop.f32.mrf.mxu0
    %v4659 = vadd.f32 0.0, %v4658
    %4660 = vmatmul.f32.gmra.mxu0 %v4434
    %v4661 = vpop.f32.mrf.mxu0
    %v4662 = vadd.f32 0.0, %v4661
    %4663 = vmatmul.f32.gmra.mxu0 %v4438
    %v4664 = vpop.f32.mrf.mxu0
    %v4665 = vadd.f32 0.0, %v4664
    %4666 = vmatmul.f32.gmra.mxu0 %v4442
    %v4667 = vpop.f32.mrf.mxu0
    %v4668 = vadd.f32 0.0, %v4667
    %4669 = vdwg.mxu0
    %4670 = vmatpush.msra.mxu0 %v4572
    %4671 = vmatpush.msra.mxu0 %v4570
    %4672 = vmatpush.msra.mxu0 %v4568
    %4673 = vmatpush.msra.mxu0 %v4566
    %4674 = vmatpush.msra.mxu0 %v4564
    %4675 = vmatpush.msra.mxu0 %v4562
    %4676 = vmatpush.msra.mxu0 %v4560
    %4677 = vmatpush.msra.mxu0 %v4558
    %4678 = vmatpush.msra.mxu0 %v4556
    %4679 = vmatpush.msra.mxu0 %v4554
    %4680 = vmatpush.msra.mxu0 %v4552
    %4681 = vmatpush.msra.mxu0 %v4550
    %4682 = vmatpush.msra.mxu0 %v4548
    %4683 = vmatpush.msra.mxu0 %v4546
    %4684 = vmatpush.msra.mxu0 %v4544
    %4685 = vmatpush.msra.mxu0 %v4542
    %4686 = vmatmul.f32.gmra.mxu0 %v4384
    %v4687 = vpop.f32.mrf.mxu0
    %v4688 = vadd.f32 %v4623, %v4687
    %4689 = vmatmul.f32.gmra.mxu0 %v4388
    %v4690 = vpop.f32.mrf.mxu0
    %v4691 = vadd.f32 %v4626, %v4690
    %4692 = vmatmul.f32.gmra.mxu0 %v4392
    %v4693 = vpop.f32.mrf.mxu0
    %v4694 = vadd.f32 %v4629, %v4693
    %4695 = vmatmul.f32.gmra.mxu0 %v4396
    %v4696 = vpop.f32.mrf.mxu0
    %v4697 = vadd.f32 %v4632, %v4696
    %4698 = vmatmul.f32.gmra.mxu0 %v4400
    %v4699 = vpop.f32.mrf.mxu0
    %v4700 = vadd.f32 %v4635, %v4699
    %4701 = vmatmul.f32.gmra.mxu0 %v4404
    %v4702 = vpop.f32.mrf.mxu0
    %v4703 = vadd.f32 %v4638, %v4702
    %4704 = vmatmul.f32.gmra.mxu0 %v4408
    %v4705 = vpop.f32.mrf.mxu0
    %v4706 = vadd.f32 %v4641, %v4705
    %4707 = vmatmul.f32.gmra.mxu0 %v4412
    %v4708 = vpop.f32.mrf.mxu0
    %v4709 = vadd.f32 %v4644, %v4708
    %4710 = vmatmul.f32.gmra.mxu0 %v4416
    %v4711 = vpop.f32.mrf.mxu0
    %v4712 = vadd.f32 %v4647, %v4711
    %4713 = vmatmul.f32.gmra.mxu0 %v4420
    %v4714 = vpop.f32.mrf.mxu0
    %v4715 = vadd.f32 %v4650, %v4714
    %4716 = vmatmul.f32.gmra.mxu0 %v4424
    %v4717 = vpop.f32.mrf.mxu0
    %v4718 = vadd.f32 %v4653, %v4717
    %4719 = vmatmul.f32.gmra.mxu0 %v4428
    %v4720 = vpop.f32.mrf.mxu0
    %v4721 = vadd.f32 %v4656, %v4720
    %4722 = vmatmul.f32.gmra.mxu0 %v4432
    %v4723 = vpop.f32.mrf.mxu0
    %v4724 = vadd.f32 %v4659, %v4723
    %4725 = vmatmul.f32.gmra.mxu0 %v4436
    %v4726 = vpop.f32.mrf.mxu0
    %v4727 = vadd.f32 %v4662, %v4726
    %4728 = vmatmul.f32.gmra.mxu0 %v4440
    %v4729 = vpop.f32.mrf.mxu0
    %v4730 = vadd.f32 %v4665, %v4729
    %4731 = vmatmul.f32.gmra.mxu0 %v4444
    %v4732 = vpop.f32.mrf.mxu0
    %v4733 = vadd.f32 %v4668, %v4732
    %4734 = vdwg.mxu0
    %v4735 = vmul.f32 %v4688, %v4493
    %v4736 = vmul.f32 %v4691, %v4494
    %v4737 = vmul.f32 %v4694, %v4495
    %v4738 = vmul.f32 %v4697, %v4496
    %v4739 = vmul.f32 %v4700, %v4497
    %v4740 = vmul.f32 %v4703, %v4498
    %v4741 = vmul.f32 %v4706, %v4499
    %v4742 = vmul.f32 %v4709, %v4500
    %v4743 = vmul.f32 %v4712, %v4501
    %v4744 = vmul.f32 %v4715, %v4502
    %v4745 = vmul.f32 %v4718, %v4503
    %v4746 = vmul.f32 %v4721, %v4504
    %v4747 = vmul.f32 %v4724, %v4505
    %v4748 = vmul.f32 %v4727, %v4506
    %v4749 = vmul.f32 %v4730, %v4507
    %v4750 = vmul.f32 %v4733, %v4508
    %4767 = vrot.lane.b32.xlu0 %v3191, 8
    %v4768 = vpop.permute.xlu0 %4767
    %4769 = vrot.lane.b32.xlu0 %v3192, 8
    %v4770 = vpop.permute.xlu0 %4769
    %4771 = vrot.lane.b32.xlu0 %v3193, 8
    %v4772 = vpop.permute.xlu0 %4771
    %4773 = vrot.lane.b32.xlu0 %v3194, 8
    %v4774 = vpop.permute.xlu0 %4773
    %4775 = vrot.lane.b32.xlu0 %v3195, 8
    %v4776 = vpop.permute.xlu0 %4775
    %4777 = vrot.lane.b32.xlu0 %v3196, 8
    %v4778 = vpop.permute.xlu0 %4777
    %4779 = vrot.lane.b32.xlu0 %v3197, 8
    %v4780 = vpop.permute.xlu0 %4779
    %4781 = vrot.lane.b32.xlu0 %v3198, 8
    %v4782 = vpop.permute.xlu0 %4781
    %4783 = vrot.lane.b32.xlu0 %v3199, 8
    %v4784 = vpop.permute.xlu0 %4783
    %4785 = vrot.lane.b32.xlu0 %v3200, 8
    %v4786 = vpop.permute.xlu0 %4785
    %4787 = vrot.lane.b32.xlu0 %v3201, 8
    %v4788 = vpop.permute.xlu0 %4787
    %4789 = vrot.lane.b32.xlu0 %v3202, 8
    %v4790 = vpop.permute.xlu0 %4789
    %4791 = vrot.lane.b32.xlu0 %v3203, 8
    %v4792 = vpop.permute.xlu0 %4791
    %4793 = vrot.lane.b32.xlu0 %v3204, 8
    %v4794 = vpop.permute.xlu0 %4793
    %4795 = vrot.lane.b32.xlu0 %v3205, 8
    %v4796 = vpop.permute.xlu0 %4795
    %4797 = vrot.lane.b32.xlu0 %v3206, 8
    %v4798 = vpop.permute.xlu0 %4797
    %4831 = vrot.lane.b32.xlu0 %v3963, 16
    %v4832 = vpop.permute.xlu0 %4831
    %4833 = vrot.lane.b32.xlu0 %v3964, 16
    %v4834 = vpop.permute.xlu0 %4833
    %4835 = vrot.lane.b32.xlu0 %v3965, 16
    %v4836 = vpop.permute.xlu0 %4835
    %4837 = vrot.lane.b32.xlu0 %v3966, 16
    %v4838 = vpop.permute.xlu0 %4837
    %4839 = vrot.lane.b32.xlu0 %v3967, 16
    %v4840 = vpop.permute.xlu0 %4839
    %4841 = vrot.lane.b32.xlu0 %v3968, 16
    %v4842 = vpop.permute.xlu0 %4841
    %4843 = vrot.lane.b32.xlu0 %v3969, 16
    %v4844 = vpop.permute.xlu0 %4843
    %4845 = vrot.lane.b32.xlu0 %v3970, 16
    %v4846 = vpop.permute.xlu0 %4845
    %4847 = vrot.lane.b32.xlu0 %v3971, 16
    %v4848 = vpop.permute.xlu0 %4847
    %4849 = vrot.lane.b32.xlu0 %v3972, 16
    %v4850 = vpop.permute.xlu0 %4849
    %4851 = vrot.lane.b32.xlu0 %v3973, 16
    %v4852 = vpop.permute.xlu0 %4851
    %4853 = vrot.lane.b32.xlu0 %v3974, 16
    %v4854 = vpop.permute.xlu0 %4853
    %4855 = vrot.lane.b32.xlu0 %v3975, 16
    %v4856 = vpop.permute.xlu0 %4855
    %4857 = vrot.lane.b32.xlu0 %v3976, 16
    %v4858 = vpop.permute.xlu0 %4857
    %4859 = vrot.lane.b32.xlu0 %v3977, 16
    %v4860 = vpop.permute.xlu0 %4859
    %4861 = vrot.lane.b32.xlu0 %v3978, 16
    %v4862 = vpop.permute.xlu0 %4861
    %4895 = vrot.lane.b32.xlu0 %v4735, 24
    %v4896 = vpop.permute.xlu0 %4895
    %4897 = vrot.lane.b32.xlu0 %v4736, 24
    %v4898 = vpop.permute.xlu0 %4897
    %4899 = vrot.lane.b32.xlu0 %v4737, 24
    %v4900 = vpop.permute.xlu0 %4899
    %4901 = vrot.lane.b32.xlu0 %v4738, 24
    %v4902 = vpop.permute.xlu0 %4901
    %4903 = vrot.lane.b32.xlu0 %v4739, 24
    %v4904 = vpop.permute.xlu0 %4903
    %4905 = vrot.lane.b32.xlu0 %v4740, 24
    %v4906 = vpop.permute.xlu0 %4905
    %4907 = vrot.lane.b32.xlu0 %v4741, 24
    %v4908 = vpop.permute.xlu0 %4907
    %4909 = vrot.lane.b32.xlu0 %v4742, 24
    %v4910 = vpop.permute.xlu0 %4909
    %4911 = vrot.lane.b32.xlu0 %v4743, 24
    %v4912 = vpop.permute.xlu0 %4911
    %4913 = vrot.lane.b32.xlu0 %v4744, 24
    %v4914 = vpop.permute.xlu0 %4913
    %4915 = vrot.lane.b32.xlu0 %v4745, 24
    %v4916 = vpop.permute.xlu0 %4915
    %4917 = vrot.lane.b32.xlu0 %v4746, 24
    %v4918 = vpop.permute.xlu0 %4917
    %4919 = vrot.lane.b32.xlu0 %v4747, 24
    %v4920 = vpop.permute.xlu0 %4919
    %4921 = vrot.lane.b32.xlu0 %v4748, 24
    %v4922 = vpop.permute.xlu0 %4921
    %4923 = vrot.lane.b32.xlu0 %v4749, 24
    %v4924 = vpop.permute.xlu0 %4923
    %4925 = vrot.lane.b32.xlu0 %v4750, 24
    %v4926 = vpop.permute.xlu0 %4925
    %v4943 = vsel %vm1790, %v2387, %v4768
    %v4944 = vsel %vm1790, %v2388, %v4770
    %v4945 = vsel %vm1790, %v2389, %v4772
    %v4946 = vsel %vm1790, %v2390, %v4774
    %v4947 = vsel %vm1790, %v2391, %v4776
    %v4948 = vsel %vm1790, %v2392, %v4778
    %v4949 = vsel %vm1790, %v2393, %v4780
    %v4950 = vsel %vm1790, %v2394, %v4782
    %v4951 = vsel %vm1790, %v2395, %v4784
    %v4952 = vsel %vm1790, %v2396, %v4786
    %v4953 = vsel %vm1790, %v2397, %v4788
    %v4954 = vsel %vm1790, %v2398, %v4790
    %v4955 = vsel %vm1790, %v2399, %v4792
    %v4956 = vsel %vm1790, %v2400, %v4794
    %v4957 = vsel %vm1790, %v2401, %v4796
    %v4958 = vsel %vm1790, %v2402, %v4798
    %vm4959 = vcmask 130048
    %v4960 = vsel %vm4959, %v4943, %v4832
    %v4961 = vsel %vm4959, %v4944, %v4834
    %v4962 = vsel %vm4959, %v4945, %v4836
    %v4963 = vsel %vm4959, %v4946, %v4838
    %v4964 = vsel %vm4959, %v4947, %v4840
    %v4965 = vsel %vm4959, %v4948, %v4842
    %v4966 = vsel %vm4959, %v4949, %v4844
    %v4967 = vsel %vm4959, %v4950, %v4846
    %v4968 = vsel %vm4959, %v4951, %v4848
    %v4969 = vsel %vm4959, %v4952, %v4850
    %v4970 = vsel %vm4959, %v4953, %v4852
    %v4971 = vsel %vm4959, %v4954, %v4854
    %v4972 = vsel %vm4959, %v4955, %v4856
    %v4973 = vsel %vm4959, %v4956, %v4858
    %v4974 = vsel %vm4959, %v4957, %v4860
    %v4975 = vsel %vm4959, %v4958, %v4862
    %vm4976 = vcmask 195584
    %v4977 = vsel %vm4976, %v4960, %v4896
    %v4978 = vsel %vm4976, %v4961, %v4898
    %v4979 = vsel %vm4976, %v4962, %v4900
    %v4980 = vsel %vm4976, %v4963, %v4902
    %v4981 = vsel %vm4976, %v4964, %v4904
    %v4982 = vsel %vm4976, %v4965, %v4906
    %v4983 = vsel %vm4976, %v4966, %v4908
    %v4984 = vsel %vm4976, %v4967, %v4910
    %v4985 = vsel %vm4976, %v4968, %v4912
    %v4986 = vsel %vm4976, %v4969, %v4914
    %v4987 = vsel %vm4976, %v4970, %v4916
    %v4988 = vsel %vm4976, %v4971, %v4918
    %v4989 = vsel %vm4976, %v4972, %v4920
    %v4990 = vsel %vm4976, %v4973, %v4922
    %v4991 = vsel %vm4976, %v4974, %v4924
    %v4992 = vsel %vm4976, %v4975, %v4926
    %5009 = vrot.lane.b32.xlu0 %v1341, 96
    %v5010 = vpop.permute.xlu0 %5009
    %5011 = vrot.lane.b32.xlu0 %v1344, 96
    %v5012 = vpop.permute.xlu0 %5011
    %5013 = vrot.lane.b32.xlu0 %v1347, 96
    %v5014 = vpop.permute.xlu0 %5013
    %5015 = vrot.lane.b32.xlu0 %v1350, 96
    %v5016 = vpop.permute.xlu0 %5015
    %5017 = vrot.lane.b32.xlu0 %v1353, 96
    %v5018 = vpop.permute.xlu0 %5017
    %5019 = vrot.lane.b32.xlu0 %v1356, 96
    %v5020 = vpop.permute.xlu0 %5019
    %5021 = vrot.lane.b32.xlu0 %v1359, 96
    %v5022 = vpop.permute.xlu0 %5021
    %5023 = vrot.lane.b32.xlu0 %v1362, 96
    %v5024 = vpop.permute.xlu0 %5023
    %5025 = vrot.lane.b32.xlu0 %v1365, 96
    %v5026 = vpop.permute.xlu0 %5025
    %5027 = vrot.lane.b32.xlu0 %v1368, 96
    %v5028 = vpop.permute.xlu0 %5027
    %5029 = vrot.lane.b32.xlu0 %v1371, 96
    %v5030 = vpop.permute.xlu0 %5029
    %5031 = vrot.lane.b32.xlu0 %v1374, 96
    %v5032 = vpop.permute.xlu0 %5031
    %5033 = vrot.lane.b32.xlu0 %v1377, 96
    %v5034 = vpop.permute.xlu0 %5033
    %5035 = vrot.lane.b32.xlu0 %v1380, 96
    %v5036 = vpop.permute.xlu0 %5035
    %5037 = vrot.lane.b32.xlu0 %v1383, 96
    %v5038 = vpop.permute.xlu0 %5037
    %5039 = vrot.lane.b32.xlu0 %v1386, 96
    %v5040 = vpop.permute.xlu0 %5039
    %5057 = vmatpush.msra.mxu0 %v5040
    %5058 = vmatpush.msra.mxu0 %v5038
    %5059 = vmatpush.msra.mxu0 %v5036
    %5060 = vmatpush.msra.mxu0 %v5034
    %5061 = vmatpush.msra.mxu0 %v5032
    %5062 = vmatpush.msra.mxu0 %v5030
    %5063 = vmatpush.msra.mxu0 %v5028
    %5064 = vmatpush.msra.mxu0 %v5026
    %5065 = vmatpush.msra.mxu0 %v5024
    %5066 = vmatpush.msra.mxu0 %v5022
    %5067 = vmatpush.msra.mxu0 %v5020
    %5068 = vmatpush.msra.mxu0 %v5018
    %5069 = vmatpush.msra.mxu0 %v5016
    %5070 = vmatpush.msra.mxu0 %v5014
    %5071 = vmatpush.msra.mxu0 %v5012
    %5072 = vmatpush.msra.mxu0 %v5010
    %5073 = vmatmul.f32.gmra.mxu0 %v1388
    %v5074 = vpop.f32.mrf.mxu0
    %v5075 = vadd.f32 0.0, %v5074
    %5076 = vmatmul.f32.gmra.mxu0 %v1389
    %v5077 = vpop.f32.mrf.mxu0
    %v5078 = vadd.f32 0.0, %v5077
    %5079 = vmatmul.f32.gmra.mxu0 %v1390
    %v5080 = vpop.f32.mrf.mxu0
    %v5081 = vadd.f32 0.0, %v5080
    %5082 = vmatmul.f32.gmra.mxu0 %v1391
    %v5083 = vpop.f32.mrf.mxu0
    %v5084 = vadd.f32 0.0, %v5083
    %5085 = vmatmul.f32.gmra.mxu0 %v1392
    %v5086 = vpop.f32.mrf.mxu0
    %v5087 = vadd.f32 0.0, %v5086
    %5088 = vmatmul.f32.gmra.mxu0 %v1393
    %v5089 = vpop.f32.mrf.mxu0
    %v5090 = vadd.f32 0.0, %v5089
    %5091 = vmatmul.f32.gmra.mxu0 %v1394
    %v5092 = vpop.f32.mrf.mxu0
    %v5093 = vadd.f32 0.0, %v5092
    %5094 = vmatmul.f32.gmra.mxu0 %v1395
    %v5095 = vpop.f32.mrf.mxu0
    %v5096 = vadd.f32 0.0, %v5095
    %5097 = vmatmul.f32.gmra.mxu0 %v1396
    %v5098 = vpop.f32.mrf.mxu0
    %v5099 = vadd.f32 0.0, %v5098
    %5100 = vmatmul.f32.gmra.mxu0 %v1397
    %v5101 = vpop.f32.mrf.mxu0
    %v5102 = vadd.f32 0.0, %v5101
    %5103 = vmatmul.f32.gmra.mxu0 %v1398
    %v5104 = vpop.f32.mrf.mxu0
    %v5105 = vadd.f32 0.0, %v5104
    %5106 = vmatmul.f32.gmra.mxu0 %v1399
    %v5107 = vpop.f32.mrf.mxu0
    %v5108 = vadd.f32 0.0, %v5107
    %5109 = vmatmul.f32.gmra.mxu0 %v1400
    %v5110 = vpop.f32.mrf.mxu0
    %v5111 = vadd.f32 0.0, %v5110
    %5112 = vmatmul.f32.gmra.mxu0 %v1401
    %v5113 = vpop.f32.mrf.mxu0
    %v5114 = vadd.f32 0.0, %v5113
    %5115 = vmatmul.f32.gmra.mxu0 %v1402
    %v5116 = vpop.f32.mrf.mxu0
    %v5117 = vadd.f32 0.0, %v5116
    %5118 = vmatmul.f32.gmra.mxu0 %v1403
    %v5119 = vpop.f32.mrf.mxu0
    %v5120 = vadd.f32 0.0, %v5119
    %5121 = vmatmul.f32.gmra.mxu0 %v1404
    %v5122 = vpop.f32.mrf.mxu0
    %v5123 = vadd.f32 0.0, %v5122
    %5124 = vmatmul.f32.gmra.mxu0 %v1405
    %v5125 = vpop.f32.mrf.mxu0
    %v5126 = vadd.f32 0.0, %v5125
    %5127 = vmatmul.f32.gmra.mxu0 %v1406
    %v5128 = vpop.f32.mrf.mxu0
    %v5129 = vadd.f32 0.0, %v5128
    %5130 = vmatmul.f32.gmra.mxu0 %v1407
    %v5131 = vpop.f32.mrf.mxu0
    %v5132 = vadd.f32 0.0, %v5131
    %5133 = vmatmul.f32.gmra.mxu0 %v1408
    %v5134 = vpop.f32.mrf.mxu0
    %v5135 = vadd.f32 0.0, %v5134
    %5136 = vmatmul.f32.gmra.mxu0 %v1409
    %v5137 = vpop.f32.mrf.mxu0
    %v5138 = vadd.f32 0.0, %v5137
    %5139 = vmatmul.f32.gmra.mxu0 %v1410
    %v5140 = vpop.f32.mrf.mxu0
    %v5141 = vadd.f32 0.0, %v5140
    %5142 = vmatmul.f32.gmra.mxu0 %v1411
    %v5143 = vpop.f32.mrf.mxu0
    %v5144 = vadd.f32 0.0, %v5143
    %5145 = vmatmul.f32.gmra.mxu0 %v1412
    %v5146 = vpop.f32.mrf.mxu0
    %v5147 = vadd.f32 0.0, %v5146
    %5148 = vmatmul.f32.gmra.mxu0 %v1413
    %v5149 = vpop.f32.mrf.mxu0
    %v5150 = vadd.f32 0.0, %v5149
    %5151 = vmatmul.f32.gmra.mxu0 %v1414
    %v5152 = vpop.f32.mrf.mxu0
    %v5153 = vadd.f32 0.0, %v5152
    %5154 = vmatmul.f32.gmra.mxu0 %v1415
    %v5155 = vpop.f32.mrf.mxu0
    %v5156 = vadd.f32 0.0, %v5155
    %5157 = vmatmul.f32.gmra.mxu0 %v1416
    %v5158 = vpop.f32.mrf.mxu0
    %v5159 = vadd.f32 0.0, %v5158
    %5160 = vmatmul.f32.gmra.mxu0 %v1417
    %v5161 = vpop.f32.mrf.mxu0
    %v5162 = vadd.f32 0.0, %v5161
    %5163 = vmatmul.f32.gmra.mxu0 %v1418
    %v5164 = vpop.f32.mrf.mxu0
    %v5165 = vadd.f32 0.0, %v5164
    %5166 = vmatmul.f32.gmra.mxu0 %v1419
    %v5167 = vpop.f32.mrf.mxu0
    %v5168 = vadd.f32 0.0, %v5167
    %5169 = vdwg.mxu0
    %5170 = vrot.lane.b32.xlu0 %v1341, 64
    %v5171 = vpop.permute.xlu0 %5170
    %5172 = vrot.lane.b32.xlu0 %v1344, 64
    %v5173 = vpop.permute.xlu0 %5172
    %5174 = vrot.lane.b32.xlu0 %v1347, 64
    %v5175 = vpop.permute.xlu0 %5174
    %5176 = vrot.lane.b32.xlu0 %v1350, 64
    %v5177 = vpop.permute.xlu0 %5176
    %5178 = vrot.lane.b32.xlu0 %v1353, 64
    %v5179 = vpop.permute.xlu0 %5178
    %5180 = vrot.lane.b32.xlu0 %v1356, 64
    %v5181 = vpop.permute.xlu0 %5180
    %5182 = vrot.lane.b32.xlu0 %v1359, 64
    %v5183 = vpop.permute.xlu0 %5182
    %5184 = vrot.lane.b32.xlu0 %v1362, 64
    %v5185 = vpop.permute.xlu0 %5184
    %5186 = vrot.lane.b32.xlu0 %v1365, 64
    %v5187 = vpop.permute.xlu0 %5186
    %5188 = vrot.lane.b32.xlu0 %v1368, 64
    %v5189 = vpop.permute.xlu0 %5188
    %5190 = vrot.lane.b32.xlu0 %v1371, 64
    %v5191 = vpop.permute.xlu0 %5190
    %5192 = vrot.lane.b32.xlu0 %v1374, 64
    %v5193 = vpop.permute.xlu0 %5192
    %5194 = vrot.lane.b32.xlu0 %v1377, 64
    %v5195 = vpop.permute.xlu0 %5194
    %5196 = vrot.lane.b32.xlu0 %v1380, 64
    %v5197 = vpop.permute.xlu0 %5196
    %5198 = vrot.lane.b32.xlu0 %v1383, 64
    %v5199 = vpop.permute.xlu0 %5198
    %5200 = vrot.lane.b32.xlu0 %v1386, 64
    %v5201 = vpop.permute.xlu0 %5200
    %5218 = vmatpush.msra.mxu0 %v5201
    %5219 = vmatpush.msra.mxu0 %v5199
    %5220 = vmatpush.msra.mxu0 %v5197
    %5221 = vmatpush.msra.mxu0 %v5195
    %5222 = vmatpush.msra.mxu0 %v5193
    %5223 = vmatpush.msra.mxu0 %v5191
    %5224 = vmatpush.msra.mxu0 %v5189
    %5225 = vmatpush.msra.mxu0 %v5187
    %5226 = vmatpush.msra.mxu0 %v5185
    %5227 = vmatpush.msra.mxu0 %v5183
    %5228 = vmatpush.msra.mxu0 %v5181
    %5229 = vmatpush.msra.mxu0 %v5179
    %5230 = vmatpush.msra.mxu0 %v5177
    %5231 = vmatpush.msra.mxu0 %v5175
    %5232 = vmatpush.msra.mxu0 %v5173
    %5233 = vmatpush.msra.mxu0 %v5171
    %5234 = vmatmul.f32.gmra.mxu0 %v1597
    %v5235 = vpop.f32.mrf.mxu0
    %v5236 = vadd.f32 0.0, %v5235
    %5237 = vmatmul.f32.gmra.mxu0 %v1598
    %v5238 = vpop.f32.mrf.mxu0
    %v5239 = vadd.f32 0.0, %v5238
    %5240 = vmatmul.f32.gmra.mxu0 %v1599
    %v5241 = vpop.f32.mrf.mxu0
    %v5242 = vadd.f32 0.0, %v5241
    %5243 = vmatmul.f32.gmra.mxu0 %v1600
    %v5244 = vpop.f32.mrf.mxu0
    %v5245 = vadd.f32 0.0, %v5244
    %5246 = vmatmul.f32.gmra.mxu0 %v1601
    %v5247 = vpop.f32.mrf.mxu0
    %v5248 = vadd.f32 0.0, %v5247
    %5249 = vmatmul.f32.gmra.mxu0 %v1602
    %v5250 = vpop.f32.mrf.mxu0
    %v5251 = vadd.f32 0.0, %v5250
    %5252 = vmatmul.f32.gmra.mxu0 %v1603
    %v5253 = vpop.f32.mrf.mxu0
    %v5254 = vadd.f32 0.0, %v5253
    %5255 = vmatmul.f32.gmra.mxu0 %v1604
    %v5256 = vpop.f32.mrf.mxu0
    %v5257 = vadd.f32 0.0, %v5256
    %5258 = vmatmul.f32.gmra.mxu0 %v1605
    %v5259 = vpop.f32.mrf.mxu0
    %v5260 = vadd.f32 0.0, %v5259
    %5261 = vmatmul.f32.gmra.mxu0 %v1606
    %v5262 = vpop.f32.mrf.mxu0
    %v5263 = vadd.f32 0.0, %v5262
    %5264 = vmatmul.f32.gmra.mxu0 %v1607
    %v5265 = vpop.f32.mrf.mxu0
    %v5266 = vadd.f32 0.0, %v5265
    %5267 = vmatmul.f32.gmra.mxu0 %v1608
    %v5268 = vpop.f32.mrf.mxu0
    %v5269 = vadd.f32 0.0, %v5268
    %5270 = vmatmul.f32.gmra.mxu0 %v1609
    %v5271 = vpop.f32.mrf.mxu0
    %v5272 = vadd.f32 0.0, %v5271
    %5273 = vmatmul.f32.gmra.mxu0 %v1610
    %v5274 = vpop.f32.mrf.mxu0
    %v5275 = vadd.f32 0.0, %v5274
    %5276 = vmatmul.f32.gmra.mxu0 %v1611
    %v5277 = vpop.f32.mrf.mxu0
    %v5278 = vadd.f32 0.0, %v5277
    %5279 = vmatmul.f32.gmra.mxu0 %v1612
    %v5280 = vpop.f32.mrf.mxu0
    %v5281 = vadd.f32 0.0, %v5280
    %5282 = vmatmul.f32.gmra.mxu0 %v1613
    %v5283 = vpop.f32.mrf.mxu0
    %v5284 = vadd.f32 0.0, %v5283
    %5285 = vmatmul.f32.gmra.mxu0 %v1614
    %v5286 = vpop.f32.mrf.mxu0
    %v5287 = vadd.f32 0.0, %v5286
    %5288 = vmatmul.f32.gmra.mxu0 %v1615
    %v5289 = vpop.f32.mrf.mxu0
    %v5290 = vadd.f32 0.0, %v5289
    %5291 = vmatmul.f32.gmra.mxu0 %v1616
    %v5292 = vpop.f32.mrf.mxu0
    %v5293 = vadd.f32 0.0, %v5292
    %5294 = vmatmul.f32.gmra.mxu0 %v1617
    %v5295 = vpop.f32.mrf.mxu0
    %v5296 = vadd.f32 0.0, %v5295
    %5297 = vmatmul.f32.gmra.mxu0 %v1618
    %v5298 = vpop.f32.mrf.mxu0
    %v5299 = vadd.f32 0.0, %v5298
    %5300 = vmatmul.f32.gmra.mxu0 %v1619
    %v5301 = vpop.f32.mrf.mxu0
    %v5302 = vadd.f32 0.0, %v5301
    %5303 = vmatmul.f32.gmra.mxu0 %v1620
    %v5304 = vpop.f32.mrf.mxu0
    %v5305 = vadd.f32 0.0, %v5304
    %5306 = vmatmul.f32.gmra.mxu0 %v1621
    %v5307 = vpop.f32.mrf.mxu0
    %v5308 = vadd.f32 0.0, %v5307
    %5309 = vmatmul.f32.gmra.mxu0 %v1622
    %v5310 = vpop.f32.mrf.mxu0
    %v5311 = vadd.f32 0.0, %v5310
    %5312 = vmatmul.f32.gmra.mxu0 %v1623
    %v5313 = vpop.f32.mrf.mxu0
    %v5314 = vadd.f32 0.0, %v5313
    %5315 = vmatmul.f32.gmra.mxu0 %v1624
    %v5316 = vpop.f32.mrf.mxu0
    %v5317 = vadd.f32 0.0, %v5316
    %5318 = vmatmul.f32.gmra.mxu0 %v1625
    %v5319 = vpop.f32.mrf.mxu0
    %v5320 = vadd.f32 0.0, %v5319
    %5321 = vmatmul.f32.gmra.mxu0 %v1626
    %v5322 = vpop.f32.mrf.mxu0
    %v5323 = vadd.f32 0.0, %v5322
    %5324 = vmatmul.f32.gmra.mxu0 %v1627
    %v5325 = vpop.f32.mrf.mxu0
    %v5326 = vadd.f32 0.0, %v5325
    %5327 = vmatmul.f32.gmra.mxu0 %v1628
    %v5328 = vpop.f32.mrf.mxu0
    %v5329 = vadd.f32 0.0, %v5328
    %5330 = vdwg.mxu0
    %v5331 = vsel %vm1790, %v1341, 0
    %v5333 = vsel %vm1790, %v1344, 0
    %v5335 = vsel %vm1790, %v1347, 0
    %v5337 = vsel %vm1790, %v1350, 0
    %v5339 = vsel %vm1790, %v1353, 0
    %v5341 = vsel %vm1790, %v1356, 0
    %v5343 = vsel %vm1790, %v1359, 0
    %v5345 = vsel %vm1790, %v1362, 0
    %v5347 = vsel %vm1790, %v1365, 0
    %v5349 = vsel %vm1790, %v1368, 0
    %v5351 = vsel %vm1790, %v1371, 0
    %v5353 = vsel %vm1790, %v1374, 0
    %v5355 = vsel %vm1790, %v1377, 0
    %v5357 = vsel %vm1790, %v1380, 0
    %v5359 = vsel %vm1790, %v1383, 0
    %v5361 = vsel %vm1790, %v1386, 0
    %v5364 = vsel %vm1790, %v5075, 0
    %v5367 = vsel %vm1790, %v5078, 0
    %v5370 = vsel %vm1790, %v5081, 0
    %v5373 = vsel %vm1790, %v5084, 0
    %v5376 = vsel %vm1790, %v5087, 0
    %v5379 = vsel %vm1790, %v5090, 0
    %v5382 = vsel %vm1790, %v5093, 0
    %v5385 = vsel %vm1790, %v5096, 0
    %v5388 = vsel %vm1790, %v5099, 0
    %v5391 = vsel %vm1790, %v5102, 0
    %v5394 = vsel %vm1790, %v5105, 0
    %v5397 = vsel %vm1790, %v5108, 0
    %v5400 = vsel %vm1790, %v5111, 0
    %v5403 = vsel %vm1790, %v5114, 0
    %v5406 = vsel %vm1790, %v5117, 0
    %v5409 = vsel %vm1790, %v5120, 0
    %v5412 = vsel %vm1790, %v5123, 0
    %v5415 = vsel %vm1790, %v5126, 0
    %v5418 = vsel %vm1790, %v5129, 0
    %v5421 = vsel %vm1790, %v5132, 0
    %v5424 = vsel %vm1790, %v5135, 0
    %v5427 = vsel %vm1790, %v5138, 0
    %v5430 = vsel %vm1790, %v5141, 0
    %v5433 = vsel %vm1790, %v5144, 0
    %v5436 = vsel %vm1790, %v5147, 0
    %v5439 = vsel %vm1790, %v5150, 0
    %v5442 = vsel %vm1790, %v5153, 0
    %v5445 = vsel %vm1790, %v5156, 0
    %v5448 = vsel %vm1790, %v5159, 0
    %v5451 = vsel %vm1790, %v5162, 0
    %v5454 = vsel %vm1790, %v5165, 0
    %v5457 = vsel %vm1790, %v5168, 0
    %5459 = vmatpush.xpose.msra.mxu0 %v5409
    %5460 = vmatpush.xpose.msra.mxu0 %v5406
    %5461 = vmatpush.xpose.msra.mxu0 %v5403
    %5462 = vmatpush.xpose.msra.mxu0 %v5400
    %5463 = vmatpush.xpose.msra.mxu0 %v5397
    %5464 = vmatpush.xpose.msra.mxu0 %v5394
    %5465 = vmatpush.xpose.msra.mxu0 %v5391
    %5466 = vmatpush.xpose.msra.mxu0 %v5388
    %5467 = vmatpush.xpose.msra.mxu0 %v5385
    %5468 = vmatpush.xpose.msra.mxu0 %v5382
    %5469 = vmatpush.xpose.msra.mxu0 %v5379
    %5470 = vmatpush.xpose.msra.mxu0 %v5376
    %5471 = vmatpush.xpose.msra.mxu0 %v5373
    %5472 = vmatpush.xpose.msra.mxu0 %v5370
    %5473 = vmatpush.xpose.msra.mxu0 %v5367
    %5474 = vmatpush.xpose.msra.mxu0 %v5364
    %5475 = vmatmul.f32.gmra.mxu0 %v5331
    %v5476 = vpop.f32.mrf.mxu0
    %v5477 = vadd.f32 0.0, %v5476
    %5478 = vmatmul.f32.gmra.mxu0 %v5333
    %v5479 = vpop.f32.mrf.mxu0
    %v5480 = vadd.f32 0.0, %v5479
    %5481 = vmatmul.f32.gmra.mxu0 %v5335
    %v5482 = vpop.f32.mrf.mxu0
    %v5483 = vadd.f32 0.0, %v5482
    %5484 = vmatmul.f32.gmra.mxu0 %v5337
    %v5485 = vpop.f32.mrf.mxu0
    %v5486 = vadd.f32 0.0, %v5485
    %5487 = vmatmul.f32.gmra.mxu0 %v5339
    %v5488 = vpop.f32.mrf.mxu0
    %v5489 = vadd.f32 0.0, %v5488
    %5490 = vmatmul.f32.gmra.mxu0 %v5341
    %v5491 = vpop.f32.mrf.mxu0
    %v5492 = vadd.f32 0.0, %v5491
    %5493 = vmatmul.f32.gmra.mxu0 %v5343
    %v5494 = vpop.f32.mrf.mxu0
    %v5495 = vadd.f32 0.0, %v5494
    %5496 = vmatmul.f32.gmra.mxu0 %v5345
    %v5497 = vpop.f32.mrf.mxu0
    %v5498 = vadd.f32 0.0, %v5497
    %5499 = vmatmul.f32.gmra.mxu0 %v5347
    %v5500 = vpop.f32.mrf.mxu0
    %v5501 = vadd.f32 0.0, %v5500
    %5502 = vmatmul.f32.gmra.mxu0 %v5349
    %v5503 = vpop.f32.mrf.mxu0
    %v5504 = vadd.f32 0.0, %v5503
    %5505 = vmatmul.f32.gmra.mxu0 %v5351
    %v5506 = vpop.f32.mrf.mxu0
    %v5507 = vadd.f32 0.0, %v5506
    %5508 = vmatmul.f32.gmra.mxu0 %v5353
    %v5509 = vpop.f32.mrf.mxu0
    %v5510 = vadd.f32 0.0, %v5509
    %5511 = vmatmul.f32.gmra.mxu0 %v5355
    %v5512 = vpop.f32.mrf.mxu0
    %v5513 = vadd.f32 0.0, %v5512
    %5514 = vmatmul.f32.gmra.mxu0 %v5357
    %v5515 = vpop.f32.mrf.mxu0
    %v5516 = vadd.f32 0.0, %v5515
    %5517 = vmatmul.f32.gmra.mxu0 %v5359
    %v5518 = vpop.f32.mrf.mxu0
    %v5519 = vadd.f32 0.0, %v5518
    %5520 = vmatmul.f32.gmra.mxu0 %v5361
    %v5521 = vpop.f32.mrf.mxu0
    %v5522 = vadd.f32 0.0, %v5521
    %5523 = vdwg.mxu0
    %5524 = vmatpush.xpose.msra.mxu0 %v5457
    %5525 = vmatpush.xpose.msra.mxu0 %v5454
    %5526 = vmatpush.xpose.msra.mxu0 %v5451
    %5527 = vmatpush.xpose.msra.mxu0 %v5448
    %5528 = vmatpush.xpose.msra.mxu0 %v5445
    %5529 = vmatpush.xpose.msra.mxu0 %v5442
    %5530 = vmatpush.xpose.msra.mxu0 %v5439
    %5531 = vmatpush.xpose.msra.mxu0 %v5436
    %5532 = vmatpush.xpose.msra.mxu0 %v5433
    %5533 = vmatpush.xpose.msra.mxu0 %v5430
    %5534 = vmatpush.xpose.msra.mxu0 %v5427
    %5535 = vmatpush.xpose.msra.mxu0 %v5424
    %5536 = vmatpush.xpose.msra.mxu0 %v5421
    %5537 = vmatpush.xpose.msra.mxu0 %v5418
    %5538 = vmatpush.xpose.msra.mxu0 %v5415
    %5539 = vmatpush.xpose.msra.mxu0 %v5412
    %5540 = vmatmul.f32.gmra.mxu0 %v5331
    %v5541 = vpop.f32.mrf.mxu0
    %v5542 = vadd.f32 0.0, %v5541
    %5543 = vmatmul.f32.gmra.mxu0 %v5333
    %v5544 = vpop.f32.mrf.mxu0
    %v5545 = vadd.f32 0.0, %v5544
    %5546 = vmatmul.f32.gmra.mxu0 %v5335
    %v5547 = vpop.f32.mrf.mxu0
    %v5548 = vadd.f32 0.0, %v5547
    %5549 = vmatmul.f32.gmra.mxu0 %v5337
    %v5550 = vpop.f32.mrf.mxu0
    %v5551 = vadd.f32 0.0, %v5550
    %5552 = vmatmul.f32.gmra.mxu0 %v5339
    %v5553 = vpop.f32.mrf.mxu0
    %v5554 = vadd.f32 0.0, %v5553
    %5555 = vmatmul.f32.gmra.mxu0 %v5341
    %v5556 = vpop.f32.mrf.mxu0
    %v5557 = vadd.f32 0.0, %v5556
    %5558 = vmatmul.f32.gmra.mxu0 %v5343
    %v5559 = vpop.f32.mrf.mxu0
    %v5560 = vadd.f32 0.0, %v5559
    %5561 = vmatmul.f32.gmra.mxu0 %v5345
    %v5562 = vpop.f32.mrf.mxu0
    %v5563 = vadd.f32 0.0, %v5562
    %5564 = vmatmul.f32.gmra.mxu0 %v5347
    %v5565 = vpop.f32.mrf.mxu0
    %v5566 = vadd.f32 0.0, %v5565
    %5567 = vmatmul.f32.gmra.mxu0 %v5349
    %v5568 = vpop.f32.mrf.mxu0
    %v5569 = vadd.f32 0.0, %v5568
    %5570 = vmatmul.f32.gmra.mxu0 %v5351
    %v5571 = vpop.f32.mrf.mxu0
    %v5572 = vadd.f32 0.0, %v5571
    %5573 = vmatmul.f32.gmra.mxu0 %v5353
    %v5574 = vpop.f32.mrf.mxu0
    %v5575 = vadd.f32 0.0, %v5574
    %5576 = vmatmul.f32.gmra.mxu0 %v5355
    %v5577 = vpop.f32.mrf.mxu0
    %v5578 = vadd.f32 0.0, %v5577
    %5579 = vmatmul.f32.gmra.mxu0 %v5357
    %v5580 = vpop.f32.mrf.mxu0
    %v5581 = vadd.f32 0.0, %v5580
    %5582 = vmatmul.f32.gmra.mxu0 %v5359
    %v5583 = vpop.f32.mrf.mxu0
    %v5584 = vadd.f32 0.0, %v5583
    %5585 = vmatmul.f32.gmra.mxu0 %v5361
    %v5586 = vpop.f32.mrf.mxu0
    %v5587 = vadd.f32 0.0, %v5586
    %5588 = vdwg.mxu0
    %v5589 = vmax.f32 %v5477, %v5542
    %5590 = vmax.xlane.f32.xlu0 %v5589
    %v5591 = vpop.xlane.xlu0 %5590
    %v5592 = vmax.f32 %v5480, %v5545
    %5593 = vmax.xlane.f32.xlu0 %v5592
    %v5594 = vpop.xlane.xlu0 %5593
    %v5595 = vmax.f32 %v5483, %v5548
    %5596 = vmax.xlane.f32.xlu0 %v5595
    %v5597 = vpop.xlane.xlu0 %5596
    %v5598 = vmax.f32 %v5486, %v5551
    %5599 = vmax.xlane.f32.xlu0 %v5598
    %v5600 = vpop.xlane.xlu0 %5599
    %v5601 = vmax.f32 %v5489, %v5554
    %5602 = vmax.xlane.f32.xlu0 %v5601
    %v5603 = vpop.xlane.xlu0 %5602
    %v5604 = vmax.f32 %v5492, %v5557
    %5605 = vmax.xlane.f32.xlu0 %v5604
    %v5606 = vpop.xlane.xlu0 %5605
    %v5607 = vmax.f32 %v5495, %v5560
    %5608 = vmax.xlane.f32.xlu0 %v5607
    %v5609 = vpop.xlane.xlu0 %5608
    %v5610 = vmax.f32 %v5498, %v5563
    %5611 = vmax.xlane.f32.xlu0 %v5610
    %v5612 = vpop.xlane.xlu0 %5611
    %v5613 = vmax.f32 %v5501, %v5566
    %5614 = vmax.xlane.f32.xlu0 %v5613
    %v5615 = vpop.xlane.xlu0 %5614
    %v5616 = vmax.f32 %v5504, %v5569
    %5617 = vmax.xlane.f32.xlu0 %v5616
    %v5618 = vpop.xlane.xlu0 %5617
    %v5619 = vmax.f32 %v5507, %v5572
    %5620 = vmax.xlane.f32.xlu0 %v5619
    %v5621 = vpop.xlane.xlu0 %5620
    %v5622 = vmax.f32 %v5510, %v5575
    %5623 = vmax.xlane.f32.xlu0 %v5622
    %v5624 = vpop.xlane.xlu0 %5623
    %v5625 = vmax.f32 %v5513, %v5578
    %5626 = vmax.xlane.f32.xlu0 %v5625
    %v5627 = vpop.xlane.xlu0 %5626
    %v5628 = vmax.f32 %v5516, %v5581
    %5629 = vmax.xlane.f32.xlu0 %v5628
    %v5630 = vpop.xlane.xlu0 %5629
    %v5631 = vmax.f32 %v5519, %v5584
    %5632 = vmax.xlane.f32.xlu0 %v5631
    %v5633 = vpop.xlane.xlu0 %5632
    %v5634 = vmax.f32 %v5522, %v5587
    %5635 = vmax.xlane.f32.xlu0 %v5634
    %v5636 = vpop.xlane.xlu0 %5635
    %v5637 = vsub.f32 %v5477, %v5591
    %v5638 = vsub.f32 %v5542, %v5591
    %v5639 = vsub.f32 %v5480, %v5594
    %v5640 = vsub.f32 %v5545, %v5594
    %v5641 = vsub.f32 %v5483, %v5597
    %v5642 = vsub.f32 %v5548, %v5597
    %v5643 = vsub.f32 %v5486, %v5600
    %v5644 = vsub.f32 %v5551, %v5600
    %v5645 = vsub.f32 %v5489, %v5603
    %v5646 = vsub.f32 %v5554, %v5603
    %v5647 = vsub.f32 %v5492, %v5606
    %v5648 = vsub.f32 %v5557, %v5606
    %v5649 = vsub.f32 %v5495, %v5609
    %v5650 = vsub.f32 %v5560, %v5609
    %v5651 = vsub.f32 %v5498, %v5612
    %v5652 = vsub.f32 %v5563, %v5612
    %v5653 = vsub.f32 %v5501, %v5615
    %v5654 = vsub.f32 %v5566, %v5615
    %v5655 = vsub.f32 %v5504, %v5618
    %v5656 = vsub.f32 %v5569, %v5618
    %v5657 = vsub.f32 %v5507, %v5621
    %v5658 = vsub.f32 %v5572, %v5621
    %v5659 = vsub.f32 %v5510, %v5624
    %v5660 = vsub.f32 %v5575, %v5624
    %v5661 = vsub.f32 %v5513, %v5627
    %v5662 = vsub.f32 %v5578, %v5627
    %v5663 = vsub.f32 %v5516, %v5630
    %v5664 = vsub.f32 %v5581, %v5630
    %v5665 = vsub.f32 %v5519, %v5633
    %v5666 = vsub.f32 %v5584, %v5633
    %v5667 = vsub.f32 %v5522, %v5636
    %v5668 = vsub.f32 %v5587, %v5636
    %v5669 = vmul.f32 %v5637, 1.442695
    %v5670 = vpow.pop %v5669
    %v5671 = vmul.f32 %v5638, 1.442695
    %v5672 = vpow.pop %v5671
    %v5673 = vmul.f32 %v5639, 1.442695
    %v5674 = vpow.pop %v5673
    %v5675 = vmul.f32 %v5640, 1.442695
    %v5676 = vpow.pop %v5675
    %v5677 = vmul.f32 %v5641, 1.442695
    %v5678 = vpow.pop %v5677
    %v5679 = vmul.f32 %v5642, 1.442695
    %v5680 = vpow.pop %v5679
    %v5681 = vmul.f32 %v5643, 1.442695
    %v5682 = vpow.pop %v5681
    %v5683 = vmul.f32 %v5644, 1.442695
    %v5684 = vpow.pop %v5683
    %v5685 = vmul.f32 %v5645, 1.442695
    %v5686 = vpow.pop %v5685
    %v5687 = vmul.f32 %v5646, 1.442695
    %v5688 = vpow.pop %v5687
    %v5689 = vmul.f32 %v5647, 1.442695
    %v5690 = vpow.pop %v5689
    %v5691 = vmul.f32 %v5648, 1.442695
    %v5692 = vpow.pop %v5691
    %v5693 = vmul.f32 %v5649, 1.442695
    %v5694 = vpow.pop %v5693
    %v5695 = vmul.f32 %v5650, 1.442695
    %v5696 = vpow.pop %v5695
    %v5697 = vmul.f32 %v5651, 1.442695
    %v5698 = vpow.pop %v5697
    %v5699 = vmul.f32 %v5652, 1.442695
    %v5700 = vpow.pop %v5699
    %v5701 = vmul.f32 %v5653, 1.442695
    %v5702 = vpow.pop %v5701
    %v5703 = vmul.f32 %v5654, 1.442695
    %v5704 = vpow.pop %v5703
    %v5705 = vmul.f32 %v5655, 1.442695
    %v5706 = vpow.pop %v5705
    %v5707 = vmul.f32 %v5656, 1.442695
    %v5708 = vpow.pop %v5707
    %v5709 = vmul.f32 %v5657, 1.442695
    %v5710 = vpow.pop %v5709
    %v5711 = vmul.f32 %v5658, 1.442695
    %v5712 = vpow.pop %v5711
    %v5713 = vmul.f32 %v5659, 1.442695
    %v5714 = vpow.pop %v5713
    %v5715 = vmul.f32 %v5660, 1.442695
    %v5716 = vpow.pop %v5715
    %v5717 = vmul.f32 %v5661, 1.442695
    %v5718 = vpow.pop %v5717
    %v5719 = vmul.f32 %v5662, 1.442695
    %v5720 = vpow.pop %v5719
    %v5721 = vmul.f32 %v5663, 1.442695
    %v5722 = vpow.pop %v5721
    %v5723 = vmul.f32 %v5664, 1.442695
    %v5724 = vpow.pop %v5723
    %v5725 = vmul.f32 %v5665, 1.442695
    %v5726 = vpow.pop %v5725
    %v5727 = vmul.f32 %v5666, 1.442695
    %v5728 = vpow.pop %v5727
    %v5729 = vmul.f32 %v5667, 1.442695
    %v5730 = vpow.pop %v5729
    %v5731 = vmul.f32 %v5668, 1.442695
    %v5732 = vpow.pop %v5731
    %v5733 = vadd.f32 %v5670, %v5672
    %5734 = vadd.xlane.f32.xlu0 %v5733
    %v5735 = vpop.xlane.xlu0 %5734
    %v5736 = vadd.f32 %v5674, %v5676
    %5737 = vadd.xlane.f32.xlu0 %v5736
    %v5738 = vpop.xlane.xlu0 %5737
    %v5739 = vadd.f32 %v5678, %v5680
    %5740 = vadd.xlane.f32.xlu0 %v5739
    %v5741 = vpop.xlane.xlu0 %5740
    %v5742 = vadd.f32 %v5682, %v5684
    %5743 = vadd.xlane.f32.xlu0 %v5742
    %v5744 = vpop.xlane.xlu0 %5743
    %v5745 = vadd.f32 %v5686, %v5688
    %5746 = vadd.xlane.f32.xlu0 %v5745
    %v5747 = vpop.xlane.xlu0 %5746
    %v5748 = vadd.f32 %v5690, %v5692
    %5749 = vadd.xlane.f32.xlu0 %v5748
    %v5750 = vpop.xlane.xlu0 %5749
    %v5751 = vadd.f32 %v5694, %v5696
    %5752 = vadd.xlane.f32.xlu0 %v5751
    %v5753 = vpop.xlane.xlu0 %5752
    %v5754 = vadd.f32 %v5698, %v5700
    %5755 = vadd.xlane.f32.xlu0 %v5754
    %v5756 = vpop.xlane.xlu0 %5755
    %v5757 = vadd.f32 %v5702, %v5704
    %5758 = vadd.xlane.f32.xlu0 %v5757
    %v5759 = vpop.xlane.xlu0 %5758
    %v5760 = vadd.f32 %v5706, %v5708
    %5761 = vadd.xlane.f32.xlu0 %v5760
    %v5762 = vpop.xlane.xlu0 %5761
    %v5763 = vadd.f32 %v5710, %v5712
    %5764 = vadd.xlane.f32.xlu0 %v5763
    %v5765 = vpop.xlane.xlu0 %5764
    %v5766 = vadd.f32 %v5714, %v5716
    %5767 = vadd.xlane.f32.xlu0 %v5766
    %v5768 = vpop.xlane.xlu0 %5767
    %v5769 = vadd.f32 %v5718, %v5720
    %5770 = vadd.xlane.f32.xlu0 %v5769
    %v5771 = vpop.xlane.xlu0 %5770
    %v5772 = vadd.f32 %v5722, %v5724
    %5773 = vadd.xlane.f32.xlu0 %v5772
    %v5774 = vpop.xlane.xlu0 %5773
    %v5775 = vadd.f32 %v5726, %v5728
    %5776 = vadd.xlane.f32.xlu0 %v5775
    %v5777 = vpop.xlane.xlu0 %5776
    %v5778 = vadd.f32 %v5730, %v5732
    %5779 = vadd.xlane.f32.xlu0 %v5778
    %v5780 = vpop.xlane.xlu0 %5779
    %v5781 = vrcp.pop %v5735
    %v5782 = vrcp.pop %v5738
    %v5783 = vrcp.pop %v5741
    %v5784 = vrcp.pop %v5744
    %v5785 = vrcp.pop %v5747
    %v5786 = vrcp.pop %v5750
    %v5787 = vrcp.pop %v5753
    %v5788 = vrcp.pop %v5756
    %v5789 = vrcp.pop %v5759
    %v5790 = vrcp.pop %v5762
    %v5791 = vrcp.pop %v5765
    %v5792 = vrcp.pop %v5768
    %v5793 = vrcp.pop %v5771
    %v5794 = vrcp.pop %v5774
    %v5795 = vrcp.pop %v5777
    %v5796 = vrcp.pop %v5780
    %5797 = vmatpush.msra.mxu0 %v5281
    %5798 = vmatpush.msra.mxu0 %v5278
    %5799 = vmatpush.msra.mxu0 %v5275
    %5800 = vmatpush.msra.mxu0 %v5272
    %5801 = vmatpush.msra.mxu0 %v5269
    %5802 = vmatpush.msra.mxu0 %v5266
    %5803 = vmatpush.msra.mxu0 %v5263
    %5804 = vmatpush.msra.mxu0 %v5260
    %5805 = vmatpush.msra.mxu0 %v5257
    %5806 = vmatpush.msra.mxu0 %v5254
    %5807 = vmatpush.msra.mxu0 %v5251
    %5808 = vmatpush.msra.mxu0 %v5248
    %5809 = vmatpush.msra.mxu0 %v5245
    %5810 = vmatpush.msra.mxu0 %v5242
    %5811 = vmatpush.msra.mxu0 %v5239
    %5812 = vmatpush.msra.mxu0 %v5236
    %5813 = vmatmul.f32.gmra.mxu0 %v5670
    %v5814 = vpop.f32.mrf.mxu0
    %v5815 = vadd.f32 0.0, %v5814
    %5816 = vmatmul.f32.gmra.mxu0 %v5674
    %v5817 = vpop.f32.mrf.mxu0
    %v5818 = vadd.f32 0.0, %v5817
    %5819 = vmatmul.f32.gmra.mxu0 %v5678
    %v5820 = vpop.f32.mrf.mxu0
    %v5821 = vadd.f32 0.0, %v5820
    %5822 = vmatmul.f32.gmra.mxu0 %v5682
    %v5823 = vpop.f32.mrf.mxu0
    %v5824 = vadd.f32 0.0, %v5823
    %5825 = vmatmul.f32.gmra.mxu0 %v5686
    %v5826 = vpop.f32.mrf.mxu0
    %v5827 = vadd.f32 0.0, %v5826
    %5828 = vmatmul.f32.gmra.mxu0 %v5690
    %v5829 = vpop.f32.mrf.mxu0
    %v5830 = vadd.f32 0.0, %v5829
    %5831 = vmatmul.f32.gmra.mxu0 %v5694
    %v5832 = vpop.f32.mrf.mxu0
    %v5833 = vadd.f32 0.0, %v5832
    %5834 = vmatmul.f32.gmra.mxu0 %v5698
    %v5835 = vpop.f32.mrf.mxu0
    %v5836 = vadd.f32 0.0, %v5835
    %5837 = vmatmul.f32.gmra.mxu0 %v5702
    %v5838 = vpop.f32.mrf.mxu0
    %v5839 = vadd.f32 0.0, %v5838
    %5840 = vmatmul.f32.gmra.mxu0 %v5706
    %v5841 = vpop.f32.mrf.mxu0
    %v5842 = vadd.f32 0.0, %v5841
    %5843 = vmatmul.f32.gmra.mxu0 %v5710
    %v5844 = vpop.f32.mrf.mxu0
    %v5845 = vadd.f32 0.0, %v5844
    %5846 = vmatmul.f32.gmra.mxu0 %v5714
    %v5847 = vpop.f32.mrf.mxu0
    %v5848 = vadd.f32 0.0, %v5847
    %5849 = vmatmul.f32.gmra.mxu0 %v5718
    %v5850 = vpop.f32.mrf.mxu0
    %v5851 = vadd.f32 0.0, %v5850
    %5852 = vmatmul.f32.gmra.mxu0 %v5722
    %v5853 = vpop.f32.mrf.mxu0
    %v5854 = vadd.f32 0.0, %v5853
    %5855 = vmatmul.f32.gmra.mxu0 %v5726
    %v5856 = vpop.f32.mrf.mxu0
    %v5857 = vadd.f32 0.0, %v5856
    %5858 = vmatmul.f32.gmra.mxu0 %v5730
    %v5859 = vpop.f32.mrf.mxu0
    %v5860 = vadd.f32 0.0, %v5859
    %5861 = vdwg.mxu0
    %5862 = vmatpush.msra.mxu0 %v5329
    %5863 = vmatpush.msra.mxu0 %v5326
    %5864 = vmatpush.msra.mxu0 %v5323
    %5865 = vmatpush.msra.mxu0 %v5320
    %5866 = vmatpush.msra.mxu0 %v5317
    %5867 = vmatpush.msra.mxu0 %v5314
    %5868 = vmatpush.msra.mxu0 %v5311
    %5869 = vmatpush.msra.mxu0 %v5308
    %5870 = vmatpush.msra.mxu0 %v5305
    %5871 = vmatpush.msra.mxu0 %v5302
    %5872 = vmatpush.msra.mxu0 %v5299
    %5873 = vmatpush.msra.mxu0 %v5296
    %5874 = vmatpush.msra.mxu0 %v5293
    %5875 = vmatpush.msra.mxu0 %v5290
    %5876 = vmatpush.msra.mxu0 %v5287
    %5877 = vmatpush.msra.mxu0 %v5284
    %5878 = vmatmul.f32.gmra.mxu0 %v5672
    %v5879 = vpop.f32.mrf.mxu0
    %v5880 = vadd.f32 %v5815, %v5879
    %5881 = vmatmul.f32.gmra.mxu0 %v5676
    %v5882 = vpop.f32.mrf.mxu0
    %v5883 = vadd.f32 %v5818, %v5882
    %5884 = vmatmul.f32.gmra.mxu0 %v5680
    %v5885 = vpop.f32.mrf.mxu0
    %v5886 = vadd.f32 %v5821, %v5885
    %5887 = vmatmul.f32.gmra.mxu0 %v5684
    %v5888 = vpop.f32.mrf.mxu0
    %v5889 = vadd.f32 %v5824, %v5888
    %5890 = vmatmul.f32.gmra.mxu0 %v5688
    %v5891 = vpop.f32.mrf.mxu0
    %v5892 = vadd.f32 %v5827, %v5891
    %5893 = vmatmul.f32.gmra.mxu0 %v5692
    %v5894 = vpop.f32.mrf.mxu0
    %v5895 = vadd.f32 %v5830, %v5894
    %5896 = vmatmul.f32.gmra.mxu0 %v5696
    %v5897 = vpop.f32.mrf.mxu0
    %v5898 = vadd.f32 %v5833, %v5897
    %5899 = vmatmul.f32.gmra.mxu0 %v5700
    %v5900 = vpop.f32.mrf.mxu0
    %v5901 = vadd.f32 %v5836, %v5900
    %5902 = vmatmul.f32.gmra.mxu0 %v5704
    %v5903 = vpop.f32.mrf.mxu0
    %v5904 = vadd.f32 %v5839, %v5903
    %5905 = vmatmul.f32.gmra.mxu0 %v5708
    %v5906 = vpop.f32.mrf.mxu0
    %v5907 = vadd.f32 %v5842, %v5906
    %5908 = vmatmul.f32.gmra.mxu0 %v5712
    %v5909 = vpop.f32.mrf.mxu0
    %v5910 = vadd.f32 %v5845, %v5909
    %5911 = vmatmul.f32.gmra.mxu0 %v5716
    %v5912 = vpop.f32.mrf.mxu0
    %v5913 = vadd.f32 %v5848, %v5912
    %5914 = vmatmul.f32.gmra.mxu0 %v5720
    %v5915 = vpop.f32.mrf.mxu0
    %v5916 = vadd.f32 %v5851, %v5915
    %5917 = vmatmul.f32.gmra.mxu0 %v5724
    %v5918 = vpop.f32.mrf.mxu0
    %v5919 = vadd.f32 %v5854, %v5918
    %5920 = vmatmul.f32.gmra.mxu0 %v5728
    %v5921 = vpop.f32.mrf.mxu0
    %v5922 = vadd.f32 %v5857, %v5921
    %5923 = vmatmul.f32.gmra.mxu0 %v5732
    %v5924 = vpop.f32.mrf.mxu0
    %v5925 = vadd.f32 %v5860, %v5924
    %5926 = vdwg.mxu0
    %v5927 = vmul.f32 %v5880, %v5781
    %v5928 = vmul.f32 %v5883, %v5782
    %v5929 = vmul.f32 %v5886, %v5783
    %v5930 = vmul.f32 %v5889, %v5784
    %v5931 = vmul.f32 %v5892, %v5785
    %v5932 = vmul.f32 %v5895, %v5786
    %v5933 = vmul.f32 %v5898, %v5787
    %v5934 = vmul.f32 %v5901, %v5788
    %v5935 = vmul.f32 %v5904, %v5789
    %v5936 = vmul.f32 %v5907, %v5790
    %v5937 = vmul.f32 %v5910, %v5791
    %v5938 = vmul.f32 %v5913, %v5792
    %v5939 = vmul.f32 %v5916, %v5793
    %v5940 = vmul.f32 %v5919, %v5794
    %v5941 = vmul.f32 %v5922, %v5795
    %v5942 = vmul.f32 %v5925, %v5796
    %5943 = vrot.lane.b32.xlu0 %v1341, 120
    %v5944 = vpop.permute.xlu0 %5943
    %5945 = vrot.lane.b32.xlu0 %v1344, 120
    %v5946 = vpop.permute.xlu0 %5945
    %5947 = vrot.lane.b32.xlu0 %v1347, 120
    %v5948 = vpop.permute.xlu0 %5947
    %5949 = vrot.lane.b32.xlu0 %v1350, 120
    %v5950 = vpop.permute.xlu0 %5949
    %5951 = vrot.lane.b32.xlu0 %v1353, 120
    %v5952 = vpop.permute.xlu0 %5951
    %5953 = vrot.lane.b32.xlu0 %v1356, 120
    %v5954 = vpop.permute.xlu0 %5953
    %5955 = vrot.lane.b32.xlu0 %v1359, 120
    %v5956 = vpop.permute.xlu0 %5955
    %5957 = vrot.lane.b32.xlu0 %v1362, 120
    %v5958 = vpop.permute.xlu0 %5957
    %5959 = vrot.lane.b32.xlu0 %v1365, 120
    %v5960 = vpop.permute.xlu0 %5959
    %5961 = vrot.lane.b32.xlu0 %v1368, 120
    %v5962 = vpop.permute.xlu0 %5961
    %5963 = vrot.lane.b32.xlu0 %v1371, 120
    %v5964 = vpop.permute.xlu0 %5963
    %5965 = vrot.lane.b32.xlu0 %v1374, 120
    %v5966 = vpop.permute.xlu0 %5965
    %5967 = vrot.lane.b32.xlu0 %v1377, 120
    %v5968 = vpop.permute.xlu0 %5967
    %5969 = vrot.lane.b32.xlu0 %v1380, 120
    %v5970 = vpop.permute.xlu0 %5969
    %5971 = vrot.lane.b32.xlu0 %v1383, 120
    %v5972 = vpop.permute.xlu0 %5971
    %5973 = vrot.lane.b32.xlu0 %v1386, 120
    %v5974 = vpop.permute.xlu0 %5973
    %5975 = vrot.lane.b32.xlu0 %v5075, 120
    %v5976 = vpop.permute.xlu0 %5975
    %5977 = vrot.lane.b32.xlu0 %v5078, 120
    %v5978 = vpop.permute.xlu0 %5977
    %5979 = vrot.lane.b32.xlu0 %v5081, 120
    %v5980 = vpop.permute.xlu0 %5979
    %5981 = vrot.lane.b32.xlu0 %v5084, 120
    %v5982 = vpop.permute.xlu0 %5981
    %5983 = vrot.lane.b32.xlu0 %v5087, 120
    %v5984 = vpop.permute.xlu0 %5983
    %5985 = vrot.lane.b32.xlu0 %v5090, 120
    %v5986 = vpop.permute.xlu0 %5985
    %5987 = vrot.lane.b32.xlu0 %v5093, 120
    %v5988 = vpop.permute.xlu0 %5987
    %5989 = vrot.lane.b32.xlu0 %v5096, 120
    %v5990 = vpop.permute.xlu0 %5989
    %5991 = vrot.lane.b32.xlu0 %v5099, 120
    %v5992 = vpop.permute.xlu0 %5991
    %5993 = vrot.lane.b32.xlu0 %v5102, 120
    %v5994 = vpop.permute.xlu0 %5993
    %5995 = vrot.lane.b32.xlu0 %v5105, 120
    %v5996 = vpop.permute.xlu0 %5995
    %5997 = vrot.lane.b32.xlu0 %v5108, 120
    %v5998 = vpop.permute.xlu0 %5997
    %5999 = vrot.lane.b32.xlu0 %v5111, 120
    %v6000 = vpop.permute.xlu0 %5999
    %6001 = vrot.lane.b32.xlu0 %v5114, 120
    %v6002 = vpop.permute.xlu0 %6001
    %6003 = vrot.lane.b32.xlu0 %v5117, 120
    %v6004 = vpop.permute.xlu0 %6003
    %6005 = vrot.lane.b32.xlu0 %v5120, 120
    %v6006 = vpop.permute.xlu0 %6005
    %6007 = vrot.lane.b32.xlu0 %v5123, 120
    %v6008 = vpop.permute.xlu0 %6007
    %6009 = vrot.lane.b32.xlu0 %v5126, 120
    %v6010 = vpop.permute.xlu0 %6009
    %6011 = vrot.lane.b32.xlu0 %v5129, 120
    %v6012 = vpop.permute.xlu0 %6011
    %6013 = vrot.lane.b32.xlu0 %v5132, 120
    %v6014 = vpop.permute.xlu0 %6013
    %6015 = vrot.lane.b32.xlu0 %v5135, 120
    %v6016 = vpop.permute.xlu0 %6015
    %6017 = vrot.lane.b32.xlu0 %v5138, 120
    %v6018 = vpop.permute.xlu0 %6017
    %6019 = vrot.lane.b32.xlu0 %v5141, 120
    %v6020 = vpop.permute.xlu0 %6019
    %6021 = vrot.lane.b32.xlu0 %v5144, 120
    %v6022 = vpop.permute.xlu0 %6021
    %6023 = vrot.lane.b32.xlu0 %v5147, 120
    %v6024 = vpop.permute.xlu0 %6023
    %6025 = vrot.lane.b32.xlu0 %v5150, 120
    %v6026 = vpop.permute.xlu0 %6025
    %6027 = vrot.lane.b32.xlu0 %v5153, 120
    %v6028 = vpop.permute.xlu0 %6027
    %6029 = vrot.lane.b32.xlu0 %v5156, 120
    %v6030 = vpop.permute.xlu0 %6029
    %6031 = vrot.lane.b32.xlu0 %v5159, 120
    %v6032 = vpop.permute.xlu0 %6031
    %6033 = vrot.lane.b32.xlu0 %v5162, 120
    %v6034 = vpop.permute.xlu0 %6033
    %6035 = vrot.lane.b32.xlu0 %v5165, 120
    %v6036 = vpop.permute.xlu0 %6035
    %6037 = vrot.lane.b32.xlu0 %v5168, 120
    %v6038 = vpop.permute.xlu0 %6037
    %v6039 = vsel %vm1790, %v5944, 0
    %v6041 = vsel %vm1790, %v5946, 0
    %v6043 = vsel %vm1790, %v5948, 0
    %v6045 = vsel %vm1790, %v5950, 0
    %v6047 = vsel %vm1790, %v5952, 0
    %v6049 = vsel %vm1790, %v5954, 0
    %v6051 = vsel %vm1790, %v5956, 0
    %v6053 = vsel %vm1790, %v5958, 0
    %v6055 = vsel %vm1790, %v5960, 0
    %v6057 = vsel %vm1790, %v5962, 0
    %v6059 = vsel %vm1790, %v5964, 0
    %v6061 = vsel %vm1790, %v5966, 0
    %v6063 = vsel %vm1790, %v5968, 0
    %v6065 = vsel %vm1790, %v5970, 0
    %v6067 = vsel %vm1790, %v5972, 0
    %v6069 = vsel %vm1790, %v5974, 0
    %v6071 = vsel %vm1790, %v5976, 0
    %v6073 = vsel %vm1790, %v5978, 0
    %v6075 = vsel %vm1790, %v5980, 0
    %v6077 = vsel %vm1790, %v5982, 0
    %v6079 = vsel %vm1790, %v5984, 0
    %v6081 = vsel %vm1790, %v5986, 0
    %v6083 = vsel %vm1790, %v5988, 0
    %v6085 = vsel %vm1790, %v5990, 0
    %v6087 = vsel %vm1790, %v5992, 0
    %v6089 = vsel %vm1790, %v5994, 0
    %v6091 = vsel %vm1790, %v5996, 0
    %v6093 = vsel %vm1790, %v5998, 0
    %v6095 = vsel %vm1790, %v6000, 0
    %v6097 = vsel %vm1790, %v6002, 0
    %v6099 = vsel %vm1790, %v6004, 0
    %v6101 = vsel %vm1790, %v6006, 0
    %v6103 = vsel %vm1790, %v6008, 0
    %v6105 = vsel %vm1790, %v6010, 0
    %v6107 = vsel %vm1790, %v6012, 0
    %v6109 = vsel %vm1790, %v6014, 0
    %v6111 = vsel %vm1790, %v6016, 0
    %v6113 = vsel %vm1790, %v6018, 0
    %v6115 = vsel %vm1790, %v6020, 0
    %v6117 = vsel %vm1790, %v6022, 0
    %v6119 = vsel %vm1790, %v6024, 0
    %v6121 = vsel %vm1790, %v6026, 0
    %v6123 = vsel %vm1790, %v6028, 0
    %v6125 = vsel %vm1790, %v6030, 0
    %v6127 = vsel %vm1790, %v6032, 0
    %v6129 = vsel %vm1790, %v6034, 0
    %v6131 = vsel %vm1790, %v6036, 0
    %v6133 = vsel %vm1790, %v6038, 0
    %6135 = vmatpush.xpose.msra.mxu0 %v6101
    %6136 = vmatpush.xpose.msra.mxu0 %v6099
    %6137 = vmatpush.xpose.msra.mxu0 %v6097
    %6138 = vmatpush.xpose.msra.mxu0 %v6095
    %6139 = vmatpush.xpose.msra.mxu0 %v6093
    %6140 = vmatpush.xpose.msra.mxu0 %v6091
    %6141 = vmatpush.xpose.msra.mxu0 %v6089
    %6142 = vmatpush.xpose.msra.mxu0 %v6087
    %6143 = vmatpush.xpose.msra.mxu0 %v6085
    %6144 = vmatpush.xpose.msra.mxu0 %v6083
    %6145 = vmatpush.xpose.msra.mxu0 %v6081
    %6146 = vmatpush.xpose.msra.mxu0 %v6079
    %6147 = vmatpush.xpose.msra.mxu0 %v6077
    %6148 = vmatpush.xpose.msra.mxu0 %v6075
    %6149 = vmatpush.xpose.msra.mxu0 %v6073
    %6150 = vmatpush.xpose.msra.mxu0 %v6071
    %6151 = vmatmul.f32.gmra.mxu0 %v6039
    %v6152 = vpop.f32.mrf.mxu0
    %v6153 = vadd.f32 0.0, %v6152
    %6154 = vmatmul.f32.gmra.mxu0 %v6041
    %v6155 = vpop.f32.mrf.mxu0
    %v6156 = vadd.f32 0.0, %v6155
    %6157 = vmatmul.f32.gmra.mxu0 %v6043
    %v6158 = vpop.f32.mrf.mxu0
    %v6159 = vadd.f32 0.0, %v6158
    %6160 = vmatmul.f32.gmra.mxu0 %v6045
    %v6161 = vpop.f32.mrf.mxu0
    %v6162 = vadd.f32 0.0, %v6161
    %6163 = vmatmul.f32.gmra.mxu0 %v6047
    %v6164 = vpop.f32.mrf.mxu0
    %v6165 = vadd.f32 0.0, %v6164
    %6166 = vmatmul.f32.gmra.mxu0 %v6049
    %v6167 = vpop.f32.mrf.mxu0
    %v6168 = vadd.f32 0.0, %v6167
    %6169 = vmatmul.f32.gmra.mxu0 %v6051
    %v6170 = vpop.f32.mrf.mxu0
    %v6171 = vadd.f32 0.0, %v6170
    %6172 = vmatmul.f32.gmra.mxu0 %v6053
    %v6173 = vpop.f32.mrf.mxu0
    %v6174 = vadd.f32 0.0, %v6173
    %6175 = vmatmul.f32.gmra.mxu0 %v6055
    %v6176 = vpop.f32.mrf.mxu0
    %v6177 = vadd.f32 0.0, %v6176
    %6178 = vmatmul.f32.gmra.mxu0 %v6057
    %v6179 = vpop.f32.mrf.mxu0
    %v6180 = vadd.f32 0.0, %v6179
    %6181 = vmatmul.f32.gmra.mxu0 %v6059
    %v6182 = vpop.f32.mrf.mxu0
    %v6183 = vadd.f32 0.0, %v6182
    %6184 = vmatmul.f32.gmra.mxu0 %v6061
    %v6185 = vpop.f32.mrf.mxu0
    %v6186 = vadd.f32 0.0, %v6185
    %6187 = vmatmul.f32.gmra.mxu0 %v6063
    %v6188 = vpop.f32.mrf.mxu0
    %v6189 = vadd.f32 0.0, %v6188
    %6190 = vmatmul.f32.gmra.mxu0 %v6065
    %v6191 = vpop.f32.mrf.mxu0
    %v6192 = vadd.f32 0.0, %v6191
    %6193 = vmatmul.f32.gmra.mxu0 %v6067
    %v6194 = vpop.f32.mrf.mxu0
    %v6195 = vadd.f32 0.0, %v6194
    %6196 = vmatmul.f32.gmra.mxu0 %v6069
    %v6197 = vpop.f32.mrf.mxu0
    %v6198 = vadd.f32 0.0, %v6197
    %6199 = vdwg.mxu0
    %6200 = vmatpush.xpose.msra.mxu0 %v6133
    %6201 = vmatpush.xpose.msra.mxu0 %v6131
    %6202 = vmatpush.xpose.msra.mxu0 %v6129
    %6203 = vmatpush.xpose.msra.mxu0 %v6127
    %6204 = vmatpush.xpose.msra.mxu0 %v6125
    %6205 = vmatpush.xpose.msra.mxu0 %v6123
    %6206 = vmatpush.xpose.msra.mxu0 %v6121
    %6207 = vmatpush.xpose.msra.mxu0 %v6119
    %6208 = vmatpush.xpose.msra.mxu0 %v6117
    %6209 = vmatpush.xpose.msra.mxu0 %v6115
    %6210 = vmatpush.xpose.msra.mxu0 %v6113
    %6211 = vmatpush.xpose.msra.mxu0 %v6111
    %6212 = vmatpush.xpose.msra.mxu0 %v6109
    %6213 = vmatpush.xpose.msra.mxu0 %v6107
    %6214 = vmatpush.xpose.msra.mxu0 %v6105
    %6215 = vmatpush.xpose.msra.mxu0 %v6103
    %6216 = vmatmul.f32.gmra.mxu0 %v6039
    %v6217 = vpop.f32.mrf.mxu0
    %v6218 = vadd.f32 0.0, %v6217
    %6219 = vmatmul.f32.gmra.mxu0 %v6041
    %v6220 = vpop.f32.mrf.mxu0
    %v6221 = vadd.f32 0.0, %v6220
    %6222 = vmatmul.f32.gmra.mxu0 %v6043
    %v6223 = vpop.f32.mrf.mxu0
    %v6224 = vadd.f32 0.0, %v6223
    %6225 = vmatmul.f32.gmra.mxu0 %v6045
    %v6226 = vpop.f32.mrf.mxu0
    %v6227 = vadd.f32 0.0, %v6226
    %6228 = vmatmul.f32.gmra.mxu0 %v6047
    %v6229 = vpop.f32.mrf.mxu0
    %v6230 = vadd.f32 0.0, %v6229
    %6231 = vmatmul.f32.gmra.mxu0 %v6049
    %v6232 = vpop.f32.mrf.mxu0
    %v6233 = vadd.f32 0.0, %v6232
    %6234 = vmatmul.f32.gmra.mxu0 %v6051
    %v6235 = vpop.f32.mrf.mxu0
    %v6236 = vadd.f32 0.0, %v6235
    %6237 = vmatmul.f32.gmra.mxu0 %v6053
    %v6238 = vpop.f32.mrf.mxu0
    %v6239 = vadd.f32 0.0, %v6238
    %6240 = vmatmul.f32.gmra.mxu0 %v6055
    %v6241 = vpop.f32.mrf.mxu0
    %v6242 = vadd.f32 0.0, %v6241
    %6243 = vmatmul.f32.gmra.mxu0 %v6057
    %v6244 = vpop.f32.mrf.mxu0
    %v6245 = vadd.f32 0.0, %v6244
    %6246 = vmatmul.f32.gmra.mxu0 %v6059
    %v6247 = vpop.f32.mrf.mxu0
    %v6248 = vadd.f32 0.0, %v6247
    %6249 = vmatmul.f32.gmra.mxu0 %v6061
    %v6250 = vpop.f32.mrf.mxu0
    %v6251 = vadd.f32 0.0, %v6250
    %6252 = vmatmul.f32.gmra.mxu0 %v6063
    %v6253 = vpop.f32.mrf.mxu0
    %v6254 = vadd.f32 0.0, %v6253
    %6255 = vmatmul.f32.gmra.mxu0 %v6065
    %v6256 = vpop.f32.mrf.mxu0
    %v6257 = vadd.f32 0.0, %v6256
    %6258 = vmatmul.f32.gmra.mxu0 %v6067
    %v6259 = vpop.f32.mrf.mxu0
    %v6260 = vadd.f32 0.0, %v6259
    %6261 = vmatmul.f32.gmra.mxu0 %v6069
    %v6262 = vpop.f32.mrf.mxu0
    %v6263 = vadd.f32 0.0, %v6262
    %6264 = vdwg.mxu0
    %v6265 = vmax.f32 %v6153, %v6218
    %6266 = vmax.xlane.f32.xlu0 %v6265
    %v6267 = vpop.xlane.xlu0 %6266
    %v6268 = vmax.f32 %v6156, %v6221
    %6269 = vmax.xlane.f32.xlu0 %v6268
    %v6270 = vpop.xlane.xlu0 %6269
    %v6271 = vmax.f32 %v6159, %v6224
    %6272 = vmax.xlane.f32.xlu0 %v6271
    %v6273 = vpop.xlane.xlu0 %6272
    %v6274 = vmax.f32 %v6162, %v6227
    %6275 = vmax.xlane.f32.xlu0 %v6274
    %v6276 = vpop.xlane.xlu0 %6275
    %v6277 = vmax.f32 %v6165, %v6230
    %6278 = vmax.xlane.f32.xlu0 %v6277
    %v6279 = vpop.xlane.xlu0 %6278
    %v6280 = vmax.f32 %v6168, %v6233
    %6281 = vmax.xlane.f32.xlu0 %v6280
    %v6282 = vpop.xlane.xlu0 %6281
    %v6283 = vmax.f32 %v6171, %v6236
    %6284 = vmax.xlane.f32.xlu0 %v6283
    %v6285 = vpop.xlane.xlu0 %6284
    %v6286 = vmax.f32 %v6174, %v6239
    %6287 = vmax.xlane.f32.xlu0 %v6286
    %v6288 = vpop.xlane.xlu0 %6287
    %v6289 = vmax.f32 %v6177, %v6242
    %6290 = vmax.xlane.f32.xlu0 %v6289
    %v6291 = vpop.xlane.xlu0 %6290
    %v6292 = vmax.f32 %v6180, %v6245
    %6293 = vmax.xlane.f32.xlu0 %v6292
    %v6294 = vpop.xlane.xlu0 %6293
    %v6295 = vmax.f32 %v6183, %v6248
    %6296 = vmax.xlane.f32.xlu0 %v6295
    %v6297 = vpop.xlane.xlu0 %6296
    %v6298 = vmax.f32 %v6186, %v6251
    %6299 = vmax.xlane.f32.xlu0 %v6298
    %v6300 = vpop.xlane.xlu0 %6299
    %v6301 = vmax.f32 %v6189, %v6254
    %6302 = vmax.xlane.f32.xlu0 %v6301
    %v6303 = vpop.xlane.xlu0 %6302
    %v6304 = vmax.f32 %v6192, %v6257
    %6305 = vmax.xlane.f32.xlu0 %v6304
    %v6306 = vpop.xlane.xlu0 %6305
    %v6307 = vmax.f32 %v6195, %v6260
    %6308 = vmax.xlane.f32.xlu0 %v6307
    %v6309 = vpop.xlane.xlu0 %6308
    %v6310 = vmax.f32 %v6198, %v6263
    %6311 = vmax.xlane.f32.xlu0 %v6310
    %v6312 = vpop.xlane.xlu0 %6311
    %v6313 = vsub.f32 %v6153, %v6267
    %v6314 = vsub.f32 %v6218, %v6267
    %v6315 = vsub.f32 %v6156, %v6270
    %v6316 = vsub.f32 %v6221, %v6270
    %v6317 = vsub.f32 %v6159, %v6273
    %v6318 = vsub.f32 %v6224, %v6273
    %v6319 = vsub.f32 %v6162, %v6276
    %v6320 = vsub.f32 %v6227, %v6276
    %v6321 = vsub.f32 %v6165, %v6279
    %v6322 = vsub.f32 %v6230, %v6279
    %v6323 = vsub.f32 %v6168, %v6282
    %v6324 = vsub.f32 %v6233, %v6282
    %v6325 = vsub.f32 %v6171, %v6285
    %v6326 = vsub.f32 %v6236, %v6285
    %v6327 = vsub.f32 %v6174, %v6288
    %v6328 = vsub.f32 %v6239, %v6288
    %v6329 = vsub.f32 %v6177, %v6291
    %v6330 = vsub.f32 %v6242, %v6291
    %v6331 = vsub.f32 %v6180, %v6294
    %v6332 = vsub.f32 %v6245, %v6294
    %v6333 = vsub.f32 %v6183, %v6297
    %v6334 = vsub.f32 %v6248, %v6297
    %v6335 = vsub.f32 %v6186, %v6300
    %v6336 = vsub.f32 %v6251, %v6300
    %v6337 = vsub.f32 %v6189, %v6303
    %v6338 = vsub.f32 %v6254, %v6303
    %v6339 = vsub.f32 %v6192, %v6306
    %v6340 = vsub.f32 %v6257, %v6306
    %v6341 = vsub.f32 %v6195, %v6309
    %v6342 = vsub.f32 %v6260, %v6309
    %v6343 = vsub.f32 %v6198, %v6312
    %v6344 = vsub.f32 %v6263, %v6312
    %v6345 = vmul.f32 %v6313, 1.442695
    %v6346 = vpow.pop %v6345
    %v6347 = vmul.f32 %v6314, 1.442695
    %v6348 = vpow.pop %v6347
    %v6349 = vmul.f32 %v6315, 1.442695
    %v6350 = vpow.pop %v6349
    %v6351 = vmul.f32 %v6316, 1.442695
    %v6352 = vpow.pop %v6351
    %v6353 = vmul.f32 %v6317, 1.442695
    %v6354 = vpow.pop %v6353
    %v6355 = vmul.f32 %v6318, 1.442695
    %v6356 = vpow.pop %v6355
    %v6357 = vmul.f32 %v6319, 1.442695
    %v6358 = vpow.pop %v6357
    %v6359 = vmul.f32 %v6320, 1.442695
    %v6360 = vpow.pop %v6359
    %v6361 = vmul.f32 %v6321, 1.442695
    %v6362 = vpow.pop %v6361
    %v6363 = vmul.f32 %v6322, 1.442695
    %v6364 = vpow.pop %v6363
    %v6365 = vmul.f32 %v6323, 1.442695
    %v6366 = vpow.pop %v6365
    %v6367 = vmul.f32 %v6324, 1.442695
    %v6368 = vpow.pop %v6367
    %v6369 = vmul.f32 %v6325, 1.442695
    %v6370 = vpow.pop %v6369
    %v6371 = vmul.f32 %v6326, 1.442695
    %v6372 = vpow.pop %v6371
    %v6373 = vmul.f32 %v6327, 1.442695
    %v6374 = vpow.pop %v6373
    %v6375 = vmul.f32 %v6328, 1.442695
    %v6376 = vpow.pop %v6375
    %v6377 = vmul.f32 %v6329, 1.442695
    %v6378 = vpow.pop %v6377
    %v6379 = vmul.f32 %v6330, 1.442695
    %v6380 = vpow.pop %v6379
    %v6381 = vmul.f32 %v6331, 1.442695
    %v6382 = vpow.pop %v6381
    %v6383 = vmul.f32 %v6332, 1.442695
    %v6384 = vpow.pop %v6383
    %v6385 = vmul.f32 %v6333, 1.442695
    %v6386 = vpow.pop %v6385
    %v6387 = vmul.f32 %v6334, 1.442695
    %v6388 = vpow.pop %v6387
    %v6389 = vmul.f32 %v6335, 1.442695
    %v6390 = vpow.pop %v6389
    %v6391 = vmul.f32 %v6336, 1.442695
    %v6392 = vpow.pop %v6391
    %v6393 = vmul.f32 %v6337, 1.442695
    %v6394 = vpow.pop %v6393
    %v6395 = vmul.f32 %v6338, 1.442695
    %v6396 = vpow.pop %v6395
    %v6397 = vmul.f32 %v6339, 1.442695
    %v6398 = vpow.pop %v6397
    %v6399 = vmul.f32 %v6340, 1.442695
    %v6400 = vpow.pop %v6399
    %v6401 = vmul.f32 %v6341, 1.442695
    %v6402 = vpow.pop %v6401
    %v6403 = vmul.f32 %v6342, 1.442695
    %v6404 = vpow.pop %v6403
    %v6405 = vmul.f32 %v6343, 1.442695
    %v6406 = vpow.pop %v6405
    %v6407 = vmul.f32 %v6344, 1.442695
    %v6408 = vpow.pop %v6407
    %v6409 = vadd.f32 %v6346, %v6348
    %6410 = vadd.xlane.f32.xlu0 %v6409
    %v6411 = vpop.xlane.xlu0 %6410
    %v6412 = vadd.f32 %v6350, %v6352
    %6413 = vadd.xlane.f32.xlu0 %v6412
    %v6414 = vpop.xlane.xlu0 %6413
    %v6415 = vadd.f32 %v6354, %v6356
    %6416 = vadd.xlane.f32.xlu0 %v6415
    %v6417 = vpop.xlane.xlu0 %6416
    %v6418 = vadd.f32 %v6358, %v6360
    %6419 = vadd.xlane.f32.xlu0 %v6418
    %v6420 = vpop.xlane.xlu0 %6419
    %v6421 = vadd.f32 %v6362, %v6364
    %6422 = vadd.xlane.f32.xlu0 %v6421
    %v6423 = vpop.xlane.xlu0 %6422
    %v6424 = vadd.f32 %v6366, %v6368
    %6425 = vadd.xlane.f32.xlu0 %v6424
    %v6426 = vpop.xlane.xlu0 %6425
    %v6427 = vadd.f32 %v6370, %v6372
    %6428 = vadd.xlane.f32.xlu0 %v6427
    %v6429 = vpop.xlane.xlu0 %6428
    %v6430 = vadd.f32 %v6374, %v6376
    %6431 = vadd.xlane.f32.xlu0 %v6430
    %v6432 = vpop.xlane.xlu0 %6431
    %v6433 = vadd.f32 %v6378, %v6380
    %6434 = vadd.xlane.f32.xlu0 %v6433
    %v6435 = vpop.xlane.xlu0 %6434
    %v6436 = vadd.f32 %v6382, %v6384
    %6437 = vadd.xlane.f32.xlu0 %v6436
    %v6438 = vpop.xlane.xlu0 %6437
    %v6439 = vadd.f32 %v6386, %v6388
    %6440 = vadd.xlane.f32.xlu0 %v6439
    %v6441 = vpop.xlane.xlu0 %6440
    %v6442 = vadd.f32 %v6390, %v6392
    %6443 = vadd.xlane.f32.xlu0 %v6442
    %v6444 = vpop.xlane.xlu0 %6443
    %v6445 = vadd.f32 %v6394, %v6396
    %6446 = vadd.xlane.f32.xlu0 %v6445
    %v6447 = vpop.xlane.xlu0 %6446
    %v6448 = vadd.f32 %v6398, %v6400
    %6449 = vadd.xlane.f32.xlu0 %v6448
    %v6450 = vpop.xlane.xlu0 %6449
    %v6451 = vadd.f32 %v6402, %v6404
    %6452 = vadd.xlane.f32.xlu0 %v6451
    %v6453 = vpop.xlane.xlu0 %6452
    %v6454 = vadd.f32 %v6406, %v6408
    %6455 = vadd.xlane.f32.xlu0 %v6454
    %v6456 = vpop.xlane.xlu0 %6455
    %v6457 = vrcp.pop %v6411
    %v6458 = vrcp.pop %v6414
    %v6459 = vrcp.pop %v6417
    %v6460 = vrcp.pop %v6420
    %v6461 = vrcp.pop %v6423
    %v6462 = vrcp.pop %v6426
    %v6463 = vrcp.pop %v6429
    %v6464 = vrcp.pop %v6432
    %v6465 = vrcp.pop %v6435
    %v6466 = vrcp.pop %v6438
    %v6467 = vrcp.pop %v6441
    %v6468 = vrcp.pop %v6444
    %v6469 = vrcp.pop %v6447
    %v6470 = vrcp.pop %v6450
    %v6471 = vrcp.pop %v6453
    %v6472 = vrcp.pop %v6456
    %6505 = vrot.lane.b32.xlu0 %v5236, 120
    %v6506 = vpop.permute.xlu0 %6505
    %6507 = vrot.lane.b32.xlu0 %v5239, 120
    %v6508 = vpop.permute.xlu0 %6507
    %6509 = vrot.lane.b32.xlu0 %v5242, 120
    %v6510 = vpop.permute.xlu0 %6509
    %6511 = vrot.lane.b32.xlu0 %v5245, 120
    %v6512 = vpop.permute.xlu0 %6511
    %6513 = vrot.lane.b32.xlu0 %v5248, 120
    %v6514 = vpop.permute.xlu0 %6513
    %6515 = vrot.lane.b32.xlu0 %v5251, 120
    %v6516 = vpop.permute.xlu0 %6515
    %6517 = vrot.lane.b32.xlu0 %v5254, 120
    %v6518 = vpop.permute.xlu0 %6517
    %6519 = vrot.lane.b32.xlu0 %v5257, 120
    %v6520 = vpop.permute.xlu0 %6519
    %6521 = vrot.lane.b32.xlu0 %v5260, 120
    %v6522 = vpop.permute.xlu0 %6521
    %6523 = vrot.lane.b32.xlu0 %v5263, 120
    %v6524 = vpop.permute.xlu0 %6523
    %6525 = vrot.lane.b32.xlu0 %v5266, 120
    %v6526 = vpop.permute.xlu0 %6525
    %6527 = vrot.lane.b32.xlu0 %v5269, 120
    %v6528 = vpop.permute.xlu0 %6527
    %6529 = vrot.lane.b32.xlu0 %v5272, 120
    %v6530 = vpop.permute.xlu0 %6529
    %6531 = vrot.lane.b32.xlu0 %v5275, 120
    %v6532 = vpop.permute.xlu0 %6531
    %6533 = vrot.lane.b32.xlu0 %v5278, 120
    %v6534 = vpop.permute.xlu0 %6533
    %6535 = vrot.lane.b32.xlu0 %v5281, 120
    %v6536 = vpop.permute.xlu0 %6535
    %6537 = vrot.lane.b32.xlu0 %v5284, 120
    %v6538 = vpop.permute.xlu0 %6537
    %6539 = vrot.lane.b32.xlu0 %v5287, 120
    %v6540 = vpop.permute.xlu0 %6539
    %6541 = vrot.lane.b32.xlu0 %v5290, 120
    %v6542 = vpop.permute.xlu0 %6541
    %6543 = vrot.lane.b32.xlu0 %v5293, 120
    %v6544 = vpop.permute.xlu0 %6543
    %6545 = vrot.lane.b32.xlu0 %v5296, 120
    %v6546 = vpop.permute.xlu0 %6545
    %6547 = vrot.lane.b32.xlu0 %v5299, 120
    %v6548 = vpop.permute.xlu0 %6547
    %6549 = vrot.lane.b32.xlu0 %v5302, 120
    %v6550 = vpop.permute.xlu0 %6549
    %6551 = vrot.lane.b32.xlu0 %v5305, 120
    %v6552 = vpop.permute.xlu0 %6551
    %6553 = vrot.lane.b32.xlu0 %v5308, 120
    %v6554 = vpop.permute.xlu0 %6553
    %6555 = vrot.lane.b32.xlu0 %v5311, 120
    %v6556 = vpop.permute.xlu0 %6555
    %6557 = vrot.lane.b32.xlu0 %v5314, 120
    %v6558 = vpop.permute.xlu0 %6557
    %6559 = vrot.lane.b32.xlu0 %v5317, 120
    %v6560 = vpop.permute.xlu0 %6559
    %6561 = vrot.lane.b32.xlu0 %v5320, 120
    %v6562 = vpop.permute.xlu0 %6561
    %6563 = vrot.lane.b32.xlu0 %v5323, 120
    %v6564 = vpop.permute.xlu0 %6563
    %6565 = vrot.lane.b32.xlu0 %v5326, 120
    %v6566 = vpop.permute.xlu0 %6565
    %6567 = vrot.lane.b32.xlu0 %v5329, 120
    %v6568 = vpop.permute.xlu0 %6567
    %6601 = vmatpush.msra.mxu0 %v6536
    %6602 = vmatpush.msra.mxu0 %v6534
    %6603 = vmatpush.msra.mxu0 %v6532
    %6604 = vmatpush.msra.mxu0 %v6530
    %6605 = vmatpush.msra.mxu0 %v6528
    %6606 = vmatpush.msra.mxu0 %v6526
    %6607 = vmatpush.msra.mxu0 %v6524
    %6608 = vmatpush.msra.mxu0 %v6522
    %6609 = vmatpush.msra.mxu0 %v6520
    %6610 = vmatpush.msra.mxu0 %v6518
    %6611 = vmatpush.msra.mxu0 %v6516
    %6612 = vmatpush.msra.mxu0 %v6514
    %6613 = vmatpush.msra.mxu0 %v6512
    %6614 = vmatpush.msra.mxu0 %v6510
    %6615 = vmatpush.msra.mxu0 %v6508
    %6616 = vmatpush.msra.mxu0 %v6506
    %6617 = vmatmul.f32.gmra.mxu0 %v6346
    %v6618 = vpop.f32.mrf.mxu0
    %v6619 = vadd.f32 0.0, %v6618
    %6620 = vmatmul.f32.gmra.mxu0 %v6350
    %v6621 = vpop.f32.mrf.mxu0
    %v6622 = vadd.f32 0.0, %v6621
    %6623 = vmatmul.f32.gmra.mxu0 %v6354
    %v6624 = vpop.f32.mrf.mxu0
    %v6625 = vadd.f32 0.0, %v6624
    %6626 = vmatmul.f32.gmra.mxu0 %v6358
    %v6627 = vpop.f32.mrf.mxu0
    %v6628 = vadd.f32 0.0, %v6627
    %6629 = vmatmul.f32.gmra.mxu0 %v6362
    %v6630 = vpop.f32.mrf.mxu0
    %v6631 = vadd.f32 0.0, %v6630
    %6632 = vmatmul.f32.gmra.mxu0 %v6366
    %v6633 = vpop.f32.mrf.mxu0
    %v6634 = vadd.f32 0.0, %v6633
    %6635 = vmatmul.f32.gmra.mxu0 %v6370
    %v6636 = vpop.f32.mrf.mxu0
    %v6637 = vadd.f32 0.0, %v6636
    %6638 = vmatmul.f32.gmra.mxu0 %v6374
    %v6639 = vpop.f32.mrf.mxu0
    %v6640 = vadd.f32 0.0, %v6639
    %6641 = vmatmul.f32.gmra.mxu0 %v6378
    %v6642 = vpop.f32.mrf.mxu0
    %v6643 = vadd.f32 0.0, %v6642
    %6644 = vmatmul.f32.gmra.mxu0 %v6382
    %v6645 = vpop.f32.mrf.mxu0
    %v6646 = vadd.f32 0.0, %v6645
    %6647 = vmatmul.f32.gmra.mxu0 %v6386
    %v6648 = vpop.f32.mrf.mxu0
    %v6649 = vadd.f32 0.0, %v6648
    %6650 = vmatmul.f32.gmra.mxu0 %v6390
    %v6651 = vpop.f32.mrf.mxu0
    %v6652 = vadd.f32 0.0, %v6651
    %6653 = vmatmul.f32.gmra.mxu0 %v6394
    %v6654 = vpop.f32.mrf.mxu0
    %v6655 = vadd.f32 0.0, %v6654
    %6656 = vmatmul.f32.gmra.mxu0 %v6398
    %v6657 = vpop.f32.mrf.mxu0
    %v6658 = vadd.f32 0.0, %v6657
    %6659 = vmatmul.f32.gmra.mxu0 %v6402
    %v6660 = vpop.f32.mrf.mxu0
    %v6661 = vadd.f32 0.0, %v6660
    %6662 = vmatmul.f32.gmra.mxu0 %v6406
    %v6663 = vpop.f32.mrf.mxu0
    %v6664 = vadd.f32 0.0, %v6663
    %6665 = vdwg.mxu0
    %6666 = vmatpush.msra.mxu0 %v6568
    %6667 = vmatpush.msra.mxu0 %v6566
    %6668 = vmatpush.msra.mxu0 %v6564
    %6669 = vmatpush.msra.mxu0 %v6562
    %6670 = vmatpush.msra.mxu0 %v6560
    %6671 = vmatpush.msra.mxu0 %v6558
    %6672 = vmatpush.msra.mxu0 %v6556
    %6673 = vmatpush.msra.mxu0 %v6554
    %6674 = vmatpush.msra.mxu0 %v6552
    %6675 = vmatpush.msra.mxu0 %v6550
    %6676 = vmatpush.msra.mxu0 %v6548
    %6677 = vmatpush.msra.mxu0 %v6546
    %6678 = vmatpush.msra.mxu0 %v6544
    %6679 = vmatpush.msra.mxu0 %v6542
    %6680 = vmatpush.msra.mxu0 %v6540
    %6681 = vmatpush.msra.mxu0 %v6538
    %6682 = vmatmul.f32.gmra.mxu0 %v6348
    %v6683 = vpop.f32.mrf.mxu0
    %v6684 = vadd.f32 %v6619, %v6683
    %6685 = vmatmul.f32.gmra.mxu0 %v6352
    %v6686 = vpop.f32.mrf.mxu0
    %v6687 = vadd.f32 %v6622, %v6686
    %6688 = vmatmul.f32.gmra.mxu0 %v6356
    %v6689 = vpop.f32.mrf.mxu0
    %v6690 = vadd.f32 %v6625, %v6689
    %6691 = vmatmul.f32.gmra.mxu0 %v6360
    %v6692 = vpop.f32.mrf.mxu0
    %v6693 = vadd.f32 %v6628, %v6692
    %6694 = vmatmul.f32.gmra.mxu0 %v6364
    %v6695 = vpop.f32.mrf.mxu0
    %v6696 = vadd.f32 %v6631, %v6695
    %6697 = vmatmul.f32.gmra.mxu0 %v6368
    %v6698 = vpop.f32.mrf.mxu0
    %v6699 = vadd.f32 %v6634, %v6698
    %6700 = vmatmul.f32.gmra.mxu0 %v6372
    %v6701 = vpop.f32.mrf.mxu0
    %v6702 = vadd.f32 %v6637, %v6701
    %6703 = vmatmul.f32.gmra.mxu0 %v6376
    %v6704 = vpop.f32.mrf.mxu0
    %v6705 = vadd.f32 %v6640, %v6704
    %6706 = vmatmul.f32.gmra.mxu0 %v6380
    %v6707 = vpop.f32.mrf.mxu0
    %v6708 = vadd.f32 %v6643, %v6707
    %6709 = vmatmul.f32.gmra.mxu0 %v6384
    %v6710 = vpop.f32.mrf.mxu0
    %v6711 = vadd.f32 %v6646, %v6710
    %6712 = vmatmul.f32.gmra.mxu0 %v6388
    %v6713 = vpop.f32.mrf.mxu0
    %v6714 = vadd.f32 %v6649, %v6713
    %6715 = vmatmul.f32.gmra.mxu0 %v6392
    %v6716 = vpop.f32.mrf.mxu0
    %v6717 = vadd.f32 %v6652, %v6716
    %6718 = vmatmul.f32.gmra.mxu0 %v6396
    %v6719 = vpop.f32.mrf.mxu0
    %v6720 = vadd.f32 %v6655, %v6719
    %6721 = vmatmul.f32.gmra.mxu0 %v6400
    %v6722 = vpop.f32.mrf.mxu0
    %v6723 = vadd.f32 %v6658, %v6722
    %6724 = vmatmul.f32.gmra.mxu0 %v6404
    %v6725 = vpop.f32.mrf.mxu0
    %v6726 = vadd.f32 %v6661, %v6725
    %6727 = vmatmul.f32.gmra.mxu0 %v6408
    %v6728 = vpop.f32.mrf.mxu0
    %v6729 = vadd.f32 %v6664, %v6728
    %6730 = vdwg.mxu0
    %v6731 = vmul.f32 %v6684, %v6457
    %v6732 = vmul.f32 %v6687, %v6458
    %v6733 = vmul.f32 %v6690, %v6459
    %v6734 = vmul.f32 %v6693, %v6460
    %v6735 = vmul.f32 %v6696, %v6461
    %v6736 = vmul.f32 %v6699, %v6462
    %v6737 = vmul.f32 %v6702, %v6463
    %v6738 = vmul.f32 %v6705, %v6464
    %v6739 = vmul.f32 %v6708, %v6465
    %v6740 = vmul.f32 %v6711, %v6466
    %v6741 = vmul.f32 %v6714, %v6467
    %v6742 = vmul.f32 %v6717, %v6468
    %v6743 = vmul.f32 %v6720, %v6469
    %v6744 = vmul.f32 %v6723, %v6470
    %v6745 = vmul.f32 %v6726, %v6471
    %v6746 = vmul.f32 %v6729, %v6472
    %6747 = vrot.lane.b32.xlu0 %v1341, 112
    %v6748 = vpop.permute.xlu0 %6747
    %6749 = vrot.lane.b32.xlu0 %v1344, 112
    %v6750 = vpop.permute.xlu0 %6749
    %6751 = vrot.lane.b32.xlu0 %v1347, 112
    %v6752 = vpop.permute.xlu0 %6751
    %6753 = vrot.lane.b32.xlu0 %v1350, 112
    %v6754 = vpop.permute.xlu0 %6753
    %6755 = vrot.lane.b32.xlu0 %v1353, 112
    %v6756 = vpop.permute.xlu0 %6755
    %6757 = vrot.lane.b32.xlu0 %v1356, 112
    %v6758 = vpop.permute.xlu0 %6757
    %6759 = vrot.lane.b32.xlu0 %v1359, 112
    %v6760 = vpop.permute.xlu0 %6759
    %6761 = vrot.lane.b32.xlu0 %v1362, 112
    %v6762 = vpop.permute.xlu0 %6761
    %6763 = vrot.lane.b32.xlu0 %v1365, 112
    %v6764 = vpop.permute.xlu0 %6763
    %6765 = vrot.lane.b32.xlu0 %v1368, 112
    %v6766 = vpop.permute.xlu0 %6765
    %6767 = vrot.lane.b32.xlu0 %v1371, 112
    %v6768 = vpop.permute.xlu0 %6767
    %6769 = vrot.lane.b32.xlu0 %v1374, 112
    %v6770 = vpop.permute.xlu0 %6769
    %6771 = vrot.lane.b32.xlu0 %v1377, 112
    %v6772 = vpop.permute.xlu0 %6771
    %6773 = vrot.lane.b32.xlu0 %v1380, 112
    %v6774 = vpop.permute.xlu0 %6773
    %6775 = vrot.lane.b32.xlu0 %v1383, 112
    %v6776 = vpop.permute.xlu0 %6775
    %6777 = vrot.lane.b32.xlu0 %v1386, 112
    %v6778 = vpop.permute.xlu0 %6777
    %6779 = vrot.lane.b32.xlu0 %v5075, 112
    %v6780 = vpop.permute.xlu0 %6779
    %6781 = vrot.lane.b32.xlu0 %v5078, 112
    %v6782 = vpop.permute.xlu0 %6781
    %6783 = vrot.lane.b32.xlu0 %v5081, 112
    %v6784 = vpop.permute.xlu0 %6783
    %6785 = vrot.lane.b32.xlu0 %v5084, 112
    %v6786 = vpop.permute.xlu0 %6785
    %6787 = vrot.lane.b32.xlu0 %v5087, 112
    %v6788 = vpop.permute.xlu0 %6787
    %6789 = vrot.lane.b32.xlu0 %v5090, 112
    %v6790 = vpop.permute.xlu0 %6789
    %6791 = vrot.lane.b32.xlu0 %v5093, 112
    %v6792 = vpop.permute.xlu0 %6791
    %6793 = vrot.lane.b32.xlu0 %v5096, 112
    %v6794 = vpop.permute.xlu0 %6793
    %6795 = vrot.lane.b32.xlu0 %v5099, 112
    %v6796 = vpop.permute.xlu0 %6795
    %6797 = vrot.lane.b32.xlu0 %v5102, 112
    %v6798 = vpop.permute.xlu0 %6797
    %6799 = vrot.lane.b32.xlu0 %v5105, 112
    %v6800 = vpop.permute.xlu0 %6799
    %6801 = vrot.lane.b32.xlu0 %v5108, 112
    %v6802 = vpop.permute.xlu0 %6801
    %6803 = vrot.lane.b32.xlu0 %v5111, 112
    %v6804 = vpop.permute.xlu0 %6803
    %6805 = vrot.lane.b32.xlu0 %v5114, 112
    %v6806 = vpop.permute.xlu0 %6805
    %6807 = vrot.lane.b32.xlu0 %v5117, 112
    %v6808 = vpop.permute.xlu0 %6807
    %6809 = vrot.lane.b32.xlu0 %v5120, 112
    %v6810 = vpop.permute.xlu0 %6809
    %6811 = vrot.lane.b32.xlu0 %v5123, 112
    %v6812 = vpop.permute.xlu0 %6811
    %6813 = vrot.lane.b32.xlu0 %v5126, 112
    %v6814 = vpop.permute.xlu0 %6813
    %6815 = vrot.lane.b32.xlu0 %v5129, 112
    %v6816 = vpop.permute.xlu0 %6815
    %6817 = vrot.lane.b32.xlu0 %v5132, 112
    %v6818 = vpop.permute.xlu0 %6817
    %6819 = vrot.lane.b32.xlu0 %v5135, 112
    %v6820 = vpop.permute.xlu0 %6819
    %6821 = vrot.lane.b32.xlu0 %v5138, 112
    %v6822 = vpop.permute.xlu0 %6821
    %6823 = vrot.lane.b32.xlu0 %v5141, 112
    %v6824 = vpop.permute.xlu0 %6823
    %6825 = vrot.lane.b32.xlu0 %v5144, 112
    %v6826 = vpop.permute.xlu0 %6825
    %6827 = vrot.lane.b32.xlu0 %v5147, 112
    %v6828 = vpop.permute.xlu0 %6827
    %6829 = vrot.lane.b32.xlu0 %v5150, 112
    %v6830 = vpop.permute.xlu0 %6829
    %6831 = vrot.lane.b32.xlu0 %v5153, 112
    %v6832 = vpop.permute.xlu0 %6831
    %6833 = vrot.lane.b32.xlu0 %v5156, 112
    %v6834 = vpop.permute.xlu0 %6833
    %6835 = vrot.lane.b32.xlu0 %v5159, 112
    %v6836 = vpop.permute.xlu0 %6835
    %6837 = vrot.lane.b32.xlu0 %v5162, 112
    %v6838 = vpop.permute.xlu0 %6837
    %6839 = vrot.lane.b32.xlu0 %v5165, 112
    %v6840 = vpop.permute.xlu0 %6839
    %6841 = vrot.lane.b32.xlu0 %v5168, 112
    %v6842 = vpop.permute.xlu0 %6841
    %v6843 = vsel %vm1790, %v6748, 0
    %v6845 = vsel %vm1790, %v6750, 0
    %v6847 = vsel %vm1790, %v6752, 0
    %v6849 = vsel %vm1790, %v6754, 0
    %v6851 = vsel %vm1790, %v6756, 0
    %v6853 = vsel %vm1790, %v6758, 0
    %v6855 = vsel %vm1790, %v6760, 0
    %v6857 = vsel %vm1790, %v6762, 0
    %v6859 = vsel %vm1790, %v6764, 0
    %v6861 = vsel %vm1790, %v6766, 0
    %v6863 = vsel %vm1790, %v6768, 0
    %v6865 = vsel %vm1790, %v6770, 0
    %v6867 = vsel %vm1790, %v6772, 0
    %v6869 = vsel %vm1790, %v6774, 0
    %v6871 = vsel %vm1790, %v6776, 0
    %v6873 = vsel %vm1790, %v6778, 0
    %v6875 = vsel %vm1790, %v6780, 0
    %v6877 = vsel %vm1790, %v6782, 0
    %v6879 = vsel %vm1790, %v6784, 0
    %v6881 = vsel %vm1790, %v6786, 0
    %v6883 = vsel %vm1790, %v6788, 0
    %v6885 = vsel %vm1790, %v6790, 0
    %v6887 = vsel %vm1790, %v6792, 0
    %v6889 = vsel %vm1790, %v6794, 0
    %v6891 = vsel %vm1790, %v6796, 0
    %v6893 = vsel %vm1790, %v6798, 0
    %v6895 = vsel %vm1790, %v6800, 0
    %v6897 = vsel %vm1790, %v6802, 0
    %v6899 = vsel %vm1790, %v6804, 0
    %v6901 = vsel %vm1790, %v6806, 0
    %v6903 = vsel %vm1790, %v6808, 0
    %v6905 = vsel %vm1790, %v6810, 0
    %v6907 = vsel %vm1790, %v6812, 0
    %v6909 = vsel %vm1790, %v6814, 0
    %v6911 = vsel %vm1790, %v6816, 0
    %v6913 = vsel %vm1790, %v6818, 0
    %v6915 = vsel %vm1790, %v6820, 0
    %v6917 = vsel %vm1790, %v6822, 0
    %v6919 = vsel %vm1790, %v6824, 0
    %v6921 = vsel %vm1790, %v6826, 0
    %v6923 = vsel %vm1790, %v6828, 0
    %v6925 = vsel %vm1790, %v6830, 0
    %v6927 = vsel %vm1790, %v6832, 0
    %v6929 = vsel %vm1790, %v6834, 0
    %v6931 = vsel %vm1790, %v6836, 0
    %v6933 = vsel %vm1790, %v6838, 0
    %v6935 = vsel %vm1790, %v6840, 0
    %v6937 = vsel %vm1790, %v6842, 0
    %6939 = vmatpush.xpose.msra.mxu0 %v6905
    %6940 = vmatpush.xpose.msra.mxu0 %v6903
    %6941 = vmatpush.xpose.msra.mxu0 %v6901
    %6942 = vmatpush.xpose.msra.mxu0 %v6899
    %6943 = vmatpush.xpose.msra.mxu0 %v6897
    %6944 = vmatpush.xpose.msra.mxu0 %v6895
    %6945 = vmatpush.xpose.msra.mxu0 %v6893
    %6946 = vmatpush.xpose.msra.mxu0 %v6891
    %6947 = vmatpush.xpose.msra.mxu0 %v6889
    %6948 = vmatpush.xpose.msra.mxu0 %v6887
    %6949 = vmatpush.xpose.msra.mxu0 %v6885
    %6950 = vmatpush.xpose.msra.mxu0 %v6883
    %6951 = vmatpush.xpose.msra.mxu0 %v6881
    %6952 = vmatpush.xpose.msra.mxu0 %v6879
    %6953 = vmatpush.xpose.msra.mxu0 %v6877
    %6954 = vmatpush.xpose.msra.mxu0 %v6875
    %6955 = vmatmul.f32.gmra.mxu0 %v6843
    %v6956 = vpop.f32.mrf.mxu0
    %v6957 = vadd.f32 0.0, %v6956
    %6958 = vmatmul.f32.gmra.mxu0 %v6845
    %v6959 = vpop.f32.mrf.mxu0
    %v6960 = vadd.f32 0.0, %v6959
    %6961 = vmatmul.f32.gmra.mxu0 %v6847
    %v6962 = vpop.f32.mrf.mxu0
    %v6963 = vadd.f32 0.0, %v6962
    %6964 = vmatmul.f32.gmra.mxu0 %v6849
    %v6965 = vpop.f32.mrf.mxu0
    %v6966 = vadd.f32 0.0, %v6965
    %6967 = vmatmul.f32.gmra.mxu0 %v6851
    %v6968 = vpop.f32.mrf.mxu0
    %v6969 = vadd.f32 0.0, %v6968
    %6970 = vmatmul.f32.gmra.mxu0 %v6853
    %v6971 = vpop.f32.mrf.mxu0
    %v6972 = vadd.f32 0.0, %v6971
    %6973 = vmatmul.f32.gmra.mxu0 %v6855
    %v6974 = vpop.f32.mrf.mxu0
    %v6975 = vadd.f32 0.0, %v6974
    %6976 = vmatmul.f32.gmra.mxu0 %v6857
    %v6977 = vpop.f32.mrf.mxu0
    %v6978 = vadd.f32 0.0, %v6977
    %6979 = vmatmul.f32.gmra.mxu0 %v6859
    %v6980 = vpop.f32.mrf.mxu0
    %v6981 = vadd.f32 0.0, %v6980
    %6982 = vmatmul.f32.gmra.mxu0 %v6861
    %v6983 = vpop.f32.mrf.mxu0
    %v6984 = vadd.f32 0.0, %v6983
    %6985 = vmatmul.f32.gmra.mxu0 %v6863
    %v6986 = vpop.f32.mrf.mxu0
    %v6987 = vadd.f32 0.0, %v6986
    %6988 = vmatmul.f32.gmra.mxu0 %v6865
    %v6989 = vpop.f32.mrf.mxu0
    %v6990 = vadd.f32 0.0, %v6989
    %6991 = vmatmul.f32.gmra.mxu0 %v6867
    %v6992 = vpop.f32.mrf.mxu0
    %v6993 = vadd.f32 0.0, %v6992
    %6994 = vmatmul.f32.gmra.mxu0 %v6869
    %v6995 = vpop.f32.mrf.mxu0
    %v6996 = vadd.f32 0.0, %v6995
    %6997 = vmatmul.f32.gmra.mxu0 %v6871
    %v6998 = vpop.f32.mrf.mxu0
    %v6999 = vadd.f32 0.0, %v6998
    %7000 = vmatmul.f32.gmra.mxu0 %v6873
    %v7001 = vpop.f32.mrf.mxu0
    %v7002 = vadd.f32 0.0, %v7001
    %7003 = vdwg.mxu0
    %7004 = vmatpush.xpose.msra.mxu0 %v6937
    %7005 = vmatpush.xpose.msra.mxu0 %v6935
    %7006 = vmatpush.xpose.msra.mxu0 %v6933
    %7007 = vmatpush.xpose.msra.mxu0 %v6931
    %7008 = vmatpush.xpose.msra.mxu0 %v6929
    %7009 = vmatpush.xpose.msra.mxu0 %v6927
    %7010 = vmatpush.xpose.msra.mxu0 %v6925
    %7011 = vmatpush.xpose.msra.mxu0 %v6923
    %7012 = vmatpush.xpose.msra.mxu0 %v6921
    %7013 = vmatpush.xpose.msra.mxu0 %v6919
    %7014 = vmatpush.xpose.msra.mxu0 %v6917
    %7015 = vmatpush.xpose.msra.mxu0 %v6915
    %7016 = vmatpush.xpose.msra.mxu0 %v6913
    %7017 = vmatpush.xpose.msra.mxu0 %v6911
    %7018 = vmatpush.xpose.msra.mxu0 %v6909
    %7019 = vmatpush.xpose.msra.mxu0 %v6907
    %7020 = vmatmul.f32.gmra.mxu0 %v6843
    %v7021 = vpop.f32.mrf.mxu0
    %v7022 = vadd.f32 0.0, %v7021
    %7023 = vmatmul.f32.gmra.mxu0 %v6845
    %v7024 = vpop.f32.mrf.mxu0
    %v7025 = vadd.f32 0.0, %v7024
    %7026 = vmatmul.f32.gmra.mxu0 %v6847
    %v7027 = vpop.f32.mrf.mxu0
    %v7028 = vadd.f32 0.0, %v7027
    %7029 = vmatmul.f32.gmra.mxu0 %v6849
    %v7030 = vpop.f32.mrf.mxu0
    %v7031 = vadd.f32 0.0, %v7030
    %7032 = vmatmul.f32.gmra.mxu0 %v6851
    %v7033 = vpop.f32.mrf.mxu0
    %v7034 = vadd.f32 0.0, %v7033
    %7035 = vmatmul.f32.gmra.mxu0 %v6853
    %v7036 = vpop.f32.mrf.mxu0
    %v7037 = vadd.f32 0.0, %v7036
    %7038 = vmatmul.f32.gmra.mxu0 %v6855
    %v7039 = vpop.f32.mrf.mxu0
    %v7040 = vadd.f32 0.0, %v7039
    %7041 = vmatmul.f32.gmra.mxu0 %v6857
    %v7042 = vpop.f32.mrf.mxu0
    %v7043 = vadd.f32 0.0, %v7042
    %7044 = vmatmul.f32.gmra.mxu0 %v6859
    %v7045 = vpop.f32.mrf.mxu0
    %v7046 = vadd.f32 0.0, %v7045
    %7047 = vmatmul.f32.gmra.mxu0 %v6861
    %v7048 = vpop.f32.mrf.mxu0
    %v7049 = vadd.f32 0.0, %v7048
    %7050 = vmatmul.f32.gmra.mxu0 %v6863
    %v7051 = vpop.f32.mrf.mxu0
    %v7052 = vadd.f32 0.0, %v7051
    %7053 = vmatmul.f32.gmra.mxu0 %v6865
    %v7054 = vpop.f32.mrf.mxu0
    %v7055 = vadd.f32 0.0, %v7054
    %7056 = vmatmul.f32.gmra.mxu0 %v6867
    %v7057 = vpop.f32.mrf.mxu0
    %v7058 = vadd.f32 0.0, %v7057
    %7059 = vmatmul.f32.gmra.mxu0 %v6869
    %v7060 = vpop.f32.mrf.mxu0
    %v7061 = vadd.f32 0.0, %v7060
    %7062 = vmatmul.f32.gmra.mxu0 %v6871
    %v7063 = vpop.f32.mrf.mxu0
    %v7064 = vadd.f32 0.0, %v7063
    %7065 = vmatmul.f32.gmra.mxu0 %v6873
    %v7066 = vpop.f32.mrf.mxu0
    %v7067 = vadd.f32 0.0, %v7066
    %7068 = vdwg.mxu0
    %v7069 = vmax.f32 %v6957, %v7022
    %7070 = vmax.xlane.f32.xlu0 %v7069
    %v7071 = vpop.xlane.xlu0 %7070
    %v7072 = vmax.f32 %v6960, %v7025
    %7073 = vmax.xlane.f32.xlu0 %v7072
    %v7074 = vpop.xlane.xlu0 %7073
    %v7075 = vmax.f32 %v6963, %v7028
    %7076 = vmax.xlane.f32.xlu0 %v7075
    %v7077 = vpop.xlane.xlu0 %7076
    %v7078 = vmax.f32 %v6966, %v7031
    %7079 = vmax.xlane.f32.xlu0 %v7078
    %v7080 = vpop.xlane.xlu0 %7079
    %v7081 = vmax.f32 %v6969, %v7034
    %7082 = vmax.xlane.f32.xlu0 %v7081
    %v7083 = vpop.xlane.xlu0 %7082
    %v7084 = vmax.f32 %v6972, %v7037
    %7085 = vmax.xlane.f32.xlu0 %v7084
    %v7086 = vpop.xlane.xlu0 %7085
    %v7087 = vmax.f32 %v6975, %v7040
    %7088 = vmax.xlane.f32.xlu0 %v7087
    %v7089 = vpop.xlane.xlu0 %7088
    %v7090 = vmax.f32 %v6978, %v7043
    %7091 = vmax.xlane.f32.xlu0 %v7090
    %v7092 = vpop.xlane.xlu0 %7091
    %v7093 = vmax.f32 %v6981, %v7046
    %7094 = vmax.xlane.f32.xlu0 %v7093
    %v7095 = vpop.xlane.xlu0 %7094
    %v7096 = vmax.f32 %v6984, %v7049
    %7097 = vmax.xlane.f32.xlu0 %v7096
    %v7098 = vpop.xlane.xlu0 %7097
    %v7099 = vmax.f32 %v6987, %v7052
    %7100 = vmax.xlane.f32.xlu0 %v7099
    %v7101 = vpop.xlane.xlu0 %7100
    %v7102 = vmax.f32 %v6990, %v7055
    %7103 = vmax.xlane.f32.xlu0 %v7102
    %v7104 = vpop.xlane.xlu0 %7103
    %v7105 = vmax.f32 %v6993, %v7058
    %7106 = vmax.xlane.f32.xlu0 %v7105
    %v7107 = vpop.xlane.xlu0 %7106
    %v7108 = vmax.f32 %v6996, %v7061
    %7109 = vmax.xlane.f32.xlu0 %v7108
    %v7110 = vpop.xlane.xlu0 %7109
    %v7111 = vmax.f32 %v6999, %v7064
    %7112 = vmax.xlane.f32.xlu0 %v7111
    %v7113 = vpop.xlane.xlu0 %7112
    %v7114 = vmax.f32 %v7002, %v7067
    %7115 = vmax.xlane.f32.xlu0 %v7114
    %v7116 = vpop.xlane.xlu0 %7115
    %v7117 = vsub.f32 %v6957, %v7071
    %v7118 = vsub.f32 %v7022, %v7071
    %v7119 = vsub.f32 %v6960, %v7074
    %v7120 = vsub.f32 %v7025, %v7074
    %v7121 = vsub.f32 %v6963, %v7077
    %v7122 = vsub.f32 %v7028, %v7077
    %v7123 = vsub.f32 %v6966, %v7080
    %v7124 = vsub.f32 %v7031, %v7080
    %v7125 = vsub.f32 %v6969, %v7083
    %v7126 = vsub.f32 %v7034, %v7083
    %v7127 = vsub.f32 %v6972, %v7086
    %v7128 = vsub.f32 %v7037, %v7086
    %v7129 = vsub.f32 %v6975, %v7089
    %v7130 = vsub.f32 %v7040, %v7089
    %v7131 = vsub.f32 %v6978, %v7092
    %v7132 = vsub.f32 %v7043, %v7092
    %v7133 = vsub.f32 %v6981, %v7095
    %v7134 = vsub.f32 %v7046, %v7095
    %v7135 = vsub.f32 %v6984, %v7098
    %v7136 = vsub.f32 %v7049, %v7098
    %v7137 = vsub.f32 %v6987, %v7101
    %v7138 = vsub.f32 %v7052, %v7101
    %v7139 = vsub.f32 %v6990, %v7104
    %v7140 = vsub.f32 %v7055, %v7104
    %v7141 = vsub.f32 %v6993, %v7107
    %v7142 = vsub.f32 %v7058, %v7107
    %v7143 = vsub.f32 %v6996, %v7110
    %v7144 = vsub.f32 %v7061, %v7110
    %v7145 = vsub.f32 %v6999, %v7113
    %v7146 = vsub.f32 %v7064, %v7113
    %v7147 = vsub.f32 %v7002, %v7116
    %v7148 = vsub.f32 %v7067, %v7116
    %v7149 = vmul.f32 %v7117, 1.442695
    %v7150 = vpow.pop %v7149
    %v7151 = vmul.f32 %v7118, 1.442695
    %v7152 = vpow.pop %v7151
    %v7153 = vmul.f32 %v7119, 1.442695
    %v7154 = vpow.pop %v7153
    %v7155 = vmul.f32 %v7120, 1.442695
    %v7156 = vpow.pop %v7155
    %v7157 = vmul.f32 %v7121, 1.442695
    %v7158 = vpow.pop %v7157
    %v7159 = vmul.f32 %v7122, 1.442695
    %v7160 = vpow.pop %v7159
    %v7161 = vmul.f32 %v7123, 1.442695
    %v7162 = vpow.pop %v7161
    %v7163 = vmul.f32 %v7124, 1.442695
    %v7164 = vpow.pop %v7163
    %v7165 = vmul.f32 %v7125, 1.442695
    %v7166 = vpow.pop %v7165
    %v7167 = vmul.f32 %v7126, 1.442695
    %v7168 = vpow.pop %v7167
    %v7169 = vmul.f32 %v7127, 1.442695
    %v7170 = vpow.pop %v7169
    %v7171 = vmul.f32 %v7128, 1.442695
    %v7172 = vpow.pop %v7171
    %v7173 = vmul.f32 %v7129, 1.442695
    %v7174 = vpow.pop %v7173
    %v7175 = vmul.f32 %v7130, 1.442695
    %v7176 = vpow.pop %v7175
    %v7177 = vmul.f32 %v7131, 1.442695
    %v7178 = vpow.pop %v7177
    %v7179 = vmul.f32 %v7132, 1.442695
    %v7180 = vpow.pop %v7179
    %v7181 = vmul.f32 %v7133, 1.442695
    %v7182 = vpow.pop %v7181
    %v7183 = vmul.f32 %v7134, 1.442695
    %v7184 = vpow.pop %v7183
    %v7185 = vmul.f32 %v7135, 1.442695
    %v7186 = vpow.pop %v7185
    %v7187 = vmul.f32 %v7136, 1.442695
    %v7188 = vpow.pop %v7187
    %v7189 = vmul.f32 %v7137, 1.442695
    %v7190 = vpow.pop %v7189
    %v7191 = vmul.f32 %v7138, 1.442695
    %v7192 = vpow.pop %v7191
    %v7193 = vmul.f32 %v7139, 1.442695
    %v7194 = vpow.pop %v7193
    %v7195 = vmul.f32 %v7140, 1.442695
    %v7196 = vpow.pop %v7195
    %v7197 = vmul.f32 %v7141, 1.442695
    %v7198 = vpow.pop %v7197
    %v7199 = vmul.f32 %v7142, 1.442695
    %v7200 = vpow.pop %v7199
    %v7201 = vmul.f32 %v7143, 1.442695
    %v7202 = vpow.pop %v7201
    %v7203 = vmul.f32 %v7144, 1.442695
    %v7204 = vpow.pop %v7203
    %v7205 = vmul.f32 %v7145, 1.442695
    %v7206 = vpow.pop %v7205
    %v7207 = vmul.f32 %v7146, 1.442695
    %v7208 = vpow.pop %v7207
    %v7209 = vmul.f32 %v7147, 1.442695
    %v7210 = vpow.pop %v7209
    %v7211 = vmul.f32 %v7148, 1.442695
    %v7212 = vpow.pop %v7211
    %v7213 = vadd.f32 %v7150, %v7152
    %7214 = vadd.xlane.f32.xlu0 %v7213
    %v7215 = vpop.xlane.xlu0 %7214
    %v7216 = vadd.f32 %v7154, %v7156
    %7217 = vadd.xlane.f32.xlu0 %v7216
    %v7218 = vpop.xlane.xlu0 %7217
    %v7219 = vadd.f32 %v7158, %v7160
    %7220 = vadd.xlane.f32.xlu0 %v7219
    %v7221 = vpop.xlane.xlu0 %7220
    %v7222 = vadd.f32 %v7162, %v7164
    %7223 = vadd.xlane.f32.xlu0 %v7222
    %v7224 = vpop.xlane.xlu0 %7223
    %v7225 = vadd.f32 %v7166, %v7168
    %7226 = vadd.xlane.f32.xlu0 %v7225
    %v7227 = vpop.xlane.xlu0 %7226
    %v7228 = vadd.f32 %v7170, %v7172
    %7229 = vadd.xlane.f32.xlu0 %v7228
    %v7230 = vpop.xlane.xlu0 %7229
    %v7231 = vadd.f32 %v7174, %v7176
    %7232 = vadd.xlane.f32.xlu0 %v7231
    %v7233 = vpop.xlane.xlu0 %7232
    %v7234 = vadd.f32 %v7178, %v7180
    %7235 = vadd.xlane.f32.xlu0 %v7234
    %v7236 = vpop.xlane.xlu0 %7235
    %v7237 = vadd.f32 %v7182, %v7184
    %7238 = vadd.xlane.f32.xlu0 %v7237
    %v7239 = vpop.xlane.xlu0 %7238
    %v7240 = vadd.f32 %v7186, %v7188
    %7241 = vadd.xlane.f32.xlu0 %v7240
    %v7242 = vpop.xlane.xlu0 %7241
    %v7243 = vadd.f32 %v7190, %v7192
    %7244 = vadd.xlane.f32.xlu0 %v7243
    %v7245 = vpop.xlane.xlu0 %7244
    %v7246 = vadd.f32 %v7194, %v7196
    %7247 = vadd.xlane.f32.xlu0 %v7246
    %v7248 = vpop.xlane.xlu0 %7247
    %v7249 = vadd.f32 %v7198, %v7200
    %7250 = vadd.xlane.f32.xlu0 %v7249
    %v7251 = vpop.xlane.xlu0 %7250
    %v7252 = vadd.f32 %v7202, %v7204
    %7253 = vadd.xlane.f32.xlu0 %v7252
    %v7254 = vpop.xlane.xlu0 %7253
    %v7255 = vadd.f32 %v7206, %v7208
    %7256 = vadd.xlane.f32.xlu0 %v7255
    %v7257 = vpop.xlane.xlu0 %7256
    %v7258 = vadd.f32 %v7210, %v7212
    %7259 = vadd.xlane.f32.xlu0 %v7258
    %v7260 = vpop.xlane.xlu0 %7259
    %v7261 = vrcp.pop %v7215
    %v7262 = vrcp.pop %v7218
    %v7263 = vrcp.pop %v7221
    %v7264 = vrcp.pop %v7224
    %v7265 = vrcp.pop %v7227
    %v7266 = vrcp.pop %v7230
    %v7267 = vrcp.pop %v7233
    %v7268 = vrcp.pop %v7236
    %v7269 = vrcp.pop %v7239
    %v7270 = vrcp.pop %v7242
    %v7271 = vrcp.pop %v7245
    %v7272 = vrcp.pop %v7248
    %v7273 = vrcp.pop %v7251
    %v7274 = vrcp.pop %v7254
    %v7275 = vrcp.pop %v7257
    %v7276 = vrcp.pop %v7260
    %7277 = vrot.lane.b32.xlu0 %v5236, 112
    %v7278 = vpop.permute.xlu0 %7277
    %7279 = vrot.lane.b32.xlu0 %v5239, 112
    %v7280 = vpop.permute.xlu0 %7279
    %7281 = vrot.lane.b32.xlu0 %v5242, 112
    %v7282 = vpop.permute.xlu0 %7281
    %7283 = vrot.lane.b32.xlu0 %v5245, 112
    %v7284 = vpop.permute.xlu0 %7283
    %7285 = vrot.lane.b32.xlu0 %v5248, 112
    %v7286 = vpop.permute.xlu0 %7285
    %7287 = vrot.lane.b32.xlu0 %v5251, 112
    %v7288 = vpop.permute.xlu0 %7287
    %7289 = vrot.lane.b32.xlu0 %v5254, 112
    %v7290 = vpop.permute.xlu0 %7289
    %7291 = vrot.lane.b32.xlu0 %v5257, 112
    %v7292 = vpop.permute.xlu0 %7291
    %7293 = vrot.lane.b32.xlu0 %v5260, 112
    %v7294 = vpop.permute.xlu0 %7293
    %7295 = vrot.lane.b32.xlu0 %v5263, 112
    %v7296 = vpop.permute.xlu0 %7295
    %7297 = vrot.lane.b32.xlu0 %v5266, 112
    %v7298 = vpop.permute.xlu0 %7297
    %7299 = vrot.lane.b32.xlu0 %v5269, 112
    %v7300 = vpop.permute.xlu0 %7299
    %7301 = vrot.lane.b32.xlu0 %v5272, 112
    %v7302 = vpop.permute.xlu0 %7301
    %7303 = vrot.lane.b32.xlu0 %v5275, 112
    %v7304 = vpop.permute.xlu0 %7303
    %7305 = vrot.lane.b32.xlu0 %v5278, 112
    %v7306 = vpop.permute.xlu0 %7305
    %7307 = vrot.lane.b32.xlu0 %v5281, 112
    %v7308 = vpop.permute.xlu0 %7307
    %7309 = vrot.lane.b32.xlu0 %v5284, 112
    %v7310 = vpop.permute.xlu0 %7309
    %7311 = vrot.lane.b32.xlu0 %v5287, 112
    %v7312 = vpop.permute.xlu0 %7311
    %7313 = vrot.lane.b32.xlu0 %v5290, 112
    %v7314 = vpop.permute.xlu0 %7313
    %7315 = vrot.lane.b32.xlu0 %v5293, 112
    %v7316 = vpop.permute.xlu0 %7315
    %7317 = vrot.lane.b32.xlu0 %v5296, 112
    %v7318 = vpop.permute.xlu0 %7317
    %7319 = vrot.lane.b32.xlu0 %v5299, 112
    %v7320 = vpop.permute.xlu0 %7319
    %7321 = vrot.lane.b32.xlu0 %v5302, 112
    %v7322 = vpop.permute.xlu0 %7321
    %7323 = vrot.lane.b32.xlu0 %v5305, 112
    %v7324 = vpop.permute.xlu0 %7323
    %7325 = vrot.lane.b32.xlu0 %v5308, 112
    %v7326 = vpop.permute.xlu0 %7325
    %7327 = vrot.lane.b32.xlu0 %v5311, 112
    %v7328 = vpop.permute.xlu0 %7327
    %7329 = vrot.lane.b32.xlu0 %v5314, 112
    %v7330 = vpop.permute.xlu0 %7329
    %7331 = vrot.lane.b32.xlu0 %v5317, 112
    %v7332 = vpop.permute.xlu0 %7331
    %7333 = vrot.lane.b32.xlu0 %v5320, 112
    %v7334 = vpop.permute.xlu0 %7333
    %7335 = vrot.lane.b32.xlu0 %v5323, 112
    %v7336 = vpop.permute.xlu0 %7335
    %7337 = vrot.lane.b32.xlu0 %v5326, 112
    %v7338 = vpop.permute.xlu0 %7337
    %7339 = vrot.lane.b32.xlu0 %v5329, 112
    %v7340 = vpop.permute.xlu0 %7339
    %7373 = vmatpush.msra.mxu0 %v7308
    %7374 = vmatpush.msra.mxu0 %v7306
    %7375 = vmatpush.msra.mxu0 %v7304
    %7376 = vmatpush.msra.mxu0 %v7302
    %7377 = vmatpush.msra.mxu0 %v7300
    %7378 = vmatpush.msra.mxu0 %v7298
    %7379 = vmatpush.msra.mxu0 %v7296
    %7380 = vmatpush.msra.mxu0 %v7294
    %7381 = vmatpush.msra.mxu0 %v7292
    %7382 = vmatpush.msra.mxu0 %v7290
    %7383 = vmatpush.msra.mxu0 %v7288
    %7384 = vmatpush.msra.mxu0 %v7286
    %7385 = vmatpush.msra.mxu0 %v7284
    %7386 = vmatpush.msra.mxu0 %v7282
    %7387 = vmatpush.msra.mxu0 %v7280
    %7388 = vmatpush.msra.mxu0 %v7278
    %7389 = vmatmul.f32.gmra.mxu0 %v7150
    %v7390 = vpop.f32.mrf.mxu0
    %v7391 = vadd.f32 0.0, %v7390
    %7392 = vmatmul.f32.gmra.mxu0 %v7154
    %v7393 = vpop.f32.mrf.mxu0
    %v7394 = vadd.f32 0.0, %v7393
    %7395 = vmatmul.f32.gmra.mxu0 %v7158
    %v7396 = vpop.f32.mrf.mxu0
    %v7397 = vadd.f32 0.0, %v7396
    %7398 = vmatmul.f32.gmra.mxu0 %v7162
    %v7399 = vpop.f32.mrf.mxu0
    %v7400 = vadd.f32 0.0, %v7399
    %7401 = vmatmul.f32.gmra.mxu0 %v7166
    %v7402 = vpop.f32.mrf.mxu0
    %v7403 = vadd.f32 0.0, %v7402
    %7404 = vmatmul.f32.gmra.mxu0 %v7170
    %v7405 = vpop.f32.mrf.mxu0
    %v7406 = vadd.f32 0.0, %v7405
    %7407 = vmatmul.f32.gmra.mxu0 %v7174
    %v7408 = vpop.f32.mrf.mxu0
    %v7409 = vadd.f32 0.0, %v7408
    %7410 = vmatmul.f32.gmra.mxu0 %v7178
    %v7411 = vpop.f32.mrf.mxu0
    %v7412 = vadd.f32 0.0, %v7411
    %7413 = vmatmul.f32.gmra.mxu0 %v7182
    %v7414 = vpop.f32.mrf.mxu0
    %v7415 = vadd.f32 0.0, %v7414
    %7416 = vmatmul.f32.gmra.mxu0 %v7186
    %v7417 = vpop.f32.mrf.mxu0
    %v7418 = vadd.f32 0.0, %v7417
    %7419 = vmatmul.f32.gmra.mxu0 %v7190
    %v7420 = vpop.f32.mrf.mxu0
    %v7421 = vadd.f32 0.0, %v7420
    %7422 = vmatmul.f32.gmra.mxu0 %v7194
    %v7423 = vpop.f32.mrf.mxu0
    %v7424 = vadd.f32 0.0, %v7423
    %7425 = vmatmul.f32.gmra.mxu0 %v7198
    %v7426 = vpop.f32.mrf.mxu0
    %v7427 = vadd.f32 0.0, %v7426
    %7428 = vmatmul.f32.gmra.mxu0 %v7202
    %v7429 = vpop.f32.mrf.mxu0
    %v7430 = vadd.f32 0.0, %v7429
    %7431 = vmatmul.f32.gmra.mxu0 %v7206
    %v7432 = vpop.f32.mrf.mxu0
    %v7433 = vadd.f32 0.0, %v7432
    %7434 = vmatmul.f32.gmra.mxu0 %v7210
    %v7435 = vpop.f32.mrf.mxu0
    %v7436 = vadd.f32 0.0, %v7435
    %7437 = vdwg.mxu0
    %7438 = vmatpush.msra.mxu0 %v7340
    %7439 = vmatpush.msra.mxu0 %v7338
    %7440 = vmatpush.msra.mxu0 %v7336
    %7441 = vmatpush.msra.mxu0 %v7334
    %7442 = vmatpush.msra.mxu0 %v7332
    %7443 = vmatpush.msra.mxu0 %v7330
    %7444 = vmatpush.msra.mxu0 %v7328
    %7445 = vmatpush.msra.mxu0 %v7326
    %7446 = vmatpush.msra.mxu0 %v7324
    %7447 = vmatpush.msra.mxu0 %v7322
    %7448 = vmatpush.msra.mxu0 %v7320
    %7449 = vmatpush.msra.mxu0 %v7318
    %7450 = vmatpush.msra.mxu0 %v7316
    %7451 = vmatpush.msra.mxu0 %v7314
    %7452 = vmatpush.msra.mxu0 %v7312
    %7453 = vmatpush.msra.mxu0 %v7310
    %7454 = vmatmul.f32.gmra.mxu0 %v7152
    %v7455 = vpop.f32.mrf.mxu0
    %v7456 = vadd.f32 %v7391, %v7455
    %7457 = vmatmul.f32.gmra.mxu0 %v7156
    %v7458 = vpop.f32.mrf.mxu0
    %v7459 = vadd.f32 %v7394, %v7458
    %7460 = vmatmul.f32.gmra.mxu0 %v7160
    %v7461 = vpop.f32.mrf.mxu0
    %v7462 = vadd.f32 %v7397, %v7461
    %7463 = vmatmul.f32.gmra.mxu0 %v7164
    %v7464 = vpop.f32.mrf.mxu0
    %v7465 = vadd.f32 %v7400, %v7464
    %7466 = vmatmul.f32.gmra.mxu0 %v7168
    %v7467 = vpop.f32.mrf.mxu0
    %v7468 = vadd.f32 %v7403, %v7467
    %7469 = vmatmul.f32.gmra.mxu0 %v7172
    %v7470 = vpop.f32.mrf.mxu0
    %v7471 = vadd.f32 %v7406, %v7470
    %7472 = vmatmul.f32.gmra.mxu0 %v7176
    %v7473 = vpop.f32.mrf.mxu0
    %v7474 = vadd.f32 %v7409, %v7473
    %7475 = vmatmul.f32.gmra.mxu0 %v7180
    %v7476 = vpop.f32.mrf.mxu0
    %v7477 = vadd.f32 %v7412, %v7476
    %7478 = vmatmul.f32.gmra.mxu0 %v7184
    %v7479 = vpop.f32.mrf.mxu0
    %v7480 = vadd.f32 %v7415, %v7479
    %7481 = vmatmul.f32.gmra.mxu0 %v7188
    %v7482 = vpop.f32.mrf.mxu0
    %v7483 = vadd.f32 %v7418, %v7482
    %7484 = vmatmul.f32.gmra.mxu0 %v7192
    %v7485 = vpop.f32.mrf.mxu0
    %v7486 = vadd.f32 %v7421, %v7485
    %7487 = vmatmul.f32.gmra.mxu0 %v7196
    %v7488 = vpop.f32.mrf.mxu0
    %v7489 = vadd.f32 %v7424, %v7488
    %7490 = vmatmul.f32.gmra.mxu0 %v7200
    %v7491 = vpop.f32.mrf.mxu0
    %v7492 = vadd.f32 %v7427, %v7491
    %7493 = vmatmul.f32.gmra.mxu0 %v7204
    %v7494 = vpop.f32.mrf.mxu0
    %v7495 = vadd.f32 %v7430, %v7494
    %7496 = vmatmul.f32.gmra.mxu0 %v7208
    %v7497 = vpop.f32.mrf.mxu0
    %v7498 = vadd.f32 %v7433, %v7497
    %7499 = vmatmul.f32.gmra.mxu0 %v7212
    %v7500 = vpop.f32.mrf.mxu0
    %v7501 = vadd.f32 %v7436, %v7500
    %7502 = vdwg.mxu0
    %v7503 = vmul.f32 %v7456, %v7261
    %v7504 = vmul.f32 %v7459, %v7262
    %v7505 = vmul.f32 %v7462, %v7263
    %v7506 = vmul.f32 %v7465, %v7264
    %v7507 = vmul.f32 %v7468, %v7265
    %v7508 = vmul.f32 %v7471, %v7266
    %v7509 = vmul.f32 %v7474, %v7267
    %v7510 = vmul.f32 %v7477, %v7268
    %v7511 = vmul.f32 %v7480, %v7269
    %v7512 = vmul.f32 %v7483, %v7270
    %v7513 = vmul.f32 %v7486, %v7271
    %v7514 = vmul.f32 %v7489, %v7272
    %v7515 = vmul.f32 %v7492, %v7273
    %v7516 = vmul.f32 %v7495, %v7274
    %v7517 = vmul.f32 %v7498, %v7275
    %v7518 = vmul.f32 %v7501, %v7276
    %7519 = vrot.lane.b32.xlu0 %v1341, 104
    %v7520 = vpop.permute.xlu0 %7519
    %7521 = vrot.lane.b32.xlu0 %v1344, 104
    %v7522 = vpop.permute.xlu0 %7521
    %7523 = vrot.lane.b32.xlu0 %v1347, 104
    %v7524 = vpop.permute.xlu0 %7523
    %7525 = vrot.lane.b32.xlu0 %v1350, 104
    %v7526 = vpop.permute.xlu0 %7525
    %7527 = vrot.lane.b32.xlu0 %v1353, 104
    %v7528 = vpop.permute.xlu0 %7527
    %7529 = vrot.lane.b32.xlu0 %v1356, 104
    %v7530 = vpop.permute.xlu0 %7529
    %7531 = vrot.lane.b32.xlu0 %v1359, 104
    %v7532 = vpop.permute.xlu0 %7531
    %7533 = vrot.lane.b32.xlu0 %v1362, 104
    %v7534 = vpop.permute.xlu0 %7533
    %7535 = vrot.lane.b32.xlu0 %v1365, 104
    %v7536 = vpop.permute.xlu0 %7535
    %7537 = vrot.lane.b32.xlu0 %v1368, 104
    %v7538 = vpop.permute.xlu0 %7537
    %7539 = vrot.lane.b32.xlu0 %v1371, 104
    %v7540 = vpop.permute.xlu0 %7539
    %7541 = vrot.lane.b32.xlu0 %v1374, 104
    %v7542 = vpop.permute.xlu0 %7541
    %7543 = vrot.lane.b32.xlu0 %v1377, 104
    %v7544 = vpop.permute.xlu0 %7543
    %7545 = vrot.lane.b32.xlu0 %v1380, 104
    %v7546 = vpop.permute.xlu0 %7545
    %7547 = vrot.lane.b32.xlu0 %v1383, 104
    %v7548 = vpop.permute.xlu0 %7547
    %7549 = vrot.lane.b32.xlu0 %v1386, 104
    %v7550 = vpop.permute.xlu0 %7549
    %7551 = vrot.lane.b32.xlu0 %v5075, 104
    %v7552 = vpop.permute.xlu0 %7551
    %7553 = vrot.lane.b32.xlu0 %v5078, 104
    %v7554 = vpop.permute.xlu0 %7553
    %7555 = vrot.lane.b32.xlu0 %v5081, 104
    %v7556 = vpop.permute.xlu0 %7555
    %7557 = vrot.lane.b32.xlu0 %v5084, 104
    %v7558 = vpop.permute.xlu0 %7557
    %7559 = vrot.lane.b32.xlu0 %v5087, 104
    %v7560 = vpop.permute.xlu0 %7559
    %7561 = vrot.lane.b32.xlu0 %v5090, 104
    %v7562 = vpop.permute.xlu0 %7561
    %7563 = vrot.lane.b32.xlu0 %v5093, 104
    %v7564 = vpop.permute.xlu0 %7563
    %7565 = vrot.lane.b32.xlu0 %v5096, 104
    %v7566 = vpop.permute.xlu0 %7565
    %7567 = vrot.lane.b32.xlu0 %v5099, 104
    %v7568 = vpop.permute.xlu0 %7567
    %7569 = vrot.lane.b32.xlu0 %v5102, 104
    %v7570 = vpop.permute.xlu0 %7569
    %7571 = vrot.lane.b32.xlu0 %v5105, 104
    %v7572 = vpop.permute.xlu0 %7571
    %7573 = vrot.lane.b32.xlu0 %v5108, 104
    %v7574 = vpop.permute.xlu0 %7573
    %7575 = vrot.lane.b32.xlu0 %v5111, 104
    %v7576 = vpop.permute.xlu0 %7575
    %7577 = vrot.lane.b32.xlu0 %v5114, 104
    %v7578 = vpop.permute.xlu0 %7577
    %7579 = vrot.lane.b32.xlu0 %v5117, 104
    %v7580 = vpop.permute.xlu0 %7579
    %7581 = vrot.lane.b32.xlu0 %v5120, 104
    %v7582 = vpop.permute.xlu0 %7581
    %7583 = vrot.lane.b32.xlu0 %v5123, 104
    %v7584 = vpop.permute.xlu0 %7583
    %7585 = vrot.lane.b32.xlu0 %v5126, 104
    %v7586 = vpop.permute.xlu0 %7585
    %7587 = vrot.lane.b32.xlu0 %v5129, 104
    %v7588 = vpop.permute.xlu0 %7587
    %7589 = vrot.lane.b32.xlu0 %v5132, 104
    %v7590 = vpop.permute.xlu0 %7589
    %7591 = vrot.lane.b32.xlu0 %v5135, 104
    %v7592 = vpop.permute.xlu0 %7591
    %7593 = vrot.lane.b32.xlu0 %v5138, 104
    %v7594 = vpop.permute.xlu0 %7593
    %7595 = vrot.lane.b32.xlu0 %v5141, 104
    %v7596 = vpop.permute.xlu0 %7595
    %7597 = vrot.lane.b32.xlu0 %v5144, 104
    %v7598 = vpop.permute.xlu0 %7597
    %7599 = vrot.lane.b32.xlu0 %v5147, 104
    %v7600 = vpop.permute.xlu0 %7599
    %7601 = vrot.lane.b32.xlu0 %v5150, 104
    %v7602 = vpop.permute.xlu0 %7601
    %7603 = vrot.lane.b32.xlu0 %v5153, 104
    %v7604 = vpop.permute.xlu0 %7603
    %7605 = vrot.lane.b32.xlu0 %v5156, 104
    %v7606 = vpop.permute.xlu0 %7605
    %7607 = vrot.lane.b32.xlu0 %v5159, 104
    %v7608 = vpop.permute.xlu0 %7607
    %7609 = vrot.lane.b32.xlu0 %v5162, 104
    %v7610 = vpop.permute.xlu0 %7609
    %7611 = vrot.lane.b32.xlu0 %v5165, 104
    %v7612 = vpop.permute.xlu0 %7611
    %7613 = vrot.lane.b32.xlu0 %v5168, 104
    %v7614 = vpop.permute.xlu0 %7613
    %v7615 = vsel %vm1790, %v7520, 0
    %v7617 = vsel %vm1790, %v7522, 0
    %v7619 = vsel %vm1790, %v7524, 0
    %v7621 = vsel %vm1790, %v7526, 0
    %v7623 = vsel %vm1790, %v7528, 0
    %v7625 = vsel %vm1790, %v7530, 0
    %v7627 = vsel %vm1790, %v7532, 0
    %v7629 = vsel %vm1790, %v7534, 0
    %v7631 = vsel %vm1790, %v7536, 0
    %v7633 = vsel %vm1790, %v7538, 0
    %v7635 = vsel %vm1790, %v7540, 0
    %v7637 = vsel %vm1790, %v7542, 0
    %v7639 = vsel %vm1790, %v7544, 0
    %v7641 = vsel %vm1790, %v7546, 0
    %v7643 = vsel %vm1790, %v7548, 0
    %v7645 = vsel %vm1790, %v7550, 0
    %v7647 = vsel %vm1790, %v7552, 0
    %v7649 = vsel %vm1790, %v7554, 0
    %v7651 = vsel %vm1790, %v7556, 0
    %v7653 = vsel %vm1790, %v7558, 0
    %v7655 = vsel %vm1790, %v7560, 0
    %v7657 = vsel %vm1790, %v7562, 0
    %v7659 = vsel %vm1790, %v7564, 0
    %v7661 = vsel %vm1790, %v7566, 0
    %v7663 = vsel %vm1790, %v7568, 0
    %v7665 = vsel %vm1790, %v7570, 0
    %v7667 = vsel %vm1790, %v7572, 0
    %v7669 = vsel %vm1790, %v7574, 0
    %v7671 = vsel %vm1790, %v7576, 0
    %v7673 = vsel %vm1790, %v7578, 0
    %v7675 = vsel %vm1790, %v7580, 0
    %v7677 = vsel %vm1790, %v7582, 0
    %v7679 = vsel %vm1790, %v7584, 0
    %v7681 = vsel %vm1790, %v7586, 0
    %v7683 = vsel %vm1790, %v7588, 0
    %v7685 = vsel %vm1790, %v7590, 0
    %v7687 = vsel %vm1790, %v7592, 0
    %v7689 = vsel %vm1790, %v7594, 0
    %v7691 = vsel %vm1790, %v7596, 0
    %v7693 = vsel %vm1790, %v7598, 0
    %v7695 = vsel %vm1790, %v7600, 0
    %v7697 = vsel %vm1790, %v7602, 0
    %v7699 = vsel %vm1790, %v7604, 0
    %v7701 = vsel %vm1790, %v7606, 0
    %v7703 = vsel %vm1790, %v7608, 0
    %v7705 = vsel %vm1790, %v7610, 0
    %v7707 = vsel %vm1790, %v7612, 0
    %v7709 = vsel %vm1790, %v7614, 0
    %7711 = vmatpush.xpose.msra.mxu0 %v7677
    %7712 = vmatpush.xpose.msra.mxu0 %v7675
    %7713 = vmatpush.xpose.msra.mxu0 %v7673
    %7714 = vmatpush.xpose.msra.mxu0 %v7671
    %7715 = vmatpush.xpose.msra.mxu0 %v7669
    %7716 = vmatpush.xpose.msra.mxu0 %v7667
    %7717 = vmatpush.xpose.msra.mxu0 %v7665
    %7718 = vmatpush.xpose.msra.mxu0 %v7663
    %7719 = vmatpush.xpose.msra.mxu0 %v7661
    %7720 = vmatpush.xpose.msra.mxu0 %v7659
    %7721 = vmatpush.xpose.msra.mxu0 %v7657
    %7722 = vmatpush.xpose.msra.mxu0 %v7655
    %7723 = vmatpush.xpose.msra.mxu0 %v7653
    %7724 = vmatpush.xpose.msra.mxu0 %v7651
    %7725 = vmatpush.xpose.msra.mxu0 %v7649
    %7726 = vmatpush.xpose.msra.mxu0 %v7647
    %7727 = vmatmul.f32.gmra.mxu0 %v7615
    %v7728 = vpop.f32.mrf.mxu0
    %v7729 = vadd.f32 0.0, %v7728
    %7730 = vmatmul.f32.gmra.mxu0 %v7617
    %v7731 = vpop.f32.mrf.mxu0
    %v7732 = vadd.f32 0.0, %v7731
    %7733 = vmatmul.f32.gmra.mxu0 %v7619
    %v7734 = vpop.f32.mrf.mxu0
    %v7735 = vadd.f32 0.0, %v7734
    %7736 = vmatmul.f32.gmra.mxu0 %v7621
    %v7737 = vpop.f32.mrf.mxu0
    %v7738 = vadd.f32 0.0, %v7737
    %7739 = vmatmul.f32.gmra.mxu0 %v7623
    %v7740 = vpop.f32.mrf.mxu0
    %v7741 = vadd.f32 0.0, %v7740
    %7742 = vmatmul.f32.gmra.mxu0 %v7625
    %v7743 = vpop.f32.mrf.mxu0
    %v7744 = vadd.f32 0.0, %v7743
    %7745 = vmatmul.f32.gmra.mxu0 %v7627
    %v7746 = vpop.f32.mrf.mxu0
    %v7747 = vadd.f32 0.0, %v7746
    %7748 = vmatmul.f32.gmra.mxu0 %v7629
    %v7749 = vpop.f32.mrf.mxu0
    %v7750 = vadd.f32 0.0, %v7749
    %7751 = vmatmul.f32.gmra.mxu0 %v7631
    %v7752 = vpop.f32.mrf.mxu0
    %v7753 = vadd.f32 0.0, %v7752
    %7754 = vmatmul.f32.gmra.mxu0 %v7633
    %v7755 = vpop.f32.mrf.mxu0
    %v7756 = vadd.f32 0.0, %v7755
    %7757 = vmatmul.f32.gmra.mxu0 %v7635
    %v7758 = vpop.f32.mrf.mxu0
    %v7759 = vadd.f32 0.0, %v7758
    %7760 = vmatmul.f32.gmra.mxu0 %v7637
    %v7761 = vpop.f32.mrf.mxu0
    %v7762 = vadd.f32 0.0, %v7761
    %7763 = vmatmul.f32.gmra.mxu0 %v7639
    %v7764 = vpop.f32.mrf.mxu0
    %v7765 = vadd.f32 0.0, %v7764
    %7766 = vmatmul.f32.gmra.mxu0 %v7641
    %v7767 = vpop.f32.mrf.mxu0
    %v7768 = vadd.f32 0.0, %v7767
    %7769 = vmatmul.f32.gmra.mxu0 %v7643
    %v7770 = vpop.f32.mrf.mxu0
    %v7771 = vadd.f32 0.0, %v7770
    %7772 = vmatmul.f32.gmra.mxu0 %v7645
    %v7773 = vpop.f32.mrf.mxu0
    %v7774 = vadd.f32 0.0, %v7773
    %7775 = vdwg.mxu0
    %7776 = vmatpush.xpose.msra.mxu0 %v7709
    %7777 = vmatpush.xpose.msra.mxu0 %v7707
    %7778 = vmatpush.xpose.msra.mxu0 %v7705
    %7779 = vmatpush.xpose.msra.mxu0 %v7703
    %7780 = vmatpush.xpose.msra.mxu0 %v7701
    %7781 = vmatpush.xpose.msra.mxu0 %v7699
    %7782 = vmatpush.xpose.msra.mxu0 %v7697
    %7783 = vmatpush.xpose.msra.mxu0 %v7695
    %7784 = vmatpush.xpose.msra.mxu0 %v7693
    %7785 = vmatpush.xpose.msra.mxu0 %v7691
    %7786 = vmatpush.xpose.msra.mxu0 %v7689
    %7787 = vmatpush.xpose.msra.mxu0 %v7687
    %7788 = vmatpush.xpose.msra.mxu0 %v7685
    %7789 = vmatpush.xpose.msra.mxu0 %v7683
    %7790 = vmatpush.xpose.msra.mxu0 %v7681
    %7791 = vmatpush.xpose.msra.mxu0 %v7679
    %7792 = vmatmul.f32.gmra.mxu0 %v7615
    %v7793 = vpop.f32.mrf.mxu0
    %v7794 = vadd.f32 0.0, %v7793
    %7795 = vmatmul.f32.gmra.mxu0 %v7617
    %v7796 = vpop.f32.mrf.mxu0
    %v7797 = vadd.f32 0.0, %v7796
    %7798 = vmatmul.f32.gmra.mxu0 %v7619
    %v7799 = vpop.f32.mrf.mxu0
    %v7800 = vadd.f32 0.0, %v7799
    %7801 = vmatmul.f32.gmra.mxu0 %v7621
    %v7802 = vpop.f32.mrf.mxu0
    %v7803 = vadd.f32 0.0, %v7802
    %7804 = vmatmul.f32.gmra.mxu0 %v7623
    %v7805 = vpop.f32.mrf.mxu0
    %v7806 = vadd.f32 0.0, %v7805
    %7807 = vmatmul.f32.gmra.mxu0 %v7625
    %v7808 = vpop.f32.mrf.mxu0
    %v7809 = vadd.f32 0.0, %v7808
    %7810 = vmatmul.f32.gmra.mxu0 %v7627
    %v7811 = vpop.f32.mrf.mxu0
    %v7812 = vadd.f32 0.0, %v7811
    %7813 = vmatmul.f32.gmra.mxu0 %v7629
    %v7814 = vpop.f32.mrf.mxu0
    %v7815 = vadd.f32 0.0, %v7814
    %7816 = vmatmul.f32.gmra.mxu0 %v7631
    %v7817 = vpop.f32.mrf.mxu0
    %v7818 = vadd.f32 0.0, %v7817
    %7819 = vmatmul.f32.gmra.mxu0 %v7633
    %v7820 = vpop.f32.mrf.mxu0
    %v7821 = vadd.f32 0.0, %v7820
    %7822 = vmatmul.f32.gmra.mxu0 %v7635
    %v7823 = vpop.f32.mrf.mxu0
    %v7824 = vadd.f32 0.0, %v7823
    %7825 = vmatmul.f32.gmra.mxu0 %v7637
    %v7826 = vpop.f32.mrf.mxu0
    %v7827 = vadd.f32 0.0, %v7826
    %7828 = vmatmul.f32.gmra.mxu0 %v7639
    %v7829 = vpop.f32.mrf.mxu0
    %v7830 = vadd.f32 0.0, %v7829
    %7831 = vmatmul.f32.gmra.mxu0 %v7641
    %v7832 = vpop.f32.mrf.mxu0
    %v7833 = vadd.f32 0.0, %v7832
    %7834 = vmatmul.f32.gmra.mxu0 %v7643
    %v7835 = vpop.f32.mrf.mxu0
    %v7836 = vadd.f32 0.0, %v7835
    %7837 = vmatmul.f32.gmra.mxu0 %v7645
    %v7838 = vpop.f32.mrf.mxu0
    %v7839 = vadd.f32 0.0, %v7838
    %7840 = vdwg.mxu0
    %v7841 = vmax.f32 %v7729, %v7794
    %7842 = vmax.xlane.f32.xlu0 %v7841
    %v7843 = vpop.xlane.xlu0 %7842
    %v7844 = vmax.f32 %v7732, %v7797
    %7845 = vmax.xlane.f32.xlu0 %v7844
    %v7846 = vpop.xlane.xlu0 %7845
    %v7847 = vmax.f32 %v7735, %v7800
    %7848 = vmax.xlane.f32.xlu0 %v7847
    %v7849 = vpop.xlane.xlu0 %7848
    %v7850 = vmax.f32 %v7738, %v7803
    %7851 = vmax.xlane.f32.xlu0 %v7850
    %v7852 = vpop.xlane.xlu0 %7851
    %v7853 = vmax.f32 %v7741, %v7806
    %7854 = vmax.xlane.f32.xlu0 %v7853
    %v7855 = vpop.xlane.xlu0 %7854
    %v7856 = vmax.f32 %v7744, %v7809
    %7857 = vmax.xlane.f32.xlu0 %v7856
    %v7858 = vpop.xlane.xlu0 %7857
    %v7859 = vmax.f32 %v7747, %v7812
    %7860 = vmax.xlane.f32.xlu0 %v7859
    %v7861 = vpop.xlane.xlu0 %7860
    %v7862 = vmax.f32 %v7750, %v7815
    %7863 = vmax.xlane.f32.xlu0 %v7862
    %v7864 = vpop.xlane.xlu0 %7863
    %v7865 = vmax.f32 %v7753, %v7818
    %7866 = vmax.xlane.f32.xlu0 %v7865
    %v7867 = vpop.xlane.xlu0 %7866
    %v7868 = vmax.f32 %v7756, %v7821
    %7869 = vmax.xlane.f32.xlu0 %v7868
    %v7870 = vpop.xlane.xlu0 %7869
    %v7871 = vmax.f32 %v7759, %v7824
    %7872 = vmax.xlane.f32.xlu0 %v7871
    %v7873 = vpop.xlane.xlu0 %7872
    %v7874 = vmax.f32 %v7762, %v7827
    %7875 = vmax.xlane.f32.xlu0 %v7874
    %v7876 = vpop.xlane.xlu0 %7875
    %v7877 = vmax.f32 %v7765, %v7830
    %7878 = vmax.xlane.f32.xlu0 %v7877
    %v7879 = vpop.xlane.xlu0 %7878
    %v7880 = vmax.f32 %v7768, %v7833
    %7881 = vmax.xlane.f32.xlu0 %v7880
    %v7882 = vpop.xlane.xlu0 %7881
    %v7883 = vmax.f32 %v7771, %v7836
    %7884 = vmax.xlane.f32.xlu0 %v7883
    %v7885 = vpop.xlane.xlu0 %7884
    %v7886 = vmax.f32 %v7774, %v7839
    %7887 = vmax.xlane.f32.xlu0 %v7886
    %v7888 = vpop.xlane.xlu0 %7887
    %v7889 = vsub.f32 %v7729, %v7843
    %v7890 = vsub.f32 %v7794, %v7843
    %v7891 = vsub.f32 %v7732, %v7846
    %v7892 = vsub.f32 %v7797, %v7846
    %v7893 = vsub.f32 %v7735, %v7849
    %v7894 = vsub.f32 %v7800, %v7849
    %v7895 = vsub.f32 %v7738, %v7852
    %v7896 = vsub.f32 %v7803, %v7852
    %v7897 = vsub.f32 %v7741, %v7855
    %v7898 = vsub.f32 %v7806, %v7855
    %v7899 = vsub.f32 %v7744, %v7858
    %v7900 = vsub.f32 %v7809, %v7858
    %v7901 = vsub.f32 %v7747, %v7861
    %v7902 = vsub.f32 %v7812, %v7861
    %v7903 = vsub.f32 %v7750, %v7864
    %v7904 = vsub.f32 %v7815, %v7864
    %v7905 = vsub.f32 %v7753, %v7867
    %v7906 = vsub.f32 %v7818, %v7867
    %v7907 = vsub.f32 %v7756, %v7870
    %v7908 = vsub.f32 %v7821, %v7870
    %v7909 = vsub.f32 %v7759, %v7873
    %v7910 = vsub.f32 %v7824, %v7873
    %v7911 = vsub.f32 %v7762, %v7876
    %v7912 = vsub.f32 %v7827, %v7876
    %v7913 = vsub.f32 %v7765, %v7879
    %v7914 = vsub.f32 %v7830, %v7879
    %v7915 = vsub.f32 %v7768, %v7882
    %v7916 = vsub.f32 %v7833, %v7882
    %v7917 = vsub.f32 %v7771, %v7885
    %v7918 = vsub.f32 %v7836, %v7885
    %v7919 = vsub.f32 %v7774, %v7888
    %v7920 = vsub.f32 %v7839, %v7888
    %v7921 = vmul.f32 %v7889, 1.442695
    %v7922 = vpow.pop %v7921
    %v7923 = vmul.f32 %v7890, 1.442695
    %v7924 = vpow.pop %v7923
    %v7925 = vmul.f32 %v7891, 1.442695
    %v7926 = vpow.pop %v7925
    %v7927 = vmul.f32 %v7892, 1.442695
    %v7928 = vpow.pop %v7927
    %v7929 = vmul.f32 %v7893, 1.442695
    %v7930 = vpow.pop %v7929
    %v7931 = vmul.f32 %v7894, 1.442695
    %v7932 = vpow.pop %v7931
    %v7933 = vmul.f32 %v7895, 1.442695
    %v7934 = vpow.pop %v7933
    %v7935 = vmul.f32 %v7896, 1.442695
    %v7936 = vpow.pop %v7935
    %v7937 = vmul.f32 %v7897, 1.442695
    %v7938 = vpow.pop %v7937
    %v7939 = vmul.f32 %v7898, 1.442695
    %v7940 = vpow.pop %v7939
    %v7941 = vmul.f32 %v7899, 1.442695
    %v7942 = vpow.pop %v7941
    %v7943 = vmul.f32 %v7900, 1.442695
    %v7944 = vpow.pop %v7943
    %v7945 = vmul.f32 %v7901, 1.442695
    %v7946 = vpow.pop %v7945
    %v7947 = vmul.f32 %v7902, 1.442695
    %v7948 = vpow.pop %v7947
    %v7949 = vmul.f32 %v7903, 1.442695
    %v7950 = vpow.pop %v7949
    %v7951 = vmul.f32 %v7904, 1.442695
    %v7952 = vpow.pop %v7951
    %v7953 = vmul.f32 %v7905, 1.442695
    %v7954 = vpow.pop %v7953
    %v7955 = vmul.f32 %v7906, 1.442695
    %v7956 = vpow.pop %v7955
    %v7957 = vmul.f32 %v7907, 1.442695
    %v7958 = vpow.pop %v7957
    %v7959 = vmul.f32 %v7908, 1.442695
    %v7960 = vpow.pop %v7959
    %v7961 = vmul.f32 %v7909, 1.442695
    %v7962 = vpow.pop %v7961
    %v7963 = vmul.f32 %v7910, 1.442695
    %v7964 = vpow.pop %v7963
    %v7965 = vmul.f32 %v7911, 1.442695
    %v7966 = vpow.pop %v7965
    %v7967 = vmul.f32 %v7912, 1.442695
    %v7968 = vpow.pop %v7967
    %v7969 = vmul.f32 %v7913, 1.442695
    %v7970 = vpow.pop %v7969
    %v7971 = vmul.f32 %v7914, 1.442695
    %v7972 = vpow.pop %v7971
    %v7973 = vmul.f32 %v7915, 1.442695
    %v7974 = vpow.pop %v7973
    %v7975 = vmul.f32 %v7916, 1.442695
    %v7976 = vpow.pop %v7975
    %v7977 = vmul.f32 %v7917, 1.442695
    %v7978 = vpow.pop %v7977
    %v7979 = vmul.f32 %v7918, 1.442695
    %v7980 = vpow.pop %v7979
    %v7981 = vmul.f32 %v7919, 1.442695
    %v7982 = vpow.pop %v7981
    %v7983 = vmul.f32 %v7920, 1.442695
    %v7984 = vpow.pop %v7983
    %v7985 = vadd.f32 %v7922, %v7924
    %7986 = vadd.xlane.f32.xlu0 %v7985
    %v7987 = vpop.xlane.xlu0 %7986
    %v7988 = vadd.f32 %v7926, %v7928
    %7989 = vadd.xlane.f32.xlu0 %v7988
    %v7990 = vpop.xlane.xlu0 %7989
    %v7991 = vadd.f32 %v7930, %v7932
    %7992 = vadd.xlane.f32.xlu0 %v7991
    %v7993 = vpop.xlane.xlu0 %7992
    %v7994 = vadd.f32 %v7934, %v7936
    %7995 = vadd.xlane.f32.xlu0 %v7994
    %v7996 = vpop.xlane.xlu0 %7995
    %v7997 = vadd.f32 %v7938, %v7940
    %7998 = vadd.xlane.f32.xlu0 %v7997
    %v7999 = vpop.xlane.xlu0 %7998
    %v8000 = vadd.f32 %v7942, %v7944
    %8001 = vadd.xlane.f32.xlu0 %v8000
    %v8002 = vpop.xlane.xlu0 %8001
    %v8003 = vadd.f32 %v7946, %v7948
    %8004 = vadd.xlane.f32.xlu0 %v8003
    %v8005 = vpop.xlane.xlu0 %8004
    %v8006 = vadd.f32 %v7950, %v7952
    %8007 = vadd.xlane.f32.xlu0 %v8006
    %v8008 = vpop.xlane.xlu0 %8007
    %v8009 = vadd.f32 %v7954, %v7956
    %8010 = vadd.xlane.f32.xlu0 %v8009
    %v8011 = vpop.xlane.xlu0 %8010
    %v8012 = vadd.f32 %v7958, %v7960
    %8013 = vadd.xlane.f32.xlu0 %v8012
    %v8014 = vpop.xlane.xlu0 %8013
    %v8015 = vadd.f32 %v7962, %v7964
    %8016 = vadd.xlane.f32.xlu0 %v8015
    %v8017 = vpop.xlane.xlu0 %8016
    %v8018 = vadd.f32 %v7966, %v7968
    %8019 = vadd.xlane.f32.xlu0 %v8018
    %v8020 = vpop.xlane.xlu0 %8019
    %v8021 = vadd.f32 %v7970, %v7972
    %8022 = vadd.xlane.f32.xlu0 %v8021
    %v8023 = vpop.xlane.xlu0 %8022
    %v8024 = vadd.f32 %v7974, %v7976
    %8025 = vadd.xlane.f32.xlu0 %v8024
    %v8026 = vpop.xlane.xlu0 %8025
    %v8027 = vadd.f32 %v7978, %v7980
    %8028 = vadd.xlane.f32.xlu0 %v8027
    %v8029 = vpop.xlane.xlu0 %8028
    %v8030 = vadd.f32 %v7982, %v7984
    %8031 = vadd.xlane.f32.xlu0 %v8030
    %v8032 = vpop.xlane.xlu0 %8031
    %v8033 = vrcp.pop %v7987
    %v8034 = vrcp.pop %v7990
    %v8035 = vrcp.pop %v7993
    %v8036 = vrcp.pop %v7996
    %v8037 = vrcp.pop %v7999
    %v8038 = vrcp.pop %v8002
    %v8039 = vrcp.pop %v8005
    %v8040 = vrcp.pop %v8008
    %v8041 = vrcp.pop %v8011
    %v8042 = vrcp.pop %v8014
    %v8043 = vrcp.pop %v8017
    %v8044 = vrcp.pop %v8020
    %v8045 = vrcp.pop %v8023
    %v8046 = vrcp.pop %v8026
    %v8047 = vrcp.pop %v8029
    %v8048 = vrcp.pop %v8032
    %8049 = vrot.lane.b32.xlu0 %v5236, 104
    %v8050 = vpop.permute.xlu0 %8049
    %8051 = vrot.lane.b32.xlu0 %v5239, 104
    %v8052 = vpop.permute.xlu0 %8051
    %8053 = vrot.lane.b32.xlu0 %v5242, 104
    %v8054 = vpop.permute.xlu0 %8053
    %8055 = vrot.lane.b32.xlu0 %v5245, 104
    %v8056 = vpop.permute.xlu0 %8055
    %8057 = vrot.lane.b32.xlu0 %v5248, 104
    %v8058 = vpop.permute.xlu0 %8057
    %8059 = vrot.lane.b32.xlu0 %v5251, 104
    %v8060 = vpop.permute.xlu0 %8059
    %8061 = vrot.lane.b32.xlu0 %v5254, 104
    %v8062 = vpop.permute.xlu0 %8061
    %8063 = vrot.lane.b32.xlu0 %v5257, 104
    %v8064 = vpop.permute.xlu0 %8063
    %8065 = vrot.lane.b32.xlu0 %v5260, 104
    %v8066 = vpop.permute.xlu0 %8065
    %8067 = vrot.lane.b32.xlu0 %v5263, 104
    %v8068 = vpop.permute.xlu0 %8067
    %8069 = vrot.lane.b32.xlu0 %v5266, 104
    %v8070 = vpop.permute.xlu0 %8069
    %8071 = vrot.lane.b32.xlu0 %v5269, 104
    %v8072 = vpop.permute.xlu0 %8071
    %8073 = vrot.lane.b32.xlu0 %v5272, 104
    %v8074 = vpop.permute.xlu0 %8073
    %8075 = vrot.lane.b32.xlu0 %v5275, 104
    %v8076 = vpop.permute.xlu0 %8075
    %8077 = vrot.lane.b32.xlu0 %v5278, 104
    %v8078 = vpop.permute.xlu0 %8077
    %8079 = vrot.lane.b32.xlu0 %v5281, 104
    %v8080 = vpop.permute.xlu0 %8079
    %8081 = vrot.lane.b32.xlu0 %v5284, 104
    %v8082 = vpop.permute.xlu0 %8081
    %8083 = vrot.lane.b32.xlu0 %v5287, 104
    %v8084 = vpop.permute.xlu0 %8083
    %8085 = vrot.lane.b32.xlu0 %v5290, 104
    %v8086 = vpop.permute.xlu0 %8085
    %8087 = vrot.lane.b32.xlu0 %v5293, 104
    %v8088 = vpop.permute.xlu0 %8087
    %8089 = vrot.lane.b32.xlu0 %v5296, 104
    %v8090 = vpop.permute.xlu0 %8089
    %8091 = vrot.lane.b32.xlu0 %v5299, 104
    %v8092 = vpop.permute.xlu0 %8091
    %8093 = vrot.lane.b32.xlu0 %v5302, 104
    %v8094 = vpop.permute.xlu0 %8093
    %8095 = vrot.lane.b32.xlu0 %v5305, 104
    %v8096 = vpop.permute.xlu0 %8095
    %8097 = vrot.lane.b32.xlu0 %v5308, 104
    %v8098 = vpop.permute.xlu0 %8097
    %8099 = vrot.lane.b32.xlu0 %v5311, 104
    %v8100 = vpop.permute.xlu0 %8099
    %8101 = vrot.lane.b32.xlu0 %v5314, 104
    %v8102 = vpop.permute.xlu0 %8101
    %8103 = vrot.lane.b32.xlu0 %v5317, 104
    %v8104 = vpop.permute.xlu0 %8103
    %8105 = vrot.lane.b32.xlu0 %v5320, 104
    %v8106 = vpop.permute.xlu0 %8105
    %8107 = vrot.lane.b32.xlu0 %v5323, 104
    %v8108 = vpop.permute.xlu0 %8107
    %8109 = vrot.lane.b32.xlu0 %v5326, 104
    %v8110 = vpop.permute.xlu0 %8109
    %8111 = vrot.lane.b32.xlu0 %v5329, 104
    %v8112 = vpop.permute.xlu0 %8111
    %8145 = vmatpush.msra.mxu0 %v8080
    %8146 = vmatpush.msra.mxu0 %v8078
    %8147 = vmatpush.msra.mxu0 %v8076
    %8148 = vmatpush.msra.mxu0 %v8074
    %8149 = vmatpush.msra.mxu0 %v8072
    %8150 = vmatpush.msra.mxu0 %v8070
    %8151 = vmatpush.msra.mxu0 %v8068
    %8152 = vmatpush.msra.mxu0 %v8066
    %8153 = vmatpush.msra.mxu0 %v8064
    %8154 = vmatpush.msra.mxu0 %v8062
    %8155 = vmatpush.msra.mxu0 %v8060
    %8156 = vmatpush.msra.mxu0 %v8058
    %8157 = vmatpush.msra.mxu0 %v8056
    %8158 = vmatpush.msra.mxu0 %v8054
    %8159 = vmatpush.msra.mxu0 %v8052
    %8160 = vmatpush.msra.mxu0 %v8050
    %8161 = vmatmul.f32.gmra.mxu0 %v7922
    %v8162 = vpop.f32.mrf.mxu0
    %v8163 = vadd.f32 0.0, %v8162
    %8164 = vmatmul.f32.gmra.mxu0 %v7926
    %v8165 = vpop.f32.mrf.mxu0
    %v8166 = vadd.f32 0.0, %v8165
    %8167 = vmatmul.f32.gmra.mxu0 %v7930
    %v8168 = vpop.f32.mrf.mxu0
    %v8169 = vadd.f32 0.0, %v8168
    %8170 = vmatmul.f32.gmra.mxu0 %v7934
    %v8171 = vpop.f32.mrf.mxu0
    %v8172 = vadd.f32 0.0, %v8171
    %8173 = vmatmul.f32.gmra.mxu0 %v7938
    %v8174 = vpop.f32.mrf.mxu0
    %v8175 = vadd.f32 0.0, %v8174
    %8176 = vmatmul.f32.gmra.mxu0 %v7942
    %v8177 = vpop.f32.mrf.mxu0
    %v8178 = vadd.f32 0.0, %v8177
    %8179 = vmatmul.f32.gmra.mxu0 %v7946
    %v8180 = vpop.f32.mrf.mxu0
    %v8181 = vadd.f32 0.0, %v8180
    %8182 = vmatmul.f32.gmra.mxu0 %v7950
    %v8183 = vpop.f32.mrf.mxu0
    %v8184 = vadd.f32 0.0, %v8183
    %8185 = vmatmul.f32.gmra.mxu0 %v7954
    %v8186 = vpop.f32.mrf.mxu0
    %v8187 = vadd.f32 0.0, %v8186
    %8188 = vmatmul.f32.gmra.mxu0 %v7958
    %v8189 = vpop.f32.mrf.mxu0
    %v8190 = vadd.f32 0.0, %v8189
    %8191 = vmatmul.f32.gmra.mxu0 %v7962
    %v8192 = vpop.f32.mrf.mxu0
    %v8193 = vadd.f32 0.0, %v8192
    %8194 = vmatmul.f32.gmra.mxu0 %v7966
    %v8195 = vpop.f32.mrf.mxu0
    %v8196 = vadd.f32 0.0, %v8195
    %8197 = vmatmul.f32.gmra.mxu0 %v7970
    %v8198 = vpop.f32.mrf.mxu0
    %v8199 = vadd.f32 0.0, %v8198
    %8200 = vmatmul.f32.gmra.mxu0 %v7974
    %v8201 = vpop.f32.mrf.mxu0
    %v8202 = vadd.f32 0.0, %v8201
    %8203 = vmatmul.f32.gmra.mxu0 %v7978
    %v8204 = vpop.f32.mrf.mxu0
    %v8205 = vadd.f32 0.0, %v8204
    %8206 = vmatmul.f32.gmra.mxu0 %v7982
    %v8207 = vpop.f32.mrf.mxu0
    %v8208 = vadd.f32 0.0, %v8207
    %8209 = vdwg.mxu0
    %8210 = vmatpush.msra.mxu0 %v8112
    %8211 = vmatpush.msra.mxu0 %v8110
    %8212 = vmatpush.msra.mxu0 %v8108
    %8213 = vmatpush.msra.mxu0 %v8106
    %8214 = vmatpush.msra.mxu0 %v8104
    %8215 = vmatpush.msra.mxu0 %v8102
    %8216 = vmatpush.msra.mxu0 %v8100
    %8217 = vmatpush.msra.mxu0 %v8098
    %8218 = vmatpush.msra.mxu0 %v8096
    %8219 = vmatpush.msra.mxu0 %v8094
    %8220 = vmatpush.msra.mxu0 %v8092
    %8221 = vmatpush.msra.mxu0 %v8090
    %8222 = vmatpush.msra.mxu0 %v8088
    %8223 = vmatpush.msra.mxu0 %v8086
    %8224 = vmatpush.msra.mxu0 %v8084
    %8225 = vmatpush.msra.mxu0 %v8082
    %8226 = vmatmul.f32.gmra.mxu0 %v7924
    %v8227 = vpop.f32.mrf.mxu0
    %v8228 = vadd.f32 %v8163, %v8227
    %8229 = vmatmul.f32.gmra.mxu0 %v7928
    %v8230 = vpop.f32.mrf.mxu0
    %v8231 = vadd.f32 %v8166, %v8230
    %8232 = vmatmul.f32.gmra.mxu0 %v7932
    %v8233 = vpop.f32.mrf.mxu0
    %v8234 = vadd.f32 %v8169, %v8233
    %8235 = vmatmul.f32.gmra.mxu0 %v7936
    %v8236 = vpop.f32.mrf.mxu0
    %v8237 = vadd.f32 %v8172, %v8236
    %8238 = vmatmul.f32.gmra.mxu0 %v7940
    %v8239 = vpop.f32.mrf.mxu0
    %v8240 = vadd.f32 %v8175, %v8239
    %8241 = vmatmul.f32.gmra.mxu0 %v7944
    %v8242 = vpop.f32.mrf.mxu0
    %v8243 = vadd.f32 %v8178, %v8242
    %8244 = vmatmul.f32.gmra.mxu0 %v7948
    %v8245 = vpop.f32.mrf.mxu0
    %v8246 = vadd.f32 %v8181, %v8245
    %8247 = vmatmul.f32.gmra.mxu0 %v7952
    %v8248 = vpop.f32.mrf.mxu0
    %v8249 = vadd.f32 %v8184, %v8248
    %8250 = vmatmul.f32.gmra.mxu0 %v7956
    %v8251 = vpop.f32.mrf.mxu0
    %v8252 = vadd.f32 %v8187, %v8251
    %8253 = vmatmul.f32.gmra.mxu0 %v7960
    %v8254 = vpop.f32.mrf.mxu0
    %v8255 = vadd.f32 %v8190, %v8254
    %8256 = vmatmul.f32.gmra.mxu0 %v7964
    %v8257 = vpop.f32.mrf.mxu0
    %v8258 = vadd.f32 %v8193, %v8257
    %8259 = vmatmul.f32.gmra.mxu0 %v7968
    %v8260 = vpop.f32.mrf.mxu0
    %v8261 = vadd.f32 %v8196, %v8260
    %8262 = vmatmul.f32.gmra.mxu0 %v7972
    %v8263 = vpop.f32.mrf.mxu0
    %v8264 = vadd.f32 %v8199, %v8263
    %8265 = vmatmul.f32.gmra.mxu0 %v7976
    %v8266 = vpop.f32.mrf.mxu0
    %v8267 = vadd.f32 %v8202, %v8266
    %8268 = vmatmul.f32.gmra.mxu0 %v7980
    %v8269 = vpop.f32.mrf.mxu0
    %v8270 = vadd.f32 %v8205, %v8269
    %8271 = vmatmul.f32.gmra.mxu0 %v7984
    %v8272 = vpop.f32.mrf.mxu0
    %v8273 = vadd.f32 %v8208, %v8272
    %8274 = vdwg.mxu0
    %v8275 = vmul.f32 %v8228, %v8033
    %v8276 = vmul.f32 %v8231, %v8034
    %v8277 = vmul.f32 %v8234, %v8035
    %v8278 = vmul.f32 %v8237, %v8036
    %v8279 = vmul.f32 %v8240, %v8037
    %v8280 = vmul.f32 %v8243, %v8038
    %v8281 = vmul.f32 %v8246, %v8039
    %v8282 = vmul.f32 %v8249, %v8040
    %v8283 = vmul.f32 %v8252, %v8041
    %v8284 = vmul.f32 %v8255, %v8042
    %v8285 = vmul.f32 %v8258, %v8043
    %v8286 = vmul.f32 %v8261, %v8044
    %v8287 = vmul.f32 %v8264, %v8045
    %v8288 = vmul.f32 %v8267, %v8046
    %v8289 = vmul.f32 %v8270, %v8047
    %v8290 = vmul.f32 %v8273, %v8048
    %8307 = vrot.lane.b32.xlu0 %v6731, 8
    %v8308 = vpop.permute.xlu0 %8307
    %8309 = vrot.lane.b32.xlu0 %v6732, 8
    %v8310 = vpop.permute.xlu0 %8309
    %8311 = vrot.lane.b32.xlu0 %v6733, 8
    %v8312 = vpop.permute.xlu0 %8311
    %8313 = vrot.lane.b32.xlu0 %v6734, 8
    %v8314 = vpop.permute.xlu0 %8313
    %8315 = vrot.lane.b32.xlu0 %v6735, 8
    %v8316 = vpop.permute.xlu0 %8315
    %8317 = vrot.lane.b32.xlu0 %v6736, 8
    %v8318 = vpop.permute.xlu0 %8317
    %8319 = vrot.lane.b32.xlu0 %v6737, 8
    %v8320 = vpop.permute.xlu0 %8319
    %8321 = vrot.lane.b32.xlu0 %v6738, 8
    %v8322 = vpop.permute.xlu0 %8321
    %8323 = vrot.lane.b32.xlu0 %v6739, 8
    %v8324 = vpop.permute.xlu0 %8323
    %8325 = vrot.lane.b32.xlu0 %v6740, 8
    %v8326 = vpop.permute.xlu0 %8325
    %8327 = vrot.lane.b32.xlu0 %v6741, 8
    %v8328 = vpop.permute.xlu0 %8327
    %8329 = vrot.lane.b32.xlu0 %v6742, 8
    %v8330 = vpop.permute.xlu0 %8329
    %8331 = vrot.lane.b32.xlu0 %v6743, 8
    %v8332 = vpop.permute.xlu0 %8331
    %8333 = vrot.lane.b32.xlu0 %v6744, 8
    %v8334 = vpop.permute.xlu0 %8333
    %8335 = vrot.lane.b32.xlu0 %v6745, 8
    %v8336 = vpop.permute.xlu0 %8335
    %8337 = vrot.lane.b32.xlu0 %v6746, 8
    %v8338 = vpop.permute.xlu0 %8337
    %8371 = vrot.lane.b32.xlu0 %v7503, 16
    %v8372 = vpop.permute.xlu0 %8371
    %8373 = vrot.lane.b32.xlu0 %v7504, 16
    %v8374 = vpop.permute.xlu0 %8373
    %8375 = vrot.lane.b32.xlu0 %v7505, 16
    %v8376 = vpop.permute.xlu0 %8375
    %8377 = vrot.lane.b32.xlu0 %v7506, 16
    %v8378 = vpop.permute.xlu0 %8377
    %8379 = vrot.lane.b32.xlu0 %v7507, 16
    %v8380 = vpop.permute.xlu0 %8379
    %8381 = vrot.lane.b32.xlu0 %v7508, 16
    %v8382 = vpop.permute.xlu0 %8381
    %8383 = vrot.lane.b32.xlu0 %v7509, 16
    %v8384 = vpop.permute.xlu0 %8383
    %8385 = vrot.lane.b32.xlu0 %v7510, 16
    %v8386 = vpop.permute.xlu0 %8385
    %8387 = vrot.lane.b32.xlu0 %v7511, 16
    %v8388 = vpop.permute.xlu0 %8387
    %8389 = vrot.lane.b32.xlu0 %v7512, 16
    %v8390 = vpop.permute.xlu0 %8389
    %8391 = vrot.lane.b32.xlu0 %v7513, 16
    %v8392 = vpop.permute.xlu0 %8391
    %8393 = vrot.lane.b32.xlu0 %v7514, 16
    %v8394 = vpop.permute.xlu0 %8393
    %8395 = vrot.lane.b32.xlu0 %v7515, 16
    %v8396 = vpop.permute.xlu0 %8395
    %8397 = vrot.lane.b32.xlu0 %v7516, 16
    %v8398 = vpop.permute.xlu0 %8397
    %8399 = vrot.lane.b32.xlu0 %v7517, 16
    %v8400 = vpop.permute.xlu0 %8399
    %8401 = vrot.lane.b32.xlu0 %v7518, 16
    %v8402 = vpop.permute.xlu0 %8401
    %8435 = vrot.lane.b32.xlu0 %v8275, 24
    %v8436 = vpop.permute.xlu0 %8435
    %8437 = vrot.lane.b32.xlu0 %v8276, 24
    %v8438 = vpop.permute.xlu0 %8437
    %8439 = vrot.lane.b32.xlu0 %v8277, 24
    %v8440 = vpop.permute.xlu0 %8439
    %8441 = vrot.lane.b32.xlu0 %v8278, 24
    %v8442 = vpop.permute.xlu0 %8441
    %8443 = vrot.lane.b32.xlu0 %v8279, 24
    %v8444 = vpop.permute.xlu0 %8443
    %8445 = vrot.lane.b32.xlu0 %v8280, 24
    %v8446 = vpop.permute.xlu0 %8445
    %8447 = vrot.lane.b32.xlu0 %v8281, 24
    %v8448 = vpop.permute.xlu0 %8447
    %8449 = vrot.lane.b32.xlu0 %v8282, 24
    %v8450 = vpop.permute.xlu0 %8449
    %8451 = vrot.lane.b32.xlu0 %v8283, 24
    %v8452 = vpop.permute.xlu0 %8451
    %8453 = vrot.lane.b32.xlu0 %v8284, 24
    %v8454 = vpop.permute.xlu0 %8453
    %8455 = vrot.lane.b32.xlu0 %v8285, 24
    %v8456 = vpop.permute.xlu0 %8455
    %8457 = vrot.lane.b32.xlu0 %v8286, 24
    %v8458 = vpop.permute.xlu0 %8457
    %8459 = vrot.lane.b32.xlu0 %v8287, 24
    %v8460 = vpop.permute.xlu0 %8459
    %8461 = vrot.lane.b32.xlu0 %v8288, 24
    %v8462 = vpop.permute.xlu0 %8461
    %8463 = vrot.lane.b32.xlu0 %v8289, 24
    %v8464 = vpop.permute.xlu0 %8463
    %8465 = vrot.lane.b32.xlu0 %v8290, 24
    %v8466 = vpop.permute.xlu0 %8465
    %v8483 = vsel %vm1790, %v5927, %v8308
    %v8484 = vsel %vm1790, %v5928, %v8310
    %v8485 = vsel %vm1790, %v5929, %v8312
    %v8486 = vsel %vm1790, %v5930, %v8314
    %v8487 = vsel %vm1790, %v5931, %v8316
    %v8488 = vsel %vm1790, %v5932, %v8318
    %v8489 = vsel %vm1790, %v5933, %v8320
    %v8490 = vsel %vm1790, %v5934, %v8322
    %v8491 = vsel %vm1790, %v5935, %v8324
    %v8492 = vsel %vm1790, %v5936, %v8326
    %v8493 = vsel %vm1790, %v5937, %v8328
    %v8494 = vsel %vm1790, %v5938, %v8330
    %v8495 = vsel %vm1790, %v5939, %v8332
    %v8496 = vsel %vm1790, %v5940, %v8334
    %v8497 = vsel %vm1790, %v5941, %v8336
    %v8498 = vsel %vm1790, %v5942, %v8338
    %v8499 = vsel %vm4959, %v8483, %v8372
    %v8500 = vsel %vm4959, %v8484, %v8374
    %v8501 = vsel %vm4959, %v8485, %v8376
    %v8502 = vsel %vm4959, %v8486, %v8378
    %v8503 = vsel %vm4959, %v8487, %v8380
    %v8504 = vsel %vm4959, %v8488, %v8382
    %v8505 = vsel %vm4959, %v8489, %v8384
    %v8506 = vsel %vm4959, %v8490, %v8386
    %v8507 = vsel %vm4959, %v8491, %v8388
    %v8508 = vsel %vm4959, %v8492, %v8390
    %v8509 = vsel %vm4959, %v8493, %v8392
    %v8510 = vsel %vm4959, %v8494, %v8394
    %v8511 = vsel %vm4959, %v8495, %v8396
    %v8512 = vsel %vm4959, %v8496, %v8398
    %v8513 = vsel %vm4959, %v8497, %v8400
    %v8514 = vsel %vm4959, %v8498, %v8402
    %v8515 = vsel %vm4976, %v8499, %v8436
    %v8516 = vsel %vm4976, %v8500, %v8438
    %v8517 = vsel %vm4976, %v8501, %v8440
    %v8518 = vsel %vm4976, %v8502, %v8442
    %v8519 = vsel %vm4976, %v8503, %v8444
    %v8520 = vsel %vm4976, %v8504, %v8446
    %v8521 = vsel %vm4976, %v8505, %v8448
    %v8522 = vsel %vm4976, %v8506, %v8450
    %v8523 = vsel %vm4976, %v8507, %v8452
    %v8524 = vsel %vm4976, %v8508, %v8454
    %v8525 = vsel %vm4976, %v8509, %v8456
    %v8526 = vsel %vm4976, %v8510, %v8458
    %v8527 = vsel %vm4976, %v8511, %v8460
    %v8528 = vsel %vm4976, %v8512, %v8462
    %v8529 = vsel %vm4976, %v8513, %v8464
    %v8530 = vsel %vm4976, %v8514, %v8466
    %v8531 = vld [vmem:[#allocation2] sm:$0xff]
    %v8532 = vld [vmem:[#allocation2 + $0x8] sm:$0xff]
    %v8533 = vld [vmem:[#allocation2 + $0x10] sm:$0xff]
    %v8534 = vld [vmem:[#allocation2 + $0x18] sm:$0xff]
    %v8536 = vsel %vm393, %v4977, 0
    %v8539 = vsel %vm393, %v4978, 0
    %v8542 = vsel %vm393, %v4979, 0
    %v8545 = vsel %vm393, %v4980, 0
    %v8548 = vsel %vm393, %v4981, 0
    %v8551 = vsel %vm393, %v4982, 0
    %v8554 = vsel %vm393, %v4983, 0
    %v8557 = vsel %vm393, %v4984, 0
    %v8560 = vsel %vm393, %v4985, 0
    %v8563 = vsel %vm393, %v4986, 0
    %v8566 = vsel %vm393, %v4987, 0
    %v8569 = vsel %vm393, %v4988, 0
    %v8572 = vsel %vm393, %v4989, 0
    %v8575 = vsel %vm393, %v4990, 0
    %v8578 = vsel %vm393, %v4991, 0
    %v8581 = vsel %vm393, %v4992, 0
    %v8584 = vsel %vm393, %v8515, 0
    %v8587 = vsel %vm393, %v8516, 0
    %v8590 = vsel %vm393, %v8517, 0
    %v8593 = vsel %vm393, %v8518, 0
    %v8596 = vsel %vm393, %v8519, 0
    %v8599 = vsel %vm393, %v8520, 0
    %v8602 = vsel %vm393, %v8521, 0
    %v8605 = vsel %vm393, %v8522, 0
    %v8608 = vsel %vm393, %v8523, 0
    %v8611 = vsel %vm393, %v8524, 0
    %v8614 = vsel %vm393, %v8525, 0
    %v8617 = vsel %vm393, %v8526, 0
    %v8620 = vsel %vm393, %v8527, 0
    %v8623 = vsel %vm393, %v8528, 0
    %v8626 = vsel %vm393, %v8529, 0
    %v8629 = vsel %vm393, %v8530, 0
    %8631 = vmatpush.msra.mxu0 0.0
    %8632 = vmatpush.msra.mxu0 0.0
    %8633 = vmatpush.msra.mxu0 0.0
    %8634 = vmatpush.msra.mxu0 0.0
    %8635 = vmatpush.msra.mxu0 0.0
    %8636 = vmatpush.msra.mxu0 0.0
    %8637 = vmatpush.msra.mxu0 0.0
    %8638 = vmatpush.msra.mxu0 0.0
    %8639 = vmatpush.msra.mxu0 0.0
    %8640 = vmatpush.msra.mxu0 0.0
    %8641 = vmatpush.msra.mxu0 0.0
    %8642 = vmatpush.msra.mxu0 0.0
    %8643 = vmatpush.msra.mxu0 %v8534
    %8644 = vmatpush.msra.mxu0 %v8533
    %8645 = vmatpush.msra.mxu0 %v8532
    %8646 = vmatpush.msra.mxu0 %v8531
    %8647 = vmatmul.f32.gmra.mxu0 %v8536
    %v8648 = vpop.f32.mrf.mxu0
    %v8649 = vadd.f32 0.0, %v8648
    %8650 = vmatmul.f32.gmra.mxu0 %v8539
    %v8651 = vpop.f32.mrf.mxu0
    %v8652 = vadd.f32 0.0, %v8651
    %8653 = vmatmul.f32.gmra.mxu0 %v8542
    %v8654 = vpop.f32.mrf.mxu0
    %v8655 = vadd.f32 0.0, %v8654
    %8656 = vmatmul.f32.gmra.mxu0 %v8545
    %v8657 = vpop.f32.mrf.mxu0
    %v8658 = vadd.f32 0.0, %v8657
    %8659 = vmatmul.f32.gmra.mxu0 %v8548
    %v8660 = vpop.f32.mrf.mxu0
    %v8661 = vadd.f32 0.0, %v8660
    %8662 = vmatmul.f32.gmra.mxu0 %v8551
    %v8663 = vpop.f32.mrf.mxu0
    %v8664 = vadd.f32 0.0, %v8663
    %8665 = vmatmul.f32.gmra.mxu0 %v8554
    %v8666 = vpop.f32.mrf.mxu0
    %v8667 = vadd.f32 0.0, %v8666
    %8668 = vmatmul.f32.gmra.mxu0 %v8557
    %v8669 = vpop.f32.mrf.mxu0
    %v8670 = vadd.f32 0.0, %v8669
    %8671 = vmatmul.f32.gmra.mxu0 %v8560
    %v8672 = vpop.f32.mrf.mxu0
    %v8673 = vadd.f32 0.0, %v8672
    %8674 = vmatmul.f32.gmra.mxu0 %v8563
    %v8675 = vpop.f32.mrf.mxu0
    %v8676 = vadd.f32 0.0, %v8675
    %8677 = vmatmul.f32.gmra.mxu0 %v8566
    %v8678 = vpop.f32.mrf.mxu0
    %v8679 = vadd.f32 0.0, %v8678
    %8680 = vmatmul.f32.gmra.mxu0 %v8569
    %v8681 = vpop.f32.mrf.mxu0
    %v8682 = vadd.f32 0.0, %v8681
    %8683 = vmatmul.f32.gmra.mxu0 %v8572
    %v8684 = vpop.f32.mrf.mxu0
    %v8685 = vadd.f32 0.0, %v8684
    %8686 = vmatmul.f32.gmra.mxu0 %v8575
    %v8687 = vpop.f32.mrf.mxu0
    %v8688 = vadd.f32 0.0, %v8687
    %8689 = vmatmul.f32.gmra.mxu0 %v8578
    %v8690 = vpop.f32.mrf.mxu0
    %v8691 = vadd.f32 0.0, %v8690
    %8692 = vmatmul.f32.gmra.mxu0 %v8581
    %v8693 = vpop.f32.mrf.mxu0
    %v8694 = vadd.f32 0.0, %v8693
    %8695 = vmatmul.f32.gmra.mxu0 %v8584
    %v8696 = vpop.f32.mrf.mxu0
    %v8697 = vadd.f32 0.0, %v8696
    %8698 = vmatmul.f32.gmra.mxu0 %v8587
    %v8699 = vpop.f32.mrf.mxu0
    %v8700 = vadd.f32 0.0, %v8699
    %8701 = vmatmul.f32.gmra.mxu0 %v8590
    %v8702 = vpop.f32.mrf.mxu0
    %v8703 = vadd.f32 0.0, %v8702
    %8704 = vmatmul.f32.gmra.mxu0 %v8593
    %v8705 = vpop.f32.mrf.mxu0
    %v8706 = vadd.f32 0.0, %v8705
    %8707 = vmatmul.f32.gmra.mxu0 %v8596
    %v8708 = vpop.f32.mrf.mxu0
    %v8709 = vadd.f32 0.0, %v8708
    %8710 = vmatmul.f32.gmra.mxu0 %v8599
    %v8711 = vpop.f32.mrf.mxu0
    %v8712 = vadd.f32 0.0, %v8711
    %8713 = vmatmul.f32.gmra.mxu0 %v8602
    %v8714 = vpop.f32.mrf.mxu0
    %v8715 = vadd.f32 0.0, %v8714
    %8716 = vmatmul.f32.gmra.mxu0 %v8605
    %v8717 = vpop.f32.mrf.mxu0
    %v8718 = vadd.f32 0.0, %v8717
    %8719 = vmatmul.f32.gmra.mxu0 %v8608
    %v8720 = vpop.f32.mrf.mxu0
    %v8721 = vadd.f32 0.0, %v8720
    %8722 = vmatmul.f32.gmra.mxu0 %v8611
    %v8723 = vpop.f32.mrf.mxu0
    %v8724 = vadd.f32 0.0, %v8723
    %8725 = vmatmul.f32.gmra.mxu0 %v8614
    %v8726 = vpop.f32.mrf.mxu0
    %v8727 = vadd.f32 0.0, %v8726
    %8728 = vmatmul.f32.gmra.mxu0 %v8617
    %v8729 = vpop.f32.mrf.mxu0
    %v8730 = vadd.f32 0.0, %v8729
    %8731 = vmatmul.f32.gmra.mxu0 %v8620
    %v8732 = vpop.f32.mrf.mxu0
    %v8733 = vadd.f32 0.0, %v8732
    %8734 = vmatmul.f32.gmra.mxu0 %v8623
    %v8735 = vpop.f32.mrf.mxu0
    %v8736 = vadd.f32 0.0, %v8735
    %8737 = vmatmul.f32.gmra.mxu0 %v8626
    %v8738 = vpop.f32.mrf.mxu0
    %v8739 = vadd.f32 0.0, %v8738
    %8740 = vmatmul.f32.gmra.mxu0 %v8629
    %v8741 = vpop.f32.mrf.mxu0
    %v8742 = vadd.f32 0.0, %v8741
    %8743 = vdwg.mxu0
    %v8744 = vadd.f32 %v246, %v8649
    %v8745 = vadd.f32 %v247, %v8652
    %v8746 = vadd.f32 %v248, %v8655
    %v8747 = vadd.f32 %v249, %v8658
    %v8748 = vadd.f32 %v250, %v8661
    %v8749 = vadd.f32 %v251, %v8664
    %v8750 = vadd.f32 %v252, %v8667
    %v8751 = vadd.f32 %v253, %v8670
    %v8752 = vadd.f32 %v254, %v8673
    %v8753 = vadd.f32 %v255, %v8676
    %v8754 = vadd.f32 %v256, %v8679
    %v8755 = vadd.f32 %v257, %v8682
    %v8756 = vadd.f32 %v258, %v8685
    %v8757 = vadd.f32 %v259, %v8688
    %v8758 = vadd.f32 %v260, %v8691
    %v8759 = vadd.f32 %v261, %v8694
    %v8760 = vadd.f32 %v375, %v8697
    %v8761 = vadd.f32 %v376, %v8700
    %v8762 = vadd.f32 %v377, %v8703
    %v8763 = vadd.f32 %v378, %v8706
    %v8764 = vadd.f32 %v379, %v8709
    %v8765 = vadd.f32 %v380, %v8712
    %v8766 = vadd.f32 %v381, %v8715
    %v8767 = vadd.f32 %v382, %v8718
    %v8768 = vadd.f32 %v383, %v8721
    %v8769 = vadd.f32 %v384, %v8724
    %v8770 = vadd.f32 %v385, %v8727
    %v8771 = vadd.f32 %v386, %v8730
    %v8772 = vadd.f32 %v387, %v8733
    %v8773 = vadd.f32 %v388, %v8736
    %v8774 = vadd.f32 %v389, %v8739
    %v8775 = vadd.f32 %v390, %v8742
    %v8776 = vld [vmem:[%s10] sm:$0x1]
    %v8778 = vperm.slane %v8776, 0
    %v8780 = vadd.f32 %v8744, %v8778
    %v8781 = vadd.f32 %v8745, %v8778
    %v8782 = vadd.f32 %v8746, %v8778
    %v8783 = vadd.f32 %v8747, %v8778
    %v8784 = vadd.f32 %v8748, %v8778
    %v8785 = vadd.f32 %v8749, %v8778
    %v8786 = vadd.f32 %v8750, %v8778
    %v8787 = vadd.f32 %v8751, %v8778
    %v8788 = vadd.f32 %v8752, %v8778
    %v8789 = vadd.f32 %v8753, %v8778
    %v8790 = vadd.f32 %v8754, %v8778
    %v8791 = vadd.f32 %v8755, %v8778
    %v8792 = vadd.f32 %v8756, %v8778
    %v8793 = vadd.f32 %v8757, %v8778
    %v8794 = vadd.f32 %v8758, %v8778
    %v8795 = vadd.f32 %v8759, %v8778
    %v8796 = vadd.f32 %v8760, %v8778
    %v8797 = vadd.f32 %v8761, %v8778
    %v8798 = vadd.f32 %v8762, %v8778
    %v8799 = vadd.f32 %v8763, %v8778
    %v8800 = vadd.f32 %v8764, %v8778
    %v8801 = vadd.f32 %v8765, %v8778
    %v8802 = vadd.f32 %v8766, %v8778
    %v8803 = vadd.f32 %v8767, %v8778
    %v8804 = vadd.f32 %v8768, %v8778
    %v8805 = vadd.f32 %v8769, %v8778
    %v8806 = vadd.f32 %v8770, %v8778
    %v8807 = vadd.f32 %v8771, %v8778
    %v8808 = vadd.f32 %v8772, %v8778
    %v8809 = vadd.f32 %v8773, %v8778
    %v8810 = vadd.f32 %v8774, %v8778
    %v8811 = vadd.f32 %v8775, %v8778
    %v8812 = vld [vmem:[%s11] sm:$0x1]
    %v8813 = vld [vmem:[%s12] sm:$0x1]
    %v8814 = vsel %vm393, %v8780, 0.0
    %8815 = vadd.xlane.f32.xlu0 %v8814
    %v8816 = vpop.xlane.xlu0 %8815
    %v8817 = vsel %vm393, %v8781, 0.0
    %8818 = vadd.xlane.f32.xlu0 %v8817
    %v8819 = vpop.xlane.xlu0 %8818
    %v8820 = vsel %vm393, %v8782, 0.0
    %8821 = vadd.xlane.f32.xlu0 %v8820
    %v8822 = vpop.xlane.xlu0 %8821
    %v8823 = vsel %vm393, %v8783, 0.0
    %8824 = vadd.xlane.f32.xlu0 %v8823
    %v8825 = vpop.xlane.xlu0 %8824
    %v8826 = vsel %vm393, %v8784, 0.0
    %8827 = vadd.xlane.f32.xlu0 %v8826
    %v8828 = vpop.xlane.xlu0 %8827
    %v8829 = vsel %vm393, %v8785, 0.0
    %8830 = vadd.xlane.f32.xlu0 %v8829
    %v8831 = vpop.xlane.xlu0 %8830
    %v8832 = vsel %vm393, %v8786, 0.0
    %8833 = vadd.xlane.f32.xlu0 %v8832
    %v8834 = vpop.xlane.xlu0 %8833
    %v8835 = vsel %vm393, %v8787, 0.0
    %8836 = vadd.xlane.f32.xlu0 %v8835
    %v8837 = vpop.xlane.xlu0 %8836
    %v8838 = vsel %vm393, %v8788, 0.0
    %8839 = vadd.xlane.f32.xlu0 %v8838
    %v8840 = vpop.xlane.xlu0 %8839
    %v8841 = vsel %vm393, %v8789, 0.0
    %8842 = vadd.xlane.f32.xlu0 %v8841
    %v8843 = vpop.xlane.xlu0 %8842
    %v8844 = vsel %vm393, %v8790, 0.0
    %8845 = vadd.xlane.f32.xlu0 %v8844
    %v8846 = vpop.xlane.xlu0 %8845
    %v8847 = vsel %vm393, %v8791, 0.0
    %8848 = vadd.xlane.f32.xlu0 %v8847
    %v8849 = vpop.xlane.xlu0 %8848
    %v8850 = vsel %vm393, %v8792, 0.0
    %8851 = vadd.xlane.f32.xlu0 %v8850
    %v8852 = vpop.xlane.xlu0 %8851
    %v8853 = vsel %vm393, %v8793, 0.0
    %8854 = vadd.xlane.f32.xlu0 %v8853
    %v8855 = vpop.xlane.xlu0 %8854
    %v8856 = vsel %vm393, %v8794, 0.0
    %8857 = vadd.xlane.f32.xlu0 %v8856
    %v8858 = vpop.xlane.xlu0 %8857
    %v8859 = vsel %vm393, %v8795, 0.0
    %8860 = vadd.xlane.f32.xlu0 %v8859
    %v8861 = vpop.xlane.xlu0 %8860
    %v8862 = vsel %vm393, %v8796, 0.0
    %8863 = vadd.xlane.f32.xlu0 %v8862
    %v8864 = vpop.xlane.xlu0 %8863
    %v8865 = vsel %vm393, %v8797, 0.0
    %8866 = vadd.xlane.f32.xlu0 %v8865
    %v8867 = vpop.xlane.xlu0 %8866
    %v8868 = vsel %vm393, %v8798, 0.0
    %8869 = vadd.xlane.f32.xlu0 %v8868
    %v8870 = vpop.xlane.xlu0 %8869
    %v8871 = vsel %vm393, %v8799, 0.0
    %8872 = vadd.xlane.f32.xlu0 %v8871
    %v8873 = vpop.xlane.xlu0 %8872
    %v8874 = vsel %vm393, %v8800, 0.0
    %8875 = vadd.xlane.f32.xlu0 %v8874
    %v8876 = vpop.xlane.xlu0 %8875
    %v8877 = vsel %vm393, %v8801, 0.0
    %8878 = vadd.xlane.f32.xlu0 %v8877
    %v8879 = vpop.xlane.xlu0 %8878
    %v8880 = vsel %vm393, %v8802, 0.0
    %8881 = vadd.xlane.f32.xlu0 %v8880
    %v8882 = vpop.xlane.xlu0 %8881
    %v8883 = vsel %vm393, %v8803, 0.0
    %8884 = vadd.xlane.f32.xlu0 %v8883
    %v8885 = vpop.xlane.xlu0 %8884
    %v8886 = vsel %vm393, %v8804, 0.0
    %8887 = vadd.xlane.f32.xlu0 %v8886
    %v8888 = vpop.xlane.xlu0 %8887
    %v8889 = vsel %vm393, %v8805, 0.0
    %8890 = vadd.xlane.f32.xlu0 %v8889
    %v8891 = vpop.xlane.xlu0 %8890
    %v8892 = vsel %vm393, %v8806, 0.0
    %8893 = vadd.xlane.f32.xlu0 %v8892
    %v8894 = vpop.xlane.xlu0 %8893
    %v8895 = vsel %vm393, %v8807, 0.0
    %8896 = vadd.xlane.f32.xlu0 %v8895
    %v8897 = vpop.xlane.xlu0 %8896
    %v8898 = vsel %vm393, %v8808, 0.0
    %8899 = vadd.xlane.f32.xlu0 %v8898
    %v8900 = vpop.xlane.xlu0 %8899
    %v8901 = vsel %vm393, %v8809, 0.0
    %8902 = vadd.xlane.f32.xlu0 %v8901
    %v8903 = vpop.xlane.xlu0 %8902
    %v8904 = vsel %vm393, %v8810, 0.0
    %8905 = vadd.xlane.f32.xlu0 %v8904
    %v8906 = vpop.xlane.xlu0 %8905
    %v8907 = vsel %vm393, %v8811, 0.0
    %8908 = vadd.xlane.f32.xlu0 %v8907
    %v8909 = vpop.xlane.xlu0 %8908
    %v8910 = vmul.f32 %v8816, %v496
    %v8911 = vmul.f32 %v8819, %v496
    %v8912 = vmul.f32 %v8822, %v496
    %v8913 = vmul.f32 %v8825, %v496
    %v8914 = vmul.f32 %v8828, %v496
    %v8915 = vmul.f32 %v8831, %v496
    %v8916 = vmul.f32 %v8834, %v496
    %v8917 = vmul.f32 %v8837, %v496
    %v8918 = vmul.f32 %v8840, %v496
    %v8919 = vmul.f32 %v8843, %v496
    %v8920 = vmul.f32 %v8846, %v496
    %v8921 = vmul.f32 %v8849, %v496
    %v8922 = vmul.f32 %v8852, %v496
    %v8923 = vmul.f32 %v8855, %v496
    %v8924 = vmul.f32 %v8858, %v496
    %v8925 = vmul.f32 %v8861, %v496
    %v8926 = vmul.f32 %v8864, %v496
    %v8927 = vmul.f32 %v8867, %v496
    %v8928 = vmul.f32 %v8870, %v496
    %v8929 = vmul.f32 %v8873, %v496
    %v8930 = vmul.f32 %v8876, %v496
    %v8931 = vmul.f32 %v8879, %v496
    %v8932 = vmul.f32 %v8882, %v496
    %v8933 = vmul.f32 %v8885, %v496
    %v8934 = vmul.f32 %v8888, %v496
    %v8935 = vmul.f32 %v8891, %v496
    %v8936 = vmul.f32 %v8894, %v496
    %v8937 = vmul.f32 %v8897, %v496
    %v8938 = vmul.f32 %v8900, %v496
    %v8939 = vmul.f32 %v8903, %v496
    %v8940 = vmul.f32 %v8906, %v496
    %v8941 = vmul.f32 %v8909, %v496
    %v8942 = vsub.f32 %v8780, %v8910
    %v8943 = vsub.f32 %v8781, %v8911
    %v8944 = vsub.f32 %v8782, %v8912
    %v8945 = vsub.f32 %v8783, %v8913
    %v8946 = vsub.f32 %v8784, %v8914
    %v8947 = vsub.f32 %v8785, %v8915
    %v8948 = vsub.f32 %v8786, %v8916
    %v8949 = vsub.f32 %v8787, %v8917
    %v8950 = vsub.f32 %v8788, %v8918
    %v8951 = vsub.f32 %v8789, %v8919
    %v8952 = vsub.f32 %v8790, %v8920
    %v8953 = vsub.f32 %v8791, %v8921
    %v8954 = vsub.f32 %v8792, %v8922
    %v8955 = vsub.f32 %v8793, %v8923
    %v8956 = vsub.f32 %v8794, %v8924
    %v8957 = vsub.f32 %v8795, %v8925
    %v8958 = vsub.f32 %v8796, %v8926
    %v8959 = vsub.f32 %v8797, %v8927
    %v8960 = vsub.f32 %v8798, %v8928
    %v8961 = vsub.f32 %v8799, %v8929
    %v8962 = vsub.f32 %v8800, %v8930
    %v8963 = vsub.f32 %v8801, %v8931
    %v8964 = vsub.f32 %v8802, %v8932
    %v8965 = vsub.f32 %v8803, %v8933
    %v8966 = vsub.f32 %v8804, %v8934
    %v8967 = vsub.f32 %v8805, %v8935
    %v8968 = vsub.f32 %v8806, %v8936
    %v8969 = vsub.f32 %v8807, %v8937
    %v8970 = vsub.f32 %v8808, %v8938
    %v8971 = vsub.f32 %v8809, %v8939
    %v8972 = vsub.f32 %v8810, %v8940
    %v8973 = vsub.f32 %v8811, %v8941
    %v8974 = vmul.f32 %v8942, %v8942
    %v8975 = vmul.f32 %v8943, %v8943
    %v8976 = vmul.f32 %v8944, %v8944
    %v8977 = vmul.f32 %v8945, %v8945
    %v8978 = vmul.f32 %v8946, %v8946
    %v8979 = vmul.f32 %v8947, %v8947
    %v8980 = vmul.f32 %v8948, %v8948
    %v8981 = vmul.f32 %v8949, %v8949
    %v8982 = vmul.f32 %v8950, %v8950
    %v8983 = vmul.f32 %v8951, %v8951
    %v8984 = vmul.f32 %v8952, %v8952
    %v8985 = vmul.f32 %v8953, %v8953
    %v8986 = vmul.f32 %v8954, %v8954
    %v8987 = vmul.f32 %v8955, %v8955
    %v8988 = vmul.f32 %v8956, %v8956
    %v8989 = vmul.f32 %v8957, %v8957
    %v8990 = vmul.f32 %v8958, %v8958
    %v8991 = vmul.f32 %v8959, %v8959
    %v8992 = vmul.f32 %v8960, %v8960
    %v8993 = vmul.f32 %v8961, %v8961
    %v8994 = vmul.f32 %v8962, %v8962
    %v8995 = vmul.f32 %v8963, %v8963
    %v8996 = vmul.f32 %v8964, %v8964
    %v8997 = vmul.f32 %v8965, %v8965
    %v8998 = vmul.f32 %v8966, %v8966
    %v8999 = vmul.f32 %v8967, %v8967
    %v9000 = vmul.f32 %v8968, %v8968
    %v9001 = vmul.f32 %v8969, %v8969
    %v9002 = vmul.f32 %v8970, %v8970
    %v9003 = vmul.f32 %v8971, %v8971
    %v9004 = vmul.f32 %v8972, %v8972
    %v9005 = vmul.f32 %v8973, %v8973
    %v9006 = vsel %vm393, %v8974, 0.0
    %9007 = vadd.xlane.f32.xlu0 %v9006
    %v9008 = vpop.xlane.xlu0 %9007
    %v9009 = vsel %vm393, %v8975, 0.0
    %9010 = vadd.xlane.f32.xlu0 %v9009
    %v9011 = vpop.xlane.xlu0 %9010
    %v9012 = vsel %vm393, %v8976, 0.0
    %9013 = vadd.xlane.f32.xlu0 %v9012
    %v9014 = vpop.xlane.xlu0 %9013
    %v9015 = vsel %vm393, %v8977, 0.0
    %9016 = vadd.xlane.f32.xlu0 %v9015
    %v9017 = vpop.xlane.xlu0 %9016
    %v9018 = vsel %vm393, %v8978, 0.0
    %9019 = vadd.xlane.f32.xlu0 %v9018
    %v9020 = vpop.xlane.xlu0 %9019
    %v9021 = vsel %vm393, %v8979, 0.0
    %9022 = vadd.xlane.f32.xlu0 %v9021
    %v9023 = vpop.xlane.xlu0 %9022
    %v9024 = vsel %vm393, %v8980, 0.0
    %9025 = vadd.xlane.f32.xlu0 %v9024
    %v9026 = vpop.xlane.xlu0 %9025
    %v9027 = vsel %vm393, %v8981, 0.0
    %9028 = vadd.xlane.f32.xlu0 %v9027
    %v9029 = vpop.xlane.xlu0 %9028
    %v9030 = vsel %vm393, %v8982, 0.0
    %9031 = vadd.xlane.f32.xlu0 %v9030
    %v9032 = vpop.xlane.xlu0 %9031
    %v9033 = vsel %vm393, %v8983, 0.0
    %9034 = vadd.xlane.f32.xlu0 %v9033
    %v9035 = vpop.xlane.xlu0 %9034
    %v9036 = vsel %vm393, %v8984, 0.0
    %9037 = vadd.xlane.f32.xlu0 %v9036
    %v9038 = vpop.xlane.xlu0 %9037
    %v9039 = vsel %vm393, %v8985, 0.0
    %9040 = vadd.xlane.f32.xlu0 %v9039
    %v9041 = vpop.xlane.xlu0 %9040
    %v9042 = vsel %vm393, %v8986, 0.0
    %9043 = vadd.xlane.f32.xlu0 %v9042
    %v9044 = vpop.xlane.xlu0 %9043
    %v9045 = vsel %vm393, %v8987, 0.0
    %9046 = vadd.xlane.f32.xlu0 %v9045
    %v9047 = vpop.xlane.xlu0 %9046
    %v9048 = vsel %vm393, %v8988, 0.0
    %9049 = vadd.xlane.f32.xlu0 %v9048
    %v9050 = vpop.xlane.xlu0 %9049
    %v9051 = vsel %vm393, %v8989, 0.0
    %9052 = vadd.xlane.f32.xlu0 %v9051
    %v9053 = vpop.xlane.xlu0 %9052
    %v9054 = vsel %vm393, %v8990, 0.0
    %9055 = vadd.xlane.f32.xlu0 %v9054
    %v9056 = vpop.xlane.xlu0 %9055
    %v9057 = vsel %vm393, %v8991, 0.0
    %9058 = vadd.xlane.f32.xlu0 %v9057
    %v9059 = vpop.xlane.xlu0 %9058
    %v9060 = vsel %vm393, %v8992, 0.0
    %9061 = vadd.xlane.f32.xlu0 %v9060
    %v9062 = vpop.xlane.xlu0 %9061
    %v9063 = vsel %vm393, %v8993, 0.0
    %9064 = vadd.xlane.f32.xlu0 %v9063
    %v9065 = vpop.xlane.xlu0 %9064
    %v9066 = vsel %vm393, %v8994, 0.0
    %9067 = vadd.xlane.f32.xlu0 %v9066
    %v9068 = vpop.xlane.xlu0 %9067
    %v9069 = vsel %vm393, %v8995, 0.0
    %9070 = vadd.xlane.f32.xlu0 %v9069
    %v9071 = vpop.xlane.xlu0 %9070
    %v9072 = vsel %vm393, %v8996, 0.0
    %9073 = vadd.xlane.f32.xlu0 %v9072
    %v9074 = vpop.xlane.xlu0 %9073
    %v9075 = vsel %vm393, %v8997, 0.0
    %9076 = vadd.xlane.f32.xlu0 %v9075
    %v9077 = vpop.xlane.xlu0 %9076
    %v9078 = vsel %vm393, %v8998, 0.0
    %9079 = vadd.xlane.f32.xlu0 %v9078
    %v9080 = vpop.xlane.xlu0 %9079
    %v9081 = vsel %vm393, %v8999, 0.0
    %9082 = vadd.xlane.f32.xlu0 %v9081
    %v9083 = vpop.xlane.xlu0 %9082
    %v9084 = vsel %vm393, %v9000, 0.0
    %9085 = vadd.xlane.f32.xlu0 %v9084
    %v9086 = vpop.xlane.xlu0 %9085
    %v9087 = vsel %vm393, %v9001, 0.0
    %9088 = vadd.xlane.f32.xlu0 %v9087
    %v9089 = vpop.xlane.xlu0 %9088
    %v9090 = vsel %vm393, %v9002, 0.0
    %9091 = vadd.xlane.f32.xlu0 %v9090
    %v9092 = vpop.xlane.xlu0 %9091
    %v9093 = vsel %vm393, %v9003, 0.0
    %9094 = vadd.xlane.f32.xlu0 %v9093
    %v9095 = vpop.xlane.xlu0 %9094
    %v9096 = vsel %vm393, %v9004, 0.0
    %9097 = vadd.xlane.f32.xlu0 %v9096
    %v9098 = vpop.xlane.xlu0 %9097
    %v9099 = vsel %vm393, %v9005, 0.0
    %9100 = vadd.xlane.f32.xlu0 %v9099
    %v9101 = vpop.xlane.xlu0 %9100
    %v9102 = vmul.f32 %v9008, %v496
    %v9103 = vmul.f32 %v9011, %v496
    %v9104 = vmul.f32 %v9014, %v496
    %v9105 = vmul.f32 %v9017, %v496
    %v9106 = vmul.f32 %v9020, %v496
    %v9107 = vmul.f32 %v9023, %v496
    %v9108 = vmul.f32 %v9026, %v496
    %v9109 = vmul.f32 %v9029, %v496
    %v9110 = vmul.f32 %v9032, %v496
    %v9111 = vmul.f32 %v9035, %v496
    %v9112 = vmul.f32 %v9038, %v496
    %v9113 = vmul.f32 %v9041, %v496
    %v9114 = vmul.f32 %v9044, %v496
    %v9115 = vmul.f32 %v9047, %v496
    %v9116 = vmul.f32 %v9050, %v496
    %v9117 = vmul.f32 %v9053, %v496
    %v9118 = vmul.f32 %v9056, %v496
    %v9119 = vmul.f32 %v9059, %v496
    %v9120 = vmul.f32 %v9062, %v496
    %v9121 = vmul.f32 %v9065, %v496
    %v9122 = vmul.f32 %v9068, %v496
    %v9123 = vmul.f32 %v9071, %v496
    %v9124 = vmul.f32 %v9074, %v496
    %v9125 = vmul.f32 %v9077, %v496
    %v9126 = vmul.f32 %v9080, %v496
    %v9127 = vmul.f32 %v9083, %v496
    %v9128 = vmul.f32 %v9086, %v496
    %v9129 = vmul.f32 %v9089, %v496
    %v9130 = vmul.f32 %v9092, %v496
    %v9131 = vmul.f32 %v9095, %v496
    %v9132 = vmul.f32 %v9098, %v496
    %v9133 = vmul.f32 %v9101, %v496
    %v9134 = vadd.f32 %v9102, 1e-05
    %v9135 = vadd.f32 %v9103, 1e-05
    %v9136 = vadd.f32 %v9104, 1e-05
    %v9137 = vadd.f32 %v9105, 1e-05
    %v9138 = vadd.f32 %v9106, 1e-05
    %v9139 = vadd.f32 %v9107, 1e-05
    %v9140 = vadd.f32 %v9108, 1e-05
    %v9141 = vadd.f32 %v9109, 1e-05
    %v9142 = vadd.f32 %v9110, 1e-05
    %v9143 = vadd.f32 %v9111, 1e-05
    %v9144 = vadd.f32 %v9112, 1e-05
    %v9145 = vadd.f32 %v9113, 1e-05
    %v9146 = vadd.f32 %v9114, 1e-05
    %v9147 = vadd.f32 %v9115, 1e-05
    %v9148 = vadd.f32 %v9116, 1e-05
    %v9149 = vadd.f32 %v9117, 1e-05
    %v9150 = vadd.f32 %v9118, 1e-05
    %v9151 = vadd.f32 %v9119, 1e-05
    %v9152 = vadd.f32 %v9120, 1e-05
    %v9153 = vadd.f32 %v9121, 1e-05
    %v9154 = vadd.f32 %v9122, 1e-05
    %v9155 = vadd.f32 %v9123, 1e-05
    %v9156 = vadd.f32 %v9124, 1e-05
    %v9157 = vadd.f32 %v9125, 1e-05
    %v9158 = vadd.f32 %v9126, 1e-05
    %v9159 = vadd.f32 %v9127, 1e-05
    %v9160 = vadd.f32 %v9128, 1e-05
    %v9161 = vadd.f32 %v9129, 1e-05
    %v9162 = vadd.f32 %v9130, 1e-05
    %v9163 = vadd.f32 %v9131, 1e-05
    %v9164 = vadd.f32 %v9132, 1e-05
    %v9165 = vadd.f32 %v9133, 1e-05
    %v9166 = vrsqrt.pop %v9134
    %v9167 = vmul.f32 %v9166, %v9134
    %v9168 = vmul.f32 %v9167, %v9166
    %v9169 = vmul.f32 0.5, %v9168
    %v9170 = vsub.f32 1.5, %v9169
    %v9171 = vmul.f32 %v9166, %v9170
    %vm9172 = vweird.f32 %v9134
    %vm9173 = vweird.f32 %v9166
    %vm9174 = vmor %vm9172, %vm9173
    %v9175 = vsel %vm9174, %v9166, %v9171
    %v9176 = vrsqrt.pop %v9135
    %v9177 = vmul.f32 %v9176, %v9135
    %v9178 = vmul.f32 %v9177, %v9176
    %v9179 = vmul.f32 0.5, %v9178
    %v9180 = vsub.f32 1.5, %v9179
    %v9181 = vmul.f32 %v9176, %v9180
    %vm9182 = vweird.f32 %v9135
    %vm9183 = vweird.f32 %v9176
    %vm9184 = vmor %vm9182, %vm9183
    %v9185 = vsel %vm9184, %v9176, %v9181
    %v9186 = vrsqrt.pop %v9136
    %v9187 = vmul.f32 %v9186, %v9136
    %v9188 = vmul.f32 %v9187, %v9186
    %v9189 = vmul.f32 0.5, %v9188
    %v9190 = vsub.f32 1.5, %v9189
    %v9191 = vmul.f32 %v9186, %v9190
    %vm9192 = vweird.f32 %v9136
    %vm9193 = vweird.f32 %v9186
    %vm9194 = vmor %vm9192, %vm9193
    %v9195 = vsel %vm9194, %v9186, %v9191
    %v9196 = vrsqrt.pop %v9137
    %v9197 = vmul.f32 %v9196, %v9137
    %v9198 = vmul.f32 %v9197, %v9196
    %v9199 = vmul.f32 0.5, %v9198
    %v9200 = vsub.f32 1.5, %v9199
    %v9201 = vmul.f32 %v9196, %v9200
    %vm9202 = vweird.f32 %v9137
    %vm9203 = vweird.f32 %v9196
    %vm9204 = vmor %vm9202, %vm9203
    %v9205 = vsel %vm9204, %v9196, %v9201
    %v9206 = vrsqrt.pop %v9138
    %v9207 = vmul.f32 %v9206, %v9138
    %v9208 = vmul.f32 %v9207, %v9206
    %v9209 = vmul.f32 0.5, %v9208
    %v9210 = vsub.f32 1.5, %v9209
    %v9211 = vmul.f32 %v9206, %v9210
    %vm9212 = vweird.f32 %v9138
    %vm9213 = vweird.f32 %v9206
    %vm9214 = vmor %vm9212, %vm9213
    %v9215 = vsel %vm9214, %v9206, %v9211
    %v9216 = vrsqrt.pop %v9139
    %v9217 = vmul.f32 %v9216, %v9139
    %v9218 = vmul.f32 %v9217, %v9216
    %v9219 = vmul.f32 0.5, %v9218
    %v9220 = vsub.f32 1.5, %v9219
    %v9221 = vmul.f32 %v9216, %v9220
    %vm9222 = vweird.f32 %v9139
    %vm9223 = vweird.f32 %v9216
    %vm9224 = vmor %vm9222, %vm9223
    %v9225 = vsel %vm9224, %v9216, %v9221
    %v9226 = vrsqrt.pop %v9140
    %v9227 = vmul.f32 %v9226, %v9140
    %v9228 = vmul.f32 %v9227, %v9226
    %v9229 = vmul.f32 0.5, %v9228
    %v9230 = vsub.f32 1.5, %v9229
    %v9231 = vmul.f32 %v9226, %v9230
    %vm9232 = vweird.f32 %v9140
    %vm9233 = vweird.f32 %v9226
    %vm9234 = vmor %vm9232, %vm9233
    %v9235 = vsel %vm9234, %v9226, %v9231
    %v9236 = vrsqrt.pop %v9141
    %v9237 = vmul.f32 %v9236, %v9141
    %v9238 = vmul.f32 %v9237, %v9236
    %v9239 = vmul.f32 0.5, %v9238
    %v9240 = vsub.f32 1.5, %v9239
    %v9241 = vmul.f32 %v9236, %v9240
    %vm9242 = vweird.f32 %v9141
    %vm9243 = vweird.f32 %v9236
    %vm9244 = vmor %vm9242, %vm9243
    %v9245 = vsel %vm9244, %v9236, %v9241
    %v9246 = vrsqrt.pop %v9142
    %v9247 = vmul.f32 %v9246, %v9142
    %v9248 = vmul.f32 %v9247, %v9246
    %v9249 = vmul.f32 0.5, %v9248
    %v9250 = vsub.f32 1.5, %v9249
    %v9251 = vmul.f32 %v9246, %v9250
    %vm9252 = vweird.f32 %v9142
    %vm9253 = vweird.f32 %v9246
    %vm9254 = vmor %vm9252, %vm9253
    %v9255 = vsel %vm9254, %v9246, %v9251
    %v9256 = vrsqrt.pop %v9143
    %v9257 = vmul.f32 %v9256, %v9143
    %v9258 = vmul.f32 %v9257, %v9256
    %v9259 = vmul.f32 0.5, %v9258
    %v9260 = vsub.f32 1.5, %v9259
    %v9261 = vmul.f32 %v9256, %v9260
    %vm9262 = vweird.f32 %v9143
    %vm9263 = vweird.f32 %v9256
    %vm9264 = vmor %vm9262, %vm9263
    %v9265 = vsel %vm9264, %v9256, %v9261
    %v9266 = vrsqrt.pop %v9144
    %v9267 = vmul.f32 %v9266, %v9144
    %v9268 = vmul.f32 %v9267, %v9266
    %v9269 = vmul.f32 0.5, %v9268
    %v9270 = vsub.f32 1.5, %v9269
    %v9271 = vmul.f32 %v9266, %v9270
    %vm9272 = vweird.f32 %v9144
    %vm9273 = vweird.f32 %v9266
    %vm9274 = vmor %vm9272, %vm9273
    %v9275 = vsel %vm9274, %v9266, %v9271
    %v9276 = vrsqrt.pop %v9145
    %v9277 = vmul.f32 %v9276, %v9145
    %v9278 = vmul.f32 %v9277, %v9276
    %v9279 = vmul.f32 0.5, %v9278
    %v9280 = vsub.f32 1.5, %v9279
    %v9281 = vmul.f32 %v9276, %v9280
    %vm9282 = vweird.f32 %v9145
    %vm9283 = vweird.f32 %v9276
    %vm9284 = vmor %vm9282, %vm9283
    %v9285 = vsel %vm9284, %v9276, %v9281
    %v9286 = vrsqrt.pop %v9146
    %v9287 = vmul.f32 %v9286, %v9146
    %v9288 = vmul.f32 %v9287, %v9286
    %v9289 = vmul.f32 0.5, %v9288
    %v9290 = vsub.f32 1.5, %v9289
    %v9291 = vmul.f32 %v9286, %v9290
    %vm9292 = vweird.f32 %v9146
    %vm9293 = vweird.f32 %v9286
    %vm9294 = vmor %vm9292, %vm9293
    %v9295 = vsel %vm9294, %v9286, %v9291
    %v9296 = vrsqrt.pop %v9147
    %v9297 = vmul.f32 %v9296, %v9147
    %v9298 = vmul.f32 %v9297, %v9296
    %v9299 = vmul.f32 0.5, %v9298
    %v9300 = vsub.f32 1.5, %v9299
    %v9301 = vmul.f32 %v9296, %v9300
    %vm9302 = vweird.f32 %v9147
    %vm9303 = vweird.f32 %v9296
    %vm9304 = vmor %vm9302, %vm9303
    %v9305 = vsel %vm9304, %v9296, %v9301
    %v9306 = vrsqrt.pop %v9148
    %v9307 = vmul.f32 %v9306, %v9148
    %v9308 = vmul.f32 %v9307, %v9306
    %v9309 = vmul.f32 0.5, %v9308
    %v9310 = vsub.f32 1.5, %v9309
    %v9311 = vmul.f32 %v9306, %v9310
    %vm9312 = vweird.f32 %v9148
    %vm9313 = vweird.f32 %v9306
    %vm9314 = vmor %vm9312, %vm9313
    %v9315 = vsel %vm9314, %v9306, %v9311
    %v9316 = vrsqrt.pop %v9149
    %v9317 = vmul.f32 %v9316, %v9149
    %v9318 = vmul.f32 %v9317, %v9316
    %v9319 = vmul.f32 0.5, %v9318
    %v9320 = vsub.f32 1.5, %v9319
    %v9321 = vmul.f32 %v9316, %v9320
    %vm9322 = vweird.f32 %v9149
    %vm9323 = vweird.f32 %v9316
    %vm9324 = vmor %vm9322, %vm9323
    %v9325 = vsel %vm9324, %v9316, %v9321
    %v9326 = vrsqrt.pop %v9150
    %v9327 = vmul.f32 %v9326, %v9150
    %v9328 = vmul.f32 %v9327, %v9326
    %v9329 = vmul.f32 0.5, %v9328
    %v9330 = vsub.f32 1.5, %v9329
    %v9331 = vmul.f32 %v9326, %v9330
    %vm9332 = vweird.f32 %v9150
    %vm9333 = vweird.f32 %v9326
    %vm9334 = vmor %vm9332, %vm9333
    %v9335 = vsel %vm9334, %v9326, %v9331
    %v9336 = vrsqrt.pop %v9151
    %v9337 = vmul.f32 %v9336, %v9151
    %v9338 = vmul.f32 %v9337, %v9336
    %v9339 = vmul.f32 0.5, %v9338
    %v9340 = vsub.f32 1.5, %v9339
    %v9341 = vmul.f32 %v9336, %v9340
    %vm9342 = vweird.f32 %v9151
    %vm9343 = vweird.f32 %v9336
    %vm9344 = vmor %vm9342, %vm9343
    %v9345 = vsel %vm9344, %v9336, %v9341
    %v9346 = vrsqrt.pop %v9152
    %v9347 = vmul.f32 %v9346, %v9152
    %v9348 = vmul.f32 %v9347, %v9346
    %v9349 = vmul.f32 0.5, %v9348
    %v9350 = vsub.f32 1.5, %v9349
    %v9351 = vmul.f32 %v9346, %v9350
    %vm9352 = vweird.f32 %v9152
    %vm9353 = vweird.f32 %v9346
    %vm9354 = vmor %vm9352, %vm9353
    %v9355 = vsel %vm9354, %v9346, %v9351
    %v9356 = vrsqrt.pop %v9153
    %v9357 = vmul.f32 %v9356, %v9153
    %v9358 = vmul.f32 %v9357, %v9356
    %v9359 = vmul.f32 0.5, %v9358
    %v9360 = vsub.f32 1.5, %v9359
    %v9361 = vmul.f32 %v9356, %v9360
    %vm9362 = vweird.f32 %v9153
    %vm9363 = vweird.f32 %v9356
    %vm9364 = vmor %vm9362, %vm9363
    %v9365 = vsel %vm9364, %v9356, %v9361
    %v9366 = vrsqrt.pop %v9154
    %v9367 = vmul.f32 %v9366, %v9154
    %v9368 = vmul.f32 %v9367, %v9366
    %v9369 = vmul.f32 0.5, %v9368
    %v9370 = vsub.f32 1.5, %v9369
    %v9371 = vmul.f32 %v9366, %v9370
    %vm9372 = vweird.f32 %v9154
    %vm9373 = vweird.f32 %v9366
    %vm9374 = vmor %vm9372, %vm9373
    %v9375 = vsel %vm9374, %v9366, %v9371
    %v9376 = vrsqrt.pop %v9155
    %v9377 = vmul.f32 %v9376, %v9155
    %v9378 = vmul.f32 %v9377, %v9376
    %v9379 = vmul.f32 0.5, %v9378
    %v9380 = vsub.f32 1.5, %v9379
    %v9381 = vmul.f32 %v9376, %v9380
    %vm9382 = vweird.f32 %v9155
    %vm9383 = vweird.f32 %v9376
    %vm9384 = vmor %vm9382, %vm9383
    %v9385 = vsel %vm9384, %v9376, %v9381
    %v9386 = vrsqrt.pop %v9156
    %v9387 = vmul.f32 %v9386, %v9156
    %v9388 = vmul.f32 %v9387, %v9386
    %v9389 = vmul.f32 0.5, %v9388
    %v9390 = vsub.f32 1.5, %v9389
    %v9391 = vmul.f32 %v9386, %v9390
    %vm9392 = vweird.f32 %v9156
    %vm9393 = vweird.f32 %v9386
    %vm9394 = vmor %vm9392, %vm9393
    %v9395 = vsel %vm9394, %v9386, %v9391
    %v9396 = vrsqrt.pop %v9157
    %v9397 = vmul.f32 %v9396, %v9157
    %v9398 = vmul.f32 %v9397, %v9396
    %v9399 = vmul.f32 0.5, %v9398
    %v9400 = vsub.f32 1.5, %v9399
    %v9401 = vmul.f32 %v9396, %v9400
    %vm9402 = vweird.f32 %v9157
    %vm9403 = vweird.f32 %v9396
    %vm9404 = vmor %vm9402, %vm9403
    %v9405 = vsel %vm9404, %v9396, %v9401
    %v9406 = vrsqrt.pop %v9158
    %v9407 = vmul.f32 %v9406, %v9158
    %v9408 = vmul.f32 %v9407, %v9406
    %v9409 = vmul.f32 0.5, %v9408
    %v9410 = vsub.f32 1.5, %v9409
    %v9411 = vmul.f32 %v9406, %v9410
    %vm9412 = vweird.f32 %v9158
    %vm9413 = vweird.f32 %v9406
    %vm9414 = vmor %vm9412, %vm9413
    %v9415 = vsel %vm9414, %v9406, %v9411
    %v9416 = vrsqrt.pop %v9159
    %v9417 = vmul.f32 %v9416, %v9159
    %v9418 = vmul.f32 %v9417, %v9416
    %v9419 = vmul.f32 0.5, %v9418
    %v9420 = vsub.f32 1.5, %v9419
    %v9421 = vmul.f32 %v9416, %v9420
    %vm9422 = vweird.f32 %v9159
    %vm9423 = vweird.f32 %v9416
    %vm9424 = vmor %vm9422, %vm9423
    %v9425 = vsel %vm9424, %v9416, %v9421
    %v9426 = vrsqrt.pop %v9160
    %v9427 = vmul.f32 %v9426, %v9160
    %v9428 = vmul.f32 %v9427, %v9426
    %v9429 = vmul.f32 0.5, %v9428
    %v9430 = vsub.f32 1.5, %v9429
    %v9431 = vmul.f32 %v9426, %v9430
    %vm9432 = vweird.f32 %v9160
    %vm9433 = vweird.f32 %v9426
    %vm9434 = vmor %vm9432, %vm9433
    %v9435 = vsel %vm9434, %v9426, %v9431
    %v9436 = vrsqrt.pop %v9161
    %v9437 = vmul.f32 %v9436, %v9161
    %v9438 = vmul.f32 %v9437, %v9436
    %v9439 = vmul.f32 0.5, %v9438
    %v9440 = vsub.f32 1.5, %v9439
    %v9441 = vmul.f32 %v9436, %v9440
    %vm9442 = vweird.f32 %v9161
    %vm9443 = vweird.f32 %v9436
    %vm9444 = vmor %vm9442, %vm9443
    %v9445 = vsel %vm9444, %v9436, %v9441
    %v9446 = vrsqrt.pop %v9162
    %v9447 = vmul.f32 %v9446, %v9162
    %v9448 = vmul.f32 %v9447, %v9446
    %v9449 = vmul.f32 0.5, %v9448
    %v9450 = vsub.f32 1.5, %v9449
    %v9451 = vmul.f32 %v9446, %v9450
    %vm9452 = vweird.f32 %v9162
    %vm9453 = vweird.f32 %v9446
    %vm9454 = vmor %vm9452, %vm9453
    %v9455 = vsel %vm9454, %v9446, %v9451
    %v9456 = vrsqrt.pop %v9163
    %v9457 = vmul.f32 %v9456, %v9163
    %v9458 = vmul.f32 %v9457, %v9456
    %v9459 = vmul.f32 0.5, %v9458
    %v9460 = vsub.f32 1.5, %v9459
    %v9461 = vmul.f32 %v9456, %v9460
    %vm9462 = vweird.f32 %v9163
    %vm9463 = vweird.f32 %v9456
    %vm9464 = vmor %vm9462, %vm9463
    %v9465 = vsel %vm9464, %v9456, %v9461
    %v9466 = vrsqrt.pop %v9164
    %v9467 = vmul.f32 %v9466, %v9164
    %v9468 = vmul.f32 %v9467, %v9466
    %v9469 = vmul.f32 0.5, %v9468
    %v9470 = vsub.f32 1.5, %v9469
    %v9471 = vmul.f32 %v9466, %v9470
    %vm9472 = vweird.f32 %v9164
    %vm9473 = vweird.f32 %v9466
    %vm9474 = vmor %vm9472, %vm9473
    %v9475 = vsel %vm9474, %v9466, %v9471
    %v9476 = vrsqrt.pop %v9165
    %v9477 = vmul.f32 %v9476, %v9165
    %v9478 = vmul.f32 %v9477, %v9476
    %v9479 = vmul.f32 0.5, %v9478
    %v9480 = vsub.f32 1.5, %v9479
    %v9481 = vmul.f32 %v9476, %v9480
    %vm9482 = vweird.f32 %v9165
    %vm9483 = vweird.f32 %v9476
    %vm9484 = vmor %vm9482, %vm9483
    %v9485 = vsel %vm9484, %v9476, %v9481
    %v9486 = vmul.f32 %v8942, %v9175
    %v9487 = vmul.f32 %v8943, %v9185
    %v9488 = vmul.f32 %v8944, %v9195
    %v9489 = vmul.f32 %v8945, %v9205
    %v9490 = vmul.f32 %v8946, %v9215
    %v9491 = vmul.f32 %v8947, %v9225
    %v9492 = vmul.f32 %v8948, %v9235
    %v9493 = vmul.f32 %v8949, %v9245
    %v9494 = vmul.f32 %v8950, %v9255
    %v9495 = vmul.f32 %v8951, %v9265
    %v9496 = vmul.f32 %v8952, %v9275
    %v9497 = vmul.f32 %v8953, %v9285
    %v9498 = vmul.f32 %v8954, %v9295
    %v9499 = vmul.f32 %v8955, %v9305
    %v9500 = vmul.f32 %v8956, %v9315
    %v9501 = vmul.f32 %v8957, %v9325
    %v9502 = vmul.f32 %v8958, %v9335
    %v9503 = vmul.f32 %v8959, %v9345
    %v9504 = vmul.f32 %v8960, %v9355
    %v9505 = vmul.f32 %v8961, %v9365
    %v9506 = vmul.f32 %v8962, %v9375
    %v9507 = vmul.f32 %v8963, %v9385
    %v9508 = vmul.f32 %v8964, %v9395
    %v9509 = vmul.f32 %v8965, %v9405
    %v9510 = vmul.f32 %v8966, %v9415
    %v9511 = vmul.f32 %v8967, %v9425
    %v9512 = vmul.f32 %v8968, %v9435
    %v9513 = vmul.f32 %v8969, %v9445
    %v9514 = vmul.f32 %v8970, %v9455
    %v9515 = vmul.f32 %v8971, %v9465
    %v9516 = vmul.f32 %v8972, %v9475
    %v9517 = vmul.f32 %v8973, %v9485
    %v9519 = vperm.slane %v8812, 0
    %v9521 = vmul.f32 %v9486, %v9519
    %v9522 = vmul.f32 %v9487, %v9519
    %v9523 = vmul.f32 %v9488, %v9519
    %v9524 = vmul.f32 %v9489, %v9519
    %v9525 = vmul.f32 %v9490, %v9519
    %v9526 = vmul.f32 %v9491, %v9519
    %v9527 = vmul.f32 %v9492, %v9519
    %v9528 = vmul.f32 %v9493, %v9519
    %v9529 = vmul.f32 %v9494, %v9519
    %v9530 = vmul.f32 %v9495, %v9519
    %v9531 = vmul.f32 %v9496, %v9519
    %v9532 = vmul.f32 %v9497, %v9519
    %v9533 = vmul.f32 %v9498, %v9519
    %v9534 = vmul.f32 %v9499, %v9519
    %v9535 = vmul.f32 %v9500, %v9519
    %v9536 = vmul.f32 %v9501, %v9519
    %v9537 = vmul.f32 %v9502, %v9519
    %v9538 = vmul.f32 %v9503, %v9519
    %v9539 = vmul.f32 %v9504, %v9519
    %v9540 = vmul.f32 %v9505, %v9519
    %v9541 = vmul.f32 %v9506, %v9519
    %v9542 = vmul.f32 %v9507, %v9519
    %v9543 = vmul.f32 %v9508, %v9519
    %v9544 = vmul.f32 %v9509, %v9519
    %v9545 = vmul.f32 %v9510, %v9519
    %v9546 = vmul.f32 %v9511, %v9519
    %v9547 = vmul.f32 %v9512, %v9519
    %v9548 = vmul.f32 %v9513, %v9519
    %v9549 = vmul.f32 %v9514, %v9519
    %v9550 = vmul.f32 %v9515, %v9519
    %v9551 = vmul.f32 %v9516, %v9519
    %v9552 = vmul.f32 %v9517, %v9519
    %v9554 = vperm.slane %v8813, 0
    %v9556 = vadd.f32 %v9521, %v9554
    %v9557 = vadd.f32 %v9522, %v9554
    %v9558 = vadd.f32 %v9523, %v9554
    %v9559 = vadd.f32 %v9524, %v9554
    %v9560 = vadd.f32 %v9525, %v9554
    %v9561 = vadd.f32 %v9526, %v9554
    %v9562 = vadd.f32 %v9527, %v9554
    %v9563 = vadd.f32 %v9528, %v9554
    %v9564 = vadd.f32 %v9529, %v9554
    %v9565 = vadd.f32 %v9530, %v9554
    %v9566 = vadd.f32 %v9531, %v9554
    %v9567 = vadd.f32 %v9532, %v9554
    %v9568 = vadd.f32 %v9533, %v9554
    %v9569 = vadd.f32 %v9534, %v9554
    %v9570 = vadd.f32 %v9535, %v9554
    %v9571 = vadd.f32 %v9536, %v9554
    %v9572 = vadd.f32 %v9537, %v9554
    %v9573 = vadd.f32 %v9538, %v9554
    %v9574 = vadd.f32 %v9539, %v9554
    %v9575 = vadd.f32 %v9540, %v9554
    %v9576 = vadd.f32 %v9541, %v9554
    %v9577 = vadd.f32 %v9542, %v9554
    %v9578 = vadd.f32 %v9543, %v9554
    %v9579 = vadd.f32 %v9544, %v9554
    %v9580 = vadd.f32 %v9545, %v9554
    %v9581 = vadd.f32 %v9546, %v9554
    %v9582 = vadd.f32 %v9547, %v9554
    %v9583 = vadd.f32 %v9548, %v9554
    %v9584 = vadd.f32 %v9549, %v9554
    %v9585 = vadd.f32 %v9550, %v9554
    %v9586 = vadd.f32 %v9551, %v9554
    %v9587 = vadd.f32 %v9552, %v9554
    %v9588 = vld [vmem:[#allocation4] sm:$0xff]
    %v9589 = vld [vmem:[#allocation4 + $0x8] sm:$0xff]
    %v9590 = vld [vmem:[#allocation4 + $0x10] sm:$0xff]
    %v9591 = vld [vmem:[#allocation4 + $0x18] sm:$0xff]
    %v9592 = vld [vmem:[%s14] sm:$0x1]
    %v9594 = vperm.slane %v9592, 0
    %v9597 = vsel %vm393, %v9556, 0
    %v9600 = vsel %vm393, %v9557, 0
    %v9603 = vsel %vm393, %v9558, 0
    %v9606 = vsel %vm393, %v9559, 0
    %v9609 = vsel %vm393, %v9560, 0
    %v9612 = vsel %vm393, %v9561, 0
    %v9615 = vsel %vm393, %v9562, 0
    %v9618 = vsel %vm393, %v9563, 0
    %v9621 = vsel %vm393, %v9564, 0
    %v9624 = vsel %vm393, %v9565, 0
    %v9627 = vsel %vm393, %v9566, 0
    %v9630 = vsel %vm393, %v9567, 0
    %v9633 = vsel %vm393, %v9568, 0
    %v9636 = vsel %vm393, %v9569, 0
    %v9639 = vsel %vm393, %v9570, 0
    %v9642 = vsel %vm393, %v9571, 0
    %v9645 = vsel %vm393, %v9572, 0
    %v9648 = vsel %vm393, %v9573, 0
    %v9651 = vsel %vm393, %v9574, 0
    %v9654 = vsel %vm393, %v9575, 0
    %v9657 = vsel %vm393, %v9576, 0
    %v9660 = vsel %vm393, %v9577, 0
    %v9663 = vsel %vm393, %v9578, 0
    %v9666 = vsel %vm393, %v9579, 0
    %v9669 = vsel %vm393, %v9580, 0
    %v9672 = vsel %vm393, %v9581, 0
    %v9675 = vsel %vm393, %v9582, 0
    %v9678 = vsel %vm393, %v9583, 0
    %v9681 = vsel %vm393, %v9584, 0
    %v9684 = vsel %vm393, %v9585, 0
    %v9687 = vsel %vm393, %v9586, 0
    %v9690 = vsel %vm393, %v9587, 0
    %9692 = vmatpush.msra.mxu0 0.0
    %9693 = vmatpush.msra.mxu0 0.0
    %9694 = vmatpush.msra.mxu0 0.0
    %9695 = vmatpush.msra.mxu0 0.0
    %9696 = vmatpush.msra.mxu0 0.0
    %9697 = vmatpush.msra.mxu0 0.0
    %9698 = vmatpush.msra.mxu0 0.0
    %9699 = vmatpush.msra.mxu0 0.0
    %9700 = vmatpush.msra.mxu0 0.0
    %9701 = vmatpush.msra.mxu0 0.0
    %9702 = vmatpush.msra.mxu0 0.0
    %9703 = vmatpush.msra.mxu0 0.0
    %9704 = vmatpush.msra.mxu0 %v9591
    %9705 = vmatpush.msra.mxu0 %v9590
    %9706 = vmatpush.msra.mxu0 %v9589
    %9707 = vmatpush.msra.mxu0 %v9588
    %9708 = vmatmul.f32.gmra.mxu0 %v9597
    %v9709 = vpop.f32.mrf.mxu0
    %v9710 = vadd.f32 %v9594, %v9709
    %9711 = vmatmul.f32.gmra.mxu0 %v9600
    %v9712 = vpop.f32.mrf.mxu0
    %v9713 = vadd.f32 %v9594, %v9712
    %9714 = vmatmul.f32.gmra.mxu0 %v9603
    %v9715 = vpop.f32.mrf.mxu0
    %v9716 = vadd.f32 %v9594, %v9715
    %9717 = vmatmul.f32.gmra.mxu0 %v9606
    %v9718 = vpop.f32.mrf.mxu0
    %v9719 = vadd.f32 %v9594, %v9718
    %9720 = vmatmul.f32.gmra.mxu0 %v9609
    %v9721 = vpop.f32.mrf.mxu0
    %v9722 = vadd.f32 %v9594, %v9721
    %9723 = vmatmul.f32.gmra.mxu0 %v9612
    %v9724 = vpop.f32.mrf.mxu0
    %v9725 = vadd.f32 %v9594, %v9724
    %9726 = vmatmul.f32.gmra.mxu0 %v9615
    %v9727 = vpop.f32.mrf.mxu0
    %v9728 = vadd.f32 %v9594, %v9727
    %9729 = vmatmul.f32.gmra.mxu0 %v9618
    %v9730 = vpop.f32.mrf.mxu0
    %v9731 = vadd.f32 %v9594, %v9730
    %9732 = vmatmul.f32.gmra.mxu0 %v9621
    %v9733 = vpop.f32.mrf.mxu0
    %v9734 = vadd.f32 %v9594, %v9733
    %9735 = vmatmul.f32.gmra.mxu0 %v9624
    %v9736 = vpop.f32.mrf.mxu0
    %v9737 = vadd.f32 %v9594, %v9736
    %9738 = vmatmul.f32.gmra.mxu0 %v9627
    %v9739 = vpop.f32.mrf.mxu0
    %v9740 = vadd.f32 %v9594, %v9739
    %9741 = vmatmul.f32.gmra.mxu0 %v9630
    %v9742 = vpop.f32.mrf.mxu0
    %v9743 = vadd.f32 %v9594, %v9742
    %9744 = vmatmul.f32.gmra.mxu0 %v9633
    %v9745 = vpop.f32.mrf.mxu0
    %v9746 = vadd.f32 %v9594, %v9745
    %9747 = vmatmul.f32.gmra.mxu0 %v9636
    %v9748 = vpop.f32.mrf.mxu0
    %v9749 = vadd.f32 %v9594, %v9748
    %9750 = vmatmul.f32.gmra.mxu0 %v9639
    %v9751 = vpop.f32.mrf.mxu0
    %v9752 = vadd.f32 %v9594, %v9751
    %9753 = vmatmul.f32.gmra.mxu0 %v9642
    %v9754 = vpop.f32.mrf.mxu0
    %v9755 = vadd.f32 %v9594, %v9754
    %9756 = vmatmul.f32.gmra.mxu0 %v9645
    %v9757 = vpop.f32.mrf.mxu0
    %v9758 = vadd.f32 %v9594, %v9757
    %9759 = vmatmul.f32.gmra.mxu0 %v9648
    %v9760 = vpop.f32.mrf.mxu0
    %v9761 = vadd.f32 %v9594, %v9760
    %9762 = vmatmul.f32.gmra.mxu0 %v9651
    %v9763 = vpop.f32.mrf.mxu0
    %v9764 = vadd.f32 %v9594, %v9763
    %9765 = vmatmul.f32.gmra.mxu0 %v9654
    %v9766 = vpop.f32.mrf.mxu0
    %v9767 = vadd.f32 %v9594, %v9766
    %9768 = vmatmul.f32.gmra.mxu0 %v9657
    %v9769 = vpop.f32.mrf.mxu0
    %v9770 = vadd.f32 %v9594, %v9769
    %9771 = vmatmul.f32.gmra.mxu0 %v9660
    %v9772 = vpop.f32.mrf.mxu0
    %v9773 = vadd.f32 %v9594, %v9772
    %9774 = vmatmul.f32.gmra.mxu0 %v9663
    %v9775 = vpop.f32.mrf.mxu0
    %v9776 = vadd.f32 %v9594, %v9775
    %9777 = vmatmul.f32.gmra.mxu0 %v9666
    %v9778 = vpop.f32.mrf.mxu0
    %v9779 = vadd.f32 %v9594, %v9778
    %9780 = vmatmul.f32.gmra.mxu0 %v9669
    %v9781 = vpop.f32.mrf.mxu0
    %v9782 = vadd.f32 %v9594, %v9781
    %9783 = vmatmul.f32.gmra.mxu0 %v9672
    %v9784 = vpop.f32.mrf.mxu0
    %v9785 = vadd.f32 %v9594, %v9784
    %9786 = vmatmul.f32.gmra.mxu0 %v9675
    %v9787 = vpop.f32.mrf.mxu0
    %v9788 = vadd.f32 %v9594, %v9787
    %9789 = vmatmul.f32.gmra.mxu0 %v9678
    %v9790 = vpop.f32.mrf.mxu0
    %v9791 = vadd.f32 %v9594, %v9790
    %9792 = vmatmul.f32.gmra.mxu0 %v9681
    %v9793 = vpop.f32.mrf.mxu0
    %v9794 = vadd.f32 %v9594, %v9793
    %9795 = vmatmul.f32.gmra.mxu0 %v9684
    %v9796 = vpop.f32.mrf.mxu0
    %v9797 = vadd.f32 %v9594, %v9796
    %9798 = vmatmul.f32.gmra.mxu0 %v9687
    %v9799 = vpop.f32.mrf.mxu0
    %v9800 = vadd.f32 %v9594, %v9799
    %9801 = vmatmul.f32.gmra.mxu0 %v9690
    %v9802 = vpop.f32.mrf.mxu0
    %v9803 = vadd.f32 %v9594, %v9802
    %9804 = vdwg.mxu0
    %v9805 = vmul.f32 %v9710, 0.5
    %v9806 = vmul.f32 %v9713, 0.5
    %v9807 = vmul.f32 %v9716, 0.5
    %v9808 = vmul.f32 %v9719, 0.5
    %v9809 = vmul.f32 %v9722, 0.5
    %v9810 = vmul.f32 %v9725, 0.5
    %v9811 = vmul.f32 %v9728, 0.5
    %v9812 = vmul.f32 %v9731, 0.5
    %v9813 = vmul.f32 %v9734, 0.5
    %v9814 = vmul.f32 %v9737, 0.5
    %v9815 = vmul.f32 %v9740, 0.5
    %v9816 = vmul.f32 %v9743, 0.5
    %v9817 = vmul.f32 %v9746, 0.5
    %v9818 = vmul.f32 %v9749, 0.5
    %v9819 = vmul.f32 %v9752, 0.5
    %v9820 = vmul.f32 %v9755, 0.5
    %v9821 = vmul.f32 %v9758, 0.5
    %v9822 = vmul.f32 %v9761, 0.5
    %v9823 = vmul.f32 %v9764, 0.5
    %v9824 = vmul.f32 %v9767, 0.5
    %v9825 = vmul.f32 %v9770, 0.5
    %v9826 = vmul.f32 %v9773, 0.5
    %v9827 = vmul.f32 %v9776, 0.5
    %v9828 = vmul.f32 %v9779, 0.5
    %v9829 = vmul.f32 %v9782, 0.5
    %v9830 = vmul.f32 %v9785, 0.5
    %v9831 = vmul.f32 %v9788, 0.5
    %v9832 = vmul.f32 %v9791, 0.5
    %v9833 = vmul.f32 %v9794, 0.5
    %v9834 = vmul.f32 %v9797, 0.5
    %v9835 = vmul.f32 %v9800, 0.5
    %v9836 = vmul.f32 %v9803, 0.5
    %v9837 = vmul.f32 %v9710, 0.044715
    %v9838 = vmul.f32 %v9713, 0.044715
    %v9839 = vmul.f32 %v9716, 0.044715
    %v9840 = vmul.f32 %v9719, 0.044715
    %v9841 = vmul.f32 %v9722, 0.044715
    %v9842 = vmul.f32 %v9725, 0.044715
    %v9843 = vmul.f32 %v9728, 0.044715
    %v9844 = vmul.f32 %v9731, 0.044715
    %v9845 = vmul.f32 %v9734, 0.044715
    %v9846 = vmul.f32 %v9737, 0.044715
    %v9847 = vmul.f32 %v9740, 0.044715
    %v9848 = vmul.f32 %v9743, 0.044715
    %v9849 = vmul.f32 %v9746, 0.044715
    %v9850 = vmul.f32 %v9749, 0.044715
    %v9851 = vmul.f32 %v9752, 0.044715
    %v9852 = vmul.f32 %v9755, 0.044715
    %v9853 = vmul.f32 %v9758, 0.044715
    %v9854 = vmul.f32 %v9761, 0.044715
    %v9855 = vmul.f32 %v9764, 0.044715
    %v9856 = vmul.f32 %v9767, 0.044715
    %v9857 = vmul.f32 %v9770, 0.044715
    %v9858 = vmul.f32 %v9773, 0.044715
    %v9859 = vmul.f32 %v9776, 0.044715
    %v9860 = vmul.f32 %v9779, 0.044715
    %v9861 = vmul.f32 %v9782, 0.044715
    %v9862 = vmul.f32 %v9785, 0.044715
    %v9863 = vmul.f32 %v9788, 0.044715
    %v9864 = vmul.f32 %v9791, 0.044715
    %v9865 = vmul.f32 %v9794, 0.044715
    %v9866 = vmul.f32 %v9797, 0.044715
    %v9867 = vmul.f32 %v9800, 0.044715
    %v9868 = vmul.f32 %v9803, 0.044715
    %v9869 = vmul.f32 %v9837, %v9710
    %v9870 = vmul.f32 %v9838, %v9713
    %v9871 = vmul.f32 %v9839, %v9716
    %v9872 = vmul.f32 %v9840, %v9719
    %v9873 = vmul.f32 %v9841, %v9722
    %v9874 = vmul.f32 %v9842, %v9725
    %v9875 = vmul.f32 %v9843, %v9728
    %v9876 = vmul.f32 %v9844, %v9731
    %v9877 = vmul.f32 %v9845, %v9734
    %v9878 = vmul.f32 %v9846, %v9737
    %v9879 = vmul.f32 %v9847, %v9740
    %v9880 = vmul.f32 %v9848, %v9743
    %v9881 = vmul.f32 %v9849, %v9746
    %v9882 = vmul.f32 %v9850, %v9749
    %v9883 = vmul.f32 %v9851, %v9752
    %v9884 = vmul.f32 %v9852, %v9755
    %v9885 = vmul.f32 %v9853, %v9758
    %v9886 = vmul.f32 %v9854, %v9761
    %v9887 = vmul.f32 %v9855, %v9764
    %v9888 = vmul.f32 %v9856, %v9767
    %v9889 = vmul.f32 %v9857, %v9770
    %v9890 = vmul.f32 %v9858, %v9773
    %v9891 = vmul.f32 %v9859, %v9776
    %v9892 = vmul.f32 %v9860, %v9779
    %v9893 = vmul.f32 %v9861, %v9782
    %v9894 = vmul.f32 %v9862, %v9785
    %v9895 = vmul.f32 %v9863, %v9788
    %v9896 = vmul.f32 %v9864, %v9791
    %v9897 = vmul.f32 %v9865, %v9794
    %v9898 = vmul.f32 %v9866, %v9797
    %v9899 = vmul.f32 %v9867, %v9800
    %v9900 = vmul.f32 %v9868, %v9803
    %v9901 = vmul.f32 %v9869, %v9710
    %v9902 = vmul.f32 %v9870, %v9713
    %v9903 = vmul.f32 %v9871, %v9716
    %v9904 = vmul.f32 %v9872, %v9719
    %v9905 = vmul.f32 %v9873, %v9722
    %v9906 = vmul.f32 %v9874, %v9725
    %v9907 = vmul.f32 %v9875, %v9728
    %v9908 = vmul.f32 %v9876, %v9731
    %v9909 = vmul.f32 %v9877, %v9734
    %v9910 = vmul.f32 %v9878, %v9737
    %v9911 = vmul.f32 %v9879, %v9740
    %v9912 = vmul.f32 %v9880, %v9743
    %v9913 = vmul.f32 %v9881, %v9746
    %v9914 = vmul.f32 %v9882, %v9749
    %v9915 = vmul.f32 %v9883, %v9752
    %v9916 = vmul.f32 %v9884, %v9755
    %v9917 = vmul.f32 %v9885, %v9758
    %v9918 = vmul.f32 %v9886, %v9761
    %v9919 = vmul.f32 %v9887, %v9764
    %v9920 = vmul.f32 %v9888, %v9767
    %v9921 = vmul.f32 %v9889, %v9770
    %v9922 = vmul.f32 %v9890, %v9773
    %v9923 = vmul.f32 %v9891, %v9776
    %v9924 = vmul.f32 %v9892, %v9779
    %v9925 = vmul.f32 %v9893, %v9782
    %v9926 = vmul.f32 %v9894, %v9785
    %v9927 = vmul.f32 %v9895, %v9788
    %v9928 = vmul.f32 %v9896, %v9791
    %v9929 = vmul.f32 %v9897, %v9794
    %v9930 = vmul.f32 %v9898, %v9797
    %v9931 = vmul.f32 %v9899, %v9800
    %v9932 = vmul.f32 %v9900, %v9803
    %v9933 = vadd.f32 %v9710, %v9901
    %v9934 = vadd.f32 %v9713, %v9902
    %v9935 = vadd.f32 %v9716, %v9903
    %v9936 = vadd.f32 %v9719, %v9904
    %v9937 = vadd.f32 %v9722, %v9905
    %v9938 = vadd.f32 %v9725, %v9906
    %v9939 = vadd.f32 %v9728, %v9907
    %v9940 = vadd.f32 %v9731, %v9908
    %v9941 = vadd.f32 %v9734, %v9909
    %v9942 = vadd.f32 %v9737, %v9910
    %v9943 = vadd.f32 %v9740, %v9911
    %v9944 = vadd.f32 %v9743, %v9912
    %v9945 = vadd.f32 %v9746, %v9913
    %v9946 = vadd.f32 %v9749, %v9914
    %v9947 = vadd.f32 %v9752, %v9915
    %v9948 = vadd.f32 %v9755, %v9916
    %v9949 = vadd.f32 %v9758, %v9917
    %v9950 = vadd.f32 %v9761, %v9918
    %v9951 = vadd.f32 %v9764, %v9919
    %v9952 = vadd.f32 %v9767, %v9920
    %v9953 = vadd.f32 %v9770, %v9921
    %v9954 = vadd.f32 %v9773, %v9922
    %v9955 = vadd.f32 %v9776, %v9923
    %v9956 = vadd.f32 %v9779, %v9924
    %v9957 = vadd.f32 %v9782, %v9925
    %v9958 = vadd.f32 %v9785, %v9926
    %v9959 = vadd.f32 %v9788, %v9927
    %v9960 = vadd.f32 %v9791, %v9928
    %v9961 = vadd.f32 %v9794, %v9929
    %v9962 = vadd.f32 %v9797, %v9930
    %v9963 = vadd.f32 %v9800, %v9931
    %v9964 = vadd.f32 %v9803, %v9932
    %v9965 = vmul.f32 %v9933, 0.7978846
    %v9966 = vmul.f32 %v9934, 0.7978846
    %v9967 = vmul.f32 %v9935, 0.7978846
    %v9968 = vmul.f32 %v9936, 0.7978846
    %v9969 = vmul.f32 %v9937, 0.7978846
    %v9970 = vmul.f32 %v9938, 0.7978846
    %v9971 = vmul.f32 %v9939, 0.7978846
    %v9972 = vmul.f32 %v9940, 0.7978846
    %v9973 = vmul.f32 %v9941, 0.7978846
    %v9974 = vmul.f32 %v9942, 0.7978846
    %v9975 = vmul.f32 %v9943, 0.7978846
    %v9976 = vmul.f32 %v9944, 0.7978846
    %v9977 = vmul.f32 %v9945, 0.7978846
    %v9978 = vmul.f32 %v9946, 0.7978846
    %v9979 = vmul.f32 %v9947, 0.7978846
    %v9980 = vmul.f32 %v9948, 0.7978846
    %v9981 = vmul.f32 %v9949, 0.7978846
    %v9982 = vmul.f32 %v9950, 0.7978846
    %v9983 = vmul.f32 %v9951, 0.7978846
    %v9984 = vmul.f32 %v9952, 0.7978846
    %v9985 = vmul.f32 %v9953, 0.7978846
    %v9986 = vmul.f32 %v9954, 0.7978846
    %v9987 = vmul.f32 %v9955, 0.7978846
    %v9988 = vmul.f32 %v9956, 0.7978846
    %v9989 = vmul.f32 %v9957, 0.7978846
    %v9990 = vmul.f32 %v9958, 0.7978846
    %v9991 = vmul.f32 %v9959, 0.7978846
    %v9992 = vmul.f32 %v9960, 0.7978846
    %v9993 = vmul.f32 %v9961, 0.7978846
    %v9994 = vmul.f32 %v9962, 0.7978846
    %v9995 = vmul.f32 %v9963, 0.7978846
    %v9996 = vmul.f32 %v9964, 0.7978846
    %v9997 = vtanh.pop %v9965
    %v9998 = vtanh.pop %v9966
    %v9999 = vtanh.pop %v9967
    %v10000 = vtanh.pop %v9968
    %v10001 = vtanh.pop %v9969
    %v10002 = vtanh.pop %v9970
    %v10003 = vtanh.pop %v9971
    %v10004 = vtanh.pop %v9972
    %v10005 = vtanh.pop %v9973
    %v10006 = vtanh.pop %v9974
    %v10007 = vtanh.pop %v9975
    %v10008 = vtanh.pop %v9976
    %v10009 = vtanh.pop %v9977
    %v10010 = vtanh.pop %v9978
    %v10011 = vtanh.pop %v9979
    %v10012 = vtanh.pop %v9980
    %v10013 = vtanh.pop %v9981
    %v10014 = vtanh.pop %v9982
    %v10015 = vtanh.pop %v9983
    %v10016 = vtanh.pop %v9984
    %v10017 = vtanh.pop %v9985
    %v10018 = vtanh.pop %v9986
    %v10019 = vtanh.pop %v9987
    %v10020 = vtanh.pop %v9988
    %v10021 = vtanh.pop %v9989
    %v10022 = vtanh.pop %v9990
    %v10023 = vtanh.pop %v9991
    %v10024 = vtanh.pop %v9992
    %v10025 = vtanh.pop %v9993
    %v10026 = vtanh.pop %v9994
    %v10027 = vtanh.pop %v9995
    %v10028 = vtanh.pop %v9996
    %v10029 = vadd.f32 %v9997, 1.0
    %v10030 = vadd.f32 %v9998, 1.0
    %v10031 = vadd.f32 %v9999, 1.0
    %v10032 = vadd.f32 %v10000, 1.0
    %v10033 = vadd.f32 %v10001, 1.0
    %v10034 = vadd.f32 %v10002, 1.0
    %v10035 = vadd.f32 %v10003, 1.0
    %v10036 = vadd.f32 %v10004, 1.0
    %v10037 = vadd.f32 %v10005, 1.0
    %v10038 = vadd.f32 %v10006, 1.0
    %v10039 = vadd.f32 %v10007, 1.0
    %v10040 = vadd.f32 %v10008, 1.0
    %v10041 = vadd.f32 %v10009, 1.0
    %v10042 = vadd.f32 %v10010, 1.0
    %v10043 = vadd.f32 %v10011, 1.0
    %v10044 = vadd.f32 %v10012, 1.0
    %v10045 = vadd.f32 %v10013, 1.0
    %v10046 = vadd.f32 %v10014, 1.0
    %v10047 = vadd.f32 %v10015, 1.0
    %v10048 = vadd.f32 %v10016, 1.0
    %v10049 = vadd.f32 %v10017, 1.0
    %v10050 = vadd.f32 %v10018, 1.0
    %v10051 = vadd.f32 %v10019, 1.0
    %v10052 = vadd.f32 %v10020, 1.0
    %v10053 = vadd.f32 %v10021, 1.0
    %v10054 = vadd.f32 %v10022, 1.0
    %v10055 = vadd.f32 %v10023, 1.0
    %v10056 = vadd.f32 %v10024, 1.0
    %v10057 = vadd.f32 %v10025, 1.0
    %v10058 = vadd.f32 %v10026, 1.0
    %v10059 = vadd.f32 %v10027, 1.0
    %v10060 = vadd.f32 %v10028, 1.0
    %v10061 = vmul.f32 %v9805, %v10029
    %v10062 = vmul.f32 %v9806, %v10030
    %v10063 = vmul.f32 %v9807, %v10031
    %v10064 = vmul.f32 %v9808, %v10032
    %v10065 = vmul.f32 %v9809, %v10033
    %v10066 = vmul.f32 %v9810, %v10034
    %v10067 = vmul.f32 %v9811, %v10035
    %v10068 = vmul.f32 %v9812, %v10036
    %v10069 = vmul.f32 %v9813, %v10037
    %v10070 = vmul.f32 %v9814, %v10038
    %v10071 = vmul.f32 %v9815, %v10039
    %v10072 = vmul.f32 %v9816, %v10040
    %v10073 = vmul.f32 %v9817, %v10041
    %v10074 = vmul.f32 %v9818, %v10042
    %v10075 = vmul.f32 %v9819, %v10043
    %v10076 = vmul.f32 %v9820, %v10044
    %v10077 = vmul.f32 %v9821, %v10045
    %v10078 = vmul.f32 %v9822, %v10046
    %v10079 = vmul.f32 %v9823, %v10047
    %v10080 = vmul.f32 %v9824, %v10048
    %v10081 = vmul.f32 %v9825, %v10049
    %v10082 = vmul.f32 %v9826, %v10050
    %v10083 = vmul.f32 %v9827, %v10051
    %v10084 = vmul.f32 %v9828, %v10052
    %v10085 = vmul.f32 %v9829, %v10053
    %v10086 = vmul.f32 %v9830, %v10054
    %v10087 = vmul.f32 %v9831, %v10055
    %v10088 = vmul.f32 %v9832, %v10056
    %v10089 = vmul.f32 %v9833, %v10057
    %v10090 = vmul.f32 %v9834, %v10058
    %v10091 = vmul.f32 %v9835, %v10059
    %v10092 = vmul.f32 %v9836, %v10060
    %v10093 = vld [vmem:[%s15] sm:$0xff]
    %v10094 = vld [vmem:[%s15 + $0x8] sm:$0xff]
    %v10095 = vld [vmem:[%s15 + $0x10] sm:$0xff]
    %v10096 = vld [vmem:[%s15 + $0x18] sm:$0xff]
    %v10097 = vld [vmem:[%s15 + $0x20] sm:$0xff]
    %v10098 = vld [vmem:[%s15 + $0x28] sm:$0xff]
    %v10099 = vld [vmem:[%s15 + $0x30] sm:$0xff]
    %v10100 = vld [vmem:[%s15 + $0x38] sm:$0xff]
    %v10101 = vld [vmem:[%s15 + $0x40] sm:$0xff]
    %v10102 = vld [vmem:[%s15 + $0x48] sm:$0xff]
    %v10103 = vld [vmem:[%s15 + $0x50] sm:$0xff]
    %v10104 = vld [vmem:[%s15 + $0x58] sm:$0xff]
    %v10105 = vld [vmem:[%s15 + $0x60] sm:$0xff]
    %v10106 = vld [vmem:[%s15 + $0x68] sm:$0xff]
    %v10107 = vld [vmem:[%s15 + $0x70] sm:$0xff]
    %v10108 = vld [vmem:[%s15 + $0x78] sm:$0xff]
    %10109 = vmatpush.msra.mxu0 %v10108
    %10110 = vmatpush.msra.mxu0 %v10107
    %10111 = vmatpush.msra.mxu0 %v10106
    %10112 = vmatpush.msra.mxu0 %v10105
    %10113 = vmatpush.msra.mxu0 %v10104
    %10114 = vmatpush.msra.mxu0 %v10103
    %10115 = vmatpush.msra.mxu0 %v10102
    %10116 = vmatpush.msra.mxu0 %v10101
    %10117 = vmatpush.msra.mxu0 %v10100
    %10118 = vmatpush.msra.mxu0 %v10099
    %10119 = vmatpush.msra.mxu0 %v10098
    %10120 = vmatpush.msra.mxu0 %v10097
    %10121 = vmatpush.msra.mxu0 %v10096
    %10122 = vmatpush.msra.mxu0 %v10095
    %10123 = vmatpush.msra.mxu0 %v10094
    %10124 = vmatpush.msra.mxu0 %v10093
    %10125 = vmatmul.f32.gmra.mxu0 %v10061
    %v10126 = vpop.f32.mrf.mxu0
    %v10127 = vadd.f32 0.0, %v10126
    %10128 = vmatmul.f32.gmra.mxu0 %v10062
    %v10129 = vpop.f32.mrf.mxu0
    %v10130 = vadd.f32 0.0, %v10129
    %10131 = vmatmul.f32.gmra.mxu0 %v10063
    %v10132 = vpop.f32.mrf.mxu0
    %v10133 = vadd.f32 0.0, %v10132
    %10134 = vmatmul.f32.gmra.mxu0 %v10064
    %v10135 = vpop.f32.mrf.mxu0
    %v10136 = vadd.f32 0.0, %v10135
    %10137 = vmatmul.f32.gmra.mxu0 %v10065
    %v10138 = vpop.f32.mrf.mxu0
    %v10139 = vadd.f32 0.0, %v10138
    %10140 = vmatmul.f32.gmra.mxu0 %v10066
    %v10141 = vpop.f32.mrf.mxu0
    %v10142 = vadd.f32 0.0, %v10141
    %10143 = vmatmul.f32.gmra.mxu0 %v10067
    %v10144 = vpop.f32.mrf.mxu0
    %v10145 = vadd.f32 0.0, %v10144
    %10146 = vmatmul.f32.gmra.mxu0 %v10068
    %v10147 = vpop.f32.mrf.mxu0
    %v10148 = vadd.f32 0.0, %v10147
    %10149 = vmatmul.f32.gmra.mxu0 %v10069
    %v10150 = vpop.f32.mrf.mxu0
    %v10151 = vadd.f32 0.0, %v10150
    %10152 = vmatmul.f32.gmra.mxu0 %v10070
    %v10153 = vpop.f32.mrf.mxu0
    %v10154 = vadd.f32 0.0, %v10153
    %10155 = vmatmul.f32.gmra.mxu0 %v10071
    %v10156 = vpop.f32.mrf.mxu0
    %v10157 = vadd.f32 0.0, %v10156
    %10158 = vmatmul.f32.gmra.mxu0 %v10072
    %v10159 = vpop.f32.mrf.mxu0
    %v10160 = vadd.f32 0.0, %v10159
    %10161 = vmatmul.f32.gmra.mxu0 %v10073
    %v10162 = vpop.f32.mrf.mxu0
    %v10163 = vadd.f32 0.0, %v10162
    %10164 = vmatmul.f32.gmra.mxu0 %v10074
    %v10165 = vpop.f32.mrf.mxu0
    %v10166 = vadd.f32 0.0, %v10165
    %10167 = vmatmul.f32.gmra.mxu0 %v10075
    %v10168 = vpop.f32.mrf.mxu0
    %v10169 = vadd.f32 0.0, %v10168
    %10170 = vmatmul.f32.gmra.mxu0 %v10076
    %v10171 = vpop.f32.mrf.mxu0
    %v10172 = vadd.f32 0.0, %v10171
    %10173 = vmatmul.f32.gmra.mxu0 %v10077
    %v10174 = vpop.f32.mrf.mxu0
    %v10175 = vadd.f32 0.0, %v10174
    %10176 = vmatmul.f32.gmra.mxu0 %v10078
    %v10177 = vpop.f32.mrf.mxu0
    %v10178 = vadd.f32 0.0, %v10177
    %10179 = vmatmul.f32.gmra.mxu0 %v10079
    %v10180 = vpop.f32.mrf.mxu0
    %v10181 = vadd.f32 0.0, %v10180
    %10182 = vmatmul.f32.gmra.mxu0 %v10080
    %v10183 = vpop.f32.mrf.mxu0
    %v10184 = vadd.f32 0.0, %v10183
    %10185 = vmatmul.f32.gmra.mxu0 %v10081
    %v10186 = vpop.f32.mrf.mxu0
    %v10187 = vadd.f32 0.0, %v10186
    %10188 = vmatmul.f32.gmra.mxu0 %v10082
    %v10189 = vpop.f32.mrf.mxu0
    %v10190 = vadd.f32 0.0, %v10189
    %10191 = vmatmul.f32.gmra.mxu0 %v10083
    %v10192 = vpop.f32.mrf.mxu0
    %v10193 = vadd.f32 0.0, %v10192
    %10194 = vmatmul.f32.gmra.mxu0 %v10084
    %v10195 = vpop.f32.mrf.mxu0
    %v10196 = vadd.f32 0.0, %v10195
    %10197 = vmatmul.f32.gmra.mxu0 %v10085
    %v10198 = vpop.f32.mrf.mxu0
    %v10199 = vadd.f32 0.0, %v10198
    %10200 = vmatmul.f32.gmra.mxu0 %v10086
    %v10201 = vpop.f32.mrf.mxu0
    %v10202 = vadd.f32 0.0, %v10201
    %10203 = vmatmul.f32.gmra.mxu0 %v10087
    %v10204 = vpop.f32.mrf.mxu0
    %v10205 = vadd.f32 0.0, %v10204
    %10206 = vmatmul.f32.gmra.mxu0 %v10088
    %v10207 = vpop.f32.mrf.mxu0
    %v10208 = vadd.f32 0.0, %v10207
    %10209 = vmatmul.f32.gmra.mxu0 %v10089
    %v10210 = vpop.f32.mrf.mxu0
    %v10211 = vadd.f32 0.0, %v10210
    %10212 = vmatmul.f32.gmra.mxu0 %v10090
    %v10213 = vpop.f32.mrf.mxu0
    %v10214 = vadd.f32 0.0, %v10213
    %10215 = vmatmul.f32.gmra.mxu0 %v10091
    %v10216 = vpop.f32.mrf.mxu0
    %v10217 = vadd.f32 0.0, %v10216
    %10218 = vmatmul.f32.gmra.mxu0 %v10092
    %v10219 = vpop.f32.mrf.mxu0
    %v10220 = vadd.f32 0.0, %v10219
    %10221 = vdwg.mxu0
    %v10222 = vadd.f32 %v8780, %v10127
    %v10223 = vadd.f32 %v8781, %v10130
    %v10224 = vadd.f32 %v8782, %v10133
    %v10225 = vadd.f32 %v8783, %v10136
    %v10226 = vadd.f32 %v8784, %v10139
    %v10227 = vadd.f32 %v8785, %v10142
    %v10228 = vadd.f32 %v8786, %v10145
    %v10229 = vadd.f32 %v8787, %v10148
    %v10230 = vadd.f32 %v8788, %v10151
    %v10231 = vadd.f32 %v8789, %v10154
    %v10232 = vadd.f32 %v8790, %v10157
    %v10233 = vadd.f32 %v8791, %v10160
    %v10234 = vadd.f32 %v8792, %v10163
    %v10235 = vadd.f32 %v8793, %v10166
    %v10236 = vadd.f32 %v8794, %v10169
    %v10237 = vadd.f32 %v8795, %v10172
    %v10238 = vadd.f32 %v8796, %v10175
    %v10239 = vadd.f32 %v8797, %v10178
    %v10240 = vadd.f32 %v8798, %v10181
    %v10241 = vadd.f32 %v8799, %v10184
    %v10242 = vadd.f32 %v8800, %v10187
    %v10243 = vadd.f32 %v8801, %v10190
    %v10244 = vadd.f32 %v8802, %v10193
    %v10245 = vadd.f32 %v8803, %v10196
    %v10246 = vadd.f32 %v8804, %v10199
    %v10247 = vadd.f32 %v8805, %v10202
    %v10248 = vadd.f32 %v8806, %v10205
    %v10249 = vadd.f32 %v8807, %v10208
    %v10250 = vadd.f32 %v8808, %v10211
    %v10251 = vadd.f32 %v8809, %v10214
    %v10252 = vadd.f32 %v8810, %v10217
    %v10253 = vadd.f32 %v8811, %v10220
    %v10254 = vld [vmem:[%s16] sm:$0x1]
    %v10256 = vperm.slane %v10254, 0
    %v10258 = vadd.f32 %v10222, %v10256
    %v10259 = vadd.f32 %v10223, %v10256
    %v10260 = vadd.f32 %v10224, %v10256
    %v10261 = vadd.f32 %v10225, %v10256
    %v10262 = vadd.f32 %v10226, %v10256
    %v10263 = vadd.f32 %v10227, %v10256
    %v10264 = vadd.f32 %v10228, %v10256
    %v10265 = vadd.f32 %v10229, %v10256
    %v10266 = vadd.f32 %v10230, %v10256
    %v10267 = vadd.f32 %v10231, %v10256
    %v10268 = vadd.f32 %v10232, %v10256
    %v10269 = vadd.f32 %v10233, %v10256
    %v10270 = vadd.f32 %v10234, %v10256
    %v10271 = vadd.f32 %v10235, %v10256
    %v10272 = vadd.f32 %v10236, %v10256
    %v10273 = vadd.f32 %v10237, %v10256
    %v10274 = vadd.f32 %v10238, %v10256
    %v10275 = vadd.f32 %v10239, %v10256
    %v10276 = vadd.f32 %v10240, %v10256
    %v10277 = vadd.f32 %v10241, %v10256
    %v10278 = vadd.f32 %v10242, %v10256
    %v10279 = vadd.f32 %v10243, %v10256
    %v10280 = vadd.f32 %v10244, %v10256
    %v10281 = vadd.f32 %v10245, %v10256
    %v10282 = vadd.f32 %v10246, %v10256
    %v10283 = vadd.f32 %v10247, %v10256
    %v10284 = vadd.f32 %v10248, %v10256
    %v10285 = vadd.f32 %v10249, %v10256
    %v10286 = vadd.f32 %v10250, %v10256
    %v10287 = vadd.f32 %v10251, %v10256
    %v10288 = vadd.f32 %v10252, %v10256
    %v10289 = vadd.f32 %v10253, %v10256
    %v10290 = vld [vmem:[%s17] sm:$0xff]
    %v10291 = vld [vmem:[%s17 + $0x8] sm:$0xff]
    %v10292 = vld [vmem:[%s17 + $0x10] sm:$0xff]
    %v10293 = vld [vmem:[%s17 + $0x18] sm:$0xff]
    %v10294 = vld [vmem:[%s18] sm:$0x1]
    %v10296 = vperm.slane %v10294, 0
    %v10299 = vsel %vm393, %v10258, 0
    %v10302 = vsel %vm393, %v10259, 0
    %v10305 = vsel %vm393, %v10260, 0
    %v10308 = vsel %vm393, %v10261, 0
    %v10311 = vsel %vm393, %v10262, 0
    %v10314 = vsel %vm393, %v10263, 0
    %v10317 = vsel %vm393, %v10264, 0
    %v10320 = vsel %vm393, %v10265, 0
    %v10323 = vsel %vm393, %v10266, 0
    %v10326 = vsel %vm393, %v10267, 0
    %v10329 = vsel %vm393, %v10268, 0
    %v10332 = vsel %vm393, %v10269, 0
    %v10335 = vsel %vm393, %v10270, 0
    %v10338 = vsel %vm393, %v10271, 0
    %v10341 = vsel %vm393, %v10272, 0
    %v10344 = vsel %vm393, %v10273, 0
    %v10347 = vsel %vm393, %v10274, 0
    %v10350 = vsel %vm393, %v10275, 0
    %v10353 = vsel %vm393, %v10276, 0
    %v10356 = vsel %vm393, %v10277, 0
    %v10359 = vsel %vm393, %v10278, 0
    %v10362 = vsel %vm393, %v10279, 0
    %v10365 = vsel %vm393, %v10280, 0
    %v10368 = vsel %vm393, %v10281, 0
    %v10371 = vsel %vm393, %v10282, 0
    %v10374 = vsel %vm393, %v10283, 0
    %v10377 = vsel %vm393, %v10284, 0
    %v10380 = vsel %vm393, %v10285, 0
    %v10383 = vsel %vm393, %v10286, 0
    %v10386 = vsel %vm393, %v10287, 0
    %v10389 = vsel %vm393, %v10288, 0
    %v10392 = vsel %vm393, %v10289, 0
    %10394 = vmatpush.msra.mxu0 0.0
    %10395 = vmatpush.msra.mxu0 0.0
    %10396 = vmatpush.msra.mxu0 0.0
    %10397 = vmatpush.msra.mxu0 0.0
    %10398 = vmatpush.msra.mxu0 0.0
    %10399 = vmatpush.msra.mxu0 0.0
    %10400 = vmatpush.msra.mxu0 0.0
    %10401 = vmatpush.msra.mxu0 0.0
    %10402 = vmatpush.msra.mxu0 0.0
    %10403 = vmatpush.msra.mxu0 0.0
    %10404 = vmatpush.msra.mxu0 0.0
    %10405 = vmatpush.msra.mxu0 0.0
    %10406 = vmatpush.msra.mxu0 %v10293
    %10407 = vmatpush.msra.mxu0 %v10292
    %10408 = vmatpush.msra.mxu0 %v10291
    %10409 = vmatpush.msra.mxu0 %v10290
    %10410 = vmatmul.f32.gmra.mxu0 %v10299
    %v10411 = vpop.f32.mrf.mxu0
    %v10412 = vadd.f32 %v10296, %v10411
    %10413 = vmatmul.f32.gmra.mxu0 %v10302
    %v10414 = vpop.f32.mrf.mxu0
    %v10415 = vadd.f32 %v10296, %v10414
    %10416 = vmatmul.f32.gmra.mxu0 %v10305
    %v10417 = vpop.f32.mrf.mxu0
    %v10418 = vadd.f32 %v10296, %v10417
    %10419 = vmatmul.f32.gmra.mxu0 %v10308
    %v10420 = vpop.f32.mrf.mxu0
    %v10421 = vadd.f32 %v10296, %v10420
    %10422 = vmatmul.f32.gmra.mxu0 %v10311
    %v10423 = vpop.f32.mrf.mxu0
    %v10424 = vadd.f32 %v10296, %v10423
    %10425 = vmatmul.f32.gmra.mxu0 %v10314
    %v10426 = vpop.f32.mrf.mxu0
    %v10427 = vadd.f32 %v10296, %v10426
    %10428 = vmatmul.f32.gmra.mxu0 %v10317
    %v10429 = vpop.f32.mrf.mxu0
    %v10430 = vadd.f32 %v10296, %v10429
    %10431 = vmatmul.f32.gmra.mxu0 %v10320
    %v10432 = vpop.f32.mrf.mxu0
    %v10433 = vadd.f32 %v10296, %v10432
    %10434 = vmatmul.f32.gmra.mxu0 %v10323
    %v10435 = vpop.f32.mrf.mxu0
    %v10436 = vadd.f32 %v10296, %v10435
    %10437 = vmatmul.f32.gmra.mxu0 %v10326
    %v10438 = vpop.f32.mrf.mxu0
    %v10439 = vadd.f32 %v10296, %v10438
    %10440 = vmatmul.f32.gmra.mxu0 %v10329
    %v10441 = vpop.f32.mrf.mxu0
    %v10442 = vadd.f32 %v10296, %v10441
    %10443 = vmatmul.f32.gmra.mxu0 %v10332
    %v10444 = vpop.f32.mrf.mxu0
    %v10445 = vadd.f32 %v10296, %v10444
    %10446 = vmatmul.f32.gmra.mxu0 %v10335
    %v10447 = vpop.f32.mrf.mxu0
    %v10448 = vadd.f32 %v10296, %v10447
    %10449 = vmatmul.f32.gmra.mxu0 %v10338
    %v10450 = vpop.f32.mrf.mxu0
    %v10451 = vadd.f32 %v10296, %v10450
    %10452 = vmatmul.f32.gmra.mxu0 %v10341
    %v10453 = vpop.f32.mrf.mxu0
    %v10454 = vadd.f32 %v10296, %v10453
    %10455 = vmatmul.f32.gmra.mxu0 %v10344
    %v10456 = vpop.f32.mrf.mxu0
    %v10457 = vadd.f32 %v10296, %v10456
    %10458 = vmatmul.f32.gmra.mxu0 %v10347
    %v10459 = vpop.f32.mrf.mxu0
    %v10460 = vadd.f32 %v10296, %v10459
    %10461 = vmatmul.f32.gmra.mxu0 %v10350
    %v10462 = vpop.f32.mrf.mxu0
    %v10463 = vadd.f32 %v10296, %v10462
    %10464 = vmatmul.f32.gmra.mxu0 %v10353
    %v10465 = vpop.f32.mrf.mxu0
    %v10466 = vadd.f32 %v10296, %v10465
    %10467 = vmatmul.f32.gmra.mxu0 %v10356
    %v10468 = vpop.f32.mrf.mxu0
    %v10469 = vadd.f32 %v10296, %v10468
    %10470 = vmatmul.f32.gmra.mxu0 %v10359
    %v10471 = vpop.f32.mrf.mxu0
    %v10472 = vadd.f32 %v10296, %v10471
    %10473 = vmatmul.f32.gmra.mxu0 %v10362
    %v10474 = vpop.f32.mrf.mxu0
    %v10475 = vadd.f32 %v10296, %v10474
    %10476 = vmatmul.f32.gmra.mxu0 %v10365
    %v10477 = vpop.f32.mrf.mxu0
    %v10478 = vadd.f32 %v10296, %v10477
    %10479 = vmatmul.f32.gmra.mxu0 %v10368
    %v10480 = vpop.f32.mrf.mxu0
    %v10481 = vadd.f32 %v10296, %v10480
    %10482 = vmatmul.f32.gmra.mxu0 %v10371
    %v10483 = vpop.f32.mrf.mxu0
    %v10484 = vadd.f32 %v10296, %v10483
    %10485 = vmatmul.f32.gmra.mxu0 %v10374
    %v10486 = vpop.f32.mrf.mxu0
    %v10487 = vadd.f32 %v10296, %v10486
    %10488 = vmatmul.f32.gmra.mxu0 %v10377
    %v10489 = vpop.f32.mrf.mxu0
    %v10490 = vadd.f32 %v10296, %v10489
    %10491 = vmatmul.f32.gmra.mxu0 %v10380
    %v10492 = vpop.f32.mrf.mxu0
    %v10493 = vadd.f32 %v10296, %v10492
    %10494 = vmatmul.f32.gmra.mxu0 %v10383
    %v10495 = vpop.f32.mrf.mxu0
    %v10496 = vadd.f32 %v10296, %v10495
    %10497 = vmatmul.f32.gmra.mxu0 %v10386
    %v10498 = vpop.f32.mrf.mxu0
    %v10499 = vadd.f32 %v10296, %v10498
    %10500 = vmatmul.f32.gmra.mxu0 %v10389
    %v10501 = vpop.f32.mrf.mxu0
    %v10502 = vadd.f32 %v10296, %v10501
    %10503 = vmatmul.f32.gmra.mxu0 %v10392
    %v10504 = vpop.f32.mrf.mxu0
    %v10505 = vadd.f32 %v10296, %v10504
    %10506 = vdwg.mxu0
    %10507 = vst.msk [vmem:[%s19] sm:$0xff] %vm4959, %v10412
    %10508 = vst.msk [vmem:[%s19 + $0x8] sm:$0xff] %vm4959, %v10415
    %10509 = vst.msk [vmem:[%s19 + $0x10] sm:$0xff] %vm4959, %v10418
    %10510 = vst.msk [vmem:[%s19 + $0x18] sm:$0xff] %vm4959, %v10421
    %10511 = vst.msk [vmem:[%s19 + $0x20] sm:$0xff] %vm4959, %v10424
    %10512 = vst.msk [vmem:[%s19 + $0x28] sm:$0xff] %vm4959, %v10427
    %10513 = vst.msk [vmem:[%s19 + $0x30] sm:$0xff] %vm4959, %v10430
    %10514 = vst.msk [vmem:[%s19 + $0x38] sm:$0xff] %vm4959, %v10433
    %10515 = vst.msk [vmem:[%s19 + $0x40] sm:$0xff] %vm4959, %v10436
    %10516 = vst.msk [vmem:[%s19 + $0x48] sm:$0xff] %vm4959, %v10439
    %10517 = vst.msk [vmem:[%s19 + $0x50] sm:$0xff] %vm4959, %v10442
    %10518 = vst.msk [vmem:[%s19 + $0x58] sm:$0xff] %vm4959, %v10445
    %10519 = vst.msk [vmem:[%s19 + $0x60] sm:$0xff] %vm4959, %v10448
    %10520 = vst.msk [vmem:[%s19 + $0x68] sm:$0xff] %vm4959, %v10451
    %10521 = vst.msk [vmem:[%s19 + $0x70] sm:$0xff] %vm4959, %v10454
    %10522 = vst.msk [vmem:[%s19 + $0x78] sm:$0xff] %vm4959, %v10457
    %s10523 = scalar_lea.vmem %s19, 128
    %10524 = vst.msk [vmem:[%s10523] sm:$0xff] %vm4959, %v10460
    %10525 = vst.msk [vmem:[%s10523 + $0x8] sm:$0xff] %vm4959, %v10463
    %10526 = vst.msk [vmem:[%s10523 + $0x10] sm:$0xff] %vm4959, %v10466
    %10527 = vst.msk [vmem:[%s10523 + $0x18] sm:$0xff] %vm4959, %v10469
    %10528 = vst.msk [vmem:[%s10523 + $0x20] sm:$0xff] %vm4959, %v10472
    %10529 = vst.msk [vmem:[%s10523 + $0x28] sm:$0xff] %vm4959, %v10475
    %10530 = vst.msk [vmem:[%s10523 + $0x30] sm:$0xff] %vm4959, %v10478
    %10531 = vst.msk [vmem:[%s10523 + $0x38] sm:$0xff] %vm4959, %v10481
    %10532 = vst.msk [vmem:[%s10523 + $0x40] sm:$0xff] %vm4959, %v10484
    %10533 = vst.msk [vmem:[%s10523 + $0x48] sm:$0xff] %vm4959, %v10487
    %10534 = vst.msk [vmem:[%s10523 + $0x50] sm:$0xff] %vm4959, %v10490
    %10535 = vst.msk [vmem:[%s10523 + $0x58] sm:$0xff] %vm4959, %v10493
    %10536 = vst.msk [vmem:[%s10523 + $0x60] sm:$0xff] %vm4959, %v10496
    %10537 = vst.msk [vmem:[%s10523 + $0x68] sm:$0xff] %vm4959, %v10499
    %10538 = vst.msk [vmem:[%s10523 + $0x70] sm:$0xff] %vm4959, %v10502
    %10539 = vst.msk [vmem:[%s10523 + $0x78] sm:$0xff] %vm4959, %v10505
    // Predicated region
    $region86: #{linformer_seq_encoder_forward.1} parent=1 // pred_check
      _
    $region87: #{linformer_seq_encoder_forward.1} parent=1 // pred_check_branch
      %10541 = sbr.rel (0) target = $region89
    $region88: #{linformer_seq_encoder_forward.1} parent=1 // pred_region
      _
    $region89: #{linformer_seq_encoder_forward.1} parent=1 // pred_fallthru
      _
    // Predicated region
    $region90: #{linformer_seq_encoder_forward.1} parent=1 // pred_check
      _
    $region91: #{linformer_seq_encoder_forward.1} parent=1 // pred_check_branch
      %10543 = sbr.rel (0) target = $region93
    $region92: #{linformer_seq_encoder_forward.1} parent=1 // pred_region
      _
    $region93: #{linformer_seq_encoder_forward.1} parent=1 // pred_fallthru
      _
    %10544 = vsyncpa [#allocation3], 1
    %10545 = vsyncpa [#allocation5], 1

</llo_original>
